<compile_context>
chip_gen: v7x
topology: tpu7x:2x2x1
jax: 0.10.0
libtpu: 0.0.40
codegen_flags: <defaults>
</compile_context>

<pallas_src>
import functools

import jax
import jax.numpy as jnp
from jax.experimental import pallas as pl
from jax.experimental.pallas import tpu as pltpu

EPS = 1e-5  # torch.nn.BatchNorm2d default


# ----------------------------------------------------------------------------
# Fused Pallas kernel
# ----------------------------------------------------------------------------
def fused_stage2_kernel(
    x_ref,            # (NH, WC) f32   input, layout row = n*H + h, col = w*Cpad + c
    gg_ref,           # (WC, WC) f32   per-channel averaging matrix (incl. 1/(N*H*W))
    s_ref,            # (2*halo+1, NH, NH) f32  row-shift + zero-pad matrices
    g0_ref, b0_ref,   # (1, WC) f32    BN0 gamma/beta, tiled per w
    b7_ref,           # (7, WC, WC) bf16   conv7 band weights (one per vertical tap)
    bias7_ref,        # (1, WC) f32
    b3_ref,           # (n_blocks, 3, WC, WC) bf16
    bias3_ref, gam3_ref, bet3_ref,   # (n_blocks, 1, WC) f32
    m1_ref,           # (WC, WC) bf16  1x1 mid_out as block-diagonal matmul
    biasm_ref,        # (1, WC) f32
    o_ref,            # (NH, WC) f32
    *, n_blocks, halo,
):
    gg = gg_ref[...]

    def batchnorm(y, gamma_row, beta_row):
        # Training-mode BN: stats per channel over all (n, h, w) rows/groups.
        colsum = jnp.sum(y, axis=0, keepdims=True)                       # (1, WC)
        mean_row = jnp.dot(colsum, gg, preferred_element_type=jnp.float32)
        yc = y - mean_row
        sqsum = jnp.sum(yc * yc, axis=0, keepdims=True)
        var_row = jnp.dot(sqsum, gg, preferred_element_type=jnp.float32)
        inv_row = jax.lax.rsqrt(var_row + EPS)                           # f32 EUP
        return yc * (inv_row * gamma_row) + beta_row

    def conv(y, get_band, ksize, pad, bias_row):
        # Same-padding KxK conv as `ksize` band matmuls + row-shift matmuls.
        yb = y.astype(jnp.bfloat16)
        acc = jnp.zeros(y.shape, jnp.float32)
        for t in range(ksize):
            z = jnp.dot(yb, get_band(t), preferred_element_type=jnp.float32)
            s = t - pad
            if s == 0:
                acc = acc + z
            else:
                acc = acc + jnp.dot(s_ref[s + halo], z,
                                    preferred_element_type=jnp.float32)
        return acc + bias_row

    # cnn1.conv1: BN0 -> Conv7x7 -> ReLU
    y = batchnorm(x_ref[...], g0_ref[...], b0_ref[...])
    y = conv(y, lambda t: b7_ref[t], 7, 3, bias7_ref[...])
    y = jnp.maximum(y, 0.0)

    # cnn1.conv2: n_blocks x (Conv3x3 -> BN -> ReLU)
    for blk in range(n_blocks):
        y = conv(y, lambda t, b=blk: b3_ref[b, t], 3, 1, bias3_ref[blk])
        y = batchnorm(y, gam3_ref[blk], bet3_ref[blk])
        y = jnp.maximum(y, 0.0)

    # mid_out (1x1 conv) + final sigmoid of the returned value
    y = jnp.dot(y.astype(jnp.bfloat16), m1_ref[...],
                preferred_element_type=jnp.float32) + biasm_ref[...]
    o_ref[...] = jax.nn.sigmoid(y)


# ----------------------------------------------------------------------------
# Wrapper: layout packing + band-weight construction + pallas_call
# ----------------------------------------------------------------------------
def stage2_cnn_forward(params, x_nchw):
    f32 = jnp.float32
    N, Cin, H, W = x_nchw.shape
    Cmid = params["conv7"][0].shape[-1]
    labels = params["mid_out"][0].shape[-1]
    n_blocks = len(params["blocks"])
    Cpad = ((max(Cin, Cmid, labels) + 7) // 8) * 8
    NH, WC = N * H, W * Cpad
    HALO = 3  # supports kernel sizes up to 7

    # ---- activations: NCHW -> (N*H, W*Cpad), channels zero padded ----------
    x_nhwc = jnp.transpose(x_nchw, (0, 2, 3, 1)).astype(f32)
    x2 = jnp.zeros((N, H, W, Cpad), f32).at[..., :Cin].set(x_nhwc)
    x2 = x2.reshape(NH, WC)

    # ---- constant helper matrices ------------------------------------------
    # per-channel averaging (broadcast back over w), includes 1/(N*H*W)
    GG = jnp.tile(jnp.eye(Cpad, dtype=f32), (W, W)) / float(N * H * W)

    # row-shift matrices S_s: (S_s @ z)[n*H+h] = z[n*H+h+s] if 0<=h+s<H else 0
    ii = jnp.arange(NH)
    hh = ii % H

    def smat(s):
        valid = (hh + s >= 0) & (hh + s < H)
        return ((ii[:, None] + s == ii[None, :]) & valid[:, None]).astype(f32)

    SHIFT = jnp.stack([smat(s) for s in range(-HALO, HALO + 1)], axis=0)

    # band matrices: fold horizontal taps + channel mix + W zero-padding into
    # (WC, WC) weights, one per vertical tap.  w layout: (KH, KW, Cin, Cout).
    def band(w):
        KH, KW, ci_, co_ = w.shape
        p = KW // 2
        wp = jnp.zeros((KH, KW, Cpad, Cpad), f32).at[:, :, :ci_, :co_].set(w)
        w2 = jnp.arange(W)[:, None, None]     # source column
        wo = jnp.arange(W)[None, :, None]     # output column
        kk = jnp.arange(KW)[None, None, :]
        sel = (w2 - wo + p == kk).astype(f32)              # (W, W, KW)
        B = jnp.einsum("vwk,dkio->dviwo", sel, wp)         # (KH, W, Cp, W, Cp)
        return B.reshape(KH, WC, WC).astype(jnp.bfloat16)

    # per-channel vectors tiled across w: (C,) -> (1, W*Cpad)
    def crow(v):
        vp = jnp.zeros((Cpad,), f32).at[: v.shape[0]].set(v.astype(f32))
        return jnp.tile(vp, W).reshape(1, WC)

    w7, b7 = params["conv7"]
    wm, bm = params["mid_out"]
    B7 = band(w7)
    M1 = band(wm)[0]
    B3 = jnp.stack([band(blk["w"]) for blk in params["blocks"]], axis=0)
    bias3 = jnp.stack([crow(blk["b"]) for blk in params["blocks"]], axis=0)
    gam3 = jnp.stack([crow(blk["gamma"]) for blk in params["blocks"]], axis=0)
    bet3 = jnp.stack([crow(blk["beta"]) for blk in params["blocks"]], axis=0)
    g0 = crow(params["bn0_gamma"])
    b0 = crow(params["bn0_beta"])
    b7row = crow(b7)
    bmrow = crow(bm)

    kern = functools.partial(fused_stage2_kernel, n_blocks=n_blocks, halo=HALO)
    vmem = pl.BlockSpec(memory_space=pltpu.MemorySpace.VMEM)
    operands = (x2, GG, SHIFT, g0, b0, B7, b7row, B3, bias3, gam3, bet3, M1,
                bmrow)

    out = pl.pallas_call(
        kern,
        out_shape=jax.ShapeDtypeStruct((NH, WC), f32),
        in_specs=[vmem] * len(operands),
        out_specs=vmem,
    )(*operands)

    y = out.reshape(N, H, W, Cpad)[..., :labels]
    return jnp.transpose(y, (0, 3, 1, 2))  # NHWC -> NCHW


# ----------------------------------------------------------------------------
# Deterministic parameter init (shapes from stage2_cnn.__init__)
# ----------------------------------------------------------------------------
def init_params(key, cin, cmid, labels):
    keys = iter(jax.random.split(key, 32))

    def conv_param(kh, kw, ci, co):
        fan_in = kh * kw * ci
        bound = 1.0 / (fan_in ** 0.5)
        w = jax.random.uniform(next(keys), (kh, kw, ci, co), jnp.float32,
                               -bound, bound)
        b = jax.random.uniform(next(keys), (co,), jnp.float32, -bound, bound)
        return w, b

    params = {
        "bn0_gamma": jnp.ones((cin,), jnp.float32),
        "bn0_beta": jnp.zeros((cin,), jnp.float32),
        "conv7": conv_param(7, 7, cin, cmid),
        "blocks": [],
        "mid_out": conv_param(1, 1, cmid, labels),
    }
    for _ in range(6):
        w, b = conv_param(3, 3, cmid, cmid)
        params["blocks"].append({
            "w": w, "b": b,
            "gamma": jnp.ones((cmid,), jnp.float32),
            "beta": jnp.zeros((cmid,), jnp.float32),
        })
    return params


if __name__ == "__main__":
    key = jax.random.PRNGKey(0)
    kx, kp = jax.random.split(key)

    N, Cin, H, W = 2, 4, 16, 16
    Cmid, labels = 8, 3

    x = jax.random.normal(kx, (N, Cin, H, W), dtype=jnp.float32)
    params = init_params(kp, Cin, Cmid, labels)

    out = jax.jit(stage2_cnn_forward)(params, x)
    out = jax.block_until_ready(out)

    assert out.shape == (N, labels, H, W), out.shape
    assert out.dtype == jnp.float32
    assert bool(jnp.all((out >= 0.0) & (out <= 1.0)))  # sigmoid range
    print("KERNEL_OK")
</pallas_src>

<mosaic_0001>
module attributes {stable_mosaic.version = 11 : i64} {
  func.func @fused_stage2_kernel(%arg0: memref<32x128xf32, #tpu.memory_space<vmem>>, %arg1: memref<128x128xf32, #tpu.memory_space<vmem>>, %arg2: memref<7x32x32xf32, #tpu.memory_space<vmem>>, %arg3: memref<1x128xf32, #tpu.memory_space<vmem>>, %arg4: memref<1x128xf32, #tpu.memory_space<vmem>>, %arg5: memref<7x128x128xbf16, #tpu.memory_space<vmem>>, %arg6: memref<1x128xf32, #tpu.memory_space<vmem>>, %arg7: memref<6x3x128x128xbf16, #tpu.memory_space<vmem>>, %arg8: memref<6x1x128xf32, #tpu.memory_space<vmem>>, %arg9: memref<6x1x128xf32, #tpu.memory_space<vmem>>, %arg10: memref<6x1x128xf32, #tpu.memory_space<vmem>>, %arg11: memref<128x128xbf16, #tpu.memory_space<vmem>>, %arg12: memref<1x128xf32, #tpu.memory_space<vmem>>, %arg13: memref<32x128xf32, #tpu.memory_space<vmem>>) attributes {dimension_semantics = [], scalar_prefetch = 0 : i64, scratch_operands = 0 : i64, tpu.core_type = #tpu.core_type<tc>} {
    %c0 = arith.constant 0 : index
    %c0_0 = arith.constant 0 : index
    %0 = vector.load %arg1[%c0, %c0_0] : memref<128x128xf32, #tpu.memory_space<vmem>>, vector<128x128xf32>
    %c0_1 = arith.constant 0 : index
    %c0_2 = arith.constant 0 : index
    %1 = vector.load %arg0[%c0_1, %c0_2] : memref<32x128xf32, #tpu.memory_space<vmem>>, vector<32x128xf32>
    %c0_3 = arith.constant 0 : index
    %c0_4 = arith.constant 0 : index
    %2 = vector.load %arg3[%c0_3, %c0_4] : memref<1x128xf32, #tpu.memory_space<vmem>>, vector<1x128xf32>
    %c0_5 = arith.constant 0 : index
    %c0_6 = arith.constant 0 : index
    %3 = vector.load %arg4[%c0_5, %c0_6] : memref<1x128xf32, #tpu.memory_space<vmem>>, vector<1x128xf32>
    %cst = arith.constant dense<0.000000e+00> : vector<128xf32>
    %4 = vector.multi_reduction <add>, %1, %cst [0] : vector<32x128xf32> to vector<128xf32>
    %5 = vector.shape_cast %4 : vector<128xf32> to vector<1x128xf32>
    %cst_7 = arith.constant dense<0.000000e+00> : vector<1x128xf32>
    %6 = tpu.matmul %5, %0, %cst_7 {dimension_numbers = #tpu.dot_dimension_numbers<[1], [0], [0], [1], [0, 0, 1, 1], [], []>} : vector<1x128xf32>, vector<128x128xf32>, vector<1x128xf32> -> vector<1x128xf32>
    %7 = vector.broadcast %6 : vector<1x128xf32> to vector<32x128xf32>
    %8 = arith.subf %1, %7 : vector<32x128xf32>
    %9 = arith.mulf %8, %8 : vector<32x128xf32>
    %cst_8 = arith.constant dense<0.000000e+00> : vector<128xf32>
    %10 = vector.multi_reduction <add>, %9, %cst_8 [0] : vector<32x128xf32> to vector<128xf32>
    %11 = vector.shape_cast %10 : vector<128xf32> to vector<1x128xf32>
    %cst_9 = arith.constant dense<0.000000e+00> : vector<1x128xf32>
    %12 = tpu.matmul %11, %0, %cst_9 {dimension_numbers = #tpu.dot_dimension_numbers<[1], [0], [0], [1], [0, 0, 1, 1], [], []>} : vector<1x128xf32>, vector<128x128xf32>, vector<1x128xf32> -> vector<1x128xf32>
    %cst_10 = arith.constant 9.99999974E-6 : f32
    %13 = vector.broadcast %cst_10 : f32 to vector<1x128xf32>
    %14 = arith.addf %12, %13 : vector<1x128xf32>
    %15 = math.rsqrt %14 : vector<1x128xf32>
    %16 = arith.mulf %15, %2 : vector<1x128xf32>
    %17 = vector.broadcast %16 : vector<1x128xf32> to vector<32x128xf32>
    %18 = arith.mulf %8, %17 : vector<32x128xf32>
    %19 = vector.broadcast %3 : vector<1x128xf32> to vector<32x128xf32>
    %20 = arith.addf %18, %19 : vector<32x128xf32>
    %c0_11 = arith.constant 0 : index
    %c0_12 = arith.constant 0 : index
    %21 = vector.load %arg6[%c0_11, %c0_12] : memref<1x128xf32, #tpu.memory_space<vmem>>, vector<1x128xf32>
    %22 = arith.truncf %20 : vector<32x128xf32> to vector<32x128xbf16>
    %cst_13 = arith.constant 0.000000e+00 : f32
    %23 = vector.broadcast %cst_13 : f32 to vector<32x128xf32>
    %c0_14 = arith.constant 0 : index
    %c0_15 = arith.constant 0 : index
    %c0_16 = arith.constant 0 : index
    %24 = vector.load %arg5[%c0_14, %c0_15, %c0_16] : memref<7x128x128xbf16, #tpu.memory_space<vmem>>, vector<1x128x128xbf16>
    %25 = vector.shape_cast %24 : vector<1x128x128xbf16> to vector<128x128xbf16>
    %cst_17 = arith.constant dense<0.000000e+00> : vector<32x128xf32>
    %26 = tpu.matmul %22, %25, %cst_17 {dimension_numbers = #tpu.dot_dimension_numbers<[1], [0], [0], [1], [0, 0, 1, 1], [], []>} : vector<32x128xbf16>, vector<128x128xbf16>, vector<32x128xf32> -> vector<32x128xf32>
    %c0_18 = arith.constant 0 : index
    %c0_19 = arith.constant 0 : index
    %c0_20 = arith.constant 0 : index
    %27 = vector.load %arg2[%c0_18, %c0_19, %c0_20] : memref<7x32x32xf32, #tpu.memory_space<vmem>>, vector<1x32x32xf32>
    %28 = vector.shape_cast %27 : vector<1x32x32xf32> to vector<32x32xf32>
    %cst_21 = arith.constant dense<0.000000e+00> : vector<32x128xf32>
    %29 = tpu.matmul %28, %26, %cst_21 {dimension_numbers = #tpu.dot_dimension_numbers<[1], [0], [0], [1], [0, 0, 1, 1], [], []>} : vector<32x32xf32>, vector<32x128xf32>, vector<32x128xf32> -> vector<32x128xf32>
    %30 = arith.addf %23, %29 : vector<32x128xf32>
    %c1 = arith.constant 1 : index
    %c0_22 = arith.constant 0 : index
    %c0_23 = arith.constant 0 : index
    %31 = vector.load %arg5[%c1, %c0_22, %c0_23] : memref<7x128x128xbf16, #tpu.memory_space<vmem>>, vector<1x128x128xbf16>
    %32 = vector.shape_cast %31 : vector<1x128x128xbf16> to vector<128x128xbf16>
    %cst_24 = arith.constant dense<0.000000e+00> : vector<32x128xf32>
    %33 = tpu.matmul %22, %32, %cst_24 {dimension_numbers = #tpu.dot_dimension_numbers<[1], [0], [0], [1], [0, 0, 1, 1], [], []>} : vector<32x128xbf16>, vector<128x128xbf16>, vector<32x128xf32> -> vector<32x128xf32>
    %c1_25 = arith.constant 1 : index
    %c0_26 = arith.constant 0 : index
    %c0_27 = arith.constant 0 : index
    %34 = vector.load %arg2[%c1_25, %c0_26, %c0_27] : memref<7x32x32xf32, #tpu.memory_space<vmem>>, vector<1x32x32xf32>
    %35 = vector.shape_cast %34 : vector<1x32x32xf32> to vector<32x32xf32>
    %cst_28 = arith.constant dense<0.000000e+00> : vector<32x128xf32>
    %36 = tpu.matmul %35, %33, %cst_28 {dimension_numbers = #tpu.dot_dimension_numbers<[1], [0], [0], [1], [0, 0, 1, 1], [], []>} : vector<32x32xf32>, vector<32x128xf32>, vector<32x128xf32> -> vector<32x128xf32>
    %37 = arith.addf %30, %36 : vector<32x128xf32>
    %c2 = arith.constant 2 : index
    %c0_29 = arith.constant 0 : index
    %c0_30 = arith.constant 0 : index
    %38 = vector.load %arg5[%c2, %c0_29, %c0_30] : memref<7x128x128xbf16, #tpu.memory_space<vmem>>, vector<1x128x128xbf16>
    %39 = vector.shape_cast %38 : vector<1x128x128xbf16> to vector<128x128xbf16>
    %cst_31 = arith.constant dense<0.000000e+00> : vector<32x128xf32>
    %40 = tpu.matmul %22, %39, %cst_31 {dimension_numbers = #tpu.dot_dimension_numbers<[1], [0], [0], [1], [0, 0, 1, 1], [], []>} : vector<32x128xbf16>, vector<128x128xbf16>, vector<32x128xf32> -> vector<32x128xf32>
    %c2_32 = arith.constant 2 : index
    %c0_33 = arith.constant 0 : index
    %c0_34 = arith.constant 0 : index
    %41 = vector.load %arg2[%c2_32, %c0_33, %c0_34] : memref<7x32x32xf32, #tpu.memory_space<vmem>>, vector<1x32x32xf32>
    %42 = vector.shape_cast %41 : vector<1x32x32xf32> to vector<32x32xf32>
    %cst_35 = arith.constant dense<0.000000e+00> : vector<32x128xf32>
    %43 = tpu.matmul %42, %40, %cst_35 {dimension_numbers = #tpu.dot_dimension_numbers<[1], [0], [0], [1], [0, 0, 1, 1], [], []>} : vector<32x32xf32>, vector<32x128xf32>, vector<32x128xf32> -> vector<32x128xf32>
    %44 = arith.addf %37, %43 : vector<32x128xf32>
    %c3 = arith.constant 3 : index
    %c0_36 = arith.constant 0 : index
    %c0_37 = arith.constant 0 : index
    %45 = vector.load %arg5[%c3, %c0_36, %c0_37] : memref<7x128x128xbf16, #tpu.memory_space<vmem>>, vector<1x128x128xbf16>
    %46 = vector.shape_cast %45 : vector<1x128x128xbf16> to vector<128x128xbf16>
    %cst_38 = arith.constant dense<0.000000e+00> : vector<32x128xf32>
    %47 = tpu.matmul %22, %46, %cst_38 {dimension_numbers = #tpu.dot_dimension_numbers<[1], [0], [0], [1], [0, 0, 1, 1], [], []>} : vector<32x128xbf16>, vector<128x128xbf16>, vector<32x128xf32> -> vector<32x128xf32>
    %48 = arith.addf %44, %47 : vector<32x128xf32>
    %c4 = arith.constant 4 : index
    %c0_39 = arith.constant 0 : index
    %c0_40 = arith.constant 0 : index
    %49 = vector.load %arg5[%c4, %c0_39, %c0_40] : memref<7x128x128xbf16, #tpu.memory_space<vmem>>, vector<1x128x128xbf16>
    %50 = vector.shape_cast %49 : vector<1x128x128xbf16> to vector<128x128xbf16>
    %cst_41 = arith.constant dense<0.000000e+00> : vector<32x128xf32>
    %51 = tpu.matmul %22, %50, %cst_41 {dimension_numbers = #tpu.dot_dimension_numbers<[1], [0], [0], [1], [0, 0, 1, 1], [], []>} : vector<32x128xbf16>, vector<128x128xbf16>, vector<32x128xf32> -> vector<32x128xf32>
    %c4_42 = arith.constant 4 : index
    %c0_43 = arith.constant 0 : index
    %c0_44 = arith.constant 0 : index
    %52 = vector.load %arg2[%c4_42, %c0_43, %c0_44] : memref<7x32x32xf32, #tpu.memory_space<vmem>>, vector<1x32x32xf32>
    %53 = vector.shape_cast %52 : vector<1x32x32xf32> to vector<32x32xf32>
    %cst_45 = arith.constant dense<0.000000e+00> : vector<32x128xf32>
    %54 = tpu.matmul %53, %51, %cst_45 {dimension_numbers = #tpu.dot_dimension_numbers<[1], [0], [0], [1], [0, 0, 1, 1], [], []>} : vector<32x32xf32>, vector<32x128xf32>, vector<32x128xf32> -> vector<32x128xf32>
    %55 = arith.addf %48, %54 : vector<32x128xf32>
    %c5 = arith.constant 5 : index
    %c0_46 = arith.constant 0 : index
    %c0_47 = arith.constant 0 : index
    %56 = vector.load %arg5[%c5, %c0_46, %c0_47] : memref<7x128x128xbf16, #tpu.memory_space<vmem>>, vector<1x128x128xbf16>
    %57 = vector.shape_cast %56 : vector<1x128x128xbf16> to vector<128x128xbf16>
    %cst_48 = arith.constant dense<0.000000e+00> : vector<32x128xf32>
    %58 = tpu.matmul %22, %57, %cst_48 {dimension_numbers = #tpu.dot_dimension_numbers<[1], [0], [0], [1], [0, 0, 1, 1], [], []>} : vector<32x128xbf16>, vector<128x128xbf16>, vector<32x128xf32> -> vector<32x128xf32>
    %c5_49 = arith.constant 5 : index
    %c0_50 = arith.constant 0 : index
    %c0_51 = arith.constant 0 : index
    %59 = vector.load %arg2[%c5_49, %c0_50, %c0_51] : memref<7x32x32xf32, #tpu.memory_space<vmem>>, vector<1x32x32xf32>
    %60 = vector.shape_cast %59 : vector<1x32x32xf32> to vector<32x32xf32>
    %cst_52 = arith.constant dense<0.000000e+00> : vector<32x128xf32>
    %61 = tpu.matmul %60, %58, %cst_52 {dimension_numbers = #tpu.dot_dimension_numbers<[1], [0], [0], [1], [0, 0, 1, 1], [], []>} : vector<32x32xf32>, vector<32x128xf32>, vector<32x128xf32> -> vector<32x128xf32>
    %62 = arith.addf %55, %61 : vector<32x128xf32>
    %c6 = arith.constant 6 : index
    %c0_53 = arith.constant 0 : index
    %c0_54 = arith.constant 0 : index
    %63 = vector.load %arg5[%c6, %c0_53, %c0_54] : memref<7x128x128xbf16, #tpu.memory_space<vmem>>, vector<1x128x128xbf16>
    %64 = vector.shape_cast %63 : vector<1x128x128xbf16> to vector<128x128xbf16>
    %cst_55 = arith.constant dense<0.000000e+00> : vector<32x128xf32>
    %65 = tpu.matmul %22, %64, %cst_55 {dimension_numbers = #tpu.dot_dimension_numbers<[1], [0], [0], [1], [0, 0, 1, 1], [], []>} : vector<32x128xbf16>, vector<128x128xbf16>, vector<32x128xf32> -> vector<32x128xf32>
    %c6_56 = arith.constant 6 : index
    %c0_57 = arith.constant 0 : index
    %c0_58 = arith.constant 0 : index
    %66 = vector.load %arg2[%c6_56, %c0_57, %c0_58] : memref<7x32x32xf32, #tpu.memory_space<vmem>>, vector<1x32x32xf32>
    %67 = vector.shape_cast %66 : vector<1x32x32xf32> to vector<32x32xf32>
    %cst_59 = arith.constant dense<0.000000e+00> : vector<32x128xf32>
    %68 = tpu.matmul %67, %65, %cst_59 {dimension_numbers = #tpu.dot_dimension_numbers<[1], [0], [0], [1], [0, 0, 1, 1], [], []>} : vector<32x32xf32>, vector<32x128xf32>, vector<32x128xf32> -> vector<32x128xf32>
    %69 = arith.addf %62, %68 : vector<32x128xf32>
    %70 = vector.broadcast %21 : vector<1x128xf32> to vector<32x128xf32>
    %71 = arith.addf %69, %70 : vector<32x128xf32>
    %cst_60 = arith.constant 0.000000e+00 : f32
    %72 = vector.broadcast %cst_60 : f32 to vector<32x128xf32>
    %73 = arith.maximumf %71, %72 : vector<32x128xf32>
    %c0_61 = arith.constant 0 : index
    %c0_62 = arith.constant 0 : index
    %c0_63 = arith.constant 0 : index
    %74 = vector.load %arg8[%c0_61, %c0_62, %c0_63] : memref<6x1x128xf32, #tpu.memory_space<vmem>>, vector<1x1x128xf32>
    %75 = vector.shape_cast %74 : vector<1x1x128xf32> to vector<1x128xf32>
    %76 = arith.truncf %73 : vector<32x128xf32> to vector<32x128xbf16>
    %cst_64 = arith.constant 0.000000e+00 : f32
    %77 = vector.broadcast %cst_64 : f32 to vector<32x128xf32>
    %c0_65 = arith.constant 0 : index
    %c0_66 = arith.constant 0 : index
    %c0_67 = arith.constant 0 : index
    %c0_68 = arith.constant 0 : index
    %78 = vector.load %arg7[%c0_65, %c0_66, %c0_67, %c0_68] : memref<6x3x128x128xbf16, #tpu.memory_space<vmem>>, vector<1x1x128x128xbf16>
    %79 = vector.shape_cast %78 : vector<1x1x128x128xbf16> to vector<128x128xbf16>
    %cst_69 = arith.constant dense<0.000000e+00> : vector<32x128xf32>
    %80 = tpu.matmul %76, %79, %cst_69 {dimension_numbers = #tpu.dot_dimension_numbers<[1], [0], [0], [1], [0, 0, 1, 1], [], []>} : vector<32x128xbf16>, vector<128x128xbf16>, vector<32x128xf32> -> vector<32x128xf32>
    %c2_70 = arith.constant 2 : index
    %c0_71 = arith.constant 0 : index
    %c0_72 = arith.constant 0 : index
    %81 = vector.load %arg2[%c2_70, %c0_71, %c0_72] : memref<7x32x32xf32, #tpu.memory_space<vmem>>, vector<1x32x32xf32>
    %82 = vector.shape_cast %81 : vector<1x32x32xf32> to vector<32x32xf32>
    %cst_73 = arith.constant dense<0.000000e+00> : vector<32x128xf32>
    %83 = tpu.matmul %82, %80, %cst_73 {dimension_numbers = #tpu.dot_dimension_numbers<[1], [0], [0], [1], [0, 0, 1, 1], [], []>} : vector<32x32xf32>, vector<32x128xf32>, vector<32x128xf32> -> vector<32x128xf32>
    %84 = arith.addf %77, %83 : vector<32x128xf32>
    %c0_74 = arith.constant 0 : index
    %c1_75 = arith.constant 1 : index
    %c0_76 = arith.constant 0 : index
    %c0_77 = arith.constant 0 : index
    %85 = vector.load %arg7[%c0_74, %c1_75, %c0_76, %c0_77] : memref<6x3x128x128xbf16, #tpu.memory_space<vmem>>, vector<1x1x128x128xbf16>
    %86 = vector.shape_cast %85 : vector<1x1x128x128xbf16> to vector<128x128xbf16>
    %cst_78 = arith.constant dense<0.000000e+00> : vector<32x128xf32>
    %87 = tpu.matmul %76, %86, %cst_78 {dimension_numbers = #tpu.dot_dimension_numbers<[1], [0], [0], [1], [0, 0, 1, 1], [], []>} : vector<32x128xbf16>, vector<128x128xbf16>, vector<32x128xf32> -> vector<32x128xf32>
    %88 = arith.addf %84, %87 : vector<32x128xf32>
    %c0_79 = arith.constant 0 : index
    %c2_80 = arith.constant 2 : index
    %c0_81 = arith.constant 0 : index
    %c0_82 = arith.constant 0 : index
    %89 = vector.load %arg7[%c0_79, %c2_80, %c0_81, %c0_82] : memref<6x3x128x128xbf16, #tpu.memory_space<vmem>>, vector<1x1x128x128xbf16>
    %90 = vector.shape_cast %89 : vector<1x1x128x128xbf16> to vector<128x128xbf16>
    %cst_83 = arith.constant dense<0.000000e+00> : vector<32x128xf32>
    %91 = tpu.matmul %76, %90, %cst_83 {dimension_numbers = #tpu.dot_dimension_numbers<[1], [0], [0], [1], [0, 0, 1, 1], [], []>} : vector<32x128xbf16>, vector<128x128xbf16>, vector<32x128xf32> -> vector<32x128xf32>
    %c4_84 = arith.constant 4 : index
    %c0_85 = arith.constant 0 : index
    %c0_86 = arith.constant 0 : index
    %92 = vector.load %arg2[%c4_84, %c0_85, %c0_86] : memref<7x32x32xf32, #tpu.memory_space<vmem>>, vector<1x32x32xf32>
    %93 = vector.shape_cast %92 : vector<1x32x32xf32> to vector<32x32xf32>
    %cst_87 = arith.constant dense<0.000000e+00> : vector<32x128xf32>
    %94 = tpu.matmul %93, %91, %cst_87 {dimension_numbers = #tpu.dot_dimension_numbers<[1], [0], [0], [1], [0, 0, 1, 1], [], []>} : vector<32x32xf32>, vector<32x128xf32>, vector<32x128xf32> -> vector<32x128xf32>
    %95 = arith.addf %88, %94 : vector<32x128xf32>
    %96 = vector.broadcast %75 : vector<1x128xf32> to vector<32x128xf32>
    %97 = arith.addf %95, %96 : vector<32x128xf32>
    %c0_88 = arith.constant 0 : index
    %c0_89 = arith.constant 0 : index
    %c0_90 = arith.constant 0 : index
    %98 = vector.load %arg9[%c0_88, %c0_89, %c0_90] : memref<6x1x128xf32, #tpu.memory_space<vmem>>, vector<1x1x128xf32>
    %99 = vector.shape_cast %98 : vector<1x1x128xf32> to vector<1x128xf32>
    %c0_91 = arith.constant 0 : index
    %c0_92 = arith.constant 0 : index
    %c0_93 = arith.constant 0 : index
    %100 = vector.load %arg10[%c0_91, %c0_92, %c0_93] : memref<6x1x128xf32, #tpu.memory_space<vmem>>, vector<1x1x128xf32>
    %101 = vector.shape_cast %100 : vector<1x1x128xf32> to vector<1x128xf32>
    %cst_94 = arith.constant dense<0.000000e+00> : vector<128xf32>
    %102 = vector.multi_reduction <add>, %97, %cst_94 [0] : vector<32x128xf32> to vector<128xf32>
    %103 = vector.shape_cast %102 : vector<128xf32> to vector<1x128xf32>
    %cst_95 = arith.constant dense<0.000000e+00> : vector<1x128xf32>
    %104 = tpu.matmul %103, %0, %cst_95 {dimension_numbers = #tpu.dot_dimension_numbers<[1], [0], [0], [1], [0, 0, 1, 1], [], []>} : vector<1x128xf32>, vector<128x128xf32>, vector<1x128xf32> -> vector<1x128xf32>
    %105 = vector.broadcast %104 : vector<1x128xf32> to vector<32x128xf32>
    %106 = arith.subf %97, %105 : vector<32x128xf32>
    %107 = arith.mulf %106, %106 : vector<32x128xf32>
    %cst_96 = arith.constant dense<0.000000e+00> : vector<128xf32>
    %108 = vector.multi_reduction <add>, %107, %cst_96 [0] : vector<32x128xf32> to vector<128xf32>
    %109 = vector.shape_cast %108 : vector<128xf32> to vector<1x128xf32>
    %cst_97 = arith.constant dense<0.000000e+00> : vector<1x128xf32>
    %110 = tpu.matmul %109, %0, %cst_97 {dimension_numbers = #tpu.dot_dimension_numbers<[1], [0], [0], [1], [0, 0, 1, 1], [], []>} : vector<1x128xf32>, vector<128x128xf32>, vector<1x128xf32> -> vector<1x128xf32>
    %cst_98 = arith.constant 9.99999974E-6 : f32
    %111 = vector.broadcast %cst_98 : f32 to vector<1x128xf32>
    %112 = arith.addf %110, %111 : vector<1x128xf32>
    %113 = math.rsqrt %112 : vector<1x128xf32>
    %114 = arith.mulf %113, %99 : vector<1x128xf32>
    %115 = vector.broadcast %114 : vector<1x128xf32> to vector<32x128xf32>
    %116 = arith.mulf %106, %115 : vector<32x128xf32>
    %117 = vector.broadcast %101 : vector<1x128xf32> to vector<32x128xf32>
    %118 = arith.addf %116, %117 : vector<32x128xf32>
    %cst_99 = arith.constant 0.000000e+00 : f32
    %119 = vector.broadcast %cst_99 : f32 to vector<32x128xf32>
    %120 = arith.maximumf %118, %119 : vector<32x128xf32>
    %c1_100 = arith.constant 1 : index
    %c0_101 = arith.constant 0 : index
    %c0_102 = arith.constant 0 : index
    %121 = vector.load %arg8[%c1_100, %c0_101, %c0_102] : memref<6x1x128xf32, #tpu.memory_space<vmem>>, vector<1x1x128xf32>
    %122 = vector.shape_cast %121 : vector<1x1x128xf32> to vector<1x128xf32>
    %123 = arith.truncf %120 : vector<32x128xf32> to vector<32x128xbf16>
    %cst_103 = arith.constant 0.000000e+00 : f32
    %124 = vector.broadcast %cst_103 : f32 to vector<32x128xf32>
    %c1_104 = arith.constant 1 : index
    %c0_105 = arith.constant 0 : index
    %c0_106 = arith.constant 0 : index
    %c0_107 = arith.constant 0 : index
    %125 = vector.load %arg7[%c1_104, %c0_105, %c0_106, %c0_107] : memref<6x3x128x128xbf16, #tpu.memory_space<vmem>>, vector<1x1x128x128xbf16>
    %126 = vector.shape_cast %125 : vector<1x1x128x128xbf16> to vector<128x128xbf16>
    %cst_108 = arith.constant dense<0.000000e+00> : vector<32x128xf32>
    %127 = tpu.matmul %123, %126, %cst_108 {dimension_numbers = #tpu.dot_dimension_numbers<[1], [0], [0], [1], [0, 0, 1, 1], [], []>} : vector<32x128xbf16>, vector<128x128xbf16>, vector<32x128xf32> -> vector<32x128xf32>
    %c2_109 = arith.constant 2 : index
    %c0_110 = arith.constant 0 : index
    %c0_111 = arith.constant 0 : index
    %128 = vector.load %arg2[%c2_109, %c0_110, %c0_111] : memref<7x32x32xf32, #tpu.memory_space<vmem>>, vector<1x32x32xf32>
    %129 = vector.shape_cast %128 : vector<1x32x32xf32> to vector<32x32xf32>
    %cst_112 = arith.constant dense<0.000000e+00> : vector<32x128xf32>
    %130 = tpu.matmul %129, %127, %cst_112 {dimension_numbers = #tpu.dot_dimension_numbers<[1], [0], [0], [1], [0, 0, 1, 1], [], []>} : vector<32x32xf32>, vector<32x128xf32>, vector<32x128xf32> -> vector<32x128xf32>
    %131 = arith.addf %124, %130 : vector<32x128xf32>
    %c1_113 = arith.constant 1 : index
    %c1_114 = arith.constant 1 : index
    %c0_115 = arith.constant 0 : index
    %c0_116 = arith.constant 0 : index
    %132 = vector.load %arg7[%c1_113, %c1_114, %c0_115, %c0_116] : memref<6x3x128x128xbf16, #tpu.memory_space<vmem>>, vector<1x1x128x128xbf16>
    %133 = vector.shape_cast %132 : vector<1x1x128x128xbf16> to vector<128x128xbf16>
    %cst_117 = arith.constant dense<0.000000e+00> : vector<32x128xf32>
    %134 = tpu.matmul %123, %133, %cst_117 {dimension_numbers = #tpu.dot_dimension_numbers<[1], [0], [0], [1], [0, 0, 1, 1], [], []>} : vector<32x128xbf16>, vector<128x128xbf16>, vector<32x128xf32> -> vector<32x128xf32>
    %135 = arith.addf %131, %134 : vector<32x128xf32>
    %c1_118 = arith.constant 1 : index
    %c2_119 = arith.constant 2 : index
    %c0_120 = arith.constant 0 : index
    %c0_121 = arith.constant 0 : index
    %136 = vector.load %arg7[%c1_118, %c2_119, %c0_120, %c0_121] : memref<6x3x128x128xbf16, #tpu.memory_space<vmem>>, vector<1x1x128x128xbf16>
    %137 = vector.shape_cast %136 : vector<1x1x128x128xbf16> to vector<128x128xbf16>
    %cst_122 = arith.constant dense<0.000000e+00> : vector<32x128xf32>
    %138 = tpu.matmul %123, %137, %cst_122 {dimension_numbers = #tpu.dot_dimension_numbers<[1], [0], [0], [1], [0, 0, 1, 1], [], []>} : vector<32x128xbf16>, vector<128x128xbf16>, vector<32x128xf32> -> vector<32x128xf32>
    %c4_123 = arith.constant 4 : index
    %c0_124 = arith.constant 0 : index
    %c0_125 = arith.constant 0 : index
    %139 = vector.load %arg2[%c4_123, %c0_124, %c0_125] : memref<7x32x32xf32, #tpu.memory_space<vmem>>, vector<1x32x32xf32>
    %140 = vector.shape_cast %139 : vector<1x32x32xf32> to vector<32x32xf32>
    %cst_126 = arith.constant dense<0.000000e+00> : vector<32x128xf32>
    %141 = tpu.matmul %140, %138, %cst_126 {dimension_numbers = #tpu.dot_dimension_numbers<[1], [0], [0], [1], [0, 0, 1, 1], [], []>} : vector<32x32xf32>, vector<32x128xf32>, vector<32x128xf32> -> vector<32x128xf32>
    %142 = arith.addf %135, %141 : vector<32x128xf32>
    %143 = vector.broadcast %122 : vector<1x128xf32> to vector<32x128xf32>
    %144 = arith.addf %142, %143 : vector<32x128xf32>
    %c1_127 = arith.constant 1 : index
    %c0_128 = arith.constant 0 : index
    %c0_129 = arith.constant 0 : index
    %145 = vector.load %arg9[%c1_127, %c0_128, %c0_129] : memref<6x1x128xf32, #tpu.memory_space<vmem>>, vector<1x1x128xf32>
    %146 = vector.shape_cast %145 : vector<1x1x128xf32> to vector<1x128xf32>
    %c1_130 = arith.constant 1 : index
    %c0_131 = arith.constant 0 : index
    %c0_132 = arith.constant 0 : index
    %147 = vector.load %arg10[%c1_130, %c0_131, %c0_132] : memref<6x1x128xf32, #tpu.memory_space<vmem>>, vector<1x1x128xf32>
    %148 = vector.shape_cast %147 : vector<1x1x128xf32> to vector<1x128xf32>
    %cst_133 = arith.constant dense<0.000000e+00> : vector<128xf32>
    %149 = vector.multi_reduction <add>, %144, %cst_133 [0] : vector<32x128xf32> to vector<128xf32>
    %150 = vector.shape_cast %149 : vector<128xf32> to vector<1x128xf32>
    %cst_134 = arith.constant dense<0.000000e+00> : vector<1x128xf32>
    %151 = tpu.matmul %150, %0, %cst_134 {dimension_numbers = #tpu.dot_dimension_numbers<[1], [0], [0], [1], [0, 0, 1, 1], [], []>} : vector<1x128xf32>, vector<128x128xf32>, vector<1x128xf32> -> vector<1x128xf32>
    %152 = vector.broadcast %151 : vector<1x128xf32> to vector<32x128xf32>
    %153 = arith.subf %144, %152 : vector<32x128xf32>
    %154 = arith.mulf %153, %153 : vector<32x128xf32>
    %cst_135 = arith.constant dense<0.000000e+00> : vector<128xf32>
    %155 = vector.multi_reduction <add>, %154, %cst_135 [0] : vector<32x128xf32> to vector<128xf32>
    %156 = vector.shape_cast %155 : vector<128xf32> to vector<1x128xf32>
    %cst_136 = arith.constant dense<0.000000e+00> : vector<1x128xf32>
    %157 = tpu.matmul %156, %0, %cst_136 {dimension_numbers = #tpu.dot_dimension_numbers<[1], [0], [0], [1], [0, 0, 1, 1], [], []>} : vector<1x128xf32>, vector<128x128xf32>, vector<1x128xf32> -> vector<1x128xf32>
    %cst_137 = arith.constant 9.99999974E-6 : f32
    %158 = vector.broadcast %cst_137 : f32 to vector<1x128xf32>
    %159 = arith.addf %157, %158 : vector<1x128xf32>
    %160 = math.rsqrt %159 : vector<1x128xf32>
    %161 = arith.mulf %160, %146 : vector<1x128xf32>
    %162 = vector.broadcast %161 : vector<1x128xf32> to vector<32x128xf32>
    %163 = arith.mulf %153, %162 : vector<32x128xf32>
    %164 = vector.broadcast %148 : vector<1x128xf32> to vector<32x128xf32>
    %165 = arith.addf %163, %164 : vector<32x128xf32>
    %cst_138 = arith.constant 0.000000e+00 : f32
    %166 = vector.broadcast %cst_138 : f32 to vector<32x128xf32>
    %167 = arith.maximumf %165, %166 : vector<32x128xf32>
    %c2_139 = arith.constant 2 : index
    %c0_140 = arith.constant 0 : index
    %c0_141 = arith.constant 0 : index
    %168 = vector.load %arg8[%c2_139, %c0_140, %c0_141] : memref<6x1x128xf32, #tpu.memory_space<vmem>>, vector<1x1x128xf32>
    %169 = vector.shape_cast %168 : vector<1x1x128xf32> to vector<1x128xf32>
    %170 = arith.truncf %167 : vector<32x128xf32> to vector<32x128xbf16>
    %cst_142 = arith.constant 0.000000e+00 : f32
    %171 = vector.broadcast %cst_142 : f32 to vector<32x128xf32>
    %c2_143 = arith.constant 2 : index
    %c0_144 = arith.constant 0 : index
    %c0_145 = arith.constant 0 : index
    %c0_146 = arith.constant 0 : index
    %172 = vector.load %arg7[%c2_143, %c0_144, %c0_145, %c0_146] : memref<6x3x128x128xbf16, #tpu.memory_space<vmem>>, vector<1x1x128x128xbf16>
    %173 = vector.shape_cast %172 : vector<1x1x128x128xbf16> to vector<128x128xbf16>
    %cst_147 = arith.constant dense<0.000000e+00> : vector<32x128xf32>
    %174 = tpu.matmul %170, %173, %cst_147 {dimension_numbers = #tpu.dot_dimension_numbers<[1], [0], [0], [1], [0, 0, 1, 1], [], []>} : vector<32x128xbf16>, vector<128x128xbf16>, vector<32x128xf32> -> vector<32x128xf32>
    %c2_148 = arith.constant 2 : index
    %c0_149 = arith.constant 0 : index
    %c0_150 = arith.constant 0 : index
    %175 = vector.load %arg2[%c2_148, %c0_149, %c0_150] : memref<7x32x32xf32, #tpu.memory_space<vmem>>, vector<1x32x32xf32>
    %176 = vector.shape_cast %175 : vector<1x32x32xf32> to vector<32x32xf32>
    %cst_151 = arith.constant dense<0.000000e+00> : vector<32x128xf32>
    %177 = tpu.matmul %176, %174, %cst_151 {dimension_numbers = #tpu.dot_dimension_numbers<[1], [0], [0], [1], [0, 0, 1, 1], [], []>} : vector<32x32xf32>, vector<32x128xf32>, vector<32x128xf32> -> vector<32x128xf32>
    %178 = arith.addf %171, %177 : vector<32x128xf32>
    %c2_152 = arith.constant 2 : index
    %c1_153 = arith.constant 1 : index
    %c0_154 = arith.constant 0 : index
    %c0_155 = arith.constant 0 : index
    %179 = vector.load %arg7[%c2_152, %c1_153, %c0_154, %c0_155] : memref<6x3x128x128xbf16, #tpu.memory_space<vmem>>, vector<1x1x128x128xbf16>
    %180 = vector.shape_cast %179 : vector<1x1x128x128xbf16> to vector<128x128xbf16>
    %cst_156 = arith.constant dense<0.000000e+00> : vector<32x128xf32>
    %181 = tpu.matmul %170, %180, %cst_156 {dimension_numbers = #tpu.dot_dimension_numbers<[1], [0], [0], [1], [0, 0, 1, 1], [], []>} : vector<32x128xbf16>, vector<128x128xbf16>, vector<32x128xf32> -> vector<32x128xf32>
    %182 = arith.addf %178, %181 : vector<32x128xf32>
    %c2_157 = arith.constant 2 : index
    %c2_158 = arith.constant 2 : index
    %c0_159 = arith.constant 0 : index
    %c0_160 = arith.constant 0 : index
    %183 = vector.load %arg7[%c2_157, %c2_158, %c0_159, %c0_160] : memref<6x3x128x128xbf16, #tpu.memory_space<vmem>>, vector<1x1x128x128xbf16>
    %184 = vector.shape_cast %183 : vector<1x1x128x128xbf16> to vector<128x128xbf16>
    %cst_161 = arith.constant dense<0.000000e+00> : vector<32x128xf32>
    %185 = tpu.matmul %170, %184, %cst_161 {dimension_numbers = #tpu.dot_dimension_numbers<[1], [0], [0], [1], [0, 0, 1, 1], [], []>} : vector<32x128xbf16>, vector<128x128xbf16>, vector<32x128xf32> -> vector<32x128xf32>
    %c4_162 = arith.constant 4 : index
    %c0_163 = arith.constant 0 : index
    %c0_164 = arith.constant 0 : index
    %186 = vector.load %arg2[%c4_162, %c0_163, %c0_164] : memref<7x32x32xf32, #tpu.memory_space<vmem>>, vector<1x32x32xf32>
    %187 = vector.shape_cast %186 : vector<1x32x32xf32> to vector<32x32xf32>
    %cst_165 = arith.constant dense<0.000000e+00> : vector<32x128xf32>
    %188 = tpu.matmul %187, %185, %cst_165 {dimension_numbers = #tpu.dot_dimension_numbers<[1], [0], [0], [1], [0, 0, 1, 1], [], []>} : vector<32x32xf32>, vector<32x128xf32>, vector<32x128xf32> -> vector<32x128xf32>
    %189 = arith.addf %182, %188 : vector<32x128xf32>
    %190 = vector.broadcast %169 : vector<1x128xf32> to vector<32x128xf32>
    %191 = arith.addf %189, %190 : vector<32x128xf32>
    %c2_166 = arith.constant 2 : index
    %c0_167 = arith.constant 0 : index
    %c0_168 = arith.constant 0 : index
    %192 = vector.load %arg9[%c2_166, %c0_167, %c0_168] : memref<6x1x128xf32, #tpu.memory_space<vmem>>, vector<1x1x128xf32>
    %193 = vector.shape_cast %192 : vector<1x1x128xf32> to vector<1x128xf32>
    %c2_169 = arith.constant 2 : index
    %c0_170 = arith.constant 0 : index
    %c0_171 = arith.constant 0 : index
    %194 = vector.load %arg10[%c2_169, %c0_170, %c0_171] : memref<6x1x128xf32, #tpu.memory_space<vmem>>, vector<1x1x128xf32>
    %195 = vector.shape_cast %194 : vector<1x1x128xf32> to vector<1x128xf32>
    %cst_172 = arith.constant dense<0.000000e+00> : vector<128xf32>
    %196 = vector.multi_reduction <add>, %191, %cst_172 [0] : vector<32x128xf32> to vector<128xf32>
    %197 = vector.shape_cast %196 : vector<128xf32> to vector<1x128xf32>
    %cst_173 = arith.constant dense<0.000000e+00> : vector<1x128xf32>
    %198 = tpu.matmul %197, %0, %cst_173 {dimension_numbers = #tpu.dot_dimension_numbers<[1], [0], [0], [1], [0, 0, 1, 1], [], []>} : vector<1x128xf32>, vector<128x128xf32>, vector<1x128xf32> -> vector<1x128xf32>
    %199 = vector.broadcast %198 : vector<1x128xf32> to vector<32x128xf32>
    %200 = arith.subf %191, %199 : vector<32x128xf32>
    %201 = arith.mulf %200, %200 : vector<32x128xf32>
    %cst_174 = arith.constant dense<0.000000e+00> : vector<128xf32>
    %202 = vector.multi_reduction <add>, %201, %cst_174 [0] : vector<32x128xf32> to vector<128xf32>
    %203 = vector.shape_cast %202 : vector<128xf32> to vector<1x128xf32>
    %cst_175 = arith.constant dense<0.000000e+00> : vector<1x128xf32>
    %204 = tpu.matmul %203, %0, %cst_175 {dimension_numbers = #tpu.dot_dimension_numbers<[1], [0], [0], [1], [0, 0, 1, 1], [], []>} : vector<1x128xf32>, vector<128x128xf32>, vector<1x128xf32> -> vector<1x128xf32>
    %cst_176 = arith.constant 9.99999974E-6 : f32
    %205 = vector.broadcast %cst_176 : f32 to vector<1x128xf32>
    %206 = arith.addf %204, %205 : vector<1x128xf32>
    %207 = math.rsqrt %206 : vector<1x128xf32>
    %208 = arith.mulf %207, %193 : vector<1x128xf32>
    %209 = vector.broadcast %208 : vector<1x128xf32> to vector<32x128xf32>
    %210 = arith.mulf %200, %209 : vector<32x128xf32>
    %211 = vector.broadcast %195 : vector<1x128xf32> to vector<32x128xf32>
    %212 = arith.addf %210, %211 : vector<32x128xf32>
    %cst_177 = arith.constant 0.000000e+00 : f32
    %213 = vector.broadcast %cst_177 : f32 to vector<32x128xf32>
    %214 = arith.maximumf %212, %213 : vector<32x128xf32>
    %c3_178 = arith.constant 3 : index
    %c0_179 = arith.constant 0 : index
    %c0_180 = arith.constant 0 : index
    %215 = vector.load %arg8[%c3_178, %c0_179, %c0_180] : memref<6x1x128xf32, #tpu.memory_space<vmem>>, vector<1x1x128xf32>
    %216 = vector.shape_cast %215 : vector<1x1x128xf32> to vector<1x128xf32>
    %217 = arith.truncf %214 : vector<32x128xf32> to vector<32x128xbf16>
    %cst_181 = arith.constant 0.000000e+00 : f32
    %218 = vector.broadcast %cst_181 : f32 to vector<32x128xf32>
    %c3_182 = arith.constant 3 : index
    %c0_183 = arith.constant 0 : index
    %c0_184 = arith.constant 0 : index
    %c0_185 = arith.constant 0 : index
    %219 = vector.load %arg7[%c3_182, %c0_183, %c0_184, %c0_185] : memref<6x3x128x128xbf16, #tpu.memory_space<vmem>>, vector<1x1x128x128xbf16>
    %220 = vector.shape_cast %219 : vector<1x1x128x128xbf16> to vector<128x128xbf16>
    %cst_186 = arith.constant dense<0.000000e+00> : vector<32x128xf32>
    %221 = tpu.matmul %217, %220, %cst_186 {dimension_numbers = #tpu.dot_dimension_numbers<[1], [0], [0], [1], [0, 0, 1, 1], [], []>} : vector<32x128xbf16>, vector<128x128xbf16>, vector<32x128xf32> -> vector<32x128xf32>
    %c2_187 = arith.constant 2 : index
    %c0_188 = arith.constant 0 : index
    %c0_189 = arith.constant 0 : index
    %222 = vector.load %arg2[%c2_187, %c0_188, %c0_189] : memref<7x32x32xf32, #tpu.memory_space<vmem>>, vector<1x32x32xf32>
    %223 = vector.shape_cast %222 : vector<1x32x32xf32> to vector<32x32xf32>
    %cst_190 = arith.constant dense<0.000000e+00> : vector<32x128xf32>
    %224 = tpu.matmul %223, %221, %cst_190 {dimension_numbers = #tpu.dot_dimension_numbers<[1], [0], [0], [1], [0, 0, 1, 1], [], []>} : vector<32x32xf32>, vector<32x128xf32>, vector<32x128xf32> -> vector<32x128xf32>
    %225 = arith.addf %218, %224 : vector<32x128xf32>
    %c3_191 = arith.constant 3 : index
    %c1_192 = arith.constant 1 : index
    %c0_193 = arith.constant 0 : index
    %c0_194 = arith.constant 0 : index
    %226 = vector.load %arg7[%c3_191, %c1_192, %c0_193, %c0_194] : memref<6x3x128x128xbf16, #tpu.memory_space<vmem>>, vector<1x1x128x128xbf16>
    %227 = vector.shape_cast %226 : vector<1x1x128x128xbf16> to vector<128x128xbf16>
    %cst_195 = arith.constant dense<0.000000e+00> : vector<32x128xf32>
    %228 = tpu.matmul %217, %227, %cst_195 {dimension_numbers = #tpu.dot_dimension_numbers<[1], [0], [0], [1], [0, 0, 1, 1], [], []>} : vector<32x128xbf16>, vector<128x128xbf16>, vector<32x128xf32> -> vector<32x128xf32>
    %229 = arith.addf %225, %228 : vector<32x128xf32>
    %c3_196 = arith.constant 3 : index
    %c2_197 = arith.constant 2 : index
    %c0_198 = arith.constant 0 : index
    %c0_199 = arith.constant 0 : index
    %230 = vector.load %arg7[%c3_196, %c2_197, %c0_198, %c0_199] : memref<6x3x128x128xbf16, #tpu.memory_space<vmem>>, vector<1x1x128x128xbf16>
    %231 = vector.shape_cast %230 : vector<1x1x128x128xbf16> to vector<128x128xbf16>
    %cst_200 = arith.constant dense<0.000000e+00> : vector<32x128xf32>
    %232 = tpu.matmul %217, %231, %cst_200 {dimension_numbers = #tpu.dot_dimension_numbers<[1], [0], [0], [1], [0, 0, 1, 1], [], []>} : vector<32x128xbf16>, vector<128x128xbf16>, vector<32x128xf32> -> vector<32x128xf32>
    %c4_201 = arith.constant 4 : index
    %c0_202 = arith.constant 0 : index
    %c0_203 = arith.constant 0 : index
    %233 = vector.load %arg2[%c4_201, %c0_202, %c0_203] : memref<7x32x32xf32, #tpu.memory_space<vmem>>, vector<1x32x32xf32>
    %234 = vector.shape_cast %233 : vector<1x32x32xf32> to vector<32x32xf32>
    %cst_204 = arith.constant dense<0.000000e+00> : vector<32x128xf32>
    %235 = tpu.matmul %234, %232, %cst_204 {dimension_numbers = #tpu.dot_dimension_numbers<[1], [0], [0], [1], [0, 0, 1, 1], [], []>} : vector<32x32xf32>, vector<32x128xf32>, vector<32x128xf32> -> vector<32x128xf32>
    %236 = arith.addf %229, %235 : vector<32x128xf32>
    %237 = vector.broadcast %216 : vector<1x128xf32> to vector<32x128xf32>
    %238 = arith.addf %236, %237 : vector<32x128xf32>
    %c3_205 = arith.constant 3 : index
    %c0_206 = arith.constant 0 : index
    %c0_207 = arith.constant 0 : index
    %239 = vector.load %arg9[%c3_205, %c0_206, %c0_207] : memref<6x1x128xf32, #tpu.memory_space<vmem>>, vector<1x1x128xf32>
    %240 = vector.shape_cast %239 : vector<1x1x128xf32> to vector<1x128xf32>
    %c3_208 = arith.constant 3 : index
    %c0_209 = arith.constant 0 : index
    %c0_210 = arith.constant 0 : index
    %241 = vector.load %arg10[%c3_208, %c0_209, %c0_210] : memref<6x1x128xf32, #tpu.memory_space<vmem>>, vector<1x1x128xf32>
    %242 = vector.shape_cast %241 : vector<1x1x128xf32> to vector<1x128xf32>
    %cst_211 = arith.constant dense<0.000000e+00> : vector<128xf32>
    %243 = vector.multi_reduction <add>, %238, %cst_211 [0] : vector<32x128xf32> to vector<128xf32>
    %244 = vector.shape_cast %243 : vector<128xf32> to vector<1x128xf32>
    %cst_212 = arith.constant dense<0.000000e+00> : vector<1x128xf32>
    %245 = tpu.matmul %244, %0, %cst_212 {dimension_numbers = #tpu.dot_dimension_numbers<[1], [0], [0], [1], [0, 0, 1, 1], [], []>} : vector<1x128xf32>, vector<128x128xf32>, vector<1x128xf32> -> vector<1x128xf32>
    %246 = vector.broadcast %245 : vector<1x128xf32> to vector<32x128xf32>
    %247 = arith.subf %238, %246 : vector<32x128xf32>
    %248 = arith.mulf %247, %247 : vector<32x128xf32>
    %cst_213 = arith.constant dense<0.000000e+00> : vector<128xf32>
    %249 = vector.multi_reduction <add>, %248, %cst_213 [0] : vector<32x128xf32> to vector<128xf32>
    %250 = vector.shape_cast %249 : vector<128xf32> to vector<1x128xf32>
    %cst_214 = arith.constant dense<0.000000e+00> : vector<1x128xf32>
    %251 = tpu.matmul %250, %0, %cst_214 {dimension_numbers = #tpu.dot_dimension_numbers<[1], [0], [0], [1], [0, 0, 1, 1], [], []>} : vector<1x128xf32>, vector<128x128xf32>, vector<1x128xf32> -> vector<1x128xf32>
    %cst_215 = arith.constant 9.99999974E-6 : f32
    %252 = vector.broadcast %cst_215 : f32 to vector<1x128xf32>
    %253 = arith.addf %251, %252 : vector<1x128xf32>
    %254 = math.rsqrt %253 : vector<1x128xf32>
    %255 = arith.mulf %254, %240 : vector<1x128xf32>
    %256 = vector.broadcast %255 : vector<1x128xf32> to vector<32x128xf32>
    %257 = arith.mulf %247, %256 : vector<32x128xf32>
    %258 = vector.broadcast %242 : vector<1x128xf32> to vector<32x128xf32>
    %259 = arith.addf %257, %258 : vector<32x128xf32>
    %cst_216 = arith.constant 0.000000e+00 : f32
    %260 = vector.broadcast %cst_216 : f32 to vector<32x128xf32>
    %261 = arith.maximumf %259, %260 : vector<32x128xf32>
    %c4_217 = arith.constant 4 : index
    %c0_218 = arith.constant 0 : index
    %c0_219 = arith.constant 0 : index
    %262 = vector.load %arg8[%c4_217, %c0_218, %c0_219] : memref<6x1x128xf32, #tpu.memory_space<vmem>>, vector<1x1x128xf32>
    %263 = vector.shape_cast %262 : vector<1x1x128xf32> to vector<1x128xf32>
    %264 = arith.truncf %261 : vector<32x128xf32> to vector<32x128xbf16>
    %cst_220 = arith.constant 0.000000e+00 : f32
    %265 = vector.broadcast %cst_220 : f32 to vector<32x128xf32>
    %c4_221 = arith.constant 4 : index
    %c0_222 = arith.constant 0 : index
    %c0_223 = arith.constant 0 : index
    %c0_224 = arith.constant 0 : index
    %266 = vector.load %arg7[%c4_221, %c0_222, %c0_223, %c0_224] : memref<6x3x128x128xbf16, #tpu.memory_space<vmem>>, vector<1x1x128x128xbf16>
    %267 = vector.shape_cast %266 : vector<1x1x128x128xbf16> to vector<128x128xbf16>
    %cst_225 = arith.constant dense<0.000000e+00> : vector<32x128xf32>
    %268 = tpu.matmul %264, %267, %cst_225 {dimension_numbers = #tpu.dot_dimension_numbers<[1], [0], [0], [1], [0, 0, 1, 1], [], []>} : vector<32x128xbf16>, vector<128x128xbf16>, vector<32x128xf32> -> vector<32x128xf32>
    %c2_226 = arith.constant 2 : index
    %c0_227 = arith.constant 0 : index
    %c0_228 = arith.constant 0 : index
    %269 = vector.load %arg2[%c2_226, %c0_227, %c0_228] : memref<7x32x32xf32, #tpu.memory_space<vmem>>, vector<1x32x32xf32>
    %270 = vector.shape_cast %269 : vector<1x32x32xf32> to vector<32x32xf32>
    %cst_229 = arith.constant dense<0.000000e+00> : vector<32x128xf32>
    %271 = tpu.matmul %270, %268, %cst_229 {dimension_numbers = #tpu.dot_dimension_numbers<[1], [0], [0], [1], [0, 0, 1, 1], [], []>} : vector<32x32xf32>, vector<32x128xf32>, vector<32x128xf32> -> vector<32x128xf32>
    %272 = arith.addf %265, %271 : vector<32x128xf32>
    %c4_230 = arith.constant 4 : index
    %c1_231 = arith.constant 1 : index
    %c0_232 = arith.constant 0 : index
    %c0_233 = arith.constant 0 : index
    %273 = vector.load %arg7[%c4_230, %c1_231, %c0_232, %c0_233] : memref<6x3x128x128xbf16, #tpu.memory_space<vmem>>, vector<1x1x128x128xbf16>
    %274 = vector.shape_cast %273 : vector<1x1x128x128xbf16> to vector<128x128xbf16>
    %cst_234 = arith.constant dense<0.000000e+00> : vector<32x128xf32>
    %275 = tpu.matmul %264, %274, %cst_234 {dimension_numbers = #tpu.dot_dimension_numbers<[1], [0], [0], [1], [0, 0, 1, 1], [], []>} : vector<32x128xbf16>, vector<128x128xbf16>, vector<32x128xf32> -> vector<32x128xf32>
    %276 = arith.addf %272, %275 : vector<32x128xf32>
    %c4_235 = arith.constant 4 : index
    %c2_236 = arith.constant 2 : index
    %c0_237 = arith.constant 0 : index
    %c0_238 = arith.constant 0 : index
    %277 = vector.load %arg7[%c4_235, %c2_236, %c0_237, %c0_238] : memref<6x3x128x128xbf16, #tpu.memory_space<vmem>>, vector<1x1x128x128xbf16>
    %278 = vector.shape_cast %277 : vector<1x1x128x128xbf16> to vector<128x128xbf16>
    %cst_239 = arith.constant dense<0.000000e+00> : vector<32x128xf32>
    %279 = tpu.matmul %264, %278, %cst_239 {dimension_numbers = #tpu.dot_dimension_numbers<[1], [0], [0], [1], [0, 0, 1, 1], [], []>} : vector<32x128xbf16>, vector<128x128xbf16>, vector<32x128xf32> -> vector<32x128xf32>
    %c4_240 = arith.constant 4 : index
    %c0_241 = arith.constant 0 : index
    %c0_242 = arith.constant 0 : index
    %280 = vector.load %arg2[%c4_240, %c0_241, %c0_242] : memref<7x32x32xf32, #tpu.memory_space<vmem>>, vector<1x32x32xf32>
    %281 = vector.shape_cast %280 : vector<1x32x32xf32> to vector<32x32xf32>
    %cst_243 = arith.constant dense<0.000000e+00> : vector<32x128xf32>
    %282 = tpu.matmul %281, %279, %cst_243 {dimension_numbers = #tpu.dot_dimension_numbers<[1], [0], [0], [1], [0, 0, 1, 1], [], []>} : vector<32x32xf32>, vector<32x128xf32>, vector<32x128xf32> -> vector<32x128xf32>
    %283 = arith.addf %276, %282 : vector<32x128xf32>
    %284 = vector.broadcast %263 : vector<1x128xf32> to vector<32x128xf32>
    %285 = arith.addf %283, %284 : vector<32x128xf32>
    %c4_244 = arith.constant 4 : index
    %c0_245 = arith.constant 0 : index
    %c0_246 = arith.constant 0 : index
    %286 = vector.load %arg9[%c4_244, %c0_245, %c0_246] : memref<6x1x128xf32, #tpu.memory_space<vmem>>, vector<1x1x128xf32>
    %287 = vector.shape_cast %286 : vector<1x1x128xf32> to vector<1x128xf32>
    %c4_247 = arith.constant 4 : index
    %c0_248 = arith.constant 0 : index
    %c0_249 = arith.constant 0 : index
    %288 = vector.load %arg10[%c4_247, %c0_248, %c0_249] : memref<6x1x128xf32, #tpu.memory_space<vmem>>, vector<1x1x128xf32>
    %289 = vector.shape_cast %288 : vector<1x1x128xf32> to vector<1x128xf32>
    %cst_250 = arith.constant dense<0.000000e+00> : vector<128xf32>
    %290 = vector.multi_reduction <add>, %285, %cst_250 [0] : vector<32x128xf32> to vector<128xf32>
    %291 = vector.shape_cast %290 : vector<128xf32> to vector<1x128xf32>
    %cst_251 = arith.constant dense<0.000000e+00> : vector<1x128xf32>
    %292 = tpu.matmul %291, %0, %cst_251 {dimension_numbers = #tpu.dot_dimension_numbers<[1], [0], [0], [1], [0, 0, 1, 1], [], []>} : vector<1x128xf32>, vector<128x128xf32>, vector<1x128xf32> -> vector<1x128xf32>
    %293 = vector.broadcast %292 : vector<1x128xf32> to vector<32x128xf32>
    %294 = arith.subf %285, %293 : vector<32x128xf32>
    %295 = arith.mulf %294, %294 : vector<32x128xf32>
    %cst_252 = arith.constant dense<0.000000e+00> : vector<128xf32>
    %296 = vector.multi_reduction <add>, %295, %cst_252 [0] : vector<32x128xf32> to vector<128xf32>
    %297 = vector.shape_cast %296 : vector<128xf32> to vector<1x128xf32>
    %cst_253 = arith.constant dense<0.000000e+00> : vector<1x128xf32>
    %298 = tpu.matmul %297, %0, %cst_253 {dimension_numbers = #tpu.dot_dimension_numbers<[1], [0], [0], [1], [0, 0, 1, 1], [], []>} : vector<1x128xf32>, vector<128x128xf32>, vector<1x128xf32> -> vector<1x128xf32>
    %cst_254 = arith.constant 9.99999974E-6 : f32
    %299 = vector.broadcast %cst_254 : f32 to vector<1x128xf32>
    %300 = arith.addf %298, %299 : vector<1x128xf32>
    %301 = math.rsqrt %300 : vector<1x128xf32>
    %302 = arith.mulf %301, %287 : vector<1x128xf32>
    %303 = vector.broadcast %302 : vector<1x128xf32> to vector<32x128xf32>
    %304 = arith.mulf %294, %303 : vector<32x128xf32>
    %305 = vector.broadcast %289 : vector<1x128xf32> to vector<32x128xf32>
    %306 = arith.addf %304, %305 : vector<32x128xf32>
    %cst_255 = arith.constant 0.000000e+00 : f32
    %307 = vector.broadcast %cst_255 : f32 to vector<32x128xf32>
    %308 = arith.maximumf %306, %307 : vector<32x128xf32>
    %c5_256 = arith.constant 5 : index
    %c0_257 = arith.constant 0 : index
    %c0_258 = arith.constant 0 : index
    %309 = vector.load %arg8[%c5_256, %c0_257, %c0_258] : memref<6x1x128xf32, #tpu.memory_space<vmem>>, vector<1x1x128xf32>
    %310 = vector.shape_cast %309 : vector<1x1x128xf32> to vector<1x128xf32>
    %311 = arith.truncf %308 : vector<32x128xf32> to vector<32x128xbf16>
    %cst_259 = arith.constant 0.000000e+00 : f32
    %312 = vector.broadcast %cst_259 : f32 to vector<32x128xf32>
    %c5_260 = arith.constant 5 : index
    %c0_261 = arith.constant 0 : index
    %c0_262 = arith.constant 0 : index
    %c0_263 = arith.constant 0 : index
    %313 = vector.load %arg7[%c5_260, %c0_261, %c0_262, %c0_263] : memref<6x3x128x128xbf16, #tpu.memory_space<vmem>>, vector<1x1x128x128xbf16>
    %314 = vector.shape_cast %313 : vector<1x1x128x128xbf16> to vector<128x128xbf16>
    %cst_264 = arith.constant dense<0.000000e+00> : vector<32x128xf32>
    %315 = tpu.matmul %311, %314, %cst_264 {dimension_numbers = #tpu.dot_dimension_numbers<[1], [0], [0], [1], [0, 0, 1, 1], [], []>} : vector<32x128xbf16>, vector<128x128xbf16>, vector<32x128xf32> -> vector<32x128xf32>
    %c2_265 = arith.constant 2 : index
    %c0_266 = arith.constant 0 : index
    %c0_267 = arith.constant 0 : index
    %316 = vector.load %arg2[%c2_265, %c0_266, %c0_267] : memref<7x32x32xf32, #tpu.memory_space<vmem>>, vector<1x32x32xf32>
    %317 = vector.shape_cast %316 : vector<1x32x32xf32> to vector<32x32xf32>
    %cst_268 = arith.constant dense<0.000000e+00> : vector<32x128xf32>
    %318 = tpu.matmul %317, %315, %cst_268 {dimension_numbers = #tpu.dot_dimension_numbers<[1], [0], [0], [1], [0, 0, 1, 1], [], []>} : vector<32x32xf32>, vector<32x128xf32>, vector<32x128xf32> -> vector<32x128xf32>
    %319 = arith.addf %312, %318 : vector<32x128xf32>
    %c5_269 = arith.constant 5 : index
    %c1_270 = arith.constant 1 : index
    %c0_271 = arith.constant 0 : index
    %c0_272 = arith.constant 0 : index
    %320 = vector.load %arg7[%c5_269, %c1_270, %c0_271, %c0_272] : memref<6x3x128x128xbf16, #tpu.memory_space<vmem>>, vector<1x1x128x128xbf16>
    %321 = vector.shape_cast %320 : vector<1x1x128x128xbf16> to vector<128x128xbf16>
    %cst_273 = arith.constant dense<0.000000e+00> : vector<32x128xf32>
    %322 = tpu.matmul %311, %321, %cst_273 {dimension_numbers = #tpu.dot_dimension_numbers<[1], [0], [0], [1], [0, 0, 1, 1], [], []>} : vector<32x128xbf16>, vector<128x128xbf16>, vector<32x128xf32> -> vector<32x128xf32>
    %323 = arith.addf %319, %322 : vector<32x128xf32>
    %c5_274 = arith.constant 5 : index
    %c2_275 = arith.constant 2 : index
    %c0_276 = arith.constant 0 : index
    %c0_277 = arith.constant 0 : index
    %324 = vector.load %arg7[%c5_274, %c2_275, %c0_276, %c0_277] : memref<6x3x128x128xbf16, #tpu.memory_space<vmem>>, vector<1x1x128x128xbf16>
    %325 = vector.shape_cast %324 : vector<1x1x128x128xbf16> to vector<128x128xbf16>
    %cst_278 = arith.constant dense<0.000000e+00> : vector<32x128xf32>
    %326 = tpu.matmul %311, %325, %cst_278 {dimension_numbers = #tpu.dot_dimension_numbers<[1], [0], [0], [1], [0, 0, 1, 1], [], []>} : vector<32x128xbf16>, vector<128x128xbf16>, vector<32x128xf32> -> vector<32x128xf32>
    %c4_279 = arith.constant 4 : index
    %c0_280 = arith.constant 0 : index
    %c0_281 = arith.constant 0 : index
    %327 = vector.load %arg2[%c4_279, %c0_280, %c0_281] : memref<7x32x32xf32, #tpu.memory_space<vmem>>, vector<1x32x32xf32>
    %328 = vector.shape_cast %327 : vector<1x32x32xf32> to vector<32x32xf32>
    %cst_282 = arith.constant dense<0.000000e+00> : vector<32x128xf32>
    %329 = tpu.matmul %328, %326, %cst_282 {dimension_numbers = #tpu.dot_dimension_numbers<[1], [0], [0], [1], [0, 0, 1, 1], [], []>} : vector<32x32xf32>, vector<32x128xf32>, vector<32x128xf32> -> vector<32x128xf32>
    %330 = arith.addf %323, %329 : vector<32x128xf32>
    %331 = vector.broadcast %310 : vector<1x128xf32> to vector<32x128xf32>
    %332 = arith.addf %330, %331 : vector<32x128xf32>
    %c5_283 = arith.constant 5 : index
    %c0_284 = arith.constant 0 : index
    %c0_285 = arith.constant 0 : index
    %333 = vector.load %arg9[%c5_283, %c0_284, %c0_285] : memref<6x1x128xf32, #tpu.memory_space<vmem>>, vector<1x1x128xf32>
    %334 = vector.shape_cast %333 : vector<1x1x128xf32> to vector<1x128xf32>
    %c5_286 = arith.constant 5 : index
    %c0_287 = arith.constant 0 : index
    %c0_288 = arith.constant 0 : index
    %335 = vector.load %arg10[%c5_286, %c0_287, %c0_288] : memref<6x1x128xf32, #tpu.memory_space<vmem>>, vector<1x1x128xf32>
    %336 = vector.shape_cast %335 : vector<1x1x128xf32> to vector<1x128xf32>
    %cst_289 = arith.constant dense<0.000000e+00> : vector<128xf32>
    %337 = vector.multi_reduction <add>, %332, %cst_289 [0] : vector<32x128xf32> to vector<128xf32>
    %338 = vector.shape_cast %337 : vector<128xf32> to vector<1x128xf32>
    %cst_290 = arith.constant dense<0.000000e+00> : vector<1x128xf32>
    %339 = tpu.matmul %338, %0, %cst_290 {dimension_numbers = #tpu.dot_dimension_numbers<[1], [0], [0], [1], [0, 0, 1, 1], [], []>} : vector<1x128xf32>, vector<128x128xf32>, vector<1x128xf32> -> vector<1x128xf32>
    %340 = vector.broadcast %339 : vector<1x128xf32> to vector<32x128xf32>
    %341 = arith.subf %332, %340 : vector<32x128xf32>
    %342 = arith.mulf %341, %341 : vector<32x128xf32>
    %cst_291 = arith.constant dense<0.000000e+00> : vector<128xf32>
    %343 = vector.multi_reduction <add>, %342, %cst_291 [0] : vector<32x128xf32> to vector<128xf32>
    %344 = vector.shape_cast %343 : vector<128xf32> to vector<1x128xf32>
    %cst_292 = arith.constant dense<0.000000e+00> : vector<1x128xf32>
    %345 = tpu.matmul %344, %0, %cst_292 {dimension_numbers = #tpu.dot_dimension_numbers<[1], [0], [0], [1], [0, 0, 1, 1], [], []>} : vector<1x128xf32>, vector<128x128xf32>, vector<1x128xf32> -> vector<1x128xf32>
    %cst_293 = arith.constant 9.99999974E-6 : f32
    %346 = vector.broadcast %cst_293 : f32 to vector<1x128xf32>
    %347 = arith.addf %345, %346 : vector<1x128xf32>
    %348 = math.rsqrt %347 : vector<1x128xf32>
    %349 = arith.mulf %348, %334 : vector<1x128xf32>
    %350 = vector.broadcast %349 : vector<1x128xf32> to vector<32x128xf32>
    %351 = arith.mulf %341, %350 : vector<32x128xf32>
    %352 = vector.broadcast %336 : vector<1x128xf32> to vector<32x128xf32>
    %353 = arith.addf %351, %352 : vector<32x128xf32>
    %cst_294 = arith.constant 0.000000e+00 : f32
    %354 = vector.broadcast %cst_294 : f32 to vector<32x128xf32>
    %355 = arith.maximumf %353, %354 : vector<32x128xf32>
    %356 = arith.truncf %355 : vector<32x128xf32> to vector<32x128xbf16>
    %c0_295 = arith.constant 0 : index
    %c0_296 = arith.constant 0 : index
    %357 = vector.load %arg11[%c0_295, %c0_296] : memref<128x128xbf16, #tpu.memory_space<vmem>>, vector<128x128xbf16>
    %cst_297 = arith.constant dense<0.000000e+00> : vector<32x128xf32>
    %358 = tpu.matmul %356, %357, %cst_297 {dimension_numbers = #tpu.dot_dimension_numbers<[1], [0], [0], [1], [0, 0, 1, 1], [], []>} : vector<32x128xbf16>, vector<128x128xbf16>, vector<32x128xf32> -> vector<32x128xf32>
    %c0_298 = arith.constant 0 : index
    %c0_299 = arith.constant 0 : index
    %359 = vector.load %arg12[%c0_298, %c0_299] : memref<1x128xf32, #tpu.memory_space<vmem>>, vector<1x128xf32>
    %360 = vector.broadcast %359 : vector<1x128xf32> to vector<32x128xf32>
    %361 = arith.addf %358, %360 : vector<32x128xf32>
    %362 = arith.negf %361 : vector<32x128xf32>
    %363 = math.exp %362 : vector<32x128xf32>
    %cst_300 = arith.constant 1.000000e+00 : f32
    %364 = vector.broadcast %cst_300 : f32 to vector<32x128xf32>
    %365 = arith.addf %364, %363 : vector<32x128xf32>
    %366 = arith.divf %364, %365 : vector<32x128xf32>
    %c0_301 = arith.constant 0 : index
    %c0_302 = arith.constant 0 : index
    %367 = vector.load %arg13[%c0_301, %c0_302] : memref<32x128xf32, #tpu.memory_space<vmem>>, vector<32x128xf32>
    tpu.vector_store %arg13[%c0_301, %c0_302], %366 {strides = array<i32>} : memref<32x128xf32, #tpu.memory_space<vmem>>, vector<32x128xf32>,
    return
  }
}

</mosaic_0001>

<llo_original>
// kernel: tile.213
$region0: #{tile.213}
  #allocation0 [shape = 's32[1]{0}', space=sflag, size = 0x4, scoped, tag = 'scoped memory for tile.213']
  %s0 = inlined_call_operand.vmem [shape: f32[8], index: 0, kind: input, shape index: {}]
  %s1 = inlined_call_operand.vmem [shape: f32[16,8], index: 1, kind: output, shape index: {}]
  // Predicated region
  $region2: #{tile.213} parent=0 // pred_check
    _
  $region3: #{tile.213} parent=0 // pred_check_branch
    %3 = sbr.rel (0) target = $region5
  $region4: #{tile.213} parent=0 // pred_region
    _
  $region5: #{tile.213} parent=0 // pred_fallthru
    _
  %v4 = vld [vmem:[%s0] ss:$0 sm:$0xff]
  %5 = vst [vmem:[%s1] sm:$0xff] %v4
  %s6 = scalar_lea.vmem %s1, 8
  %7 = vst [vmem:[%s6] sm:$0xff] %v4

// kernel: tile.214
$region0: #{tile.214}
  %s0 = inlined_call_operand.vmem [shape: f32[16,8], index: 0, kind: input, shape index: {}]
  %s1 = inlined_call_operand.vmem [shape: f32[1,128], index: 1, kind: output, shape index: {}]
  $region1: #{tile.214} parent=0
    #allocation0 [shape = 'u8[4096]{0}', space=vmem, size = 0x1000, scoped, tag = 'scoped mem for output reshape']
    %v2 = vld [vmem:[%s0] sm:$0x1]
    %vm3 = vcmask 64512
    %4 = vst.msk [vmem:[#allocation0] sm:$0x1] %vm3, %v2
    %s5 = scalar_lea.vmem %s0, 15
    %v6 = vld [vmem:[%s5] sm:$0x1]
    %7 = vrot.lane.b32.xlu0 %v6, 120
    %v8 = vpop.permute.xlu0 %7
    %vm9 = vcmask 1048512
    %10 = vst.msk [vmem:[#allocation0] sm:$0x1] %vm9, %v8
    %s11 = scalar_lea.vmem %s0, 14
    %v12 = vld [vmem:[%s11] sm:$0x1]
    %13 = vrot.lane.b32.xlu0 %v12, 112
    %v14 = vpop.permute.xlu0 %13
    %vm15 = vcmask 982912
    %16 = vst.msk [vmem:[#allocation0] sm:$0x1] %vm15, %v14
    %s17 = scalar_lea.vmem %s0, 13
    %v18 = vld [vmem:[%s17] sm:$0x1]
    %19 = vrot.lane.b32.xlu0 %v18, 104
    %v20 = vpop.permute.xlu0 %19
    %vm21 = vcmask 917312
    %22 = vst.msk [vmem:[#allocation0] sm:$0x1] %vm21, %v20
    %s23 = scalar_lea.vmem %s0, 12
    %v24 = vld [vmem:[%s23] sm:$0x1]
    %25 = vrot.lane.b32.xlu0 %v24, 96
    %v26 = vpop.permute.xlu0 %25
    %vm27 = vcmask 851712
    %28 = vst.msk [vmem:[#allocation0] sm:$0x1] %vm27, %v26
    %s29 = scalar_lea.vmem %s0, 11
    %v30 = vld [vmem:[%s29] sm:$0x1]
    %31 = vrot.lane.b32.xlu0 %v30, 88
    %v32 = vpop.permute.xlu0 %31
    %vm33 = vcmask 786112
    %34 = vst.msk [vmem:[#allocation0] sm:$0x1] %vm33, %v32
    %s35 = scalar_lea.vmem %s0, 10
    %v36 = vld [vmem:[%s35] sm:$0x1]
    %37 = vrot.lane.b32.xlu0 %v36, 80
    %v38 = vpop.permute.xlu0 %37
    %vm39 = vcmask 720512
    %40 = vst.msk [vmem:[#allocation0] sm:$0x1] %vm39, %v38
    %s41 = scalar_lea.vmem %s0, 9
    %v42 = vld [vmem:[%s41] sm:$0x1]
    %43 = vrot.lane.b32.xlu0 %v42, 72
    %v44 = vpop.permute.xlu0 %43
    %vm45 = vcmask 654912
    %46 = vst.msk [vmem:[#allocation0] sm:$0x1] %vm45, %v44
    %s47 = scalar_lea.vmem %s0, 8
    %v48 = vld [vmem:[%s47] sm:$0x1]
    %49 = vrot.lane.b32.xlu0 %v48, 64
    %v50 = vpop.permute.xlu0 %49
    %vm51 = vcmask 589312
    %52 = vst.msk [vmem:[#allocation0] sm:$0x1] %vm51, %v50
    %s53 = scalar_lea.vmem %s0, 7
    %v54 = vld [vmem:[%s53] sm:$0x1]
    %55 = vrot.lane.b32.xlu0 %v54, 56
    %v56 = vpop.permute.xlu0 %55
    %vm57 = vcmask 523712
    %58 = vst.msk [vmem:[#allocation0] sm:$0x1] %vm57, %v56
    %s59 = scalar_lea.vmem %s0, 6
    %v60 = vld [vmem:[%s59] sm:$0x1]
    %61 = vrot.lane.b32.xlu0 %v60, 48
    %v62 = vpop.permute.xlu0 %61
    %vm63 = vcmask 458112
    %64 = vst.msk [vmem:[#allocation0] sm:$0x1] %vm63, %v62
    %s65 = scalar_lea.vmem %s0, 5
    %v66 = vld [vmem:[%s65] sm:$0x1]
    %67 = vrot.lane.b32.xlu0 %v66, 40
    %v68 = vpop.permute.xlu0 %67
    %vm69 = vcmask 392512
    %70 = vst.msk [vmem:[#allocation0] sm:$0x1] %vm69, %v68
    %s71 = scalar_lea.vmem %s0, 4
    %v72 = vld [vmem:[%s71] sm:$0x1]
    %73 = vrot.lane.b32.xlu0 %v72, 32
    %v74 = vpop.permute.xlu0 %73
    %vm75 = vcmask 326912
    %76 = vst.msk [vmem:[#allocation0] sm:$0x1] %vm75, %v74
    %s77 = scalar_lea.vmem %s0, 3
    %v78 = vld [vmem:[%s77] sm:$0x1]
    %79 = vrot.lane.b32.xlu0 %v78, 24
    %v80 = vpop.permute.xlu0 %79
    %vm81 = vcmask 261312
    %82 = vst.msk [vmem:[#allocation0] sm:$0x1] %vm81, %v80
    %s83 = scalar_lea.vmem %s0, 2
    %v84 = vld [vmem:[%s83] sm:$0x1]
    %85 = vrot.lane.b32.xlu0 %v84, 16
    %v86 = vpop.permute.xlu0 %85
    %vm87 = vcmask 195712
    %88 = vst.msk [vmem:[#allocation0] sm:$0x1] %vm87, %v86
    %s89 = scalar_lea.vmem %s0, 1
    %v90 = vld [vmem:[%s89] sm:$0x1]
    %91 = vrot.lane.b32.xlu0 %v90, 8
    %v92 = vpop.permute.xlu0 %91
    %vm93 = vcmask 130112
    %94 = vst.msk [vmem:[#allocation0] sm:$0x1] %vm93, %v92
    %s96 = sshllo.u32 0, 1
    %v98 = vld [vmem:[#allocation0] sm:%s96]
    %s99 = sshllo.u32 0, 1
    %100 = vst [vmem:[%s1] sm:%s99] %v98

// kernel: tile.144
$region0: #{tile.144}
  %s0 = inlined_call_operand.vmem [shape: f32[16,8], index: 0, kind: input, shape index: {}]
  %s1 = inlined_call_operand.vmem [shape: f32[1,1,128], index: 1, kind: output, shape index: {}]
  $region1: #{tile.144} parent=0
    #allocation0 [shape = 'u8[4096]{0}', space=vmem, size = 0x1000, scoped, tag = 'scoped mem for output reshape']
    %v2 = vld [vmem:[%s0] sm:$0x1]
    %vm3 = vcmask 64512
    %4 = vst.msk [vmem:[#allocation0] sm:$0x1] %vm3, %v2
    %s5 = scalar_lea.vmem %s0, 15
    %v6 = vld [vmem:[%s5] sm:$0x1]
    %7 = vrot.lane.b32.xlu0 %v6, 120
    %v8 = vpop.permute.xlu0 %7
    %vm9 = vcmask 1048512
    %10 = vst.msk [vmem:[#allocation0] sm:$0x1] %vm9, %v8
    %s11 = scalar_lea.vmem %s0, 14
    %v12 = vld [vmem:[%s11] sm:$0x1]
    %13 = vrot.lane.b32.xlu0 %v12, 112
    %v14 = vpop.permute.xlu0 %13
    %vm15 = vcmask 982912
    %16 = vst.msk [vmem:[#allocation0] sm:$0x1] %vm15, %v14
    %s17 = scalar_lea.vmem %s0, 13
    %v18 = vld [vmem:[%s17] sm:$0x1]
    %19 = vrot.lane.b32.xlu0 %v18, 104
    %v20 = vpop.permute.xlu0 %19
    %vm21 = vcmask 917312
    %22 = vst.msk [vmem:[#allocation0] sm:$0x1] %vm21, %v20
    %s23 = scalar_lea.vmem %s0, 12
    %v24 = vld [vmem:[%s23] sm:$0x1]
    %25 = vrot.lane.b32.xlu0 %v24, 96
    %v26 = vpop.permute.xlu0 %25
    %vm27 = vcmask 851712
    %28 = vst.msk [vmem:[#allocation0] sm:$0x1] %vm27, %v26
    %s29 = scalar_lea.vmem %s0, 11
    %v30 = vld [vmem:[%s29] sm:$0x1]
    %31 = vrot.lane.b32.xlu0 %v30, 88
    %v32 = vpop.permute.xlu0 %31
    %vm33 = vcmask 786112
    %34 = vst.msk [vmem:[#allocation0] sm:$0x1] %vm33, %v32
    %s35 = scalar_lea.vmem %s0, 10
    %v36 = vld [vmem:[%s35] sm:$0x1]
    %37 = vrot.lane.b32.xlu0 %v36, 80
    %v38 = vpop.permute.xlu0 %37
    %vm39 = vcmask 720512
    %40 = vst.msk [vmem:[#allocation0] sm:$0x1] %vm39, %v38
    %s41 = scalar_lea.vmem %s0, 9
    %v42 = vld [vmem:[%s41] sm:$0x1]
    %43 = vrot.lane.b32.xlu0 %v42, 72
    %v44 = vpop.permute.xlu0 %43
    %vm45 = vcmask 654912
    %46 = vst.msk [vmem:[#allocation0] sm:$0x1] %vm45, %v44
    %s47 = scalar_lea.vmem %s0, 8
    %v48 = vld [vmem:[%s47] sm:$0x1]
    %49 = vrot.lane.b32.xlu0 %v48, 64
    %v50 = vpop.permute.xlu0 %49
    %vm51 = vcmask 589312
    %52 = vst.msk [vmem:[#allocation0] sm:$0x1] %vm51, %v50
    %s53 = scalar_lea.vmem %s0, 7
    %v54 = vld [vmem:[%s53] sm:$0x1]
    %55 = vrot.lane.b32.xlu0 %v54, 56
    %v56 = vpop.permute.xlu0 %55
    %vm57 = vcmask 523712
    %58 = vst.msk [vmem:[#allocation0] sm:$0x1] %vm57, %v56
    %s59 = scalar_lea.vmem %s0, 6
    %v60 = vld [vmem:[%s59] sm:$0x1]
    %61 = vrot.lane.b32.xlu0 %v60, 48
    %v62 = vpop.permute.xlu0 %61
    %vm63 = vcmask 458112
    %64 = vst.msk [vmem:[#allocation0] sm:$0x1] %vm63, %v62
    %s65 = scalar_lea.vmem %s0, 5
    %v66 = vld [vmem:[%s65] sm:$0x1]
    %67 = vrot.lane.b32.xlu0 %v66, 40
    %v68 = vpop.permute.xlu0 %67
    %vm69 = vcmask 392512
    %70 = vst.msk [vmem:[#allocation0] sm:$0x1] %vm69, %v68
    %s71 = scalar_lea.vmem %s0, 4
    %v72 = vld [vmem:[%s71] sm:$0x1]
    %73 = vrot.lane.b32.xlu0 %v72, 32
    %v74 = vpop.permute.xlu0 %73
    %vm75 = vcmask 326912
    %76 = vst.msk [vmem:[#allocation0] sm:$0x1] %vm75, %v74
    %s77 = scalar_lea.vmem %s0, 3
    %v78 = vld [vmem:[%s77] sm:$0x1]
    %79 = vrot.lane.b32.xlu0 %v78, 24
    %v80 = vpop.permute.xlu0 %79
    %vm81 = vcmask 261312
    %82 = vst.msk [vmem:[#allocation0] sm:$0x1] %vm81, %v80
    %s83 = scalar_lea.vmem %s0, 2
    %v84 = vld [vmem:[%s83] sm:$0x1]
    %85 = vrot.lane.b32.xlu0 %v84, 16
    %v86 = vpop.permute.xlu0 %85
    %vm87 = vcmask 195712
    %88 = vst.msk [vmem:[#allocation0] sm:$0x1] %vm87, %v86
    %s89 = scalar_lea.vmem %s0, 1
    %v90 = vld [vmem:[%s89] sm:$0x1]
    %91 = vrot.lane.b32.xlu0 %v90, 8
    %v92 = vpop.permute.xlu0 %91
    %vm93 = vcmask 130112
    %94 = vst.msk [vmem:[#allocation0] sm:$0x1] %vm93, %v92
    %s96 = sshllo.u32 0, 1
    %v98 = vld [vmem:[#allocation0] sm:%s96]
    %s99 = sshllo.u32 0, 1
    %100 = vst [vmem:[%s1] sm:%s99] %v98

// kernel: stage2_cnn_forward.1
$region0: #{stage2_cnn_forward.1}
  #allocation0 [shape = 'u32[]', space=smem, size = 0x4, offset = 0x4, fixed_abs, tag = 'smem constant byte address 0x4 - core index']
  #allocation1 [shape = 'u32[144,128]{1,0:T(1,128)}', space=vmem, size = 0x12000, scoped, tag = 'internal scratch']
  %s0 = inlined_call_operand.vmem [shape: f32[32,128], index: 0, kind: input, shape index: {}]
  %s1 = inlined_call_operand.vmem [shape: f32[128,128], index: 1, kind: input, shape index: {}]
  %s2 = inlined_call_operand.vmem [shape: f32[7,32,32], index: 2, kind: input, shape index: {}]
  %s3 = inlined_call_operand.vmem [shape: f32[1,128], index: 3, kind: input, shape index: {}]
  %s4 = inlined_call_operand.vmem [shape: f32[1,128], index: 4, kind: input, shape index: {}]
  %s5 = inlined_call_operand.vmem [shape: bf16[7,128,128], index: 5, kind: input, shape index: {}]
  %s6 = inlined_call_operand.vmem [shape: f32[1,128], index: 6, kind: input, shape index: {}]
  %s7 = inlined_call_operand.vmem [shape: bf16[6,3,128,128], index: 7, kind: input, shape index: {}]
  %s8 = inlined_call_operand.vmem [shape: f32[6,1,128], index: 8, kind: input, shape index: {}]
  %s9 = inlined_call_operand.vmem [shape: f32[6,1,128], index: 9, kind: input, shape index: {}]
  %s10 = inlined_call_operand.vmem [shape: f32[6,1,128], index: 10, kind: input, shape index: {}]
  %s11 = inlined_call_operand.vmem [shape: bf16[128,128], index: 11, kind: input, shape index: {}]
  %s12 = inlined_call_operand.vmem [shape: f32[1,128], index: 12, kind: input, shape index: {}]
  %s13 = inlined_call_operand.vmem [shape: f32[32,128], index: 13, kind: output, shape index: {}]
  %s14 = sld [smem:[#allocation0]]
  $region62: #{stage2_cnn_forward.1} parent=0
    _
  %s16 = ssub.s32 1, %s14
  %s17 = scalar_select 0, %s16, %s14
  // Predicated region
  $region2: #{stage2_cnn_forward.1} parent=0 // pred_check
    _
  $region3: #{stage2_cnn_forward.1} parent=0 // pred_check_branch
    %19 = sbr.rel (0) target = $region5
  $region4: #{stage2_cnn_forward.1} parent=0 // pred_region
    _
  $region5: #{stage2_cnn_forward.1} parent=0 // pred_fallthru
    _
  // Predicated region
  $region6: #{stage2_cnn_forward.1} parent=0 // pred_check
    _
  $region7: #{stage2_cnn_forward.1} parent=0 // pred_check_branch
    %21 = sbr.rel (0) target = $region9
  $region8: #{stage2_cnn_forward.1} parent=0 // pred_region
    _
  $region9: #{stage2_cnn_forward.1} parent=0 // pred_fallthru
    _
  // Predicated region
  $region10: #{stage2_cnn_forward.1} parent=0 // pred_check
    _
  $region11: #{stage2_cnn_forward.1} parent=0 // pred_check_branch
    %23 = sbr.rel (0) target = $region13
  $region12: #{stage2_cnn_forward.1} parent=0 // pred_region
    _
  $region13: #{stage2_cnn_forward.1} parent=0 // pred_fallthru
    _
  // Predicated region
  $region14: #{stage2_cnn_forward.1} parent=0 // pred_check
    _
  $region15: #{stage2_cnn_forward.1} parent=0 // pred_check_branch
    %25 = sbr.rel (0) target = $region17
  $region16: #{stage2_cnn_forward.1} parent=0 // pred_region
    _
  $region17: #{stage2_cnn_forward.1} parent=0 // pred_fallthru
    _
  // Predicated region
  $region18: #{stage2_cnn_forward.1} parent=0 // pred_check
    _
  $region19: #{stage2_cnn_forward.1} parent=0 // pred_check_branch
    %27 = sbr.rel (0) target = $region21
  $region20: #{stage2_cnn_forward.1} parent=0 // pred_region
    _
  $region21: #{stage2_cnn_forward.1} parent=0 // pred_fallthru
    _
  // Predicated region
  $region22: #{stage2_cnn_forward.1} parent=0 // pred_check
    _
  $region23: #{stage2_cnn_forward.1} parent=0 // pred_check_branch
    %29 = sbr.rel (0) target = $region25
  $region24: #{stage2_cnn_forward.1} parent=0 // pred_region
    _
  $region25: #{stage2_cnn_forward.1} parent=0 // pred_fallthru
    _
  // Predicated region
  $region26: #{stage2_cnn_forward.1} parent=0 // pred_check
    _
  $region27: #{stage2_cnn_forward.1} parent=0 // pred_check_branch
    %31 = sbr.rel (0) target = $region29
  $region28: #{stage2_cnn_forward.1} parent=0 // pred_region
    _
  $region29: #{stage2_cnn_forward.1} parent=0 // pred_fallthru
    _
  // Predicated region
  $region30: #{stage2_cnn_forward.1} parent=0 // pred_check
    _
  $region31: #{stage2_cnn_forward.1} parent=0 // pred_check_branch
    %33 = sbr.rel (0) target = $region33
  $region32: #{stage2_cnn_forward.1} parent=0 // pred_region
    _
  $region33: #{stage2_cnn_forward.1} parent=0 // pred_fallthru
    _
  // Predicated region
  $region34: #{stage2_cnn_forward.1} parent=0 // pred_check
    _
  $region35: #{stage2_cnn_forward.1} parent=0 // pred_check_branch
    %35 = sbr.rel (0) target = $region37
  $region36: #{stage2_cnn_forward.1} parent=0 // pred_region
    _
  $region37: #{stage2_cnn_forward.1} parent=0 // pred_fallthru
    _
  // Predicated region
  $region38: #{stage2_cnn_forward.1} parent=0 // pred_check
    _
  $region39: #{stage2_cnn_forward.1} parent=0 // pred_check_branch
    %37 = sbr.rel (0) target = $region41
  $region40: #{stage2_cnn_forward.1} parent=0 // pred_region
    _
  $region41: #{stage2_cnn_forward.1} parent=0 // pred_fallthru
    _
  // Predicated region
  $region42: #{stage2_cnn_forward.1} parent=0 // pred_check
    _
  $region43: #{stage2_cnn_forward.1} parent=0 // pred_check_branch
    %39 = sbr.rel (0) target = $region45
  $region44: #{stage2_cnn_forward.1} parent=0 // pred_region
    _
  $region45: #{stage2_cnn_forward.1} parent=0 // pred_fallthru
    _
  // Predicated region
  $region46: #{stage2_cnn_forward.1} parent=0 // pred_check
    _
  $region47: #{stage2_cnn_forward.1} parent=0 // pred_check_branch
    %41 = sbr.rel (0) target = $region49
  $region48: #{stage2_cnn_forward.1} parent=0 // pred_region
    _
  $region49: #{stage2_cnn_forward.1} parent=0 // pred_fallthru
    _
  // Predicated region
  $region50: #{stage2_cnn_forward.1} parent=0 // pred_check
    _
  $region51: #{stage2_cnn_forward.1} parent=0 // pred_check_branch
    %43 = sbr.rel (0) target = $region53
  $region52: #{stage2_cnn_forward.1} parent=0 // pred_region
    _
  $region53: #{stage2_cnn_forward.1} parent=0 // pred_fallthru
    _
  %v45 = vld [vmem:[%s1] sm:$0xff]
  %v46 = vld [vmem:[%s1 + $0x8] sm:$0xff]
  %v47 = vld [vmem:[%s1 + $0x10] sm:$0xff]
  %v48 = vld [vmem:[%s1 + $0x18] sm:$0xff]
  %v49 = vld [vmem:[%s1 + $0x20] sm:$0xff]
  %v50 = vld [vmem:[%s1 + $0x28] sm:$0xff]
  %v51 = vld [vmem:[%s1 + $0x30] sm:$0xff]
  %v52 = vld [vmem:[%s1 + $0x38] sm:$0xff]
  %v53 = vld [vmem:[%s1 + $0x40] sm:$0xff]
  %v54 = vld [vmem:[%s1 + $0x48] sm:$0xff]
  %v55 = vld [vmem:[%s1 + $0x50] sm:$0xff]
  %v56 = vld [vmem:[%s1 + $0x58] sm:$0xff]
  %v57 = vld [vmem:[%s1 + $0x60] sm:$0xff]
  %v58 = vld [vmem:[%s1 + $0x68] sm:$0xff]
  %v59 = vld [vmem:[%s1 + $0x70] sm:$0xff]
  %v60 = vld [vmem:[%s1 + $0x78] sm:$0xff]
  %v61 = vld [vmem:[%s0] sm:$0xff]
  %v62 = vld [vmem:[%s0 + $0x8] sm:$0xff]
  %v63 = vld [vmem:[%s0 + $0x10] sm:$0xff]
  %v64 = vld [vmem:[%s0 + $0x18] sm:$0xff]
  %v65 = vld [vmem:[%s3] sm:$0x1]
  %v66 = vld [vmem:[%s4] sm:$0x1]
  %v67 = vadd.f32 %v61, %v62
  %v68 = vadd.f32 %v67, %v63
  %v69 = vadd.f32 %v68, %v64
  %v70 = vrot.slane %v69, 4
  %v71 = vadd.f32 %v69, %v70
  %v72 = vrot.slane %v71, 2
  %v73 = vadd.f32 %v71, %v72
  %v74 = vrot.slane %v73, 1
  %v75 = vadd.f32 %v73, %v74
  %76 = vmatprep.subr.mxu0 0.0
  %77 = vmatpush1.msra.mxu0 %v45
  %78 = vmatprep.subr.mxu0 0.0
  %79 = vmatpush1.msra.mxu0 %v46
  %80 = vmatprep.subr.mxu0 0.0
  %81 = vmatpush1.msra.mxu0 %v47
  %82 = vmatprep.subr.mxu0 0.0
  %83 = vmatpush1.msra.mxu0 %v48
  %84 = vmatprep.subr.mxu0 0.0
  %85 = vmatpush1.msra.mxu0 %v49
  %86 = vmatprep.subr.mxu0 0.0
  %87 = vmatpush1.msra.mxu0 %v50
  %88 = vmatprep.subr.mxu0 0.0
  %89 = vmatpush1.msra.mxu0 %v51
  %90 = vmatprep.subr.mxu0 0.0
  %91 = vmatpush1.msra.mxu0 %v52
  %92 = vmatprep.subr.mxu0 0.0
  %93 = vmatpush1.msra.mxu0 %v53
  %94 = vmatprep.subr.mxu0 0.0
  %95 = vmatpush1.msra.mxu0 %v54
  %96 = vmatprep.subr.mxu0 0.0
  %97 = vmatpush1.msra.mxu0 %v55
  %98 = vmatprep.subr.mxu0 0.0
  %99 = vmatpush1.msra.mxu0 %v56
  %100 = vmatprep.subr.mxu0 0.0
  %101 = vmatpush1.msra.mxu0 %v57
  %102 = vmatprep.subr.mxu0 0.0
  %103 = vmatpush1.msra.mxu0 %v58
  %104 = vmatprep.subr.mxu0 0.0
  %105 = vmatpush1.msra.mxu0 %v59
  %106 = vmatprep.subr.mxu0 0.0
  %107 = vmatpush1.msra.mxu0 %v60
  %108 = vmatprep.subr.mxu0 0.0
  %109 = vmatpush1.msra.mxu0 0.0
  %110 = vmatprep.subr.mxu0 0.0
  %111 = vmatpush1.msra.mxu0 0.0
  %112 = vmatprep.subr.mxu0 0.0
  %113 = vmatpush1.msra.mxu0 0.0
  %114 = vmatprep.subr.mxu0 0.0
  %115 = vmatpush1.msra.mxu0 0.0
  %116 = vmatprep.subr.mxu0 0.0
  %117 = vmatpush1.msra.mxu0 0.0
  %118 = vmatprep.subr.mxu0 0.0
  %119 = vmatpush1.msra.mxu0 0.0
  %120 = vmatprep.subr.mxu0 0.0
  %121 = vmatpush1.msra.mxu0 0.0
  %122 = vmatprep.subr.mxu0 0.0
  %123 = vmatpush1.msra.mxu0 0.0
  %124 = vmatprep.subr.mxu0 0.0
  %125 = vmatpush1.msra.mxu0 0.0
  %126 = vmatprep.subr.mxu0 0.0
  %127 = vmatpush1.msra.mxu0 0.0
  %128 = vmatprep.subr.mxu0 0.0
  %129 = vmatpush1.msra.mxu0 0.0
  %130 = vmatprep.subr.mxu0 0.0
  %131 = vmatpush1.msra.mxu0 0.0
  %132 = vmatprep.subr.mxu0 0.0
  %133 = vmatpush1.msra.mxu0 0.0
  %134 = vmatprep.subr.mxu0 0.0
  %135 = vmatpush1.msra.mxu0 0.0
  %136 = vmatprep.subr.mxu0 0.0
  %137 = vmatpush1.msra.mxu0 0.0
  %138 = vmatprep.subr.mxu0 0.0
  %139 = vmatpush1.msra.mxu0 0.0
  %140 = vmatprep.mubr.f32.mxu0 0.0
  %141 = vmatmul.mubr.f32.gmra.mrb[0].mxu0 %v75
  %v142 = vpop.f32.mrb[0].mxu0
  %v143 = vadd.f32 0.0, %v142
  %v144 = vpop.f32.mrb[0].mxu0
  %145 = vdwg.mxu0
  %v146 = vlaneseq
  %v147 = vshrl.u32 %v146, 7
  %v148 = vsub.s32 0, %v147
  %v149 = vrot.slane %v143, %v148
  %v150 = vsub.f32 %v61, %v149
  %v151 = vsub.f32 %v62, %v149
  %v152 = vsub.f32 %v63, %v149
  %v153 = vsub.f32 %v64, %v149
  %v154 = vmul.f32 %v150, %v150
  %v155 = vmul.f32 %v151, %v151
  %v156 = vmul.f32 %v152, %v152
  %v157 = vmul.f32 %v153, %v153
  %v158 = vadd.f32 %v154, %v155
  %v159 = vadd.f32 %v158, %v156
  %v160 = vadd.f32 %v159, %v157
  %v161 = vrot.slane %v160, 4
  %v162 = vadd.f32 %v160, %v161
  %v163 = vrot.slane %v162, 2
  %v164 = vadd.f32 %v162, %v163
  %v165 = vrot.slane %v164, 1
  %v166 = vadd.f32 %v164, %v165
  %167 = vmatprep.subr.mxu0 0.0
  %168 = vmatpush1.msra.mxu0 %v45
  %169 = vmatprep.subr.mxu0 0.0
  %170 = vmatpush1.msra.mxu0 %v46
  %171 = vmatprep.subr.mxu0 0.0
  %172 = vmatpush1.msra.mxu0 %v47
  %173 = vmatprep.subr.mxu0 0.0
  %174 = vmatpush1.msra.mxu0 %v48
  %175 = vmatprep.subr.mxu0 0.0
  %176 = vmatpush1.msra.mxu0 %v49
  %177 = vmatprep.subr.mxu0 0.0
  %178 = vmatpush1.msra.mxu0 %v50
  %179 = vmatprep.subr.mxu0 0.0
  %180 = vmatpush1.msra.mxu0 %v51
  %181 = vmatprep.subr.mxu0 0.0
  %182 = vmatpush1.msra.mxu0 %v52
  %183 = vmatprep.subr.mxu0 0.0
  %184 = vmatpush1.msra.mxu0 %v53
  %185 = vmatprep.subr.mxu0 0.0
  %186 = vmatpush1.msra.mxu0 %v54
  %187 = vmatprep.subr.mxu0 0.0
  %188 = vmatpush1.msra.mxu0 %v55
  %189 = vmatprep.subr.mxu0 0.0
  %190 = vmatpush1.msra.mxu0 %v56
  %191 = vmatprep.subr.mxu0 0.0
  %192 = vmatpush1.msra.mxu0 %v57
  %193 = vmatprep.subr.mxu0 0.0
  %194 = vmatpush1.msra.mxu0 %v58
  %195 = vmatprep.subr.mxu0 0.0
  %196 = vmatpush1.msra.mxu0 %v59
  %197 = vmatprep.subr.mxu0 0.0
  %198 = vmatpush1.msra.mxu0 %v60
  %199 = vmatprep.subr.mxu0 0.0
  %200 = vmatpush1.msra.mxu0 0.0
  %201 = vmatprep.subr.mxu0 0.0
  %202 = vmatpush1.msra.mxu0 0.0
  %203 = vmatprep.subr.mxu0 0.0
  %204 = vmatpush1.msra.mxu0 0.0
  %205 = vmatprep.subr.mxu0 0.0
  %206 = vmatpush1.msra.mxu0 0.0
  %207 = vmatprep.subr.mxu0 0.0
  %208 = vmatpush1.msra.mxu0 0.0
  %209 = vmatprep.subr.mxu0 0.0
  %210 = vmatpush1.msra.mxu0 0.0
  %211 = vmatprep.subr.mxu0 0.0
  %212 = vmatpush1.msra.mxu0 0.0
  %213 = vmatprep.subr.mxu0 0.0
  %214 = vmatpush1.msra.mxu0 0.0
  %215 = vmatprep.subr.mxu0 0.0
  %216 = vmatpush1.msra.mxu0 0.0
  %217 = vmatprep.subr.mxu0 0.0
  %218 = vmatpush1.msra.mxu0 0.0
  %219 = vmatprep.subr.mxu0 0.0
  %220 = vmatpush1.msra.mxu0 0.0
  %221 = vmatprep.subr.mxu0 0.0
  %222 = vmatpush1.msra.mxu0 0.0
  %223 = vmatprep.subr.mxu0 0.0
  %224 = vmatpush1.msra.mxu0 0.0
  %225 = vmatprep.subr.mxu0 0.0
  %226 = vmatpush1.msra.mxu0 0.0
  %227 = vmatprep.subr.mxu0 0.0
  %228 = vmatpush1.msra.mxu0 0.0
  %229 = vmatprep.subr.mxu0 0.0
  %230 = vmatpush1.msra.mxu0 0.0
  %231 = vmatprep.mubr.f32.mxu0 0.0
  %232 = vmatmul.mubr.f32.gmra.mrb[0].mxu0 %v166
  %v233 = vpop.f32.mrb[0].mxu0
  %v234 = vadd.f32 1e-05, %v233
  %v235 = vpop.f32.mrb[0].mxu0
  %236 = vdwg.mxu0
  %v237 = vrsqrt.pop %v234
  %v238 = vmul.f32 %v237, %v65
  %v239 = vlaneseq
  %v240 = vshrl.u32 %v239, 7
  %v241 = vsub.s32 0, %v240
  %v242 = vrot.slane %v238, %v241
  %v243 = vmul.f32 %v150, %v242
  %v244 = vmul.f32 %v151, %v242
  %v245 = vmul.f32 %v152, %v242
  %v246 = vmul.f32 %v153, %v242
  %v248 = vlaneseq
  %v249 = vshrl.u32 %v248, 7
  %v250 = vsub.s32 0, %v249
  %v251 = vrot.slane %v66, %v250
  %v253 = vadd.f32 %v243, %v251
  %v254 = vadd.f32 %v244, %v251
  %v255 = vadd.f32 %v245, %v251
  %v256 = vadd.f32 %v246, %v251
  %v257 = vld [vmem:[%s6] sm:$0x1]
  %v258 = vpack.c.bf16 %v254, %v253
  %v259 = vpack.c.bf16 %v256, %v255
  %v260 = vld [vmem:[%s5] sm:$0xf]
  %v261 = vld [vmem:[%s5 + $0x4] sm:$0xf]
  %v262 = vld [vmem:[%s5 + $0x8] sm:$0xf]
  %v263 = vld [vmem:[%s5 + $0xc] sm:$0xf]
  %v264 = vld [vmem:[%s5 + $0x10] sm:$0xf]
  %v265 = vld [vmem:[%s5 + $0x14] sm:$0xf]
  %v266 = vld [vmem:[%s5 + $0x18] sm:$0xf]
  %v267 = vld [vmem:[%s5 + $0x1c] sm:$0xf]
  %v268 = vld [vmem:[%s5 + $0x20] sm:$0xf]
  %v269 = vld [vmem:[%s5 + $0x24] sm:$0xf]
  %v270 = vld [vmem:[%s5 + $0x28] sm:$0xf]
  %v271 = vld [vmem:[%s5 + $0x2c] sm:$0xf]
  %v272 = vld [vmem:[%s5 + $0x30] sm:$0xf]
  %v273 = vld [vmem:[%s5 + $0x34] sm:$0xf]
  %v274 = vld [vmem:[%s5 + $0x38] sm:$0xf]
  %v275 = vld [vmem:[%s5 + $0x3c] sm:$0xf]
  %v292 = vunpack.c.l.b16 %v260
  %v293 = vunpack.c.l.b16 %v261
  %v294 = vunpack.c.l.b16 %v262
  %v295 = vunpack.c.l.b16 %v263
  %v296 = vunpack.c.l.b16 %v264
  %v297 = vunpack.c.l.b16 %v265
  %v298 = vunpack.c.l.b16 %v266
  %v299 = vunpack.c.l.b16 %v267
  %v300 = vunpack.c.l.b16 %v268
  %v301 = vunpack.c.l.b16 %v269
  %v302 = vunpack.c.l.b16 %v270
  %v303 = vunpack.c.l.b16 %v271
  %v304 = vunpack.c.l.b16 %v272
  %v305 = vunpack.c.l.b16 %v273
  %v306 = vunpack.c.l.b16 %v274
  %v307 = vunpack.c.l.b16 %v275
  %v308 = vpack.c.b16 %v293, %v292
  %v309 = vpack.c.b16 %v295, %v294
  %v310 = vpack.c.b16 %v297, %v296
  %v311 = vpack.c.b16 %v299, %v298
  %v312 = vpack.c.b16 %v301, %v300
  %v313 = vpack.c.b16 %v303, %v302
  %v314 = vpack.c.b16 %v305, %v304
  %v315 = vpack.c.b16 %v307, %v306
  %324 = vmatprep.subr.bf16.mxu0 0
  %325 = vmatpush1.bf16.msra.mxu0 %v308
  %326 = vmatprep.subr.bf16.mxu0 0
  %327 = vmatpush1.bf16.msra.mxu0 %v309
  %328 = vmatprep.subr.bf16.mxu0 0
  %329 = vmatpush1.bf16.msra.mxu0 %v310
  %330 = vmatprep.subr.bf16.mxu0 0
  %331 = vmatpush1.bf16.msra.mxu0 %v311
  %332 = vmatprep.subr.bf16.mxu0 0
  %333 = vmatpush1.bf16.msra.mxu0 %v312
  %334 = vmatprep.subr.bf16.mxu0 0
  %335 = vmatpush1.bf16.msra.mxu0 %v313
  %336 = vmatprep.subr.bf16.mxu0 0
  %337 = vmatpush1.bf16.msra.mxu0 %v314
  %338 = vmatprep.subr.bf16.mxu0 0
  %339 = vmatpush1.bf16.msra.mxu0 %v315
  %340 = vmatprep.subr.bf16.mxu0 0
  %341 = vmatpush1.bf16.msra.mxu0 0
  %342 = vmatprep.subr.bf16.mxu0 0
  %343 = vmatpush1.bf16.msra.mxu0 0
  %344 = vmatprep.subr.bf16.mxu0 0
  %345 = vmatpush1.bf16.msra.mxu0 0
  %346 = vmatprep.subr.bf16.mxu0 0
  %347 = vmatpush1.bf16.msra.mxu0 0
  %348 = vmatprep.subr.bf16.mxu0 0
  %349 = vmatpush1.bf16.msra.mxu0 0
  %350 = vmatprep.subr.bf16.mxu0 0
  %351 = vmatpush1.bf16.msra.mxu0 0
  %352 = vmatprep.subr.bf16.mxu0 0
  %353 = vmatpush1.bf16.msra.mxu0 0
  %354 = vmatprep.subr.bf16.mxu0 0
  %355 = vmatpush1.bf16.msra.mxu0 0
  %356 = vmatprep.mubr.bf16.mxu0 0
  %357 = vmatmul.mubr.bf16.gmra.mrb[0].mxu0 %v258
  %v358 = vpop.f32.mrb[0].mxu0
  %v359 = vadd.f32 0.0, %v358
  %v360 = vpop.f32.mrb[0].mxu0
  %v361 = vpop.f32.mrb[0].mxu0
  %v362 = vadd.f32 0.0, %v361
  %v363 = vpop.f32.mrb[0].mxu0
  %364 = vmatprep.mubr.bf16.mxu0 0
  %365 = vmatmul.mubr.bf16.gmra.mrb[0].mxu0 %v259
  %v366 = vpop.f32.mrb[0].mxu0
  %v367 = vadd.f32 0.0, %v366
  %v368 = vpop.f32.mrb[0].mxu0
  %v369 = vpop.f32.mrb[0].mxu0
  %v370 = vadd.f32 0.0, %v369
  %v371 = vpop.f32.mrb[0].mxu0
  %372 = vdwg.mxu0
  %v373 = vld [vmem:[%s2] sm:$0xff]
  %v374 = vld [vmem:[%s2 + $0x8] sm:$0xff]
  %v375 = vld [vmem:[%s2 + $0x10] sm:$0xff]
  %v376 = vld [vmem:[%s2 + $0x18] sm:$0xff]
  %s377 = scalar_lea.vmem %s5, 64
  %v378 = vld [vmem:[%s377] sm:$0xf]
  %v379 = vld [vmem:[%s377 + $0x4] sm:$0xf]
  %v380 = vld [vmem:[%s377 + $0x8] sm:$0xf]
  %v381 = vld [vmem:[%s377 + $0xc] sm:$0xf]
  %v382 = vld [vmem:[%s377 + $0x10] sm:$0xf]
  %v383 = vld [vmem:[%s377 + $0x14] sm:$0xf]
  %v384 = vld [vmem:[%s377 + $0x18] sm:$0xf]
  %v385 = vld [vmem:[%s377 + $0x1c] sm:$0xf]
  %v386 = vld [vmem:[%s377 + $0x20] sm:$0xf]
  %v387 = vld [vmem:[%s377 + $0x24] sm:$0xf]
  %v388 = vld [vmem:[%s377 + $0x28] sm:$0xf]
  %v389 = vld [vmem:[%s377 + $0x2c] sm:$0xf]
  %v390 = vld [vmem:[%s377 + $0x30] sm:$0xf]
  %v391 = vld [vmem:[%s377 + $0x34] sm:$0xf]
  %v392 = vld [vmem:[%s377 + $0x38] sm:$0xf]
  %v393 = vld [vmem:[%s377 + $0x3c] sm:$0xf]
  %v410 = vunpack.c.l.b16 %v378
  %v411 = vunpack.c.l.b16 %v379
  %v412 = vunpack.c.l.b16 %v380
  %v413 = vunpack.c.l.b16 %v381
  %v414 = vunpack.c.l.b16 %v382
  %v415 = vunpack.c.l.b16 %v383
  %v416 = vunpack.c.l.b16 %v384
  %v417 = vunpack.c.l.b16 %v385
  %v418 = vunpack.c.l.b16 %v386
  %v419 = vunpack.c.l.b16 %v387
  %v420 = vunpack.c.l.b16 %v388
  %v421 = vunpack.c.l.b16 %v389
  %v422 = vunpack.c.l.b16 %v390
  %v423 = vunpack.c.l.b16 %v391
  %v424 = vunpack.c.l.b16 %v392
  %v425 = vunpack.c.l.b16 %v393
  %v426 = vpack.c.b16 %v411, %v410
  %v427 = vpack.c.b16 %v413, %v412
  %v428 = vpack.c.b16 %v415, %v414
  %v429 = vpack.c.b16 %v417, %v416
  %v430 = vpack.c.b16 %v419, %v418
  %v431 = vpack.c.b16 %v421, %v420
  %v432 = vpack.c.b16 %v423, %v422
  %v433 = vpack.c.b16 %v425, %v424
  %442 = vmatprep.subr.bf16.mxu0 0
  %443 = vmatpush1.bf16.msra.mxu0 %v426
  %444 = vmatprep.subr.bf16.mxu0 0
  %445 = vmatpush1.bf16.msra.mxu0 %v427
  %446 = vmatprep.subr.bf16.mxu0 0
  %447 = vmatpush1.bf16.msra.mxu0 %v428
  %448 = vmatprep.subr.bf16.mxu0 0
  %449 = vmatpush1.bf16.msra.mxu0 %v429
  %450 = vmatprep.subr.bf16.mxu0 0
  %451 = vmatpush1.bf16.msra.mxu0 %v430
  %452 = vmatprep.subr.bf16.mxu0 0
  %453 = vmatpush1.bf16.msra.mxu0 %v431
  %454 = vmatprep.subr.bf16.mxu0 0
  %455 = vmatpush1.bf16.msra.mxu0 %v432
  %456 = vmatprep.subr.bf16.mxu0 0
  %457 = vmatpush1.bf16.msra.mxu0 %v433
  %458 = vmatprep.subr.bf16.mxu0 0
  %459 = vmatpush1.bf16.msra.mxu0 0
  %460 = vmatprep.subr.bf16.mxu0 0
  %461 = vmatpush1.bf16.msra.mxu0 0
  %462 = vmatprep.subr.bf16.mxu0 0
  %463 = vmatpush1.bf16.msra.mxu0 0
  %464 = vmatprep.subr.bf16.mxu0 0
  %465 = vmatpush1.bf16.msra.mxu0 0
  %466 = vmatprep.subr.bf16.mxu0 0
  %467 = vmatpush1.bf16.msra.mxu0 0
  %468 = vmatprep.subr.bf16.mxu0 0
  %469 = vmatpush1.bf16.msra.mxu0 0
  %470 = vmatprep.subr.bf16.mxu0 0
  %471 = vmatpush1.bf16.msra.mxu0 0
  %472 = vmatprep.subr.bf16.mxu0 0
  %473 = vmatpush1.bf16.msra.mxu0 0
  %474 = vmatprep.mubr.bf16.mxu0 0
  %475 = vmatmul.mubr.bf16.gmra.mrb[0].mxu0 %v258
  %v476 = vpop.f32.mrb[0].mxu0
  %v477 = vadd.f32 0.0, %v476
  %v478 = vpop.f32.mrb[0].mxu0
  %v479 = vpop.f32.mrb[0].mxu0
  %v480 = vadd.f32 0.0, %v479
  %v481 = vpop.f32.mrb[0].mxu0
  %482 = vmatprep.mubr.bf16.mxu0 0
  %483 = vmatmul.mubr.bf16.gmra.mrb[0].mxu0 %v259
  %v484 = vpop.f32.mrb[0].mxu0
  %v485 = vadd.f32 0.0, %v484
  %v486 = vpop.f32.mrb[0].mxu0
  %v487 = vpop.f32.mrb[0].mxu0
  %v488 = vadd.f32 0.0, %v487
  %v489 = vpop.f32.mrb[0].mxu0
  %490 = vdwg.mxu0
  %s491 = scalar_lea.vmem %s2, 32
  %v492 = vld [vmem:[%s491] sm:$0xff]
  %v493 = vld [vmem:[%s491 + $0x8] sm:$0xff]
  %v494 = vld [vmem:[%s491 + $0x10] sm:$0xff]
  %v495 = vld [vmem:[%s491 + $0x18] sm:$0xff]
  %vm496 = vcmask 261120
  %v498 = vsel %vm496, %v492, 0
  %v501 = vsel %vm496, %v493, 0
  %v504 = vsel %vm496, %v494, 0
  %v507 = vsel %vm496, %v495, 0
  %509 = vmatprep.subr.mxu0 0.0
  %510 = vmatpush1.msra.mxu0 %v477
  %511 = vmatprep.subr.mxu0 0.0
  %512 = vmatpush1.msra.mxu0 %v480
  %513 = vmatprep.subr.mxu0 0.0
  %514 = vmatpush1.msra.mxu0 %v485
  %515 = vmatprep.subr.mxu0 0.0
  %516 = vmatpush1.msra.mxu0 %v488
  %517 = vmatprep.subr.mxu0 0.0
  %518 = vmatpush1.msra.mxu0 0.0
  %519 = vmatprep.subr.mxu0 0.0
  %520 = vmatpush1.msra.mxu0 0.0
  %521 = vmatprep.subr.mxu0 0.0
  %522 = vmatpush1.msra.mxu0 0.0
  %523 = vmatprep.subr.mxu0 0.0
  %524 = vmatpush1.msra.mxu0 0.0
  %525 = vmatprep.subr.mxu0 0.0
  %526 = vmatpush1.msra.mxu0 0.0
  %527 = vmatprep.subr.mxu0 0.0
  %528 = vmatpush1.msra.mxu0 0.0
  %529 = vmatprep.subr.mxu0 0.0
  %530 = vmatpush1.msra.mxu0 0.0
  %531 = vmatprep.subr.mxu0 0.0
  %532 = vmatpush1.msra.mxu0 0.0
  %533 = vmatprep.subr.mxu0 0.0
  %534 = vmatpush1.msra.mxu0 0.0
  %535 = vmatprep.subr.mxu0 0.0
  %536 = vmatpush1.msra.mxu0 0.0
  %537 = vmatprep.subr.mxu0 0.0
  %538 = vmatpush1.msra.mxu0 0.0
  %539 = vmatprep.subr.mxu0 0.0
  %540 = vmatpush1.msra.mxu0 0.0
  %541 = vmatprep.subr.mxu0 0.0
  %542 = vmatpush1.msra.mxu0 0.0
  %543 = vmatprep.subr.mxu0 0.0
  %544 = vmatpush1.msra.mxu0 0.0
  %545 = vmatprep.subr.mxu0 0.0
  %546 = vmatpush1.msra.mxu0 0.0
  %547 = vmatprep.subr.mxu0 0.0
  %548 = vmatpush1.msra.mxu0 0.0
  %549 = vmatprep.subr.mxu0 0.0
  %550 = vmatpush1.msra.mxu0 0.0
  %551 = vmatprep.subr.mxu0 0.0
  %552 = vmatpush1.msra.mxu0 0.0
  %553 = vmatprep.subr.mxu0 0.0
  %554 = vmatpush1.msra.mxu0 0.0
  %555 = vmatprep.subr.mxu0 0.0
  %556 = vmatpush1.msra.mxu0 0.0
  %557 = vmatprep.subr.mxu0 0.0
  %558 = vmatpush1.msra.mxu0 0.0
  %559 = vmatprep.subr.mxu0 0.0
  %560 = vmatpush1.msra.mxu0 0.0
  %561 = vmatprep.subr.mxu0 0.0
  %562 = vmatpush1.msra.mxu0 0.0
  %563 = vmatprep.subr.mxu0 0.0
  %564 = vmatpush1.msra.mxu0 0.0
  %565 = vmatprep.subr.mxu0 0.0
  %566 = vmatpush1.msra.mxu0 0.0
  %567 = vmatprep.subr.mxu0 0.0
  %568 = vmatpush1.msra.mxu0 0.0
  %569 = vmatprep.subr.mxu0 0.0
  %570 = vmatpush1.msra.mxu0 0.0
  %571 = vmatprep.subr.mxu0 0.0
  %572 = vmatpush1.msra.mxu0 0.0
  %573 = vmatprep.mubr.f32.mxu0 0.0
  %574 = vmatmul.mubr.f32.gmra.mrb[0].mxu0 %v498
  %v575 = vpop.f32.mrb[0].mxu0
  %v576 = vadd.f32 0.0, %v575
  %v577 = vpop.f32.mrb[0].mxu0
  %578 = vmatprep.mubr.f32.mxu0 0.0
  %579 = vmatmul.mubr.f32.gmra.mrb[0].mxu0 %v501
  %v580 = vpop.f32.mrb[0].mxu0
  %v581 = vadd.f32 0.0, %v580
  %v582 = vpop.f32.mrb[0].mxu0
  %583 = vmatprep.mubr.f32.mxu0 0.0
  %584 = vmatmul.mubr.f32.gmra.mrb[0].mxu0 %v504
  %v585 = vpop.f32.mrb[0].mxu0
  %v586 = vadd.f32 0.0, %v585
  %v587 = vpop.f32.mrb[0].mxu0
  %588 = vmatprep.mubr.f32.mxu0 0.0
  %589 = vmatmul.mubr.f32.gmra.mrb[0].mxu0 %v507
  %v590 = vpop.f32.mrb[0].mxu0
  %v591 = vadd.f32 0.0, %v590
  %v592 = vpop.f32.mrb[0].mxu0
  %593 = vdwg.mxu0
  %v595 = vsel %vm496, %v373, 0
  %v598 = vsel %vm496, %v374, 0
  %v601 = vsel %vm496, %v375, 0
  %v604 = vsel %vm496, %v376, 0
  %606 = vmatprep.subr.mxu0 0.0
  %607 = vmatpush1.msra.mxu0 %v359
  %608 = vmatprep.subr.mxu0 0.0
  %609 = vmatpush1.msra.mxu0 %v362
  %610 = vmatprep.subr.mxu0 0.0
  %611 = vmatpush1.msra.mxu0 %v367
  %612 = vmatprep.subr.mxu0 0.0
  %613 = vmatpush1.msra.mxu0 %v370
  %614 = vmatprep.subr.mxu0 0.0
  %615 = vmatpush1.msra.mxu0 0.0
  %616 = vmatprep.subr.mxu0 0.0
  %617 = vmatpush1.msra.mxu0 0.0
  %618 = vmatprep.subr.mxu0 0.0
  %619 = vmatpush1.msra.mxu0 0.0
  %620 = vmatprep.subr.mxu0 0.0
  %621 = vmatpush1.msra.mxu0 0.0
  %622 = vmatprep.subr.mxu0 0.0
  %623 = vmatpush1.msra.mxu0 0.0
  %624 = vmatprep.subr.mxu0 0.0
  %625 = vmatpush1.msra.mxu0 0.0
  %626 = vmatprep.subr.mxu0 0.0
  %627 = vmatpush1.msra.mxu0 0.0
  %628 = vmatprep.subr.mxu0 0.0
  %629 = vmatpush1.msra.mxu0 0.0
  %630 = vmatprep.subr.mxu0 0.0
  %631 = vmatpush1.msra.mxu0 0.0
  %632 = vmatprep.subr.mxu0 0.0
  %633 = vmatpush1.msra.mxu0 0.0
  %634 = vmatprep.subr.mxu0 0.0
  %635 = vmatpush1.msra.mxu0 0.0
  %636 = vmatprep.subr.mxu0 0.0
  %637 = vmatpush1.msra.mxu0 0.0
  %638 = vmatprep.subr.mxu0 0.0
  %639 = vmatpush1.msra.mxu0 0.0
  %640 = vmatprep.subr.mxu0 0.0
  %641 = vmatpush1.msra.mxu0 0.0
  %642 = vmatprep.subr.mxu0 0.0
  %643 = vmatpush1.msra.mxu0 0.0
  %644 = vmatprep.subr.mxu0 0.0
  %645 = vmatpush1.msra.mxu0 0.0
  %646 = vmatprep.subr.mxu0 0.0
  %647 = vmatpush1.msra.mxu0 0.0
  %648 = vmatprep.subr.mxu0 0.0
  %649 = vmatpush1.msra.mxu0 0.0
  %650 = vmatprep.subr.mxu0 0.0
  %651 = vmatpush1.msra.mxu0 0.0
  %652 = vmatprep.subr.mxu0 0.0
  %653 = vmatpush1.msra.mxu0 0.0
  %654 = vmatprep.subr.mxu0 0.0
  %655 = vmatpush1.msra.mxu0 0.0
  %656 = vmatprep.subr.mxu0 0.0
  %657 = vmatpush1.msra.mxu0 0.0
  %658 = vmatprep.subr.mxu0 0.0
  %659 = vmatpush1.msra.mxu0 0.0
  %660 = vmatprep.subr.mxu0 0.0
  %661 = vmatpush1.msra.mxu0 0.0
  %662 = vmatprep.subr.mxu0 0.0
  %663 = vmatpush1.msra.mxu0 0.0
  %664 = vmatprep.subr.mxu0 0.0
  %665 = vmatpush1.msra.mxu0 0.0
  %666 = vmatprep.subr.mxu0 0.0
  %667 = vmatpush1.msra.mxu0 0.0
  %668 = vmatprep.subr.mxu0 0.0
  %669 = vmatpush1.msra.mxu0 0.0
  %670 = vmatprep.mubr.f32.mxu0 0.0
  %671 = vmatmul.mubr.f32.gmra.mrb[0].mxu0 %v595
  %v672 = vpop.f32.mrb[0].mxu0
  %v673 = vadd.f32 %v576, %v672
  %v674 = vpop.f32.mrb[0].mxu0
  %675 = vmatprep.mubr.f32.mxu0 0.0
  %676 = vmatmul.mubr.f32.gmra.mrb[0].mxu0 %v598
  %v677 = vpop.f32.mrb[0].mxu0
  %v678 = vadd.f32 %v581, %v677
  %v679 = vpop.f32.mrb[0].mxu0
  %680 = vmatprep.mubr.f32.mxu0 0.0
  %681 = vmatmul.mubr.f32.gmra.mrb[0].mxu0 %v601
  %v682 = vpop.f32.mrb[0].mxu0
  %v683 = vadd.f32 %v586, %v682
  %v684 = vpop.f32.mrb[0].mxu0
  %685 = vmatprep.mubr.f32.mxu0 0.0
  %686 = vmatmul.mubr.f32.gmra.mrb[0].mxu0 %v604
  %v687 = vpop.f32.mrb[0].mxu0
  %v688 = vadd.f32 %v591, %v687
  %v689 = vpop.f32.mrb[0].mxu0
  %690 = vdwg.mxu0
  %s691 = scalar_lea.vmem %s5, 128
  %v692 = vld [vmem:[%s691] sm:$0xf]
  %v693 = vld [vmem:[%s691 + $0x4] sm:$0xf]
  %v694 = vld [vmem:[%s691 + $0x8] sm:$0xf]
  %v695 = vld [vmem:[%s691 + $0xc] sm:$0xf]
  %v696 = vld [vmem:[%s691 + $0x10] sm:$0xf]
  %v697 = vld [vmem:[%s691 + $0x14] sm:$0xf]
  %v698 = vld [vmem:[%s691 + $0x18] sm:$0xf]
  %v699 = vld [vmem:[%s691 + $0x1c] sm:$0xf]
  %v700 = vld [vmem:[%s691 + $0x20] sm:$0xf]
  %v701 = vld [vmem:[%s691 + $0x24] sm:$0xf]
  %v702 = vld [vmem:[%s691 + $0x28] sm:$0xf]
  %v703 = vld [vmem:[%s691 + $0x2c] sm:$0xf]
  %v704 = vld [vmem:[%s691 + $0x30] sm:$0xf]
  %v705 = vld [vmem:[%s691 + $0x34] sm:$0xf]
  %v706 = vld [vmem:[%s691 + $0x38] sm:$0xf]
  %v707 = vld [vmem:[%s691 + $0x3c] sm:$0xf]
  %v724 = vunpack.c.l.b16 %v692
  %v725 = vunpack.c.l.b16 %v693
  %v726 = vunpack.c.l.b16 %v694
  %v727 = vunpack.c.l.b16 %v695
  %v728 = vunpack.c.l.b16 %v696
  %v729 = vunpack.c.l.b16 %v697
  %v730 = vunpack.c.l.b16 %v698
  %v731 = vunpack.c.l.b16 %v699
  %v732 = vunpack.c.l.b16 %v700
  %v733 = vunpack.c.l.b16 %v701
  %v734 = vunpack.c.l.b16 %v702
  %v735 = vunpack.c.l.b16 %v703
  %v736 = vunpack.c.l.b16 %v704
  %v737 = vunpack.c.l.b16 %v705
  %v738 = vunpack.c.l.b16 %v706
  %v739 = vunpack.c.l.b16 %v707
  %v740 = vpack.c.b16 %v725, %v724
  %v741 = vpack.c.b16 %v727, %v726
  %v742 = vpack.c.b16 %v729, %v728
  %v743 = vpack.c.b16 %v731, %v730
  %v744 = vpack.c.b16 %v733, %v732
  %v745 = vpack.c.b16 %v735, %v734
  %v746 = vpack.c.b16 %v737, %v736
  %v747 = vpack.c.b16 %v739, %v738
  %756 = vmatprep.subr.bf16.mxu0 0
  %757 = vmatpush1.bf16.msra.mxu0 %v740
  %758 = vmatprep.subr.bf16.mxu0 0
  %759 = vmatpush1.bf16.msra.mxu0 %v741
  %760 = vmatprep.subr.bf16.mxu0 0
  %761 = vmatpush1.bf16.msra.mxu0 %v742
  %762 = vmatprep.subr.bf16.mxu0 0
  %763 = vmatpush1.bf16.msra.mxu0 %v743
  %764 = vmatprep.subr.bf16.mxu0 0
  %765 = vmatpush1.bf16.msra.mxu0 %v744
  %766 = vmatprep.subr.bf16.mxu0 0
  %767 = vmatpush1.bf16.msra.mxu0 %v745
  %768 = vmatprep.subr.bf16.mxu0 0
  %769 = vmatpush1.bf16.msra.mxu0 %v746
  %770 = vmatprep.subr.bf16.mxu0 0
  %771 = vmatpush1.bf16.msra.mxu0 %v747
  %772 = vmatprep.subr.bf16.mxu0 0
  %773 = vmatpush1.bf16.msra.mxu0 0
  %774 = vmatprep.subr.bf16.mxu0 0
  %775 = vmatpush1.bf16.msra.mxu0 0
  %776 = vmatprep.subr.bf16.mxu0 0
  %777 = vmatpush1.bf16.msra.mxu0 0
  %778 = vmatprep.subr.bf16.mxu0 0
  %779 = vmatpush1.bf16.msra.mxu0 0
  %780 = vmatprep.subr.bf16.mxu0 0
  %781 = vmatpush1.bf16.msra.mxu0 0
  %782 = vmatprep.subr.bf16.mxu0 0
  %783 = vmatpush1.bf16.msra.mxu0 0
  %784 = vmatprep.subr.bf16.mxu0 0
  %785 = vmatpush1.bf16.msra.mxu0 0
  %786 = vmatprep.subr.bf16.mxu0 0
  %787 = vmatpush1.bf16.msra.mxu0 0
  %788 = vmatprep.mubr.bf16.mxu0 0
  %789 = vmatmul.mubr.bf16.gmra.mrb[0].mxu0 %v258
  %v790 = vpop.f32.mrb[0].mxu0
  %v791 = vadd.f32 0.0, %v790
  %v792 = vpop.f32.mrb[0].mxu0
  %v793 = vpop.f32.mrb[0].mxu0
  %v794 = vadd.f32 0.0, %v793
  %v795 = vpop.f32.mrb[0].mxu0
  %796 = vmatprep.mubr.bf16.mxu0 0
  %797 = vmatmul.mubr.bf16.gmra.mrb[0].mxu0 %v259
  %v798 = vpop.f32.mrb[0].mxu0
  %v799 = vadd.f32 0.0, %v798
  %v800 = vpop.f32.mrb[0].mxu0
  %v801 = vpop.f32.mrb[0].mxu0
  %v802 = vadd.f32 0.0, %v801
  %v803 = vpop.f32.mrb[0].mxu0
  %804 = vdwg.mxu0
  %s805 = scalar_lea.vmem %s2, 64
  %v806 = vld [vmem:[%s805] sm:$0xff]
  %v807 = vld [vmem:[%s805 + $0x8] sm:$0xff]
  %v808 = vld [vmem:[%s805 + $0x10] sm:$0xff]
  %v809 = vld [vmem:[%s805 + $0x18] sm:$0xff]
  %v811 = vsel %vm496, %v806, 0
  %v814 = vsel %vm496, %v807, 0
  %v817 = vsel %vm496, %v808, 0
  %v820 = vsel %vm496, %v809, 0
  %822 = vmatprep.subr.mxu0 0.0
  %823 = vmatpush1.msra.mxu0 %v791
  %824 = vmatprep.subr.mxu0 0.0
  %825 = vmatpush1.msra.mxu0 %v794
  %826 = vmatprep.subr.mxu0 0.0
  %827 = vmatpush1.msra.mxu0 %v799
  %828 = vmatprep.subr.mxu0 0.0
  %829 = vmatpush1.msra.mxu0 %v802
  %830 = vmatprep.subr.mxu0 0.0
  %831 = vmatpush1.msra.mxu0 0.0
  %832 = vmatprep.subr.mxu0 0.0
  %833 = vmatpush1.msra.mxu0 0.0
  %834 = vmatprep.subr.mxu0 0.0
  %835 = vmatpush1.msra.mxu0 0.0
  %836 = vmatprep.subr.mxu0 0.0
  %837 = vmatpush1.msra.mxu0 0.0
  %838 = vmatprep.subr.mxu0 0.0
  %839 = vmatpush1.msra.mxu0 0.0
  %840 = vmatprep.subr.mxu0 0.0
  %841 = vmatpush1.msra.mxu0 0.0
  %842 = vmatprep.subr.mxu0 0.0
  %843 = vmatpush1.msra.mxu0 0.0
  %844 = vmatprep.subr.mxu0 0.0
  %845 = vmatpush1.msra.mxu0 0.0
  %846 = vmatprep.subr.mxu0 0.0
  %847 = vmatpush1.msra.mxu0 0.0
  %848 = vmatprep.subr.mxu0 0.0
  %849 = vmatpush1.msra.mxu0 0.0
  %850 = vmatprep.subr.mxu0 0.0
  %851 = vmatpush1.msra.mxu0 0.0
  %852 = vmatprep.subr.mxu0 0.0
  %853 = vmatpush1.msra.mxu0 0.0
  %854 = vmatprep.subr.mxu0 0.0
  %855 = vmatpush1.msra.mxu0 0.0
  %856 = vmatprep.subr.mxu0 0.0
  %857 = vmatpush1.msra.mxu0 0.0
  %858 = vmatprep.subr.mxu0 0.0
  %859 = vmatpush1.msra.mxu0 0.0
  %860 = vmatprep.subr.mxu0 0.0
  %861 = vmatpush1.msra.mxu0 0.0
  %862 = vmatprep.subr.mxu0 0.0
  %863 = vmatpush1.msra.mxu0 0.0
  %864 = vmatprep.subr.mxu0 0.0
  %865 = vmatpush1.msra.mxu0 0.0
  %866 = vmatprep.subr.mxu0 0.0
  %867 = vmatpush1.msra.mxu0 0.0
  %868 = vmatprep.subr.mxu0 0.0
  %869 = vmatpush1.msra.mxu0 0.0
  %870 = vmatprep.subr.mxu0 0.0
  %871 = vmatpush1.msra.mxu0 0.0
  %872 = vmatprep.subr.mxu0 0.0
  %873 = vmatpush1.msra.mxu0 0.0
  %874 = vmatprep.subr.mxu0 0.0
  %875 = vmatpush1.msra.mxu0 0.0
  %876 = vmatprep.subr.mxu0 0.0
  %877 = vmatpush1.msra.mxu0 0.0
  %878 = vmatprep.subr.mxu0 0.0
  %879 = vmatpush1.msra.mxu0 0.0
  %880 = vmatprep.subr.mxu0 0.0
  %881 = vmatpush1.msra.mxu0 0.0
  %882 = vmatprep.subr.mxu0 0.0
  %883 = vmatpush1.msra.mxu0 0.0
  %884 = vmatprep.subr.mxu0 0.0
  %885 = vmatpush1.msra.mxu0 0.0
  %886 = vmatprep.mubr.f32.mxu0 0.0
  %887 = vmatmul.mubr.f32.gmra.mrb[0].mxu0 %v811
  %v888 = vpop.f32.mrb[0].mxu0
  %v889 = vadd.f32 0.0, %v888
  %v890 = vpop.f32.mrb[0].mxu0
  %891 = vmatprep.mubr.f32.mxu0 0.0
  %892 = vmatmul.mubr.f32.gmra.mrb[0].mxu0 %v814
  %v893 = vpop.f32.mrb[0].mxu0
  %v894 = vadd.f32 0.0, %v893
  %v895 = vpop.f32.mrb[0].mxu0
  %896 = vmatprep.mubr.f32.mxu0 0.0
  %897 = vmatmul.mubr.f32.gmra.mrb[0].mxu0 %v817
  %v898 = vpop.f32.mrb[0].mxu0
  %v899 = vadd.f32 0.0, %v898
  %v900 = vpop.f32.mrb[0].mxu0
  %901 = vmatprep.mubr.f32.mxu0 0.0
  %902 = vmatmul.mubr.f32.gmra.mrb[0].mxu0 %v820
  %v903 = vpop.f32.mrb[0].mxu0
  %v904 = vadd.f32 0.0, %v903
  %v905 = vpop.f32.mrb[0].mxu0
  %906 = vdwg.mxu0
  %v907 = vadd.f32 %v673, %v889
  %v908 = vadd.f32 %v678, %v894
  %v909 = vadd.f32 %v683, %v899
  %v910 = vadd.f32 %v688, %v904
  %s911 = scalar_lea.vmem %s5, 192
  %v912 = vld [vmem:[%s911] sm:$0xf]
  %v913 = vld [vmem:[%s911 + $0x4] sm:$0xf]
  %v914 = vld [vmem:[%s911 + $0x8] sm:$0xf]
  %v915 = vld [vmem:[%s911 + $0xc] sm:$0xf]
  %v916 = vld [vmem:[%s911 + $0x10] sm:$0xf]
  %v917 = vld [vmem:[%s911 + $0x14] sm:$0xf]
  %v918 = vld [vmem:[%s911 + $0x18] sm:$0xf]
  %v919 = vld [vmem:[%s911 + $0x1c] sm:$0xf]
  %v920 = vld [vmem:[%s911 + $0x20] sm:$0xf]
  %v921 = vld [vmem:[%s911 + $0x24] sm:$0xf]
  %v922 = vld [vmem:[%s911 + $0x28] sm:$0xf]
  %v923 = vld [vmem:[%s911 + $0x2c] sm:$0xf]
  %v924 = vld [vmem:[%s911 + $0x30] sm:$0xf]
  %v925 = vld [vmem:[%s911 + $0x34] sm:$0xf]
  %v926 = vld [vmem:[%s911 + $0x38] sm:$0xf]
  %v927 = vld [vmem:[%s911 + $0x3c] sm:$0xf]
  %v944 = vunpack.c.l.b16 %v912
  %v945 = vunpack.c.l.b16 %v913
  %v946 = vunpack.c.l.b16 %v914
  %v947 = vunpack.c.l.b16 %v915
  %v948 = vunpack.c.l.b16 %v916
  %v949 = vunpack.c.l.b16 %v917
  %v950 = vunpack.c.l.b16 %v918
  %v951 = vunpack.c.l.b16 %v919
  %v952 = vunpack.c.l.b16 %v920
  %v953 = vunpack.c.l.b16 %v921
  %v954 = vunpack.c.l.b16 %v922
  %v955 = vunpack.c.l.b16 %v923
  %v956 = vunpack.c.l.b16 %v924
  %v957 = vunpack.c.l.b16 %v925
  %v958 = vunpack.c.l.b16 %v926
  %v959 = vunpack.c.l.b16 %v927
  %v960 = vpack.c.b16 %v945, %v944
  %v961 = vpack.c.b16 %v947, %v946
  %v962 = vpack.c.b16 %v949, %v948
  %v963 = vpack.c.b16 %v951, %v950
  %v964 = vpack.c.b16 %v953, %v952
  %v965 = vpack.c.b16 %v955, %v954
  %v966 = vpack.c.b16 %v957, %v956
  %v967 = vpack.c.b16 %v959, %v958
  %976 = vmatprep.subr.bf16.mxu0 0
  %977 = vmatpush1.bf16.msra.mxu0 %v960
  %978 = vmatprep.subr.bf16.mxu0 0
  %979 = vmatpush1.bf16.msra.mxu0 %v961
  %980 = vmatprep.subr.bf16.mxu0 0
  %981 = vmatpush1.bf16.msra.mxu0 %v962
  %982 = vmatprep.subr.bf16.mxu0 0
  %983 = vmatpush1.bf16.msra.mxu0 %v963
  %984 = vmatprep.subr.bf16.mxu0 0
  %985 = vmatpush1.bf16.msra.mxu0 %v964
  %986 = vmatprep.subr.bf16.mxu0 0
  %987 = vmatpush1.bf16.msra.mxu0 %v965
  %988 = vmatprep.subr.bf16.mxu0 0
  %989 = vmatpush1.bf16.msra.mxu0 %v966
  %990 = vmatprep.subr.bf16.mxu0 0
  %991 = vmatpush1.bf16.msra.mxu0 %v967
  %992 = vmatprep.subr.bf16.mxu0 0
  %993 = vmatpush1.bf16.msra.mxu0 0
  %994 = vmatprep.subr.bf16.mxu0 0
  %995 = vmatpush1.bf16.msra.mxu0 0
  %996 = vmatprep.subr.bf16.mxu0 0
  %997 = vmatpush1.bf16.msra.mxu0 0
  %998 = vmatprep.subr.bf16.mxu0 0
  %999 = vmatpush1.bf16.msra.mxu0 0
  %1000 = vmatprep.subr.bf16.mxu0 0
  %1001 = vmatpush1.bf16.msra.mxu0 0
  %1002 = vmatprep.subr.bf16.mxu0 0
  %1003 = vmatpush1.bf16.msra.mxu0 0
  %1004 = vmatprep.subr.bf16.mxu0 0
  %1005 = vmatpush1.bf16.msra.mxu0 0
  %1006 = vmatprep.subr.bf16.mxu0 0
  %1007 = vmatpush1.bf16.msra.mxu0 0
  %1008 = vmatprep.mubr.bf16.mxu0 0
  %1009 = vmatmul.mubr.bf16.gmra.mrb[0].mxu0 %v258
  %v1010 = vpop.f32.mrb[0].mxu0
  %v1011 = vadd.f32 0.0, %v1010
  %v1012 = vpop.f32.mrb[0].mxu0
  %v1013 = vpop.f32.mrb[0].mxu0
  %v1014 = vadd.f32 0.0, %v1013
  %v1015 = vpop.f32.mrb[0].mxu0
  %1016 = vmatprep.mubr.bf16.mxu0 0
  %1017 = vmatmul.mubr.bf16.gmra.mrb[0].mxu0 %v259
  %v1018 = vpop.f32.mrb[0].mxu0
  %v1019 = vadd.f32 0.0, %v1018
  %v1020 = vpop.f32.mrb[0].mxu0
  %v1021 = vpop.f32.mrb[0].mxu0
  %v1022 = vadd.f32 0.0, %v1021
  %v1023 = vpop.f32.mrb[0].mxu0
  %1024 = vdwg.mxu0
  %v1025 = vadd.f32 %v907, %v1011
  %v1026 = vadd.f32 %v908, %v1014
  %v1027 = vadd.f32 %v909, %v1019
  %v1028 = vadd.f32 %v910, %v1022
  %s1029 = scalar_lea.vmem %s5, 256
  %v1030 = vld [vmem:[%s1029] sm:$0xf]
  %v1031 = vld [vmem:[%s1029 + $0x4] sm:$0xf]
  %v1032 = vld [vmem:[%s1029 + $0x8] sm:$0xf]
  %v1033 = vld [vmem:[%s1029 + $0xc] sm:$0xf]
  %v1034 = vld [vmem:[%s1029 + $0x10] sm:$0xf]
  %v1035 = vld [vmem:[%s1029 + $0x14] sm:$0xf]
  %v1036 = vld [vmem:[%s1029 + $0x18] sm:$0xf]
  %v1037 = vld [vmem:[%s1029 + $0x1c] sm:$0xf]
  %v1038 = vld [vmem:[%s1029 + $0x20] sm:$0xf]
  %v1039 = vld [vmem:[%s1029 + $0x24] sm:$0xf]
  %v1040 = vld [vmem:[%s1029 + $0x28] sm:$0xf]
  %v1041 = vld [vmem:[%s1029 + $0x2c] sm:$0xf]
  %v1042 = vld [vmem:[%s1029 + $0x30] sm:$0xf]
  %v1043 = vld [vmem:[%s1029 + $0x34] sm:$0xf]
  %v1044 = vld [vmem:[%s1029 + $0x38] sm:$0xf]
  %v1045 = vld [vmem:[%s1029 + $0x3c] sm:$0xf]
  %v1062 = vunpack.c.l.b16 %v1030
  %v1063 = vunpack.c.l.b16 %v1031
  %v1064 = vunpack.c.l.b16 %v1032
  %v1065 = vunpack.c.l.b16 %v1033
  %v1066 = vunpack.c.l.b16 %v1034
  %v1067 = vunpack.c.l.b16 %v1035
  %v1068 = vunpack.c.l.b16 %v1036
  %v1069 = vunpack.c.l.b16 %v1037
  %v1070 = vunpack.c.l.b16 %v1038
  %v1071 = vunpack.c.l.b16 %v1039
  %v1072 = vunpack.c.l.b16 %v1040
  %v1073 = vunpack.c.l.b16 %v1041
  %v1074 = vunpack.c.l.b16 %v1042
  %v1075 = vunpack.c.l.b16 %v1043
  %v1076 = vunpack.c.l.b16 %v1044
  %v1077 = vunpack.c.l.b16 %v1045
  %v1078 = vpack.c.b16 %v1063, %v1062
  %v1079 = vpack.c.b16 %v1065, %v1064
  %v1080 = vpack.c.b16 %v1067, %v1066
  %v1081 = vpack.c.b16 %v1069, %v1068
  %v1082 = vpack.c.b16 %v1071, %v1070
  %v1083 = vpack.c.b16 %v1073, %v1072
  %v1084 = vpack.c.b16 %v1075, %v1074
  %v1085 = vpack.c.b16 %v1077, %v1076
  %1094 = vmatprep.subr.bf16.mxu0 0
  %1095 = vmatpush1.bf16.msra.mxu0 %v1078
  %1096 = vmatprep.subr.bf16.mxu0 0
  %1097 = vmatpush1.bf16.msra.mxu0 %v1079
  %1098 = vmatprep.subr.bf16.mxu0 0
  %1099 = vmatpush1.bf16.msra.mxu0 %v1080
  %1100 = vmatprep.subr.bf16.mxu0 0
  %1101 = vmatpush1.bf16.msra.mxu0 %v1081
  %1102 = vmatprep.subr.bf16.mxu0 0
  %1103 = vmatpush1.bf16.msra.mxu0 %v1082
  %1104 = vmatprep.subr.bf16.mxu0 0
  %1105 = vmatpush1.bf16.msra.mxu0 %v1083
  %1106 = vmatprep.subr.bf16.mxu0 0
  %1107 = vmatpush1.bf16.msra.mxu0 %v1084
  %1108 = vmatprep.subr.bf16.mxu0 0
  %1109 = vmatpush1.bf16.msra.mxu0 %v1085
  %1110 = vmatprep.subr.bf16.mxu0 0
  %1111 = vmatpush1.bf16.msra.mxu0 0
  %1112 = vmatprep.subr.bf16.mxu0 0
  %1113 = vmatpush1.bf16.msra.mxu0 0
  %1114 = vmatprep.subr.bf16.mxu0 0
  %1115 = vmatpush1.bf16.msra.mxu0 0
  %1116 = vmatprep.subr.bf16.mxu0 0
  %1117 = vmatpush1.bf16.msra.mxu0 0
  %1118 = vmatprep.subr.bf16.mxu0 0
  %1119 = vmatpush1.bf16.msra.mxu0 0
  %1120 = vmatprep.subr.bf16.mxu0 0
  %1121 = vmatpush1.bf16.msra.mxu0 0
  %1122 = vmatprep.subr.bf16.mxu0 0
  %1123 = vmatpush1.bf16.msra.mxu0 0
  %1124 = vmatprep.subr.bf16.mxu0 0
  %1125 = vmatpush1.bf16.msra.mxu0 0
  %1126 = vmatprep.mubr.bf16.mxu0 0
  %1127 = vmatmul.mubr.bf16.gmra.mrb[0].mxu0 %v258
  %v1128 = vpop.f32.mrb[0].mxu0
  %v1129 = vadd.f32 0.0, %v1128
  %v1130 = vpop.f32.mrb[0].mxu0
  %v1131 = vpop.f32.mrb[0].mxu0
  %v1132 = vadd.f32 0.0, %v1131
  %v1133 = vpop.f32.mrb[0].mxu0
  %1134 = vmatprep.mubr.bf16.mxu0 0
  %1135 = vmatmul.mubr.bf16.gmra.mrb[0].mxu0 %v259
  %v1136 = vpop.f32.mrb[0].mxu0
  %v1137 = vadd.f32 0.0, %v1136
  %v1138 = vpop.f32.mrb[0].mxu0
  %v1139 = vpop.f32.mrb[0].mxu0
  %v1140 = vadd.f32 0.0, %v1139
  %v1141 = vpop.f32.mrb[0].mxu0
  %1142 = vdwg.mxu0
  %s1143 = scalar_lea.vmem %s2, 128
  %v1144 = vld [vmem:[%s1143] sm:$0xff]
  %v1145 = vld [vmem:[%s1143 + $0x8] sm:$0xff]
  %v1146 = vld [vmem:[%s1143 + $0x10] sm:$0xff]
  %v1147 = vld [vmem:[%s1143 + $0x18] sm:$0xff]
  %v1149 = vsel %vm496, %v1144, 0
  %v1152 = vsel %vm496, %v1145, 0
  %v1155 = vsel %vm496, %v1146, 0
  %v1158 = vsel %vm496, %v1147, 0
  %1160 = vmatprep.subr.mxu0 0.0
  %1161 = vmatpush1.msra.mxu0 %v1129
  %1162 = vmatprep.subr.mxu0 0.0
  %1163 = vmatpush1.msra.mxu0 %v1132
  %1164 = vmatprep.subr.mxu0 0.0
  %1165 = vmatpush1.msra.mxu0 %v1137
  %1166 = vmatprep.subr.mxu0 0.0
  %1167 = vmatpush1.msra.mxu0 %v1140
  %1168 = vmatprep.subr.mxu0 0.0
  %1169 = vmatpush1.msra.mxu0 0.0
  %1170 = vmatprep.subr.mxu0 0.0
  %1171 = vmatpush1.msra.mxu0 0.0
  %1172 = vmatprep.subr.mxu0 0.0
  %1173 = vmatpush1.msra.mxu0 0.0
  %1174 = vmatprep.subr.mxu0 0.0
  %1175 = vmatpush1.msra.mxu0 0.0
  %1176 = vmatprep.subr.mxu0 0.0
  %1177 = vmatpush1.msra.mxu0 0.0
  %1178 = vmatprep.subr.mxu0 0.0
  %1179 = vmatpush1.msra.mxu0 0.0
  %1180 = vmatprep.subr.mxu0 0.0
  %1181 = vmatpush1.msra.mxu0 0.0
  %1182 = vmatprep.subr.mxu0 0.0
  %1183 = vmatpush1.msra.mxu0 0.0
  %1184 = vmatprep.subr.mxu0 0.0
  %1185 = vmatpush1.msra.mxu0 0.0
  %1186 = vmatprep.subr.mxu0 0.0
  %1187 = vmatpush1.msra.mxu0 0.0
  %1188 = vmatprep.subr.mxu0 0.0
  %1189 = vmatpush1.msra.mxu0 0.0
  %1190 = vmatprep.subr.mxu0 0.0
  %1191 = vmatpush1.msra.mxu0 0.0
  %1192 = vmatprep.subr.mxu0 0.0
  %1193 = vmatpush1.msra.mxu0 0.0
  %1194 = vmatprep.subr.mxu0 0.0
  %1195 = vmatpush1.msra.mxu0 0.0
  %1196 = vmatprep.subr.mxu0 0.0
  %1197 = vmatpush1.msra.mxu0 0.0
  %1198 = vmatprep.subr.mxu0 0.0
  %1199 = vmatpush1.msra.mxu0 0.0
  %1200 = vmatprep.subr.mxu0 0.0
  %1201 = vmatpush1.msra.mxu0 0.0
  %1202 = vmatprep.subr.mxu0 0.0
  %1203 = vmatpush1.msra.mxu0 0.0
  %1204 = vmatprep.subr.mxu0 0.0
  %1205 = vmatpush1.msra.mxu0 0.0
  %1206 = vmatprep.subr.mxu0 0.0
  %1207 = vmatpush1.msra.mxu0 0.0
  %1208 = vmatprep.subr.mxu0 0.0
  %1209 = vmatpush1.msra.mxu0 0.0
  %1210 = vmatprep.subr.mxu0 0.0
  %1211 = vmatpush1.msra.mxu0 0.0
  %1212 = vmatprep.subr.mxu0 0.0
  %1213 = vmatpush1.msra.mxu0 0.0
  %1214 = vmatprep.subr.mxu0 0.0
  %1215 = vmatpush1.msra.mxu0 0.0
  %1216 = vmatprep.subr.mxu0 0.0
  %1217 = vmatpush1.msra.mxu0 0.0
  %1218 = vmatprep.subr.mxu0 0.0
  %1219 = vmatpush1.msra.mxu0 0.0
  %1220 = vmatprep.subr.mxu0 0.0
  %1221 = vmatpush1.msra.mxu0 0.0
  %1222 = vmatprep.subr.mxu0 0.0
  %1223 = vmatpush1.msra.mxu0 0.0
  %1224 = vmatprep.mubr.f32.mxu0 0.0
  %1225 = vmatmul.mubr.f32.gmra.mrb[0].mxu0 %v1149
  %v1226 = vpop.f32.mrb[0].mxu0
  %v1227 = vadd.f32 0.0, %v1226
  %v1228 = vpop.f32.mrb[0].mxu0
  %1229 = vmatprep.mubr.f32.mxu0 0.0
  %1230 = vmatmul.mubr.f32.gmra.mrb[0].mxu0 %v1152
  %v1231 = vpop.f32.mrb[0].mxu0
  %v1232 = vadd.f32 0.0, %v1231
  %v1233 = vpop.f32.mrb[0].mxu0
  %1234 = vmatprep.mubr.f32.mxu0 0.0
  %1235 = vmatmul.mubr.f32.gmra.mrb[0].mxu0 %v1155
  %v1236 = vpop.f32.mrb[0].mxu0
  %v1237 = vadd.f32 0.0, %v1236
  %v1238 = vpop.f32.mrb[0].mxu0
  %1239 = vmatprep.mubr.f32.mxu0 0.0
  %1240 = vmatmul.mubr.f32.gmra.mrb[0].mxu0 %v1158
  %v1241 = vpop.f32.mrb[0].mxu0
  %v1242 = vadd.f32 0.0, %v1241
  %v1243 = vpop.f32.mrb[0].mxu0
  %1244 = vdwg.mxu0
  %v1245 = vadd.f32 %v1025, %v1227
  %v1246 = vadd.f32 %v1026, %v1232
  %v1247 = vadd.f32 %v1027, %v1237
  %v1248 = vadd.f32 %v1028, %v1242
  %s1249 = scalar_lea.vmem %s5, 320
  %v1250 = vld [vmem:[%s1249] sm:$0xf]
  %v1251 = vld [vmem:[%s1249 + $0x4] sm:$0xf]
  %v1252 = vld [vmem:[%s1249 + $0x8] sm:$0xf]
  %v1253 = vld [vmem:[%s1249 + $0xc] sm:$0xf]
  %v1254 = vld [vmem:[%s1249 + $0x10] sm:$0xf]
  %v1255 = vld [vmem:[%s1249 + $0x14] sm:$0xf]
  %v1256 = vld [vmem:[%s1249 + $0x18] sm:$0xf]
  %v1257 = vld [vmem:[%s1249 + $0x1c] sm:$0xf]
  %v1258 = vld [vmem:[%s1249 + $0x20] sm:$0xf]
  %v1259 = vld [vmem:[%s1249 + $0x24] sm:$0xf]
  %v1260 = vld [vmem:[%s1249 + $0x28] sm:$0xf]
  %v1261 = vld [vmem:[%s1249 + $0x2c] sm:$0xf]
  %v1262 = vld [vmem:[%s1249 + $0x30] sm:$0xf]
  %v1263 = vld [vmem:[%s1249 + $0x34] sm:$0xf]
  %v1264 = vld [vmem:[%s1249 + $0x38] sm:$0xf]
  %v1265 = vld [vmem:[%s1249 + $0x3c] sm:$0xf]
  %v1282 = vunpack.c.l.b16 %v1250
  %v1283 = vunpack.c.l.b16 %v1251
  %v1284 = vunpack.c.l.b16 %v1252
  %v1285 = vunpack.c.l.b16 %v1253
  %v1286 = vunpack.c.l.b16 %v1254
  %v1287 = vunpack.c.l.b16 %v1255
  %v1288 = vunpack.c.l.b16 %v1256
  %v1289 = vunpack.c.l.b16 %v1257
  %v1290 = vunpack.c.l.b16 %v1258
  %v1291 = vunpack.c.l.b16 %v1259
  %v1292 = vunpack.c.l.b16 %v1260
  %v1293 = vunpack.c.l.b16 %v1261
  %v1294 = vunpack.c.l.b16 %v1262
  %v1295 = vunpack.c.l.b16 %v1263
  %v1296 = vunpack.c.l.b16 %v1264
  %v1297 = vunpack.c.l.b16 %v1265
  %v1298 = vpack.c.b16 %v1283, %v1282
  %v1299 = vpack.c.b16 %v1285, %v1284
  %v1300 = vpack.c.b16 %v1287, %v1286
  %v1301 = vpack.c.b16 %v1289, %v1288
  %v1302 = vpack.c.b16 %v1291, %v1290
  %v1303 = vpack.c.b16 %v1293, %v1292
  %v1304 = vpack.c.b16 %v1295, %v1294
  %v1305 = vpack.c.b16 %v1297, %v1296
  %1314 = vmatprep.subr.bf16.mxu0 0
  %1315 = vmatpush1.bf16.msra.mxu0 %v1298
  %1316 = vmatprep.subr.bf16.mxu0 0
  %1317 = vmatpush1.bf16.msra.mxu0 %v1299
  %1318 = vmatprep.subr.bf16.mxu0 0
  %1319 = vmatpush1.bf16.msra.mxu0 %v1300
  %1320 = vmatprep.subr.bf16.mxu0 0
  %1321 = vmatpush1.bf16.msra.mxu0 %v1301
  %1322 = vmatprep.subr.bf16.mxu0 0
  %1323 = vmatpush1.bf16.msra.mxu0 %v1302
  %1324 = vmatprep.subr.bf16.mxu0 0
  %1325 = vmatpush1.bf16.msra.mxu0 %v1303
  %1326 = vmatprep.subr.bf16.mxu0 0
  %1327 = vmatpush1.bf16.msra.mxu0 %v1304
  %1328 = vmatprep.subr.bf16.mxu0 0
  %1329 = vmatpush1.bf16.msra.mxu0 %v1305
  %1330 = vmatprep.subr.bf16.mxu0 0
  %1331 = vmatpush1.bf16.msra.mxu0 0
  %1332 = vmatprep.subr.bf16.mxu0 0
  %1333 = vmatpush1.bf16.msra.mxu0 0
  %1334 = vmatprep.subr.bf16.mxu0 0
  %1335 = vmatpush1.bf16.msra.mxu0 0
  %1336 = vmatprep.subr.bf16.mxu0 0
  %1337 = vmatpush1.bf16.msra.mxu0 0
  %1338 = vmatprep.subr.bf16.mxu0 0
  %1339 = vmatpush1.bf16.msra.mxu0 0
  %1340 = vmatprep.subr.bf16.mxu0 0
  %1341 = vmatpush1.bf16.msra.mxu0 0
  %1342 = vmatprep.subr.bf16.mxu0 0
  %1343 = vmatpush1.bf16.msra.mxu0 0
  %1344 = vmatprep.subr.bf16.mxu0 0
  %1345 = vmatpush1.bf16.msra.mxu0 0
  %1346 = vmatprep.mubr.bf16.mxu0 0
  %1347 = vmatmul.mubr.bf16.gmra.mrb[0].mxu0 %v258
  %v1348 = vpop.f32.mrb[0].mxu0
  %v1349 = vadd.f32 0.0, %v1348
  %v1350 = vpop.f32.mrb[0].mxu0
  %v1351 = vpop.f32.mrb[0].mxu0
  %v1352 = vadd.f32 0.0, %v1351
  %v1353 = vpop.f32.mrb[0].mxu0
  %1354 = vmatprep.mubr.bf16.mxu0 0
  %1355 = vmatmul.mubr.bf16.gmra.mrb[0].mxu0 %v259
  %v1356 = vpop.f32.mrb[0].mxu0
  %v1357 = vadd.f32 0.0, %v1356
  %v1358 = vpop.f32.mrb[0].mxu0
  %v1359 = vpop.f32.mrb[0].mxu0
  %v1360 = vadd.f32 0.0, %v1359
  %v1361 = vpop.f32.mrb[0].mxu0
  %1362 = vdwg.mxu0
  %s1363 = scalar_lea.vmem %s2, 160
  %v1364 = vld [vmem:[%s1363] sm:$0xff]
  %v1365 = vld [vmem:[%s1363 + $0x8] sm:$0xff]
  %v1366 = vld [vmem:[%s1363 + $0x10] sm:$0xff]
  %v1367 = vld [vmem:[%s1363 + $0x18] sm:$0xff]
  %v1369 = vsel %vm496, %v1364, 0
  %v1372 = vsel %vm496, %v1365, 0
  %v1375 = vsel %vm496, %v1366, 0
  %v1378 = vsel %vm496, %v1367, 0
  %1380 = vmatprep.subr.mxu0 0.0
  %1381 = vmatpush1.msra.mxu0 %v1349
  %1382 = vmatprep.subr.mxu0 0.0
  %1383 = vmatpush1.msra.mxu0 %v1352
  %1384 = vmatprep.subr.mxu0 0.0
  %1385 = vmatpush1.msra.mxu0 %v1357
  %1386 = vmatprep.subr.mxu0 0.0
  %1387 = vmatpush1.msra.mxu0 %v1360
  %1388 = vmatprep.subr.mxu0 0.0
  %1389 = vmatpush1.msra.mxu0 0.0
  %1390 = vmatprep.subr.mxu0 0.0
  %1391 = vmatpush1.msra.mxu0 0.0
  %1392 = vmatprep.subr.mxu0 0.0
  %1393 = vmatpush1.msra.mxu0 0.0
  %1394 = vmatprep.subr.mxu0 0.0
  %1395 = vmatpush1.msra.mxu0 0.0
  %1396 = vmatprep.subr.mxu0 0.0
  %1397 = vmatpush1.msra.mxu0 0.0
  %1398 = vmatprep.subr.mxu0 0.0
  %1399 = vmatpush1.msra.mxu0 0.0
  %1400 = vmatprep.subr.mxu0 0.0
  %1401 = vmatpush1.msra.mxu0 0.0
  %1402 = vmatprep.subr.mxu0 0.0
  %1403 = vmatpush1.msra.mxu0 0.0
  %1404 = vmatprep.subr.mxu0 0.0
  %1405 = vmatpush1.msra.mxu0 0.0
  %1406 = vmatprep.subr.mxu0 0.0
  %1407 = vmatpush1.msra.mxu0 0.0
  %1408 = vmatprep.subr.mxu0 0.0
  %1409 = vmatpush1.msra.mxu0 0.0
  %1410 = vmatprep.subr.mxu0 0.0
  %1411 = vmatpush1.msra.mxu0 0.0
  %1412 = vmatprep.subr.mxu0 0.0
  %1413 = vmatpush1.msra.mxu0 0.0
  %1414 = vmatprep.subr.mxu0 0.0
  %1415 = vmatpush1.msra.mxu0 0.0
  %1416 = vmatprep.subr.mxu0 0.0
  %1417 = vmatpush1.msra.mxu0 0.0
  %1418 = vmatprep.subr.mxu0 0.0
  %1419 = vmatpush1.msra.mxu0 0.0
  %1420 = vmatprep.subr.mxu0 0.0
  %1421 = vmatpush1.msra.mxu0 0.0
  %1422 = vmatprep.subr.mxu0 0.0
  %1423 = vmatpush1.msra.mxu0 0.0
  %1424 = vmatprep.subr.mxu0 0.0
  %1425 = vmatpush1.msra.mxu0 0.0
  %1426 = vmatprep.subr.mxu0 0.0
  %1427 = vmatpush1.msra.mxu0 0.0
  %1428 = vmatprep.subr.mxu0 0.0
  %1429 = vmatpush1.msra.mxu0 0.0
  %1430 = vmatprep.subr.mxu0 0.0
  %1431 = vmatpush1.msra.mxu0 0.0
  %1432 = vmatprep.subr.mxu0 0.0
  %1433 = vmatpush1.msra.mxu0 0.0
  %1434 = vmatprep.subr.mxu0 0.0
  %1435 = vmatpush1.msra.mxu0 0.0
  %1436 = vmatprep.subr.mxu0 0.0
  %1437 = vmatpush1.msra.mxu0 0.0
  %1438 = vmatprep.subr.mxu0 0.0
  %1439 = vmatpush1.msra.mxu0 0.0
  %1440 = vmatprep.subr.mxu0 0.0
  %1441 = vmatpush1.msra.mxu0 0.0
  %1442 = vmatprep.subr.mxu0 0.0
  %1443 = vmatpush1.msra.mxu0 0.0
  %1444 = vmatprep.mubr.f32.mxu0 0.0
  %1445 = vmatmul.mubr.f32.gmra.mrb[0].mxu0 %v1369
  %v1446 = vpop.f32.mrb[0].mxu0
  %v1447 = vadd.f32 0.0, %v1446
  %v1448 = vpop.f32.mrb[0].mxu0
  %1449 = vmatprep.mubr.f32.mxu0 0.0
  %1450 = vmatmul.mubr.f32.gmra.mrb[0].mxu0 %v1372
  %v1451 = vpop.f32.mrb[0].mxu0
  %v1452 = vadd.f32 0.0, %v1451
  %v1453 = vpop.f32.mrb[0].mxu0
  %1454 = vmatprep.mubr.f32.mxu0 0.0
  %1455 = vmatmul.mubr.f32.gmra.mrb[0].mxu0 %v1375
  %v1456 = vpop.f32.mrb[0].mxu0
  %v1457 = vadd.f32 0.0, %v1456
  %v1458 = vpop.f32.mrb[0].mxu0
  %1459 = vmatprep.mubr.f32.mxu0 0.0
  %1460 = vmatmul.mubr.f32.gmra.mrb[0].mxu0 %v1378
  %v1461 = vpop.f32.mrb[0].mxu0
  %v1462 = vadd.f32 0.0, %v1461
  %v1463 = vpop.f32.mrb[0].mxu0
  %1464 = vdwg.mxu0
  %v1465 = vadd.f32 %v1245, %v1447
  %v1466 = vadd.f32 %v1246, %v1452
  %v1467 = vadd.f32 %v1247, %v1457
  %v1468 = vadd.f32 %v1248, %v1462
  %s1469 = scalar_lea.vmem %s5, 384
  %v1470 = vld [vmem:[%s1469] sm:$0xf]
  %v1471 = vld [vmem:[%s1469 + $0x4] sm:$0xf]
  %v1472 = vld [vmem:[%s1469 + $0x8] sm:$0xf]
  %v1473 = vld [vmem:[%s1469 + $0xc] sm:$0xf]
  %v1474 = vld [vmem:[%s1469 + $0x10] sm:$0xf]
  %v1475 = vld [vmem:[%s1469 + $0x14] sm:$0xf]
  %v1476 = vld [vmem:[%s1469 + $0x18] sm:$0xf]
  %v1477 = vld [vmem:[%s1469 + $0x1c] sm:$0xf]
  %v1478 = vld [vmem:[%s1469 + $0x20] sm:$0xf]
  %v1479 = vld [vmem:[%s1469 + $0x24] sm:$0xf]
  %v1480 = vld [vmem:[%s1469 + $0x28] sm:$0xf]
  %v1481 = vld [vmem:[%s1469 + $0x2c] sm:$0xf]
  %v1482 = vld [vmem:[%s1469 + $0x30] sm:$0xf]
  %v1483 = vld [vmem:[%s1469 + $0x34] sm:$0xf]
  %v1484 = vld [vmem:[%s1469 + $0x38] sm:$0xf]
  %v1485 = vld [vmem:[%s1469 + $0x3c] sm:$0xf]
  %v1502 = vunpack.c.l.b16 %v1470
  %v1503 = vunpack.c.l.b16 %v1471
  %v1504 = vunpack.c.l.b16 %v1472
  %v1505 = vunpack.c.l.b16 %v1473
  %v1506 = vunpack.c.l.b16 %v1474
  %v1507 = vunpack.c.l.b16 %v1475
  %v1508 = vunpack.c.l.b16 %v1476
  %v1509 = vunpack.c.l.b16 %v1477
  %v1510 = vunpack.c.l.b16 %v1478
  %v1511 = vunpack.c.l.b16 %v1479
  %v1512 = vunpack.c.l.b16 %v1480
  %v1513 = vunpack.c.l.b16 %v1481
  %v1514 = vunpack.c.l.b16 %v1482
  %v1515 = vunpack.c.l.b16 %v1483
  %v1516 = vunpack.c.l.b16 %v1484
  %v1517 = vunpack.c.l.b16 %v1485
  %v1518 = vpack.c.b16 %v1503, %v1502
  %v1519 = vpack.c.b16 %v1505, %v1504
  %v1520 = vpack.c.b16 %v1507, %v1506
  %v1521 = vpack.c.b16 %v1509, %v1508
  %v1522 = vpack.c.b16 %v1511, %v1510
  %v1523 = vpack.c.b16 %v1513, %v1512
  %v1524 = vpack.c.b16 %v1515, %v1514
  %v1525 = vpack.c.b16 %v1517, %v1516
  %1534 = vmatprep.subr.bf16.mxu0 0
  %1535 = vmatpush1.bf16.msra.mxu0 %v1518
  %1536 = vmatprep.subr.bf16.mxu0 0
  %1537 = vmatpush1.bf16.msra.mxu0 %v1519
  %1538 = vmatprep.subr.bf16.mxu0 0
  %1539 = vmatpush1.bf16.msra.mxu0 %v1520
  %1540 = vmatprep.subr.bf16.mxu0 0
  %1541 = vmatpush1.bf16.msra.mxu0 %v1521
  %1542 = vmatprep.subr.bf16.mxu0 0
  %1543 = vmatpush1.bf16.msra.mxu0 %v1522
  %1544 = vmatprep.subr.bf16.mxu0 0
  %1545 = vmatpush1.bf16.msra.mxu0 %v1523
  %1546 = vmatprep.subr.bf16.mxu0 0
  %1547 = vmatpush1.bf16.msra.mxu0 %v1524
  %1548 = vmatprep.subr.bf16.mxu0 0
  %1549 = vmatpush1.bf16.msra.mxu0 %v1525
  %1550 = vmatprep.subr.bf16.mxu0 0
  %1551 = vmatpush1.bf16.msra.mxu0 0
  %1552 = vmatprep.subr.bf16.mxu0 0
  %1553 = vmatpush1.bf16.msra.mxu0 0
  %1554 = vmatprep.subr.bf16.mxu0 0
  %1555 = vmatpush1.bf16.msra.mxu0 0
  %1556 = vmatprep.subr.bf16.mxu0 0
  %1557 = vmatpush1.bf16.msra.mxu0 0
  %1558 = vmatprep.subr.bf16.mxu0 0
  %1559 = vmatpush1.bf16.msra.mxu0 0
  %1560 = vmatprep.subr.bf16.mxu0 0
  %1561 = vmatpush1.bf16.msra.mxu0 0
  %1562 = vmatprep.subr.bf16.mxu0 0
  %1563 = vmatpush1.bf16.msra.mxu0 0
  %1564 = vmatprep.subr.bf16.mxu0 0
  %1565 = vmatpush1.bf16.msra.mxu0 0
  %1566 = vmatprep.mubr.bf16.mxu0 0
  %1567 = vmatmul.mubr.bf16.gmra.mrb[0].mxu0 %v258
  %v1568 = vpop.f32.mrb[0].mxu0
  %v1569 = vadd.f32 0.0, %v1568
  %v1570 = vpop.f32.mrb[0].mxu0
  %v1571 = vpop.f32.mrb[0].mxu0
  %v1572 = vadd.f32 0.0, %v1571
  %v1573 = vpop.f32.mrb[0].mxu0
  %1574 = vmatprep.mubr.bf16.mxu0 0
  %1575 = vmatmul.mubr.bf16.gmra.mrb[0].mxu0 %v259
  %v1576 = vpop.f32.mrb[0].mxu0
  %v1577 = vadd.f32 0.0, %v1576
  %v1578 = vpop.f32.mrb[0].mxu0
  %v1579 = vpop.f32.mrb[0].mxu0
  %v1580 = vadd.f32 0.0, %v1579
  %v1581 = vpop.f32.mrb[0].mxu0
  %1582 = vdwg.mxu0
  %s1583 = scalar_lea.vmem %s2, 192
  %v1584 = vld [vmem:[%s1583] sm:$0xff]
  %v1585 = vld [vmem:[%s1583 + $0x8] sm:$0xff]
  %v1586 = vld [vmem:[%s1583 + $0x10] sm:$0xff]
  %v1587 = vld [vmem:[%s1583 + $0x18] sm:$0xff]
  %v1589 = vsel %vm496, %v1584, 0
  %v1592 = vsel %vm496, %v1585, 0
  %v1595 = vsel %vm496, %v1586, 0
  %v1598 = vsel %vm496, %v1587, 0
  %1600 = vmatprep.subr.mxu0 0.0
  %1601 = vmatpush1.msra.mxu0 %v1569
  %1602 = vmatprep.subr.mxu0 0.0
  %1603 = vmatpush1.msra.mxu0 %v1572
  %1604 = vmatprep.subr.mxu0 0.0
  %1605 = vmatpush1.msra.mxu0 %v1577
  %1606 = vmatprep.subr.mxu0 0.0
  %1607 = vmatpush1.msra.mxu0 %v1580
  %1608 = vmatprep.subr.mxu0 0.0
  %1609 = vmatpush1.msra.mxu0 0.0
  %1610 = vmatprep.subr.mxu0 0.0
  %1611 = vmatpush1.msra.mxu0 0.0
  %1612 = vmatprep.subr.mxu0 0.0
  %1613 = vmatpush1.msra.mxu0 0.0
  %1614 = vmatprep.subr.mxu0 0.0
  %1615 = vmatpush1.msra.mxu0 0.0
  %1616 = vmatprep.subr.mxu0 0.0
  %1617 = vmatpush1.msra.mxu0 0.0
  %1618 = vmatprep.subr.mxu0 0.0
  %1619 = vmatpush1.msra.mxu0 0.0
  %1620 = vmatprep.subr.mxu0 0.0
  %1621 = vmatpush1.msra.mxu0 0.0
  %1622 = vmatprep.subr.mxu0 0.0
  %1623 = vmatpush1.msra.mxu0 0.0
  %1624 = vmatprep.subr.mxu0 0.0
  %1625 = vmatpush1.msra.mxu0 0.0
  %1626 = vmatprep.subr.mxu0 0.0
  %1627 = vmatpush1.msra.mxu0 0.0
  %1628 = vmatprep.subr.mxu0 0.0
  %1629 = vmatpush1.msra.mxu0 0.0
  %1630 = vmatprep.subr.mxu0 0.0
  %1631 = vmatpush1.msra.mxu0 0.0
  %1632 = vmatprep.subr.mxu0 0.0
  %1633 = vmatpush1.msra.mxu0 0.0
  %1634 = vmatprep.subr.mxu0 0.0
  %1635 = vmatpush1.msra.mxu0 0.0
  %1636 = vmatprep.subr.mxu0 0.0
  %1637 = vmatpush1.msra.mxu0 0.0
  %1638 = vmatprep.subr.mxu0 0.0
  %1639 = vmatpush1.msra.mxu0 0.0
  %1640 = vmatprep.subr.mxu0 0.0
  %1641 = vmatpush1.msra.mxu0 0.0
  %1642 = vmatprep.subr.mxu0 0.0
  %1643 = vmatpush1.msra.mxu0 0.0
  %1644 = vmatprep.subr.mxu0 0.0
  %1645 = vmatpush1.msra.mxu0 0.0
  %1646 = vmatprep.subr.mxu0 0.0
  %1647 = vmatpush1.msra.mxu0 0.0
  %1648 = vmatprep.subr.mxu0 0.0
  %1649 = vmatpush1.msra.mxu0 0.0
  %1650 = vmatprep.subr.mxu0 0.0
  %1651 = vmatpush1.msra.mxu0 0.0
  %1652 = vmatprep.subr.mxu0 0.0
  %1653 = vmatpush1.msra.mxu0 0.0
  %1654 = vmatprep.subr.mxu0 0.0
  %1655 = vmatpush1.msra.mxu0 0.0
  %1656 = vmatprep.subr.mxu0 0.0
  %1657 = vmatpush1.msra.mxu0 0.0
  %1658 = vmatprep.subr.mxu0 0.0
  %1659 = vmatpush1.msra.mxu0 0.0
  %1660 = vmatprep.subr.mxu0 0.0
  %1661 = vmatpush1.msra.mxu0 0.0
  %1662 = vmatprep.subr.mxu0 0.0
  %1663 = vmatpush1.msra.mxu0 0.0
  %1664 = vmatprep.mubr.f32.mxu0 0.0
  %1665 = vmatmul.mubr.f32.gmra.mrb[0].mxu0 %v1589
  %v1666 = vpop.f32.mrb[0].mxu0
  %v1667 = vadd.f32 0.0, %v1666
  %v1668 = vpop.f32.mrb[0].mxu0
  %1669 = vmatprep.mubr.f32.mxu0 0.0
  %1670 = vmatmul.mubr.f32.gmra.mrb[0].mxu0 %v1592
  %v1671 = vpop.f32.mrb[0].mxu0
  %v1672 = vadd.f32 0.0, %v1671
  %v1673 = vpop.f32.mrb[0].mxu0
  %1674 = vmatprep.mubr.f32.mxu0 0.0
  %1675 = vmatmul.mubr.f32.gmra.mrb[0].mxu0 %v1595
  %v1676 = vpop.f32.mrb[0].mxu0
  %v1677 = vadd.f32 0.0, %v1676
  %v1678 = vpop.f32.mrb[0].mxu0
  %1679 = vmatprep.mubr.f32.mxu0 0.0
  %1680 = vmatmul.mubr.f32.gmra.mrb[0].mxu0 %v1598
  %v1681 = vpop.f32.mrb[0].mxu0
  %v1682 = vadd.f32 0.0, %v1681
  %v1683 = vpop.f32.mrb[0].mxu0
  %1684 = vdwg.mxu0
  %v1685 = vadd.f32 %v1465, %v1667
  %v1686 = vadd.f32 %v1466, %v1672
  %v1687 = vadd.f32 %v1467, %v1677
  %v1688 = vadd.f32 %v1468, %v1682
  %v1690 = vlaneseq
  %v1691 = vshrl.u32 %v1690, 7
  %v1692 = vsub.s32 0, %v1691
  %v1693 = vrot.slane %v257, %v1692
  %v1695 = vadd.f32 %v1685, %v1693
  %v1696 = vadd.f32 %v1686, %v1693
  %v1697 = vadd.f32 %v1687, %v1693
  %v1698 = vadd.f32 %v1688, %v1693
  %v1699 = vmax.f32 %v1695, 0.0
  %v1700 = vmax.f32 %v1696, 0.0
  %v1701 = vmax.f32 %v1697, 0.0
  %v1702 = vmax.f32 %v1698, 0.0
  %v1703 = vld [vmem:[%s8] sm:$0x1]
  %v1704 = vpack.c.bf16 %v1700, %v1699
  %v1705 = vpack.c.bf16 %v1702, %v1701
  %v1706 = vld [vmem:[%s7] sm:$0xf]
  %v1707 = vld [vmem:[%s7 + $0x4] sm:$0xf]
  %v1708 = vld [vmem:[%s7 + $0x8] sm:$0xf]
  %v1709 = vld [vmem:[%s7 + $0xc] sm:$0xf]
  %v1710 = vld [vmem:[%s7 + $0x10] sm:$0xf]
  %v1711 = vld [vmem:[%s7 + $0x14] sm:$0xf]
  %v1712 = vld [vmem:[%s7 + $0x18] sm:$0xf]
  %v1713 = vld [vmem:[%s7 + $0x1c] sm:$0xf]
  %v1714 = vld [vmem:[%s7 + $0x20] sm:$0xf]
  %v1715 = vld [vmem:[%s7 + $0x24] sm:$0xf]
  %v1716 = vld [vmem:[%s7 + $0x28] sm:$0xf]
  %v1717 = vld [vmem:[%s7 + $0x2c] sm:$0xf]
  %v1718 = vld [vmem:[%s7 + $0x30] sm:$0xf]
  %v1719 = vld [vmem:[%s7 + $0x34] sm:$0xf]
  %v1720 = vld [vmem:[%s7 + $0x38] sm:$0xf]
  %v1721 = vld [vmem:[%s7 + $0x3c] sm:$0xf]
  %v1738 = vunpack.c.l.b16 %v1706
  %v1739 = vunpack.c.l.b16 %v1707
  %v1740 = vunpack.c.l.b16 %v1708
  %v1741 = vunpack.c.l.b16 %v1709
  %v1742 = vunpack.c.l.b16 %v1710
  %v1743 = vunpack.c.l.b16 %v1711
  %v1744 = vunpack.c.l.b16 %v1712
  %v1745 = vunpack.c.l.b16 %v1713
  %v1746 = vunpack.c.l.b16 %v1714
  %v1747 = vunpack.c.l.b16 %v1715
  %v1748 = vunpack.c.l.b16 %v1716
  %v1749 = vunpack.c.l.b16 %v1717
  %v1750 = vunpack.c.l.b16 %v1718
  %v1751 = vunpack.c.l.b16 %v1719
  %v1752 = vunpack.c.l.b16 %v1720
  %v1753 = vunpack.c.l.b16 %v1721
  %v1754 = vpack.c.b16 %v1739, %v1738
  %v1755 = vpack.c.b16 %v1741, %v1740
  %v1756 = vpack.c.b16 %v1743, %v1742
  %v1757 = vpack.c.b16 %v1745, %v1744
  %v1758 = vpack.c.b16 %v1747, %v1746
  %v1759 = vpack.c.b16 %v1749, %v1748
  %v1760 = vpack.c.b16 %v1751, %v1750
  %v1761 = vpack.c.b16 %v1753, %v1752
  %1770 = vmatprep.subr.bf16.mxu0 0
  %1771 = vmatpush1.bf16.msra.mxu0 %v1754
  %1772 = vmatprep.subr.bf16.mxu0 0
  %1773 = vmatpush1.bf16.msra.mxu0 %v1755
  %1774 = vmatprep.subr.bf16.mxu0 0
  %1775 = vmatpush1.bf16.msra.mxu0 %v1756
  %1776 = vmatprep.subr.bf16.mxu0 0
  %1777 = vmatpush1.bf16.msra.mxu0 %v1757
  %1778 = vmatprep.subr.bf16.mxu0 0
  %1779 = vmatpush1.bf16.msra.mxu0 %v1758
  %1780 = vmatprep.subr.bf16.mxu0 0
  %1781 = vmatpush1.bf16.msra.mxu0 %v1759
  %1782 = vmatprep.subr.bf16.mxu0 0
  %1783 = vmatpush1.bf16.msra.mxu0 %v1760
  %1784 = vmatprep.subr.bf16.mxu0 0
  %1785 = vmatpush1.bf16.msra.mxu0 %v1761
  %1786 = vmatprep.subr.bf16.mxu0 0
  %1787 = vmatpush1.bf16.msra.mxu0 0
  %1788 = vmatprep.subr.bf16.mxu0 0
  %1789 = vmatpush1.bf16.msra.mxu0 0
  %1790 = vmatprep.subr.bf16.mxu0 0
  %1791 = vmatpush1.bf16.msra.mxu0 0
  %1792 = vmatprep.subr.bf16.mxu0 0
  %1793 = vmatpush1.bf16.msra.mxu0 0
  %1794 = vmatprep.subr.bf16.mxu0 0
  %1795 = vmatpush1.bf16.msra.mxu0 0
  %1796 = vmatprep.subr.bf16.mxu0 0
  %1797 = vmatpush1.bf16.msra.mxu0 0
  %1798 = vmatprep.subr.bf16.mxu0 0
  %1799 = vmatpush1.bf16.msra.mxu0 0
  %1800 = vmatprep.subr.bf16.mxu0 0
  %1801 = vmatpush1.bf16.msra.mxu0 0
  %1802 = vmatprep.mubr.bf16.mxu0 0
  %1803 = vmatmul.mubr.bf16.gmra.mrb[0].mxu0 %v1704
  %v1804 = vpop.f32.mrb[0].mxu0
  %v1805 = vadd.f32 0.0, %v1804
  %v1806 = vpop.f32.mrb[0].mxu0
  %v1807 = vpop.f32.mrb[0].mxu0
  %v1808 = vadd.f32 0.0, %v1807
  %v1809 = vpop.f32.mrb[0].mxu0
  %1810 = vmatprep.mubr.bf16.mxu0 0
  %1811 = vmatmul.mubr.bf16.gmra.mrb[0].mxu0 %v1705
  %v1812 = vpop.f32.mrb[0].mxu0
  %v1813 = vadd.f32 0.0, %v1812
  %v1814 = vpop.f32.mrb[0].mxu0
  %v1815 = vpop.f32.mrb[0].mxu0
  %v1816 = vadd.f32 0.0, %v1815
  %v1817 = vpop.f32.mrb[0].mxu0
  %1818 = vdwg.mxu0
  %s1819 = scalar_lea.vmem %s7, 64
  %v1820 = vld [vmem:[%s1819] sm:$0xf]
  %v1821 = vld [vmem:[%s1819 + $0x4] sm:$0xf]
  %v1822 = vld [vmem:[%s1819 + $0x8] sm:$0xf]
  %v1823 = vld [vmem:[%s1819 + $0xc] sm:$0xf]
  %v1824 = vld [vmem:[%s1819 + $0x10] sm:$0xf]
  %v1825 = vld [vmem:[%s1819 + $0x14] sm:$0xf]
  %v1826 = vld [vmem:[%s1819 + $0x18] sm:$0xf]
  %v1827 = vld [vmem:[%s1819 + $0x1c] sm:$0xf]
  %v1828 = vld [vmem:[%s1819 + $0x20] sm:$0xf]
  %v1829 = vld [vmem:[%s1819 + $0x24] sm:$0xf]
  %v1830 = vld [vmem:[%s1819 + $0x28] sm:$0xf]
  %v1831 = vld [vmem:[%s1819 + $0x2c] sm:$0xf]
  %v1832 = vld [vmem:[%s1819 + $0x30] sm:$0xf]
  %v1833 = vld [vmem:[%s1819 + $0x34] sm:$0xf]
  %v1834 = vld [vmem:[%s1819 + $0x38] sm:$0xf]
  %v1835 = vld [vmem:[%s1819 + $0x3c] sm:$0xf]
  %v1852 = vunpack.c.l.b16 %v1820
  %v1853 = vunpack.c.l.b16 %v1821
  %v1854 = vunpack.c.l.b16 %v1822
  %v1855 = vunpack.c.l.b16 %v1823
  %v1856 = vunpack.c.l.b16 %v1824
  %v1857 = vunpack.c.l.b16 %v1825
  %v1858 = vunpack.c.l.b16 %v1826
  %v1859 = vunpack.c.l.b16 %v1827
  %v1860 = vunpack.c.l.b16 %v1828
  %v1861 = vunpack.c.l.b16 %v1829
  %v1862 = vunpack.c.l.b16 %v1830
  %v1863 = vunpack.c.l.b16 %v1831
  %v1864 = vunpack.c.l.b16 %v1832
  %v1865 = vunpack.c.l.b16 %v1833
  %v1866 = vunpack.c.l.b16 %v1834
  %v1867 = vunpack.c.l.b16 %v1835
  %v1868 = vpack.c.b16 %v1853, %v1852
  %v1869 = vpack.c.b16 %v1855, %v1854
  %v1870 = vpack.c.b16 %v1857, %v1856
  %v1871 = vpack.c.b16 %v1859, %v1858
  %v1872 = vpack.c.b16 %v1861, %v1860
  %v1873 = vpack.c.b16 %v1863, %v1862
  %v1874 = vpack.c.b16 %v1865, %v1864
  %v1875 = vpack.c.b16 %v1867, %v1866
  %1884 = vmatprep.subr.bf16.mxu0 0
  %1885 = vmatpush1.bf16.msra.mxu0 %v1868
  %1886 = vmatprep.subr.bf16.mxu0 0
  %1887 = vmatpush1.bf16.msra.mxu0 %v1869
  %1888 = vmatprep.subr.bf16.mxu0 0
  %1889 = vmatpush1.bf16.msra.mxu0 %v1870
  %1890 = vmatprep.subr.bf16.mxu0 0
  %1891 = vmatpush1.bf16.msra.mxu0 %v1871
  %1892 = vmatprep.subr.bf16.mxu0 0
  %1893 = vmatpush1.bf16.msra.mxu0 %v1872
  %1894 = vmatprep.subr.bf16.mxu0 0
  %1895 = vmatpush1.bf16.msra.mxu0 %v1873
  %1896 = vmatprep.subr.bf16.mxu0 0
  %1897 = vmatpush1.bf16.msra.mxu0 %v1874
  %1898 = vmatprep.subr.bf16.mxu0 0
  %1899 = vmatpush1.bf16.msra.mxu0 %v1875
  %1900 = vmatprep.subr.bf16.mxu0 0
  %1901 = vmatpush1.bf16.msra.mxu0 0
  %1902 = vmatprep.subr.bf16.mxu0 0
  %1903 = vmatpush1.bf16.msra.mxu0 0
  %1904 = vmatprep.subr.bf16.mxu0 0
  %1905 = vmatpush1.bf16.msra.mxu0 0
  %1906 = vmatprep.subr.bf16.mxu0 0
  %1907 = vmatpush1.bf16.msra.mxu0 0
  %1908 = vmatprep.subr.bf16.mxu0 0
  %1909 = vmatpush1.bf16.msra.mxu0 0
  %1910 = vmatprep.subr.bf16.mxu0 0
  %1911 = vmatpush1.bf16.msra.mxu0 0
  %1912 = vmatprep.subr.bf16.mxu0 0
  %1913 = vmatpush1.bf16.msra.mxu0 0
  %1914 = vmatprep.subr.bf16.mxu0 0
  %1915 = vmatpush1.bf16.msra.mxu0 0
  %1916 = vmatprep.mubr.bf16.mxu0 0
  %1917 = vmatmul.mubr.bf16.gmra.mrb[0].mxu0 %v1704
  %v1918 = vpop.f32.mrb[0].mxu0
  %v1919 = vadd.f32 0.0, %v1918
  %v1920 = vpop.f32.mrb[0].mxu0
  %v1921 = vpop.f32.mrb[0].mxu0
  %v1922 = vadd.f32 0.0, %v1921
  %v1923 = vpop.f32.mrb[0].mxu0
  %1924 = vmatprep.mubr.bf16.mxu0 0
  %1925 = vmatmul.mubr.bf16.gmra.mrb[0].mxu0 %v1705
  %v1926 = vpop.f32.mrb[0].mxu0
  %v1927 = vadd.f32 0.0, %v1926
  %v1928 = vpop.f32.mrb[0].mxu0
  %v1929 = vpop.f32.mrb[0].mxu0
  %v1930 = vadd.f32 0.0, %v1929
  %v1931 = vpop.f32.mrb[0].mxu0
  %1932 = vdwg.mxu0
  %1933 = vmatprep.subr.mxu0 0.0
  %1934 = vmatpush1.msra.mxu0 %v1805
  %1935 = vmatprep.subr.mxu0 0.0
  %1936 = vmatpush1.msra.mxu0 %v1808
  %1937 = vmatprep.subr.mxu0 0.0
  %1938 = vmatpush1.msra.mxu0 %v1813
  %1939 = vmatprep.subr.mxu0 0.0
  %1940 = vmatpush1.msra.mxu0 %v1816
  %1941 = vmatprep.subr.mxu0 0.0
  %1942 = vmatpush1.msra.mxu0 0.0
  %1943 = vmatprep.subr.mxu0 0.0
  %1944 = vmatpush1.msra.mxu0 0.0
  %1945 = vmatprep.subr.mxu0 0.0
  %1946 = vmatpush1.msra.mxu0 0.0
  %1947 = vmatprep.subr.mxu0 0.0
  %1948 = vmatpush1.msra.mxu0 0.0
  %1949 = vmatprep.subr.mxu0 0.0
  %1950 = vmatpush1.msra.mxu0 0.0
  %1951 = vmatprep.subr.mxu0 0.0
  %1952 = vmatpush1.msra.mxu0 0.0
  %1953 = vmatprep.subr.mxu0 0.0
  %1954 = vmatpush1.msra.mxu0 0.0
  %1955 = vmatprep.subr.mxu0 0.0
  %1956 = vmatpush1.msra.mxu0 0.0
  %1957 = vmatprep.subr.mxu0 0.0
  %1958 = vmatpush1.msra.mxu0 0.0
  %1959 = vmatprep.subr.mxu0 0.0
  %1960 = vmatpush1.msra.mxu0 0.0
  %1961 = vmatprep.subr.mxu0 0.0
  %1962 = vmatpush1.msra.mxu0 0.0
  %1963 = vmatprep.subr.mxu0 0.0
  %1964 = vmatpush1.msra.mxu0 0.0
  %1965 = vmatprep.subr.mxu0 0.0
  %1966 = vmatpush1.msra.mxu0 0.0
  %1967 = vmatprep.subr.mxu0 0.0
  %1968 = vmatpush1.msra.mxu0 0.0
  %1969 = vmatprep.subr.mxu0 0.0
  %1970 = vmatpush1.msra.mxu0 0.0
  %1971 = vmatprep.subr.mxu0 0.0
  %1972 = vmatpush1.msra.mxu0 0.0
  %1973 = vmatprep.subr.mxu0 0.0
  %1974 = vmatpush1.msra.mxu0 0.0
  %1975 = vmatprep.subr.mxu0 0.0
  %1976 = vmatpush1.msra.mxu0 0.0
  %1977 = vmatprep.subr.mxu0 0.0
  %1978 = vmatpush1.msra.mxu0 0.0
  %1979 = vmatprep.subr.mxu0 0.0
  %1980 = vmatpush1.msra.mxu0 0.0
  %1981 = vmatprep.subr.mxu0 0.0
  %1982 = vmatpush1.msra.mxu0 0.0
  %1983 = vmatprep.subr.mxu0 0.0
  %1984 = vmatpush1.msra.mxu0 0.0
  %1985 = vmatprep.subr.mxu0 0.0
  %1986 = vmatpush1.msra.mxu0 0.0
  %1987 = vmatprep.subr.mxu0 0.0
  %1988 = vmatpush1.msra.mxu0 0.0
  %1989 = vmatprep.subr.mxu0 0.0
  %1990 = vmatpush1.msra.mxu0 0.0
  %1991 = vmatprep.subr.mxu0 0.0
  %1992 = vmatpush1.msra.mxu0 0.0
  %1993 = vmatprep.subr.mxu0 0.0
  %1994 = vmatpush1.msra.mxu0 0.0
  %1995 = vmatprep.subr.mxu0 0.0
  %1996 = vmatpush1.msra.mxu0 0.0
  %1997 = vmatprep.mubr.f32.mxu0 0.0
  %1998 = vmatmul.mubr.f32.gmra.mrb[0].mxu0 %v811
  %v1999 = vpop.f32.mrb[0].mxu0
  %v2000 = vadd.f32 %v1919, %v1999
  %v2001 = vpop.f32.mrb[0].mxu0
  %2002 = vmatprep.mubr.f32.mxu0 0.0
  %2003 = vmatmul.mubr.f32.gmra.mrb[0].mxu0 %v814
  %v2004 = vpop.f32.mrb[0].mxu0
  %v2005 = vadd.f32 %v1922, %v2004
  %v2006 = vpop.f32.mrb[0].mxu0
  %2007 = vmatprep.mubr.f32.mxu0 0.0
  %2008 = vmatmul.mubr.f32.gmra.mrb[0].mxu0 %v817
  %v2009 = vpop.f32.mrb[0].mxu0
  %v2010 = vadd.f32 %v1927, %v2009
  %v2011 = vpop.f32.mrb[0].mxu0
  %2012 = vmatprep.mubr.f32.mxu0 0.0
  %2013 = vmatmul.mubr.f32.gmra.mrb[0].mxu0 %v820
  %v2014 = vpop.f32.mrb[0].mxu0
  %v2015 = vadd.f32 %v1930, %v2014
  %v2016 = vpop.f32.mrb[0].mxu0
  %2017 = vdwg.mxu0
  %s2018 = scalar_lea.vmem %s7, 128
  %v2019 = vld [vmem:[%s2018] sm:$0xf]
  %v2020 = vld [vmem:[%s2018 + $0x4] sm:$0xf]
  %v2021 = vld [vmem:[%s2018 + $0x8] sm:$0xf]
  %v2022 = vld [vmem:[%s2018 + $0xc] sm:$0xf]
  %v2023 = vld [vmem:[%s2018 + $0x10] sm:$0xf]
  %v2024 = vld [vmem:[%s2018 + $0x14] sm:$0xf]
  %v2025 = vld [vmem:[%s2018 + $0x18] sm:$0xf]
  %v2026 = vld [vmem:[%s2018 + $0x1c] sm:$0xf]
  %v2027 = vld [vmem:[%s2018 + $0x20] sm:$0xf]
  %v2028 = vld [vmem:[%s2018 + $0x24] sm:$0xf]
  %v2029 = vld [vmem:[%s2018 + $0x28] sm:$0xf]
  %v2030 = vld [vmem:[%s2018 + $0x2c] sm:$0xf]
  %v2031 = vld [vmem:[%s2018 + $0x30] sm:$0xf]
  %v2032 = vld [vmem:[%s2018 + $0x34] sm:$0xf]
  %v2033 = vld [vmem:[%s2018 + $0x38] sm:$0xf]
  %v2034 = vld [vmem:[%s2018 + $0x3c] sm:$0xf]
  %v2051 = vunpack.c.l.b16 %v2019
  %v2052 = vunpack.c.l.b16 %v2020
  %v2053 = vunpack.c.l.b16 %v2021
  %v2054 = vunpack.c.l.b16 %v2022
  %v2055 = vunpack.c.l.b16 %v2023
  %v2056 = vunpack.c.l.b16 %v2024
  %v2057 = vunpack.c.l.b16 %v2025
  %v2058 = vunpack.c.l.b16 %v2026
  %v2059 = vunpack.c.l.b16 %v2027
  %v2060 = vunpack.c.l.b16 %v2028
  %v2061 = vunpack.c.l.b16 %v2029
  %v2062 = vunpack.c.l.b16 %v2030
  %v2063 = vunpack.c.l.b16 %v2031
  %v2064 = vunpack.c.l.b16 %v2032
  %v2065 = vunpack.c.l.b16 %v2033
  %v2066 = vunpack.c.l.b16 %v2034
  %v2067 = vpack.c.b16 %v2052, %v2051
  %v2068 = vpack.c.b16 %v2054, %v2053
  %v2069 = vpack.c.b16 %v2056, %v2055
  %v2070 = vpack.c.b16 %v2058, %v2057
  %v2071 = vpack.c.b16 %v2060, %v2059
  %v2072 = vpack.c.b16 %v2062, %v2061
  %v2073 = vpack.c.b16 %v2064, %v2063
  %v2074 = vpack.c.b16 %v2066, %v2065
  %2083 = vmatprep.subr.bf16.mxu0 0
  %2084 = vmatpush1.bf16.msra.mxu0 %v2067
  %2085 = vmatprep.subr.bf16.mxu0 0
  %2086 = vmatpush1.bf16.msra.mxu0 %v2068
  %2087 = vmatprep.subr.bf16.mxu0 0
  %2088 = vmatpush1.bf16.msra.mxu0 %v2069
  %2089 = vmatprep.subr.bf16.mxu0 0
  %2090 = vmatpush1.bf16.msra.mxu0 %v2070
  %2091 = vmatprep.subr.bf16.mxu0 0
  %2092 = vmatpush1.bf16.msra.mxu0 %v2071
  %2093 = vmatprep.subr.bf16.mxu0 0
  %2094 = vmatpush1.bf16.msra.mxu0 %v2072
  %2095 = vmatprep.subr.bf16.mxu0 0
  %2096 = vmatpush1.bf16.msra.mxu0 %v2073
  %2097 = vmatprep.subr.bf16.mxu0 0
  %2098 = vmatpush1.bf16.msra.mxu0 %v2074
  %2099 = vmatprep.subr.bf16.mxu0 0
  %2100 = vmatpush1.bf16.msra.mxu0 0
  %2101 = vmatprep.subr.bf16.mxu0 0
  %2102 = vmatpush1.bf16.msra.mxu0 0
  %2103 = vmatprep.subr.bf16.mxu0 0
  %2104 = vmatpush1.bf16.msra.mxu0 0
  %2105 = vmatprep.subr.bf16.mxu0 0
  %2106 = vmatpush1.bf16.msra.mxu0 0
  %2107 = vmatprep.subr.bf16.mxu0 0
  %2108 = vmatpush1.bf16.msra.mxu0 0
  %2109 = vmatprep.subr.bf16.mxu0 0
  %2110 = vmatpush1.bf16.msra.mxu0 0
  %2111 = vmatprep.subr.bf16.mxu0 0
  %2112 = vmatpush1.bf16.msra.mxu0 0
  %2113 = vmatprep.subr.bf16.mxu0 0
  %2114 = vmatpush1.bf16.msra.mxu0 0
  %2115 = vmatprep.mubr.bf16.mxu0 0
  %2116 = vmatmul.mubr.bf16.gmra.mrb[0].mxu0 %v1704
  %v2117 = vpop.f32.mrb[0].mxu0
  %v2118 = vadd.f32 0.0, %v2117
  %v2119 = vpop.f32.mrb[0].mxu0
  %v2120 = vpop.f32.mrb[0].mxu0
  %v2121 = vadd.f32 0.0, %v2120
  %v2122 = vpop.f32.mrb[0].mxu0
  %2123 = vmatprep.mubr.bf16.mxu0 0
  %2124 = vmatmul.mubr.bf16.gmra.mrb[0].mxu0 %v1705
  %v2125 = vpop.f32.mrb[0].mxu0
  %v2126 = vadd.f32 0.0, %v2125
  %v2127 = vpop.f32.mrb[0].mxu0
  %v2128 = vpop.f32.mrb[0].mxu0
  %v2129 = vadd.f32 0.0, %v2128
  %v2130 = vpop.f32.mrb[0].mxu0
  %2131 = vdwg.mxu0
  %2132 = vmatprep.subr.mxu0 0.0
  %2133 = vmatpush1.msra.mxu0 %v2118
  %2134 = vmatprep.subr.mxu0 0.0
  %2135 = vmatpush1.msra.mxu0 %v2121
  %2136 = vmatprep.subr.mxu0 0.0
  %2137 = vmatpush1.msra.mxu0 %v2126
  %2138 = vmatprep.subr.mxu0 0.0
  %2139 = vmatpush1.msra.mxu0 %v2129
  %2140 = vmatprep.subr.mxu0 0.0
  %2141 = vmatpush1.msra.mxu0 0.0
  %2142 = vmatprep.subr.mxu0 0.0
  %2143 = vmatpush1.msra.mxu0 0.0
  %2144 = vmatprep.subr.mxu0 0.0
  %2145 = vmatpush1.msra.mxu0 0.0
  %2146 = vmatprep.subr.mxu0 0.0
  %2147 = vmatpush1.msra.mxu0 0.0
  %2148 = vmatprep.subr.mxu0 0.0
  %2149 = vmatpush1.msra.mxu0 0.0
  %2150 = vmatprep.subr.mxu0 0.0
  %2151 = vmatpush1.msra.mxu0 0.0
  %2152 = vmatprep.subr.mxu0 0.0
  %2153 = vmatpush1.msra.mxu0 0.0
  %2154 = vmatprep.subr.mxu0 0.0
  %2155 = vmatpush1.msra.mxu0 0.0
  %2156 = vmatprep.subr.mxu0 0.0
  %2157 = vmatpush1.msra.mxu0 0.0
  %2158 = vmatprep.subr.mxu0 0.0
  %2159 = vmatpush1.msra.mxu0 0.0
  %2160 = vmatprep.subr.mxu0 0.0
  %2161 = vmatpush1.msra.mxu0 0.0
  %2162 = vmatprep.subr.mxu0 0.0
  %2163 = vmatpush1.msra.mxu0 0.0
  %2164 = vmatprep.subr.mxu0 0.0
  %2165 = vmatpush1.msra.mxu0 0.0
  %2166 = vmatprep.subr.mxu0 0.0
  %2167 = vmatpush1.msra.mxu0 0.0
  %2168 = vmatprep.subr.mxu0 0.0
  %2169 = vmatpush1.msra.mxu0 0.0
  %2170 = vmatprep.subr.mxu0 0.0
  %2171 = vmatpush1.msra.mxu0 0.0
  %2172 = vmatprep.subr.mxu0 0.0
  %2173 = vmatpush1.msra.mxu0 0.0
  %2174 = vmatprep.subr.mxu0 0.0
  %2175 = vmatpush1.msra.mxu0 0.0
  %2176 = vmatprep.subr.mxu0 0.0
  %2177 = vmatpush1.msra.mxu0 0.0
  %2178 = vmatprep.subr.mxu0 0.0
  %2179 = vmatpush1.msra.mxu0 0.0
  %2180 = vmatprep.subr.mxu0 0.0
  %2181 = vmatpush1.msra.mxu0 0.0
  %2182 = vmatprep.subr.mxu0 0.0
  %2183 = vmatpush1.msra.mxu0 0.0
  %2184 = vmatprep.subr.mxu0 0.0
  %2185 = vmatpush1.msra.mxu0 0.0
  %2186 = vmatprep.subr.mxu0 0.0
  %2187 = vmatpush1.msra.mxu0 0.0
  %2188 = vmatprep.subr.mxu0 0.0
  %2189 = vmatpush1.msra.mxu0 0.0
  %2190 = vmatprep.subr.mxu0 0.0
  %2191 = vmatpush1.msra.mxu0 0.0
  %2192 = vmatprep.subr.mxu0 0.0
  %2193 = vmatpush1.msra.mxu0 0.0
  %2194 = vmatprep.subr.mxu0 0.0
  %2195 = vmatpush1.msra.mxu0 0.0
  %2196 = vmatprep.mubr.f32.mxu0 0.0
  %2197 = vmatmul.mubr.f32.gmra.mrb[0].mxu0 %v1149
  %v2198 = vpop.f32.mrb[0].mxu0
  %v2199 = vadd.f32 0.0, %v2198
  %v2200 = vpop.f32.mrb[0].mxu0
  %2201 = vmatprep.mubr.f32.mxu0 0.0
  %2202 = vmatmul.mubr.f32.gmra.mrb[0].mxu0 %v1152
  %v2203 = vpop.f32.mrb[0].mxu0
  %v2204 = vadd.f32 0.0, %v2203
  %v2205 = vpop.f32.mrb[0].mxu0
  %2206 = vmatprep.mubr.f32.mxu0 0.0
  %2207 = vmatmul.mubr.f32.gmra.mrb[0].mxu0 %v1155
  %v2208 = vpop.f32.mrb[0].mxu0
  %v2209 = vadd.f32 0.0, %v2208
  %v2210 = vpop.f32.mrb[0].mxu0
  %2211 = vmatprep.mubr.f32.mxu0 0.0
  %2212 = vmatmul.mubr.f32.gmra.mrb[0].mxu0 %v1158
  %v2213 = vpop.f32.mrb[0].mxu0
  %v2214 = vadd.f32 0.0, %v2213
  %v2215 = vpop.f32.mrb[0].mxu0
  %2216 = vdwg.mxu0
  %v2217 = vadd.f32 %v2000, %v2199
  %v2218 = vadd.f32 %v2005, %v2204
  %v2219 = vadd.f32 %v2010, %v2209
  %v2220 = vadd.f32 %v2015, %v2214
  %v2222 = vlaneseq
  %v2223 = vshrl.u32 %v2222, 7
  %v2224 = vsub.s32 0, %v2223
  %v2225 = vrot.slane %v1703, %v2224
  %v2227 = vadd.f32 %v2217, %v2225
  %v2228 = vadd.f32 %v2218, %v2225
  %v2229 = vadd.f32 %v2219, %v2225
  %v2230 = vadd.f32 %v2220, %v2225
  %v2231 = vld [vmem:[%s9] sm:$0x1]
  %v2232 = vld [vmem:[%s10] sm:$0x1]
  %v2233 = vadd.f32 %v2227, %v2228
  %v2234 = vadd.f32 %v2233, %v2229
  %v2235 = vadd.f32 %v2234, %v2230
  %v2236 = vrot.slane %v2235, 4
  %v2237 = vadd.f32 %v2235, %v2236
  %v2238 = vrot.slane %v2237, 2
  %v2239 = vadd.f32 %v2237, %v2238
  %v2240 = vrot.slane %v2239, 1
  %v2241 = vadd.f32 %v2239, %v2240
  %2242 = vmatprep.subr.mxu0 0.0
  %2243 = vmatpush1.msra.mxu0 %v45
  %2244 = vmatprep.subr.mxu0 0.0
  %2245 = vmatpush1.msra.mxu0 %v46
  %2246 = vmatprep.subr.mxu0 0.0
  %2247 = vmatpush1.msra.mxu0 %v47
  %2248 = vmatprep.subr.mxu0 0.0
  %2249 = vmatpush1.msra.mxu0 %v48
  %2250 = vmatprep.subr.mxu0 0.0
  %2251 = vmatpush1.msra.mxu0 %v49
  %2252 = vmatprep.subr.mxu0 0.0
  %2253 = vmatpush1.msra.mxu0 %v50
  %2254 = vmatprep.subr.mxu0 0.0
  %2255 = vmatpush1.msra.mxu0 %v51
  %2256 = vmatprep.subr.mxu0 0.0
  %2257 = vmatpush1.msra.mxu0 %v52
  %2258 = vmatprep.subr.mxu0 0.0
  %2259 = vmatpush1.msra.mxu0 %v53
  %2260 = vmatprep.subr.mxu0 0.0
  %2261 = vmatpush1.msra.mxu0 %v54
  %2262 = vmatprep.subr.mxu0 0.0
  %2263 = vmatpush1.msra.mxu0 %v55
  %2264 = vmatprep.subr.mxu0 0.0
  %2265 = vmatpush1.msra.mxu0 %v56
  %2266 = vmatprep.subr.mxu0 0.0
  %2267 = vmatpush1.msra.mxu0 %v57
  %2268 = vmatprep.subr.mxu0 0.0
  %2269 = vmatpush1.msra.mxu0 %v58
  %2270 = vmatprep.subr.mxu0 0.0
  %2271 = vmatpush1.msra.mxu0 %v59
  %2272 = vmatprep.subr.mxu0 0.0
  %2273 = vmatpush1.msra.mxu0 %v60
  %2274 = vmatprep.subr.mxu0 0.0
  %2275 = vmatpush1.msra.mxu0 0.0
  %2276 = vmatprep.subr.mxu0 0.0
  %2277 = vmatpush1.msra.mxu0 0.0
  %2278 = vmatprep.subr.mxu0 0.0
  %2279 = vmatpush1.msra.mxu0 0.0
  %2280 = vmatprep.subr.mxu0 0.0
  %2281 = vmatpush1.msra.mxu0 0.0
  %2282 = vmatprep.subr.mxu0 0.0
  %2283 = vmatpush1.msra.mxu0 0.0
  %2284 = vmatprep.subr.mxu0 0.0
  %2285 = vmatpush1.msra.mxu0 0.0
  %2286 = vmatprep.subr.mxu0 0.0
  %2287 = vmatpush1.msra.mxu0 0.0
  %2288 = vmatprep.subr.mxu0 0.0
  %2289 = vmatpush1.msra.mxu0 0.0
  %2290 = vmatprep.subr.mxu0 0.0
  %2291 = vmatpush1.msra.mxu0 0.0
  %2292 = vmatprep.subr.mxu0 0.0
  %2293 = vmatpush1.msra.mxu0 0.0
  %2294 = vmatprep.subr.mxu0 0.0
  %2295 = vmatpush1.msra.mxu0 0.0
  %2296 = vmatprep.subr.mxu0 0.0
  %2297 = vmatpush1.msra.mxu0 0.0
  %2298 = vmatprep.subr.mxu0 0.0
  %2299 = vmatpush1.msra.mxu0 0.0
  %2300 = vmatprep.subr.mxu0 0.0
  %2301 = vmatpush1.msra.mxu0 0.0
  %2302 = vmatprep.subr.mxu0 0.0
  %2303 = vmatpush1.msra.mxu0 0.0
  %2304 = vmatprep.subr.mxu0 0.0
  %2305 = vmatpush1.msra.mxu0 0.0
  %2306 = vmatprep.mubr.f32.mxu0 0.0
  %2307 = vmatmul.mubr.f32.gmra.mrb[0].mxu0 %v2241
  %v2308 = vpop.f32.mrb[0].mxu0
  %v2309 = vadd.f32 0.0, %v2308
  %v2310 = vpop.f32.mrb[0].mxu0
  %2311 = vdwg.mxu0
  %v2312 = vlaneseq
  %v2313 = vshrl.u32 %v2312, 7
  %v2314 = vsub.s32 0, %v2313
  %v2315 = vrot.slane %v2309, %v2314
  %v2316 = vsub.f32 %v2227, %v2315
  %v2317 = vsub.f32 %v2228, %v2315
  %v2318 = vsub.f32 %v2229, %v2315
  %v2319 = vsub.f32 %v2230, %v2315
  %v2320 = vmul.f32 %v2316, %v2316
  %v2321 = vmul.f32 %v2317, %v2317
  %v2322 = vmul.f32 %v2318, %v2318
  %v2323 = vmul.f32 %v2319, %v2319
  %v2324 = vadd.f32 %v2320, %v2321
  %v2325 = vadd.f32 %v2324, %v2322
  %v2326 = vadd.f32 %v2325, %v2323
  %v2327 = vrot.slane %v2326, 4
  %v2328 = vadd.f32 %v2326, %v2327
  %v2329 = vrot.slane %v2328, 2
  %v2330 = vadd.f32 %v2328, %v2329
  %v2331 = vrot.slane %v2330, 1
  %v2332 = vadd.f32 %v2330, %v2331
  %2333 = vmatprep.subr.mxu0 0.0
  %2334 = vmatpush1.msra.mxu0 %v45
  %2335 = vmatprep.subr.mxu0 0.0
  %2336 = vmatpush1.msra.mxu0 %v46
  %2337 = vmatprep.subr.mxu0 0.0
  %2338 = vmatpush1.msra.mxu0 %v47
  %2339 = vmatprep.subr.mxu0 0.0
  %2340 = vmatpush1.msra.mxu0 %v48
  %2341 = vmatprep.subr.mxu0 0.0
  %2342 = vmatpush1.msra.mxu0 %v49
  %2343 = vmatprep.subr.mxu0 0.0
  %2344 = vmatpush1.msra.mxu0 %v50
  %2345 = vmatprep.subr.mxu0 0.0
  %2346 = vmatpush1.msra.mxu0 %v51
  %2347 = vmatprep.subr.mxu0 0.0
  %2348 = vmatpush1.msra.mxu0 %v52
  %2349 = vmatprep.subr.mxu0 0.0
  %2350 = vmatpush1.msra.mxu0 %v53
  %2351 = vmatprep.subr.mxu0 0.0
  %2352 = vmatpush1.msra.mxu0 %v54
  %2353 = vmatprep.subr.mxu0 0.0
  %2354 = vmatpush1.msra.mxu0 %v55
  %2355 = vmatprep.subr.mxu0 0.0
  %2356 = vmatpush1.msra.mxu0 %v56
  %2357 = vmatprep.subr.mxu0 0.0
  %2358 = vmatpush1.msra.mxu0 %v57
  %2359 = vmatprep.subr.mxu0 0.0
  %2360 = vmatpush1.msra.mxu0 %v58
  %2361 = vmatprep.subr.mxu0 0.0
  %2362 = vmatpush1.msra.mxu0 %v59
  %2363 = vmatprep.subr.mxu0 0.0
  %2364 = vmatpush1.msra.mxu0 %v60
  %2365 = vmatprep.subr.mxu0 0.0
  %2366 = vmatpush1.msra.mxu0 0.0
  %2367 = vmatprep.subr.mxu0 0.0
  %2368 = vmatpush1.msra.mxu0 0.0
  %2369 = vmatprep.subr.mxu0 0.0
  %2370 = vmatpush1.msra.mxu0 0.0
  %2371 = vmatprep.subr.mxu0 0.0
  %2372 = vmatpush1.msra.mxu0 0.0
  %2373 = vmatprep.subr.mxu0 0.0
  %2374 = vmatpush1.msra.mxu0 0.0
  %2375 = vmatprep.subr.mxu0 0.0
  %2376 = vmatpush1.msra.mxu0 0.0
  %2377 = vmatprep.subr.mxu0 0.0
  %2378 = vmatpush1.msra.mxu0 0.0
  %2379 = vmatprep.subr.mxu0 0.0
  %2380 = vmatpush1.msra.mxu0 0.0
  %2381 = vmatprep.subr.mxu0 0.0
  %2382 = vmatpush1.msra.mxu0 0.0
  %2383 = vmatprep.subr.mxu0 0.0
  %2384 = vmatpush1.msra.mxu0 0.0
  %2385 = vmatprep.subr.mxu0 0.0
  %2386 = vmatpush1.msra.mxu0 0.0
  %2387 = vmatprep.subr.mxu0 0.0
  %2388 = vmatpush1.msra.mxu0 0.0
  %2389 = vmatprep.subr.mxu0 0.0
  %2390 = vmatpush1.msra.mxu0 0.0
  %2391 = vmatprep.subr.mxu0 0.0
  %2392 = vmatpush1.msra.mxu0 0.0
  %2393 = vmatprep.subr.mxu0 0.0
  %2394 = vmatpush1.msra.mxu0 0.0
  %2395 = vmatprep.subr.mxu0 0.0
  %2396 = vmatpush1.msra.mxu0 0.0
  %2397 = vmatprep.mubr.f32.mxu0 0.0
  %2398 = vmatmul.mubr.f32.gmra.mrb[0].mxu0 %v2332
  %v2399 = vpop.f32.mrb[0].mxu0
  %v2400 = vadd.f32 1e-05, %v2399
  %v2401 = vpop.f32.mrb[0].mxu0
  %2402 = vdwg.mxu0
  %v2403 = vrsqrt.pop %v2400
  %v2404 = vmul.f32 %v2403, %v2231
  %v2405 = vlaneseq
  %v2406 = vshrl.u32 %v2405, 7
  %v2407 = vsub.s32 0, %v2406
  %v2408 = vrot.slane %v2404, %v2407
  %v2409 = vmul.f32 %v2316, %v2408
  %v2410 = vmul.f32 %v2317, %v2408
  %v2411 = vmul.f32 %v2318, %v2408
  %v2412 = vmul.f32 %v2319, %v2408
  %v2414 = vlaneseq
  %v2415 = vshrl.u32 %v2414, 7
  %v2416 = vsub.s32 0, %v2415
  %v2417 = vrot.slane %v2232, %v2416
  %v2419 = vadd.f32 %v2409, %v2417
  %v2420 = vadd.f32 %v2410, %v2417
  %v2421 = vadd.f32 %v2411, %v2417
  %v2422 = vadd.f32 %v2412, %v2417
  %v2423 = vmax.f32 %v2419, 0.0
  %v2424 = vmax.f32 %v2420, 0.0
  %v2425 = vmax.f32 %v2421, 0.0
  %v2426 = vmax.f32 %v2422, 0.0
  %s2427 = scalar_lea.vmem %s8, 1
  %v2428 = vld [vmem:[%s2427] sm:$0x1]
  %v2429 = vpack.c.bf16 %v2424, %v2423
  %v2430 = vpack.c.bf16 %v2426, %v2425
  %s2431 = scalar_lea.vmem %s7, 192
  %v2432 = vld [vmem:[%s2431] sm:$0xf]
  %v2433 = vld [vmem:[%s2431 + $0x4] sm:$0xf]
  %v2434 = vld [vmem:[%s2431 + $0x8] sm:$0xf]
  %v2435 = vld [vmem:[%s2431 + $0xc] sm:$0xf]
  %v2436 = vld [vmem:[%s2431 + $0x10] sm:$0xf]
  %v2437 = vld [vmem:[%s2431 + $0x14] sm:$0xf]
  %v2438 = vld [vmem:[%s2431 + $0x18] sm:$0xf]
  %v2439 = vld [vmem:[%s2431 + $0x1c] sm:$0xf]
  %v2440 = vld [vmem:[%s2431 + $0x20] sm:$0xf]
  %v2441 = vld [vmem:[%s2431 + $0x24] sm:$0xf]
  %v2442 = vld [vmem:[%s2431 + $0x28] sm:$0xf]
  %v2443 = vld [vmem:[%s2431 + $0x2c] sm:$0xf]
  %v2444 = vld [vmem:[%s2431 + $0x30] sm:$0xf]
  %v2445 = vld [vmem:[%s2431 + $0x34] sm:$0xf]
  %v2446 = vld [vmem:[%s2431 + $0x38] sm:$0xf]
  %v2447 = vld [vmem:[%s2431 + $0x3c] sm:$0xf]
  %v2464 = vunpack.c.l.b16 %v2432
  %v2465 = vunpack.c.l.b16 %v2433
  %v2466 = vunpack.c.l.b16 %v2434
  %v2467 = vunpack.c.l.b16 %v2435
  %v2468 = vunpack.c.l.b16 %v2436
  %v2469 = vunpack.c.l.b16 %v2437
  %v2470 = vunpack.c.l.b16 %v2438
  %v2471 = vunpack.c.l.b16 %v2439
  %v2472 = vunpack.c.l.b16 %v2440
  %v2473 = vunpack.c.l.b16 %v2441
  %v2474 = vunpack.c.l.b16 %v2442
  %v2475 = vunpack.c.l.b16 %v2443
  %v2476 = vunpack.c.l.b16 %v2444
  %v2477 = vunpack.c.l.b16 %v2445
  %v2478 = vunpack.c.l.b16 %v2446
  %v2479 = vunpack.c.l.b16 %v2447
  %v2480 = vpack.c.b16 %v2465, %v2464
  %v2481 = vpack.c.b16 %v2467, %v2466
  %v2482 = vpack.c.b16 %v2469, %v2468
  %v2483 = vpack.c.b16 %v2471, %v2470
  %v2484 = vpack.c.b16 %v2473, %v2472
  %v2485 = vpack.c.b16 %v2475, %v2474
  %v2486 = vpack.c.b16 %v2477, %v2476
  %v2487 = vpack.c.b16 %v2479, %v2478
  %2496 = vmatprep.subr.bf16.mxu0 0
  %2497 = vmatpush1.bf16.msra.mxu0 %v2480
  %2498 = vmatprep.subr.bf16.mxu0 0
  %2499 = vmatpush1.bf16.msra.mxu0 %v2481
  %2500 = vmatprep.subr.bf16.mxu0 0
  %2501 = vmatpush1.bf16.msra.mxu0 %v2482
  %2502 = vmatprep.subr.bf16.mxu0 0
  %2503 = vmatpush1.bf16.msra.mxu0 %v2483
  %2504 = vmatprep.subr.bf16.mxu0 0
  %2505 = vmatpush1.bf16.msra.mxu0 %v2484
  %2506 = vmatprep.subr.bf16.mxu0 0
  %2507 = vmatpush1.bf16.msra.mxu0 %v2485
  %2508 = vmatprep.subr.bf16.mxu0 0
  %2509 = vmatpush1.bf16.msra.mxu0 %v2486
  %2510 = vmatprep.subr.bf16.mxu0 0
  %2511 = vmatpush1.bf16.msra.mxu0 %v2487
  %2512 = vmatprep.subr.bf16.mxu0 0
  %2513 = vmatpush1.bf16.msra.mxu0 0
  %2514 = vmatprep.subr.bf16.mxu0 0
  %2515 = vmatpush1.bf16.msra.mxu0 0
  %2516 = vmatprep.subr.bf16.mxu0 0
  %2517 = vmatpush1.bf16.msra.mxu0 0
  %2518 = vmatprep.subr.bf16.mxu0 0
  %2519 = vmatpush1.bf16.msra.mxu0 0
  %2520 = vmatprep.subr.bf16.mxu0 0
  %2521 = vmatpush1.bf16.msra.mxu0 0
  %2522 = vmatprep.subr.bf16.mxu0 0
  %2523 = vmatpush1.bf16.msra.mxu0 0
  %2524 = vmatprep.subr.bf16.mxu0 0
  %2525 = vmatpush1.bf16.msra.mxu0 0
  %2526 = vmatprep.subr.bf16.mxu0 0
  %2527 = vmatpush1.bf16.msra.mxu0 0
  %2528 = vmatprep.mubr.bf16.mxu0 0
  %2529 = vmatmul.mubr.bf16.gmra.mrb[0].mxu0 %v2429
  %v2530 = vpop.f32.mrb[0].mxu0
  %v2531 = vadd.f32 0.0, %v2530
  %v2532 = vpop.f32.mrb[0].mxu0
  %v2533 = vpop.f32.mrb[0].mxu0
  %v2534 = vadd.f32 0.0, %v2533
  %v2535 = vpop.f32.mrb[0].mxu0
  %2536 = vmatprep.mubr.bf16.mxu0 0
  %2537 = vmatmul.mubr.bf16.gmra.mrb[0].mxu0 %v2430
  %v2538 = vpop.f32.mrb[0].mxu0
  %v2539 = vadd.f32 0.0, %v2538
  %v2540 = vpop.f32.mrb[0].mxu0
  %v2541 = vpop.f32.mrb[0].mxu0
  %v2542 = vadd.f32 0.0, %v2541
  %v2543 = vpop.f32.mrb[0].mxu0
  %2544 = vdwg.mxu0
  %s2545 = scalar_lea.vmem %s7, 256
  %v2546 = vld [vmem:[%s2545] sm:$0xf]
  %v2547 = vld [vmem:[%s2545 + $0x4] sm:$0xf]
  %v2548 = vld [vmem:[%s2545 + $0x8] sm:$0xf]
  %v2549 = vld [vmem:[%s2545 + $0xc] sm:$0xf]
  %v2550 = vld [vmem:[%s2545 + $0x10] sm:$0xf]
  %v2551 = vld [vmem:[%s2545 + $0x14] sm:$0xf]
  %v2552 = vld [vmem:[%s2545 + $0x18] sm:$0xf]
  %v2553 = vld [vmem:[%s2545 + $0x1c] sm:$0xf]
  %v2554 = vld [vmem:[%s2545 + $0x20] sm:$0xf]
  %v2555 = vld [vmem:[%s2545 + $0x24] sm:$0xf]
  %v2556 = vld [vmem:[%s2545 + $0x28] sm:$0xf]
  %v2557 = vld [vmem:[%s2545 + $0x2c] sm:$0xf]
  %v2558 = vld [vmem:[%s2545 + $0x30] sm:$0xf]
  %v2559 = vld [vmem:[%s2545 + $0x34] sm:$0xf]
  %v2560 = vld [vmem:[%s2545 + $0x38] sm:$0xf]
  %v2561 = vld [vmem:[%s2545 + $0x3c] sm:$0xf]
  %v2578 = vunpack.c.l.b16 %v2546
  %v2579 = vunpack.c.l.b16 %v2547
  %v2580 = vunpack.c.l.b16 %v2548
  %v2581 = vunpack.c.l.b16 %v2549
  %v2582 = vunpack.c.l.b16 %v2550
  %v2583 = vunpack.c.l.b16 %v2551
  %v2584 = vunpack.c.l.b16 %v2552
  %v2585 = vunpack.c.l.b16 %v2553
  %v2586 = vunpack.c.l.b16 %v2554
  %v2587 = vunpack.c.l.b16 %v2555
  %v2588 = vunpack.c.l.b16 %v2556
  %v2589 = vunpack.c.l.b16 %v2557
  %v2590 = vunpack.c.l.b16 %v2558
  %v2591 = vunpack.c.l.b16 %v2559
  %v2592 = vunpack.c.l.b16 %v2560
  %v2593 = vunpack.c.l.b16 %v2561
  %v2594 = vpack.c.b16 %v2579, %v2578
  %v2595 = vpack.c.b16 %v2581, %v2580
  %v2596 = vpack.c.b16 %v2583, %v2582
  %v2597 = vpack.c.b16 %v2585, %v2584
  %v2598 = vpack.c.b16 %v2587, %v2586
  %v2599 = vpack.c.b16 %v2589, %v2588
  %v2600 = vpack.c.b16 %v2591, %v2590
  %v2601 = vpack.c.b16 %v2593, %v2592
  %2610 = vmatprep.subr.bf16.mxu0 0
  %2611 = vmatpush1.bf16.msra.mxu0 %v2594
  %2612 = vmatprep.subr.bf16.mxu0 0
  %2613 = vmatpush1.bf16.msra.mxu0 %v2595
  %2614 = vmatprep.subr.bf16.mxu0 0
  %2615 = vmatpush1.bf16.msra.mxu0 %v2596
  %2616 = vmatprep.subr.bf16.mxu0 0
  %2617 = vmatpush1.bf16.msra.mxu0 %v2597
  %2618 = vmatprep.subr.bf16.mxu0 0
  %2619 = vmatpush1.bf16.msra.mxu0 %v2598
  %2620 = vmatprep.subr.bf16.mxu0 0
  %2621 = vmatpush1.bf16.msra.mxu0 %v2599
  %2622 = vmatprep.subr.bf16.mxu0 0
  %2623 = vmatpush1.bf16.msra.mxu0 %v2600
  %2624 = vmatprep.subr.bf16.mxu0 0
  %2625 = vmatpush1.bf16.msra.mxu0 %v2601
  %2626 = vmatprep.subr.bf16.mxu0 0
  %2627 = vmatpush1.bf16.msra.mxu0 0
  %2628 = vmatprep.subr.bf16.mxu0 0
  %2629 = vmatpush1.bf16.msra.mxu0 0
  %2630 = vmatprep.subr.bf16.mxu0 0
  %2631 = vmatpush1.bf16.msra.mxu0 0
  %2632 = vmatprep.subr.bf16.mxu0 0
  %2633 = vmatpush1.bf16.msra.mxu0 0
  %2634 = vmatprep.subr.bf16.mxu0 0
  %2635 = vmatpush1.bf16.msra.mxu0 0
  %2636 = vmatprep.subr.bf16.mxu0 0
  %2637 = vmatpush1.bf16.msra.mxu0 0
  %2638 = vmatprep.subr.bf16.mxu0 0
  %2639 = vmatpush1.bf16.msra.mxu0 0
  %2640 = vmatprep.subr.bf16.mxu0 0
  %2641 = vmatpush1.bf16.msra.mxu0 0
  %2642 = vmatprep.mubr.bf16.mxu0 0
  %2643 = vmatmul.mubr.bf16.gmra.mrb[0].mxu0 %v2429
  %v2644 = vpop.f32.mrb[0].mxu0
  %v2645 = vadd.f32 0.0, %v2644
  %v2646 = vpop.f32.mrb[0].mxu0
  %v2647 = vpop.f32.mrb[0].mxu0
  %v2648 = vadd.f32 0.0, %v2647
  %v2649 = vpop.f32.mrb[0].mxu0
  %2650 = vmatprep.mubr.bf16.mxu0 0
  %2651 = vmatmul.mubr.bf16.gmra.mrb[0].mxu0 %v2430
  %v2652 = vpop.f32.mrb[0].mxu0
  %v2653 = vadd.f32 0.0, %v2652
  %v2654 = vpop.f32.mrb[0].mxu0
  %v2655 = vpop.f32.mrb[0].mxu0
  %v2656 = vadd.f32 0.0, %v2655
  %v2657 = vpop.f32.mrb[0].mxu0
  %2658 = vdwg.mxu0
  %2659 = vmatprep.subr.mxu0 0.0
  %2660 = vmatpush1.msra.mxu0 %v2531
  %2661 = vmatprep.subr.mxu0 0.0
  %2662 = vmatpush1.msra.mxu0 %v2534
  %2663 = vmatprep.subr.mxu0 0.0
  %2664 = vmatpush1.msra.mxu0 %v2539
  %2665 = vmatprep.subr.mxu0 0.0
  %2666 = vmatpush1.msra.mxu0 %v2542
  %2667 = vmatprep.subr.mxu0 0.0
  %2668 = vmatpush1.msra.mxu0 0.0
  %2669 = vmatprep.subr.mxu0 0.0
  %2670 = vmatpush1.msra.mxu0 0.0
  %2671 = vmatprep.subr.mxu0 0.0
  %2672 = vmatpush1.msra.mxu0 0.0
  %2673 = vmatprep.subr.mxu0 0.0
  %2674 = vmatpush1.msra.mxu0 0.0
  %2675 = vmatprep.subr.mxu0 0.0
  %2676 = vmatpush1.msra.mxu0 0.0
  %2677 = vmatprep.subr.mxu0 0.0
  %2678 = vmatpush1.msra.mxu0 0.0
  %2679 = vmatprep.subr.mxu0 0.0
  %2680 = vmatpush1.msra.mxu0 0.0
  %2681 = vmatprep.subr.mxu0 0.0
  %2682 = vmatpush1.msra.mxu0 0.0
  %2683 = vmatprep.subr.mxu0 0.0
  %2684 = vmatpush1.msra.mxu0 0.0
  %2685 = vmatprep.subr.mxu0 0.0
  %2686 = vmatpush1.msra.mxu0 0.0
  %2687 = vmatprep.subr.mxu0 0.0
  %2688 = vmatpush1.msra.mxu0 0.0
  %2689 = vmatprep.subr.mxu0 0.0
  %2690 = vmatpush1.msra.mxu0 0.0
  %2691 = vmatprep.subr.mxu0 0.0
  %2692 = vmatpush1.msra.mxu0 0.0
  %2693 = vmatprep.subr.mxu0 0.0
  %2694 = vmatpush1.msra.mxu0 0.0
  %2695 = vmatprep.subr.mxu0 0.0
  %2696 = vmatpush1.msra.mxu0 0.0
  %2697 = vmatprep.subr.mxu0 0.0
  %2698 = vmatpush1.msra.mxu0 0.0
  %2699 = vmatprep.subr.mxu0 0.0
  %2700 = vmatpush1.msra.mxu0 0.0
  %2701 = vmatprep.subr.mxu0 0.0
  %2702 = vmatpush1.msra.mxu0 0.0
  %2703 = vmatprep.subr.mxu0 0.0
  %2704 = vmatpush1.msra.mxu0 0.0
  %2705 = vmatprep.subr.mxu0 0.0
  %2706 = vmatpush1.msra.mxu0 0.0
  %2707 = vmatprep.subr.mxu0 0.0
  %2708 = vmatpush1.msra.mxu0 0.0
  %2709 = vmatprep.subr.mxu0 0.0
  %2710 = vmatpush1.msra.mxu0 0.0
  %2711 = vmatprep.subr.mxu0 0.0
  %2712 = vmatpush1.msra.mxu0 0.0
  %2713 = vmatprep.subr.mxu0 0.0
  %2714 = vmatpush1.msra.mxu0 0.0
  %2715 = vmatprep.subr.mxu0 0.0
  %2716 = vmatpush1.msra.mxu0 0.0
  %2717 = vmatprep.subr.mxu0 0.0
  %2718 = vmatpush1.msra.mxu0 0.0
  %2719 = vmatprep.subr.mxu0 0.0
  %2720 = vmatpush1.msra.mxu0 0.0
  %2721 = vmatprep.subr.mxu0 0.0
  %2722 = vmatpush1.msra.mxu0 0.0
  %2723 = vmatprep.mubr.f32.mxu0 0.0
  %2724 = vmatmul.mubr.f32.gmra.mrb[0].mxu0 %v811
  %v2725 = vpop.f32.mrb[0].mxu0
  %v2726 = vadd.f32 %v2645, %v2725
  %v2727 = vpop.f32.mrb[0].mxu0
  %2728 = vmatprep.mubr.f32.mxu0 0.0
  %2729 = vmatmul.mubr.f32.gmra.mrb[0].mxu0 %v814
  %v2730 = vpop.f32.mrb[0].mxu0
  %v2731 = vadd.f32 %v2648, %v2730
  %v2732 = vpop.f32.mrb[0].mxu0
  %2733 = vmatprep.mubr.f32.mxu0 0.0
  %2734 = vmatmul.mubr.f32.gmra.mrb[0].mxu0 %v817
  %v2735 = vpop.f32.mrb[0].mxu0
  %v2736 = vadd.f32 %v2653, %v2735
  %v2737 = vpop.f32.mrb[0].mxu0
  %2738 = vmatprep.mubr.f32.mxu0 0.0
  %2739 = vmatmul.mubr.f32.gmra.mrb[0].mxu0 %v820
  %v2740 = vpop.f32.mrb[0].mxu0
  %v2741 = vadd.f32 %v2656, %v2740
  %v2742 = vpop.f32.mrb[0].mxu0
  %2743 = vdwg.mxu0
  %s2744 = scalar_lea.vmem %s7, 320
  %v2745 = vld [vmem:[%s2744] sm:$0xf]
  %v2746 = vld [vmem:[%s2744 + $0x4] sm:$0xf]
  %v2747 = vld [vmem:[%s2744 + $0x8] sm:$0xf]
  %v2748 = vld [vmem:[%s2744 + $0xc] sm:$0xf]
  %v2749 = vld [vmem:[%s2744 + $0x10] sm:$0xf]
  %v2750 = vld [vmem:[%s2744 + $0x14] sm:$0xf]
  %v2751 = vld [vmem:[%s2744 + $0x18] sm:$0xf]
  %v2752 = vld [vmem:[%s2744 + $0x1c] sm:$0xf]
  %v2753 = vld [vmem:[%s2744 + $0x20] sm:$0xf]
  %v2754 = vld [vmem:[%s2744 + $0x24] sm:$0xf]
  %v2755 = vld [vmem:[%s2744 + $0x28] sm:$0xf]
  %v2756 = vld [vmem:[%s2744 + $0x2c] sm:$0xf]
  %v2757 = vld [vmem:[%s2744 + $0x30] sm:$0xf]
  %v2758 = vld [vmem:[%s2744 + $0x34] sm:$0xf]
  %v2759 = vld [vmem:[%s2744 + $0x38] sm:$0xf]
  %v2760 = vld [vmem:[%s2744 + $0x3c] sm:$0xf]
  %v2777 = vunpack.c.l.b16 %v2745
  %v2778 = vunpack.c.l.b16 %v2746
  %v2779 = vunpack.c.l.b16 %v2747
  %v2780 = vunpack.c.l.b16 %v2748
  %v2781 = vunpack.c.l.b16 %v2749
  %v2782 = vunpack.c.l.b16 %v2750
  %v2783 = vunpack.c.l.b16 %v2751
  %v2784 = vunpack.c.l.b16 %v2752
  %v2785 = vunpack.c.l.b16 %v2753
  %v2786 = vunpack.c.l.b16 %v2754
  %v2787 = vunpack.c.l.b16 %v2755
  %v2788 = vunpack.c.l.b16 %v2756
  %v2789 = vunpack.c.l.b16 %v2757
  %v2790 = vunpack.c.l.b16 %v2758
  %v2791 = vunpack.c.l.b16 %v2759
  %v2792 = vunpack.c.l.b16 %v2760
  %v2793 = vpack.c.b16 %v2778, %v2777
  %v2794 = vpack.c.b16 %v2780, %v2779
  %v2795 = vpack.c.b16 %v2782, %v2781
  %v2796 = vpack.c.b16 %v2784, %v2783
  %v2797 = vpack.c.b16 %v2786, %v2785
  %v2798 = vpack.c.b16 %v2788, %v2787
  %v2799 = vpack.c.b16 %v2790, %v2789
  %v2800 = vpack.c.b16 %v2792, %v2791
  %2809 = vmatprep.subr.bf16.mxu0 0
  %2810 = vmatpush1.bf16.msra.mxu0 %v2793
  %2811 = vmatprep.subr.bf16.mxu0 0
  %2812 = vmatpush1.bf16.msra.mxu0 %v2794
  %2813 = vmatprep.subr.bf16.mxu0 0
  %2814 = vmatpush1.bf16.msra.mxu0 %v2795
  %2815 = vmatprep.subr.bf16.mxu0 0
  %2816 = vmatpush1.bf16.msra.mxu0 %v2796
  %2817 = vmatprep.subr.bf16.mxu0 0
  %2818 = vmatpush1.bf16.msra.mxu0 %v2797
  %2819 = vmatprep.subr.bf16.mxu0 0
  %2820 = vmatpush1.bf16.msra.mxu0 %v2798
  %2821 = vmatprep.subr.bf16.mxu0 0
  %2822 = vmatpush1.bf16.msra.mxu0 %v2799
  %2823 = vmatprep.subr.bf16.mxu0 0
  %2824 = vmatpush1.bf16.msra.mxu0 %v2800
  %2825 = vmatprep.subr.bf16.mxu0 0
  %2826 = vmatpush1.bf16.msra.mxu0 0
  %2827 = vmatprep.subr.bf16.mxu0 0
  %2828 = vmatpush1.bf16.msra.mxu0 0
  %2829 = vmatprep.subr.bf16.mxu0 0
  %2830 = vmatpush1.bf16.msra.mxu0 0
  %2831 = vmatprep.subr.bf16.mxu0 0
  %2832 = vmatpush1.bf16.msra.mxu0 0
  %2833 = vmatprep.subr.bf16.mxu0 0
  %2834 = vmatpush1.bf16.msra.mxu0 0
  %2835 = vmatprep.subr.bf16.mxu0 0
  %2836 = vmatpush1.bf16.msra.mxu0 0
  %2837 = vmatprep.subr.bf16.mxu0 0
  %2838 = vmatpush1.bf16.msra.mxu0 0
  %2839 = vmatprep.subr.bf16.mxu0 0
  %2840 = vmatpush1.bf16.msra.mxu0 0
  %2841 = vmatprep.mubr.bf16.mxu0 0
  %2842 = vmatmul.mubr.bf16.gmra.mrb[0].mxu0 %v2429
  %v2843 = vpop.f32.mrb[0].mxu0
  %v2844 = vadd.f32 0.0, %v2843
  %v2845 = vpop.f32.mrb[0].mxu0
  %v2846 = vpop.f32.mrb[0].mxu0
  %v2847 = vadd.f32 0.0, %v2846
  %v2848 = vpop.f32.mrb[0].mxu0
  %2849 = vmatprep.mubr.bf16.mxu0 0
  %2850 = vmatmul.mubr.bf16.gmra.mrb[0].mxu0 %v2430
  %v2851 = vpop.f32.mrb[0].mxu0
  %v2852 = vadd.f32 0.0, %v2851
  %v2853 = vpop.f32.mrb[0].mxu0
  %v2854 = vpop.f32.mrb[0].mxu0
  %v2855 = vadd.f32 0.0, %v2854
  %v2856 = vpop.f32.mrb[0].mxu0
  %2857 = vdwg.mxu0
  %2858 = vmatprep.subr.mxu0 0.0
  %2859 = vmatpush1.msra.mxu0 %v2844
  %2860 = vmatprep.subr.mxu0 0.0
  %2861 = vmatpush1.msra.mxu0 %v2847
  %2862 = vmatprep.subr.mxu0 0.0
  %2863 = vmatpush1.msra.mxu0 %v2852
  %2864 = vmatprep.subr.mxu0 0.0
  %2865 = vmatpush1.msra.mxu0 %v2855
  %2866 = vmatprep.subr.mxu0 0.0
  %2867 = vmatpush1.msra.mxu0 0.0
  %2868 = vmatprep.subr.mxu0 0.0
  %2869 = vmatpush1.msra.mxu0 0.0
  %2870 = vmatprep.subr.mxu0 0.0
  %2871 = vmatpush1.msra.mxu0 0.0
  %2872 = vmatprep.subr.mxu0 0.0
  %2873 = vmatpush1.msra.mxu0 0.0
  %2874 = vmatprep.subr.mxu0 0.0
  %2875 = vmatpush1.msra.mxu0 0.0
  %2876 = vmatprep.subr.mxu0 0.0
  %2877 = vmatpush1.msra.mxu0 0.0
  %2878 = vmatprep.subr.mxu0 0.0
  %2879 = vmatpush1.msra.mxu0 0.0
  %2880 = vmatprep.subr.mxu0 0.0
  %2881 = vmatpush1.msra.mxu0 0.0
  %2882 = vmatprep.subr.mxu0 0.0
  %2883 = vmatpush1.msra.mxu0 0.0
  %2884 = vmatprep.subr.mxu0 0.0
  %2885 = vmatpush1.msra.mxu0 0.0
  %2886 = vmatprep.subr.mxu0 0.0
  %2887 = vmatpush1.msra.mxu0 0.0
  %2888 = vmatprep.subr.mxu0 0.0
  %2889 = vmatpush1.msra.mxu0 0.0
  %2890 = vmatprep.subr.mxu0 0.0
  %2891 = vmatpush1.msra.mxu0 0.0
  %2892 = vmatprep.subr.mxu0 0.0
  %2893 = vmatpush1.msra.mxu0 0.0
  %2894 = vmatprep.subr.mxu0 0.0
  %2895 = vmatpush1.msra.mxu0 0.0
  %2896 = vmatprep.subr.mxu0 0.0
  %2897 = vmatpush1.msra.mxu0 0.0
  %2898 = vmatprep.subr.mxu0 0.0
  %2899 = vmatpush1.msra.mxu0 0.0
  %2900 = vmatprep.subr.mxu0 0.0
  %2901 = vmatpush1.msra.mxu0 0.0
  %2902 = vmatprep.subr.mxu0 0.0
  %2903 = vmatpush1.msra.mxu0 0.0
  %2904 = vmatprep.subr.mxu0 0.0
  %2905 = vmatpush1.msra.mxu0 0.0
  %2906 = vmatprep.subr.mxu0 0.0
  %2907 = vmatpush1.msra.mxu0 0.0
  %2908 = vmatprep.subr.mxu0 0.0
  %2909 = vmatpush1.msra.mxu0 0.0
  %2910 = vmatprep.subr.mxu0 0.0
  %2911 = vmatpush1.msra.mxu0 0.0
  %2912 = vmatprep.subr.mxu0 0.0
  %2913 = vmatpush1.msra.mxu0 0.0
  %2914 = vmatprep.subr.mxu0 0.0
  %2915 = vmatpush1.msra.mxu0 0.0
  %2916 = vmatprep.subr.mxu0 0.0
  %2917 = vmatpush1.msra.mxu0 0.0
  %2918 = vmatprep.subr.mxu0 0.0
  %2919 = vmatpush1.msra.mxu0 0.0
  %2920 = vmatprep.subr.mxu0 0.0
  %2921 = vmatpush1.msra.mxu0 0.0
  %2922 = vmatprep.mubr.f32.mxu0 0.0
  %2923 = vmatmul.mubr.f32.gmra.mrb[0].mxu0 %v1149
  %v2924 = vpop.f32.mrb[0].mxu0
  %v2925 = vadd.f32 0.0, %v2924
  %v2926 = vpop.f32.mrb[0].mxu0
  %2927 = vmatprep.mubr.f32.mxu0 0.0
  %2928 = vmatmul.mubr.f32.gmra.mrb[0].mxu0 %v1152
  %v2929 = vpop.f32.mrb[0].mxu0
  %v2930 = vadd.f32 0.0, %v2929
  %v2931 = vpop.f32.mrb[0].mxu0
  %2932 = vmatprep.mubr.f32.mxu0 0.0
  %2933 = vmatmul.mubr.f32.gmra.mrb[0].mxu0 %v1155
  %v2934 = vpop.f32.mrb[0].mxu0
  %v2935 = vadd.f32 0.0, %v2934
  %v2936 = vpop.f32.mrb[0].mxu0
  %2937 = vmatprep.mubr.f32.mxu0 0.0
  %2938 = vmatmul.mubr.f32.gmra.mrb[0].mxu0 %v1158
  %v2939 = vpop.f32.mrb[0].mxu0
  %v2940 = vadd.f32 0.0, %v2939
  %v2941 = vpop.f32.mrb[0].mxu0
  %2942 = vdwg.mxu0
  %v2943 = vadd.f32 %v2726, %v2925
  %v2944 = vadd.f32 %v2731, %v2930
  %v2945 = vadd.f32 %v2736, %v2935
  %v2946 = vadd.f32 %v2741, %v2940
  %v2948 = vlaneseq
  %v2949 = vshrl.u32 %v2948, 7
  %v2950 = vsub.s32 0, %v2949
  %v2951 = vrot.slane %v2428, %v2950
  %v2953 = vadd.f32 %v2943, %v2951
  %v2954 = vadd.f32 %v2944, %v2951
  %v2955 = vadd.f32 %v2945, %v2951
  %v2956 = vadd.f32 %v2946, %v2951
  %s2957 = scalar_lea.vmem %s9, 1
  %v2958 = vld [vmem:[%s2957] sm:$0x1]
  %s2959 = scalar_lea.vmem %s10, 1
  %v2960 = vld [vmem:[%s2959] sm:$0x1]
  %v2961 = vadd.f32 %v2953, %v2954
  %v2962 = vadd.f32 %v2961, %v2955
  %v2963 = vadd.f32 %v2962, %v2956
  %v2964 = vrot.slane %v2963, 4
  %v2965 = vadd.f32 %v2963, %v2964
  %v2966 = vrot.slane %v2965, 2
  %v2967 = vadd.f32 %v2965, %v2966
  %v2968 = vrot.slane %v2967, 1
  %v2969 = vadd.f32 %v2967, %v2968
  %2970 = vmatprep.subr.mxu0 0.0
  %2971 = vmatpush1.msra.mxu0 %v45
  %2972 = vmatprep.subr.mxu0 0.0
  %2973 = vmatpush1.msra.mxu0 %v46
  %2974 = vmatprep.subr.mxu0 0.0
  %2975 = vmatpush1.msra.mxu0 %v47
  %2976 = vmatprep.subr.mxu0 0.0
  %2977 = vmatpush1.msra.mxu0 %v48
  %2978 = vmatprep.subr.mxu0 0.0
  %2979 = vmatpush1.msra.mxu0 %v49
  %2980 = vmatprep.subr.mxu0 0.0
  %2981 = vmatpush1.msra.mxu0 %v50
  %2982 = vmatprep.subr.mxu0 0.0
  %2983 = vmatpush1.msra.mxu0 %v51
  %2984 = vmatprep.subr.mxu0 0.0
  %2985 = vmatpush1.msra.mxu0 %v52
  %2986 = vmatprep.subr.mxu0 0.0
  %2987 = vmatpush1.msra.mxu0 %v53
  %2988 = vmatprep.subr.mxu0 0.0
  %2989 = vmatpush1.msra.mxu0 %v54
  %2990 = vmatprep.subr.mxu0 0.0
  %2991 = vmatpush1.msra.mxu0 %v55
  %2992 = vmatprep.subr.mxu0 0.0
  %2993 = vmatpush1.msra.mxu0 %v56
  %2994 = vmatprep.subr.mxu0 0.0
  %2995 = vmatpush1.msra.mxu0 %v57
  %2996 = vmatprep.subr.mxu0 0.0
  %2997 = vmatpush1.msra.mxu0 %v58
  %2998 = vmatprep.subr.mxu0 0.0
  %2999 = vmatpush1.msra.mxu0 %v59
  %3000 = vmatprep.subr.mxu0 0.0
  %3001 = vmatpush1.msra.mxu0 %v60
  %3002 = vmatprep.subr.mxu0 0.0
  %3003 = vmatpush1.msra.mxu0 0.0
  %3004 = vmatprep.subr.mxu0 0.0
  %3005 = vmatpush1.msra.mxu0 0.0
  %3006 = vmatprep.subr.mxu0 0.0
  %3007 = vmatpush1.msra.mxu0 0.0
  %3008 = vmatprep.subr.mxu0 0.0
  %3009 = vmatpush1.msra.mxu0 0.0
  %3010 = vmatprep.subr.mxu0 0.0
  %3011 = vmatpush1.msra.mxu0 0.0
  %3012 = vmatprep.subr.mxu0 0.0
  %3013 = vmatpush1.msra.mxu0 0.0
  %3014 = vmatprep.subr.mxu0 0.0
  %3015 = vmatpush1.msra.mxu0 0.0
  %3016 = vmatprep.subr.mxu0 0.0
  %3017 = vmatpush1.msra.mxu0 0.0
  %3018 = vmatprep.subr.mxu0 0.0
  %3019 = vmatpush1.msra.mxu0 0.0
  %3020 = vmatprep.subr.mxu0 0.0
  %3021 = vmatpush1.msra.mxu0 0.0
  %3022 = vmatprep.subr.mxu0 0.0
  %3023 = vmatpush1.msra.mxu0 0.0
  %3024 = vmatprep.subr.mxu0 0.0
  %3025 = vmatpush1.msra.mxu0 0.0
  %3026 = vmatprep.subr.mxu0 0.0
  %3027 = vmatpush1.msra.mxu0 0.0
  %3028 = vmatprep.subr.mxu0 0.0
  %3029 = vmatpush1.msra.mxu0 0.0
  %3030 = vmatprep.subr.mxu0 0.0
  %3031 = vmatpush1.msra.mxu0 0.0
  %3032 = vmatprep.subr.mxu0 0.0
  %3033 = vmatpush1.msra.mxu0 0.0
  %3034 = vmatprep.mubr.f32.mxu0 0.0
  %3035 = vmatmul.mubr.f32.gmra.mrb[0].mxu0 %v2969
  %v3036 = vpop.f32.mrb[0].mxu0
  %v3037 = vadd.f32 0.0, %v3036
  %v3038 = vpop.f32.mrb[0].mxu0
  %3039 = vdwg.mxu0
  %v3040 = vlaneseq
  %v3041 = vshrl.u32 %v3040, 7
  %v3042 = vsub.s32 0, %v3041
  %v3043 = vrot.slane %v3037, %v3042
  %v3044 = vsub.f32 %v2953, %v3043
  %v3045 = vsub.f32 %v2954, %v3043
  %v3046 = vsub.f32 %v2955, %v3043
  %v3047 = vsub.f32 %v2956, %v3043
  %v3048 = vmul.f32 %v3044, %v3044
  %v3049 = vmul.f32 %v3045, %v3045
  %v3050 = vmul.f32 %v3046, %v3046
  %v3051 = vmul.f32 %v3047, %v3047
  %v3052 = vadd.f32 %v3048, %v3049
  %v3053 = vadd.f32 %v3052, %v3050
  %v3054 = vadd.f32 %v3053, %v3051
  %v3055 = vrot.slane %v3054, 4
  %v3056 = vadd.f32 %v3054, %v3055
  %v3057 = vrot.slane %v3056, 2
  %v3058 = vadd.f32 %v3056, %v3057
  %v3059 = vrot.slane %v3058, 1
  %v3060 = vadd.f32 %v3058, %v3059
  %3061 = vmatprep.subr.mxu0 0.0
  %3062 = vmatpush1.msra.mxu0 %v45
  %3063 = vmatprep.subr.mxu0 0.0
  %3064 = vmatpush1.msra.mxu0 %v46
  %3065 = vmatprep.subr.mxu0 0.0
  %3066 = vmatpush1.msra.mxu0 %v47
  %3067 = vmatprep.subr.mxu0 0.0
  %3068 = vmatpush1.msra.mxu0 %v48
  %3069 = vmatprep.subr.mxu0 0.0
  %3070 = vmatpush1.msra.mxu0 %v49
  %3071 = vmatprep.subr.mxu0 0.0
  %3072 = vmatpush1.msra.mxu0 %v50
  %3073 = vmatprep.subr.mxu0 0.0
  %3074 = vmatpush1.msra.mxu0 %v51
  %3075 = vmatprep.subr.mxu0 0.0
  %3076 = vmatpush1.msra.mxu0 %v52
  %3077 = vmatprep.subr.mxu0 0.0
  %3078 = vmatpush1.msra.mxu0 %v53
  %3079 = vmatprep.subr.mxu0 0.0
  %3080 = vmatpush1.msra.mxu0 %v54
  %3081 = vmatprep.subr.mxu0 0.0
  %3082 = vmatpush1.msra.mxu0 %v55
  %3083 = vmatprep.subr.mxu0 0.0
  %3084 = vmatpush1.msra.mxu0 %v56
  %3085 = vmatprep.subr.mxu0 0.0
  %3086 = vmatpush1.msra.mxu0 %v57
  %3087 = vmatprep.subr.mxu0 0.0
  %3088 = vmatpush1.msra.mxu0 %v58
  %3089 = vmatprep.subr.mxu0 0.0
  %3090 = vmatpush1.msra.mxu0 %v59
  %3091 = vmatprep.subr.mxu0 0.0
  %3092 = vmatpush1.msra.mxu0 %v60
  %3093 = vmatprep.subr.mxu0 0.0
  %3094 = vmatpush1.msra.mxu0 0.0
  %3095 = vmatprep.subr.mxu0 0.0
  %3096 = vmatpush1.msra.mxu0 0.0
  %3097 = vmatprep.subr.mxu0 0.0
  %3098 = vmatpush1.msra.mxu0 0.0
  %3099 = vmatprep.subr.mxu0 0.0
  %3100 = vmatpush1.msra.mxu0 0.0
  %3101 = vmatprep.subr.mxu0 0.0
  %3102 = vmatpush1.msra.mxu0 0.0
  %3103 = vmatprep.subr.mxu0 0.0
  %3104 = vmatpush1.msra.mxu0 0.0
  %3105 = vmatprep.subr.mxu0 0.0
  %3106 = vmatpush1.msra.mxu0 0.0
  %3107 = vmatprep.subr.mxu0 0.0
  %3108 = vmatpush1.msra.mxu0 0.0
  %3109 = vmatprep.subr.mxu0 0.0
  %3110 = vmatpush1.msra.mxu0 0.0
  %3111 = vmatprep.subr.mxu0 0.0
  %3112 = vmatpush1.msra.mxu0 0.0
  %3113 = vmatprep.subr.mxu0 0.0
  %3114 = vmatpush1.msra.mxu0 0.0
  %3115 = vmatprep.subr.mxu0 0.0
  %3116 = vmatpush1.msra.mxu0 0.0
  %3117 = vmatprep.subr.mxu0 0.0
  %3118 = vmatpush1.msra.mxu0 0.0
  %3119 = vmatprep.subr.mxu0 0.0
  %3120 = vmatpush1.msra.mxu0 0.0
  %3121 = vmatprep.subr.mxu0 0.0
  %3122 = vmatpush1.msra.mxu0 0.0
  %3123 = vmatprep.subr.mxu0 0.0
  %3124 = vmatpush1.msra.mxu0 0.0
  %3125 = vmatprep.mubr.f32.mxu0 0.0
  %3126 = vmatmul.mubr.f32.gmra.mrb[0].mxu0 %v3060
  %v3127 = vpop.f32.mrb[0].mxu0
  %v3128 = vadd.f32 1e-05, %v3127
  %v3129 = vpop.f32.mrb[0].mxu0
  %3130 = vdwg.mxu0
  %v3131 = vrsqrt.pop %v3128
  %v3132 = vmul.f32 %v3131, %v2958
  %v3133 = vlaneseq
  %v3134 = vshrl.u32 %v3133, 7
  %v3135 = vsub.s32 0, %v3134
  %v3136 = vrot.slane %v3132, %v3135
  %v3137 = vmul.f32 %v3044, %v3136
  %v3138 = vmul.f32 %v3045, %v3136
  %v3139 = vmul.f32 %v3046, %v3136
  %v3140 = vmul.f32 %v3047, %v3136
  %v3142 = vlaneseq
  %v3143 = vshrl.u32 %v3142, 7
  %v3144 = vsub.s32 0, %v3143
  %v3145 = vrot.slane %v2960, %v3144
  %v3147 = vadd.f32 %v3137, %v3145
  %v3148 = vadd.f32 %v3138, %v3145
  %v3149 = vadd.f32 %v3139, %v3145
  %v3150 = vadd.f32 %v3140, %v3145
  %v3151 = vmax.f32 %v3147, 0.0
  %v3152 = vmax.f32 %v3148, 0.0
  %v3153 = vmax.f32 %v3149, 0.0
  %v3154 = vmax.f32 %v3150, 0.0
  %s3155 = scalar_lea.vmem %s8, 2
  %v3156 = vld [vmem:[%s3155] sm:$0x1]
  %v3157 = vpack.c.bf16 %v3152, %v3151
  %v3158 = vpack.c.bf16 %v3154, %v3153
  %s3159 = scalar_lea.vmem %s7, 384
  %v3160 = vld [vmem:[%s3159] sm:$0xf]
  %v3161 = vld [vmem:[%s3159 + $0x4] sm:$0xf]
  %v3162 = vld [vmem:[%s3159 + $0x8] sm:$0xf]
  %v3163 = vld [vmem:[%s3159 + $0xc] sm:$0xf]
  %v3164 = vld [vmem:[%s3159 + $0x10] sm:$0xf]
  %v3165 = vld [vmem:[%s3159 + $0x14] sm:$0xf]
  %v3166 = vld [vmem:[%s3159 + $0x18] sm:$0xf]
  %v3167 = vld [vmem:[%s3159 + $0x1c] sm:$0xf]
  %v3168 = vld [vmem:[%s3159 + $0x20] sm:$0xf]
  %v3169 = vld [vmem:[%s3159 + $0x24] sm:$0xf]
  %v3170 = vld [vmem:[%s3159 + $0x28] sm:$0xf]
  %v3171 = vld [vmem:[%s3159 + $0x2c] sm:$0xf]
  %v3172 = vld [vmem:[%s3159 + $0x30] sm:$0xf]
  %v3173 = vld [vmem:[%s3159 + $0x34] sm:$0xf]
  %v3174 = vld [vmem:[%s3159 + $0x38] sm:$0xf]
  %v3175 = vld [vmem:[%s3159 + $0x3c] sm:$0xf]
  %v3192 = vunpack.c.l.b16 %v3160
  %v3193 = vunpack.c.l.b16 %v3161
  %v3194 = vunpack.c.l.b16 %v3162
  %v3195 = vunpack.c.l.b16 %v3163
  %v3196 = vunpack.c.l.b16 %v3164
  %v3197 = vunpack.c.l.b16 %v3165
  %v3198 = vunpack.c.l.b16 %v3166
  %v3199 = vunpack.c.l.b16 %v3167
  %v3200 = vunpack.c.l.b16 %v3168
  %v3201 = vunpack.c.l.b16 %v3169
  %v3202 = vunpack.c.l.b16 %v3170
  %v3203 = vunpack.c.l.b16 %v3171
  %v3204 = vunpack.c.l.b16 %v3172
  %v3205 = vunpack.c.l.b16 %v3173
  %v3206 = vunpack.c.l.b16 %v3174
  %v3207 = vunpack.c.l.b16 %v3175
  %v3208 = vpack.c.b16 %v3193, %v3192
  %v3209 = vpack.c.b16 %v3195, %v3194
  %v3210 = vpack.c.b16 %v3197, %v3196
  %v3211 = vpack.c.b16 %v3199, %v3198
  %v3212 = vpack.c.b16 %v3201, %v3200
  %v3213 = vpack.c.b16 %v3203, %v3202
  %v3214 = vpack.c.b16 %v3205, %v3204
  %v3215 = vpack.c.b16 %v3207, %v3206
  %3224 = vmatprep.subr.bf16.mxu0 0
  %3225 = vmatpush1.bf16.msra.mxu0 %v3208
  %3226 = vmatprep.subr.bf16.mxu0 0
  %3227 = vmatpush1.bf16.msra.mxu0 %v3209
  %3228 = vmatprep.subr.bf16.mxu0 0
  %3229 = vmatpush1.bf16.msra.mxu0 %v3210
  %3230 = vmatprep.subr.bf16.mxu0 0
  %3231 = vmatpush1.bf16.msra.mxu0 %v3211
  %3232 = vmatprep.subr.bf16.mxu0 0
  %3233 = vmatpush1.bf16.msra.mxu0 %v3212
  %3234 = vmatprep.subr.bf16.mxu0 0
  %3235 = vmatpush1.bf16.msra.mxu0 %v3213
  %3236 = vmatprep.subr.bf16.mxu0 0
  %3237 = vmatpush1.bf16.msra.mxu0 %v3214
  %3238 = vmatprep.subr.bf16.mxu0 0
  %3239 = vmatpush1.bf16.msra.mxu0 %v3215
  %3240 = vmatprep.subr.bf16.mxu0 0
  %3241 = vmatpush1.bf16.msra.mxu0 0
  %3242 = vmatprep.subr.bf16.mxu0 0
  %3243 = vmatpush1.bf16.msra.mxu0 0
  %3244 = vmatprep.subr.bf16.mxu0 0
  %3245 = vmatpush1.bf16.msra.mxu0 0
  %3246 = vmatprep.subr.bf16.mxu0 0
  %3247 = vmatpush1.bf16.msra.mxu0 0
  %3248 = vmatprep.subr.bf16.mxu0 0
  %3249 = vmatpush1.bf16.msra.mxu0 0
  %3250 = vmatprep.subr.bf16.mxu0 0
  %3251 = vmatpush1.bf16.msra.mxu0 0
  %3252 = vmatprep.subr.bf16.mxu0 0
  %3253 = vmatpush1.bf16.msra.mxu0 0
  %3254 = vmatprep.subr.bf16.mxu0 0
  %3255 = vmatpush1.bf16.msra.mxu0 0
  %3256 = vmatprep.mubr.bf16.mxu0 0
  %3257 = vmatmul.mubr.bf16.gmra.mrb[0].mxu0 %v3157
  %v3258 = vpop.f32.mrb[0].mxu0
  %v3259 = vadd.f32 0.0, %v3258
  %v3260 = vpop.f32.mrb[0].mxu0
  %v3261 = vpop.f32.mrb[0].mxu0
  %v3262 = vadd.f32 0.0, %v3261
  %v3263 = vpop.f32.mrb[0].mxu0
  %3264 = vmatprep.mubr.bf16.mxu0 0
  %3265 = vmatmul.mubr.bf16.gmra.mrb[0].mxu0 %v3158
  %v3266 = vpop.f32.mrb[0].mxu0
  %v3267 = vadd.f32 0.0, %v3266
  %v3268 = vpop.f32.mrb[0].mxu0
  %v3269 = vpop.f32.mrb[0].mxu0
  %v3270 = vadd.f32 0.0, %v3269
  %v3271 = vpop.f32.mrb[0].mxu0
  %3272 = vdwg.mxu0
  %s3273 = scalar_lea.vmem %s7, 448
  %v3274 = vld [vmem:[%s3273] sm:$0xf]
  %v3275 = vld [vmem:[%s3273 + $0x4] sm:$0xf]
  %v3276 = vld [vmem:[%s3273 + $0x8] sm:$0xf]
  %v3277 = vld [vmem:[%s3273 + $0xc] sm:$0xf]
  %v3278 = vld [vmem:[%s3273 + $0x10] sm:$0xf]
  %v3279 = vld [vmem:[%s3273 + $0x14] sm:$0xf]
  %v3280 = vld [vmem:[%s3273 + $0x18] sm:$0xf]
  %v3281 = vld [vmem:[%s3273 + $0x1c] sm:$0xf]
  %v3282 = vld [vmem:[%s3273 + $0x20] sm:$0xf]
  %v3283 = vld [vmem:[%s3273 + $0x24] sm:$0xf]
  %v3284 = vld [vmem:[%s3273 + $0x28] sm:$0xf]
  %v3285 = vld [vmem:[%s3273 + $0x2c] sm:$0xf]
  %v3286 = vld [vmem:[%s3273 + $0x30] sm:$0xf]
  %v3287 = vld [vmem:[%s3273 + $0x34] sm:$0xf]
  %v3288 = vld [vmem:[%s3273 + $0x38] sm:$0xf]
  %v3289 = vld [vmem:[%s3273 + $0x3c] sm:$0xf]
  %v3306 = vunpack.c.l.b16 %v3274
  %v3307 = vunpack.c.l.b16 %v3275
  %v3308 = vunpack.c.l.b16 %v3276
  %v3309 = vunpack.c.l.b16 %v3277
  %v3310 = vunpack.c.l.b16 %v3278
  %v3311 = vunpack.c.l.b16 %v3279
  %v3312 = vunpack.c.l.b16 %v3280
  %v3313 = vunpack.c.l.b16 %v3281
  %v3314 = vunpack.c.l.b16 %v3282
  %v3315 = vunpack.c.l.b16 %v3283
  %v3316 = vunpack.c.l.b16 %v3284
  %v3317 = vunpack.c.l.b16 %v3285
  %v3318 = vunpack.c.l.b16 %v3286
  %v3319 = vunpack.c.l.b16 %v3287
  %v3320 = vunpack.c.l.b16 %v3288
  %v3321 = vunpack.c.l.b16 %v3289
  %v3322 = vpack.c.b16 %v3307, %v3306
  %v3323 = vpack.c.b16 %v3309, %v3308
  %v3324 = vpack.c.b16 %v3311, %v3310
  %v3325 = vpack.c.b16 %v3313, %v3312
  %v3326 = vpack.c.b16 %v3315, %v3314
  %v3327 = vpack.c.b16 %v3317, %v3316
  %v3328 = vpack.c.b16 %v3319, %v3318
  %v3329 = vpack.c.b16 %v3321, %v3320
  %3338 = vmatprep.subr.bf16.mxu0 0
  %3339 = vmatpush1.bf16.msra.mxu0 %v3322
  %3340 = vmatprep.subr.bf16.mxu0 0
  %3341 = vmatpush1.bf16.msra.mxu0 %v3323
  %3342 = vmatprep.subr.bf16.mxu0 0
  %3343 = vmatpush1.bf16.msra.mxu0 %v3324
  %3344 = vmatprep.subr.bf16.mxu0 0
  %3345 = vmatpush1.bf16.msra.mxu0 %v3325
  %3346 = vmatprep.subr.bf16.mxu0 0
  %3347 = vmatpush1.bf16.msra.mxu0 %v3326
  %3348 = vmatprep.subr.bf16.mxu0 0
  %3349 = vmatpush1.bf16.msra.mxu0 %v3327
  %3350 = vmatprep.subr.bf16.mxu0 0
  %3351 = vmatpush1.bf16.msra.mxu0 %v3328
  %3352 = vmatprep.subr.bf16.mxu0 0
  %3353 = vmatpush1.bf16.msra.mxu0 %v3329
  %3354 = vmatprep.subr.bf16.mxu0 0
  %3355 = vmatpush1.bf16.msra.mxu0 0
  %3356 = vmatprep.subr.bf16.mxu0 0
  %3357 = vmatpush1.bf16.msra.mxu0 0
  %3358 = vmatprep.subr.bf16.mxu0 0
  %3359 = vmatpush1.bf16.msra.mxu0 0
  %3360 = vmatprep.subr.bf16.mxu0 0
  %3361 = vmatpush1.bf16.msra.mxu0 0
  %3362 = vmatprep.subr.bf16.mxu0 0
  %3363 = vmatpush1.bf16.msra.mxu0 0
  %3364 = vmatprep.subr.bf16.mxu0 0
  %3365 = vmatpush1.bf16.msra.mxu0 0
  %3366 = vmatprep.subr.bf16.mxu0 0
  %3367 = vmatpush1.bf16.msra.mxu0 0
  %3368 = vmatprep.subr.bf16.mxu0 0
  %3369 = vmatpush1.bf16.msra.mxu0 0
  %3370 = vmatprep.mubr.bf16.mxu0 0
  %3371 = vmatmul.mubr.bf16.gmra.mrb[0].mxu0 %v3157
  %v3372 = vpop.f32.mrb[0].mxu0
  %v3373 = vadd.f32 0.0, %v3372
  %v3374 = vpop.f32.mrb[0].mxu0
  %v3375 = vpop.f32.mrb[0].mxu0
  %v3376 = vadd.f32 0.0, %v3375
  %v3377 = vpop.f32.mrb[0].mxu0
  %3378 = vmatprep.mubr.bf16.mxu0 0
  %3379 = vmatmul.mubr.bf16.gmra.mrb[0].mxu0 %v3158
  %v3380 = vpop.f32.mrb[0].mxu0
  %v3381 = vadd.f32 0.0, %v3380
  %v3382 = vpop.f32.mrb[0].mxu0
  %v3383 = vpop.f32.mrb[0].mxu0
  %v3384 = vadd.f32 0.0, %v3383
  %v3385 = vpop.f32.mrb[0].mxu0
  %3386 = vdwg.mxu0
  %3387 = vmatprep.subr.mxu0 0.0
  %3388 = vmatpush1.msra.mxu0 %v3259
  %3389 = vmatprep.subr.mxu0 0.0
  %3390 = vmatpush1.msra.mxu0 %v3262
  %3391 = vmatprep.subr.mxu0 0.0
  %3392 = vmatpush1.msra.mxu0 %v3267
  %3393 = vmatprep.subr.mxu0 0.0
  %3394 = vmatpush1.msra.mxu0 %v3270
  %3395 = vmatprep.subr.mxu0 0.0
  %3396 = vmatpush1.msra.mxu0 0.0
  %3397 = vmatprep.subr.mxu0 0.0
  %3398 = vmatpush1.msra.mxu0 0.0
  %3399 = vmatprep.subr.mxu0 0.0
  %3400 = vmatpush1.msra.mxu0 0.0
  %3401 = vmatprep.subr.mxu0 0.0
  %3402 = vmatpush1.msra.mxu0 0.0
  %3403 = vmatprep.subr.mxu0 0.0
  %3404 = vmatpush1.msra.mxu0 0.0
  %3405 = vmatprep.subr.mxu0 0.0
  %3406 = vmatpush1.msra.mxu0 0.0
  %3407 = vmatprep.subr.mxu0 0.0
  %3408 = vmatpush1.msra.mxu0 0.0
  %3409 = vmatprep.subr.mxu0 0.0
  %3410 = vmatpush1.msra.mxu0 0.0
  %3411 = vmatprep.subr.mxu0 0.0
  %3412 = vmatpush1.msra.mxu0 0.0
  %3413 = vmatprep.subr.mxu0 0.0
  %3414 = vmatpush1.msra.mxu0 0.0
  %3415 = vmatprep.subr.mxu0 0.0
  %3416 = vmatpush1.msra.mxu0 0.0
  %3417 = vmatprep.subr.mxu0 0.0
  %3418 = vmatpush1.msra.mxu0 0.0
  %3419 = vmatprep.subr.mxu0 0.0
  %3420 = vmatpush1.msra.mxu0 0.0
  %3421 = vmatprep.subr.mxu0 0.0
  %3422 = vmatpush1.msra.mxu0 0.0
  %3423 = vmatprep.subr.mxu0 0.0
  %3424 = vmatpush1.msra.mxu0 0.0
  %3425 = vmatprep.subr.mxu0 0.0
  %3426 = vmatpush1.msra.mxu0 0.0
  %3427 = vmatprep.subr.mxu0 0.0
  %3428 = vmatpush1.msra.mxu0 0.0
  %3429 = vmatprep.subr.mxu0 0.0
  %3430 = vmatpush1.msra.mxu0 0.0
  %3431 = vmatprep.subr.mxu0 0.0
  %3432 = vmatpush1.msra.mxu0 0.0
  %3433 = vmatprep.subr.mxu0 0.0
  %3434 = vmatpush1.msra.mxu0 0.0
  %3435 = vmatprep.subr.mxu0 0.0
  %3436 = vmatpush1.msra.mxu0 0.0
  %3437 = vmatprep.subr.mxu0 0.0
  %3438 = vmatpush1.msra.mxu0 0.0
  %3439 = vmatprep.subr.mxu0 0.0
  %3440 = vmatpush1.msra.mxu0 0.0
  %3441 = vmatprep.subr.mxu0 0.0
  %3442 = vmatpush1.msra.mxu0 0.0
  %3443 = vmatprep.subr.mxu0 0.0
  %3444 = vmatpush1.msra.mxu0 0.0
  %3445 = vmatprep.subr.mxu0 0.0
  %3446 = vmatpush1.msra.mxu0 0.0
  %3447 = vmatprep.subr.mxu0 0.0
  %3448 = vmatpush1.msra.mxu0 0.0
  %3449 = vmatprep.subr.mxu0 0.0
  %3450 = vmatpush1.msra.mxu0 0.0
  %3451 = vmatprep.mubr.f32.mxu0 0.0
  %3452 = vmatmul.mubr.f32.gmra.mrb[0].mxu0 %v811
  %v3453 = vpop.f32.mrb[0].mxu0
  %v3454 = vadd.f32 %v3373, %v3453
  %v3455 = vpop.f32.mrb[0].mxu0
  %3456 = vmatprep.mubr.f32.mxu0 0.0
  %3457 = vmatmul.mubr.f32.gmra.mrb[0].mxu0 %v814
  %v3458 = vpop.f32.mrb[0].mxu0
  %v3459 = vadd.f32 %v3376, %v3458
  %v3460 = vpop.f32.mrb[0].mxu0
  %3461 = vmatprep.mubr.f32.mxu0 0.0
  %3462 = vmatmul.mubr.f32.gmra.mrb[0].mxu0 %v817
  %v3463 = vpop.f32.mrb[0].mxu0
  %v3464 = vadd.f32 %v3381, %v3463
  %v3465 = vpop.f32.mrb[0].mxu0
  %3466 = vmatprep.mubr.f32.mxu0 0.0
  %3467 = vmatmul.mubr.f32.gmra.mrb[0].mxu0 %v820
  %v3468 = vpop.f32.mrb[0].mxu0
  %v3469 = vadd.f32 %v3384, %v3468
  %v3470 = vpop.f32.mrb[0].mxu0
  %3471 = vdwg.mxu0
  %s3472 = scalar_lea.vmem %s7, 512
  %v3473 = vld [vmem:[%s3472] sm:$0xf]
  %v3474 = vld [vmem:[%s3472 + $0x4] sm:$0xf]
  %v3475 = vld [vmem:[%s3472 + $0x8] sm:$0xf]
  %v3476 = vld [vmem:[%s3472 + $0xc] sm:$0xf]
  %v3477 = vld [vmem:[%s3472 + $0x10] sm:$0xf]
  %v3478 = vld [vmem:[%s3472 + $0x14] sm:$0xf]
  %v3479 = vld [vmem:[%s3472 + $0x18] sm:$0xf]
  %v3480 = vld [vmem:[%s3472 + $0x1c] sm:$0xf]
  %v3481 = vld [vmem:[%s3472 + $0x20] sm:$0xf]
  %v3482 = vld [vmem:[%s3472 + $0x24] sm:$0xf]
  %v3483 = vld [vmem:[%s3472 + $0x28] sm:$0xf]
  %v3484 = vld [vmem:[%s3472 + $0x2c] sm:$0xf]
  %v3485 = vld [vmem:[%s3472 + $0x30] sm:$0xf]
  %v3486 = vld [vmem:[%s3472 + $0x34] sm:$0xf]
  %v3487 = vld [vmem:[%s3472 + $0x38] sm:$0xf]
  %v3488 = vld [vmem:[%s3472 + $0x3c] sm:$0xf]
  %v3505 = vunpack.c.l.b16 %v3473
  %v3506 = vunpack.c.l.b16 %v3474
  %v3507 = vunpack.c.l.b16 %v3475
  %v3508 = vunpack.c.l.b16 %v3476
  %v3509 = vunpack.c.l.b16 %v3477
  %v3510 = vunpack.c.l.b16 %v3478
  %v3511 = vunpack.c.l.b16 %v3479
  %v3512 = vunpack.c.l.b16 %v3480
  %v3513 = vunpack.c.l.b16 %v3481
  %v3514 = vunpack.c.l.b16 %v3482
  %v3515 = vunpack.c.l.b16 %v3483
  %v3516 = vunpack.c.l.b16 %v3484
  %v3517 = vunpack.c.l.b16 %v3485
  %v3518 = vunpack.c.l.b16 %v3486
  %v3519 = vunpack.c.l.b16 %v3487
  %v3520 = vunpack.c.l.b16 %v3488
  %v3521 = vpack.c.b16 %v3506, %v3505
  %v3522 = vpack.c.b16 %v3508, %v3507
  %v3523 = vpack.c.b16 %v3510, %v3509
  %v3524 = vpack.c.b16 %v3512, %v3511
  %v3525 = vpack.c.b16 %v3514, %v3513
  %v3526 = vpack.c.b16 %v3516, %v3515
  %v3527 = vpack.c.b16 %v3518, %v3517
  %v3528 = vpack.c.b16 %v3520, %v3519
  %3537 = vmatprep.subr.bf16.mxu0 0
  %3538 = vmatpush1.bf16.msra.mxu0 %v3521
  %3539 = vmatprep.subr.bf16.mxu0 0
  %3540 = vmatpush1.bf16.msra.mxu0 %v3522
  %3541 = vmatprep.subr.bf16.mxu0 0
  %3542 = vmatpush1.bf16.msra.mxu0 %v3523
  %3543 = vmatprep.subr.bf16.mxu0 0
  %3544 = vmatpush1.bf16.msra.mxu0 %v3524
  %3545 = vmatprep.subr.bf16.mxu0 0
  %3546 = vmatpush1.bf16.msra.mxu0 %v3525
  %3547 = vmatprep.subr.bf16.mxu0 0
  %3548 = vmatpush1.bf16.msra.mxu0 %v3526
  %3549 = vmatprep.subr.bf16.mxu0 0
  %3550 = vmatpush1.bf16.msra.mxu0 %v3527
  %3551 = vmatprep.subr.bf16.mxu0 0
  %3552 = vmatpush1.bf16.msra.mxu0 %v3528
  %3553 = vmatprep.subr.bf16.mxu0 0
  %3554 = vmatpush1.bf16.msra.mxu0 0
  %3555 = vmatprep.subr.bf16.mxu0 0
  %3556 = vmatpush1.bf16.msra.mxu0 0
  %3557 = vmatprep.subr.bf16.mxu0 0
  %3558 = vmatpush1.bf16.msra.mxu0 0
  %3559 = vmatprep.subr.bf16.mxu0 0
  %3560 = vmatpush1.bf16.msra.mxu0 0
  %3561 = vmatprep.subr.bf16.mxu0 0
  %3562 = vmatpush1.bf16.msra.mxu0 0
  %3563 = vmatprep.subr.bf16.mxu0 0
  %3564 = vmatpush1.bf16.msra.mxu0 0
  %3565 = vmatprep.subr.bf16.mxu0 0
  %3566 = vmatpush1.bf16.msra.mxu0 0
  %3567 = vmatprep.subr.bf16.mxu0 0
  %3568 = vmatpush1.bf16.msra.mxu0 0
  %3569 = vmatprep.mubr.bf16.mxu0 0
  %3570 = vmatmul.mubr.bf16.gmra.mrb[0].mxu0 %v3157
  %v3571 = vpop.f32.mrb[0].mxu0
  %v3572 = vadd.f32 0.0, %v3571
  %v3573 = vpop.f32.mrb[0].mxu0
  %v3574 = vpop.f32.mrb[0].mxu0
  %v3575 = vadd.f32 0.0, %v3574
  %v3576 = vpop.f32.mrb[0].mxu0
  %3577 = vmatprep.mubr.bf16.mxu0 0
  %3578 = vmatmul.mubr.bf16.gmra.mrb[0].mxu0 %v3158
  %v3579 = vpop.f32.mrb[0].mxu0
  %v3580 = vadd.f32 0.0, %v3579
  %v3581 = vpop.f32.mrb[0].mxu0
  %v3582 = vpop.f32.mrb[0].mxu0
  %v3583 = vadd.f32 0.0, %v3582
  %v3584 = vpop.f32.mrb[0].mxu0
  %3585 = vdwg.mxu0
  %3586 = vmatprep.subr.mxu0 0.0
  %3587 = vmatpush1.msra.mxu0 %v3572
  %3588 = vmatprep.subr.mxu0 0.0
  %3589 = vmatpush1.msra.mxu0 %v3575
  %3590 = vmatprep.subr.mxu0 0.0
  %3591 = vmatpush1.msra.mxu0 %v3580
  %3592 = vmatprep.subr.mxu0 0.0
  %3593 = vmatpush1.msra.mxu0 %v3583
  %3594 = vmatprep.subr.mxu0 0.0
  %3595 = vmatpush1.msra.mxu0 0.0
  %3596 = vmatprep.subr.mxu0 0.0
  %3597 = vmatpush1.msra.mxu0 0.0
  %3598 = vmatprep.subr.mxu0 0.0
  %3599 = vmatpush1.msra.mxu0 0.0
  %3600 = vmatprep.subr.mxu0 0.0
  %3601 = vmatpush1.msra.mxu0 0.0
  %3602 = vmatprep.subr.mxu0 0.0
  %3603 = vmatpush1.msra.mxu0 0.0
  %3604 = vmatprep.subr.mxu0 0.0
  %3605 = vmatpush1.msra.mxu0 0.0
  %3606 = vmatprep.subr.mxu0 0.0
  %3607 = vmatpush1.msra.mxu0 0.0
  %3608 = vmatprep.subr.mxu0 0.0
  %3609 = vmatpush1.msra.mxu0 0.0
  %3610 = vmatprep.subr.mxu0 0.0
  %3611 = vmatpush1.msra.mxu0 0.0
  %3612 = vmatprep.subr.mxu0 0.0
  %3613 = vmatpush1.msra.mxu0 0.0
  %3614 = vmatprep.subr.mxu0 0.0
  %3615 = vmatpush1.msra.mxu0 0.0
  %3616 = vmatprep.subr.mxu0 0.0
  %3617 = vmatpush1.msra.mxu0 0.0
  %3618 = vmatprep.subr.mxu0 0.0
  %3619 = vmatpush1.msra.mxu0 0.0
  %3620 = vmatprep.subr.mxu0 0.0
  %3621 = vmatpush1.msra.mxu0 0.0
  %3622 = vmatprep.subr.mxu0 0.0
  %3623 = vmatpush1.msra.mxu0 0.0
  %3624 = vmatprep.subr.mxu0 0.0
  %3625 = vmatpush1.msra.mxu0 0.0
  %3626 = vmatprep.subr.mxu0 0.0
  %3627 = vmatpush1.msra.mxu0 0.0
  %3628 = vmatprep.subr.mxu0 0.0
  %3629 = vmatpush1.msra.mxu0 0.0
  %3630 = vmatprep.subr.mxu0 0.0
  %3631 = vmatpush1.msra.mxu0 0.0
  %3632 = vmatprep.subr.mxu0 0.0
  %3633 = vmatpush1.msra.mxu0 0.0
  %3634 = vmatprep.subr.mxu0 0.0
  %3635 = vmatpush1.msra.mxu0 0.0
  %3636 = vmatprep.subr.mxu0 0.0
  %3637 = vmatpush1.msra.mxu0 0.0
  %3638 = vmatprep.subr.mxu0 0.0
  %3639 = vmatpush1.msra.mxu0 0.0
  %3640 = vmatprep.subr.mxu0 0.0
  %3641 = vmatpush1.msra.mxu0 0.0
  %3642 = vmatprep.subr.mxu0 0.0
  %3643 = vmatpush1.msra.mxu0 0.0
  %3644 = vmatprep.subr.mxu0 0.0
  %3645 = vmatpush1.msra.mxu0 0.0
  %3646 = vmatprep.subr.mxu0 0.0
  %3647 = vmatpush1.msra.mxu0 0.0
  %3648 = vmatprep.subr.mxu0 0.0
  %3649 = vmatpush1.msra.mxu0 0.0
  %3650 = vmatprep.mubr.f32.mxu0 0.0
  %3651 = vmatmul.mubr.f32.gmra.mrb[0].mxu0 %v1149
  %v3652 = vpop.f32.mrb[0].mxu0
  %v3653 = vadd.f32 0.0, %v3652
  %v3654 = vpop.f32.mrb[0].mxu0
  %3655 = vmatprep.mubr.f32.mxu0 0.0
  %3656 = vmatmul.mubr.f32.gmra.mrb[0].mxu0 %v1152
  %v3657 = vpop.f32.mrb[0].mxu0
  %v3658 = vadd.f32 0.0, %v3657
  %v3659 = vpop.f32.mrb[0].mxu0
  %3660 = vmatprep.mubr.f32.mxu0 0.0
  %3661 = vmatmul.mubr.f32.gmra.mrb[0].mxu0 %v1155
  %v3662 = vpop.f32.mrb[0].mxu0
  %v3663 = vadd.f32 0.0, %v3662
  %v3664 = vpop.f32.mrb[0].mxu0
  %3665 = vmatprep.mubr.f32.mxu0 0.0
  %3666 = vmatmul.mubr.f32.gmra.mrb[0].mxu0 %v1158
  %v3667 = vpop.f32.mrb[0].mxu0
  %v3668 = vadd.f32 0.0, %v3667
  %v3669 = vpop.f32.mrb[0].mxu0
  %3670 = vdwg.mxu0
  %v3671 = vadd.f32 %v3454, %v3653
  %v3672 = vadd.f32 %v3459, %v3658
  %v3673 = vadd.f32 %v3464, %v3663
  %v3674 = vadd.f32 %v3469, %v3668
  %v3676 = vlaneseq
  %v3677 = vshrl.u32 %v3676, 7
  %v3678 = vsub.s32 0, %v3677
  %v3679 = vrot.slane %v3156, %v3678
  %v3681 = vadd.f32 %v3671, %v3679
  %v3682 = vadd.f32 %v3672, %v3679
  %v3683 = vadd.f32 %v3673, %v3679
  %v3684 = vadd.f32 %v3674, %v3679
  %s3685 = scalar_lea.vmem %s9, 2
  %v3686 = vld [vmem:[%s3685] sm:$0x1]
  %s3687 = scalar_lea.vmem %s10, 2
  %v3688 = vld [vmem:[%s3687] sm:$0x1]
  %v3689 = vadd.f32 %v3681, %v3682
  %v3690 = vadd.f32 %v3689, %v3683
  %v3691 = vadd.f32 %v3690, %v3684
  %v3692 = vrot.slane %v3691, 4
  %v3693 = vadd.f32 %v3691, %v3692
  %v3694 = vrot.slane %v3693, 2
  %v3695 = vadd.f32 %v3693, %v3694
  %v3696 = vrot.slane %v3695, 1
  %v3697 = vadd.f32 %v3695, %v3696
  %3698 = vmatprep.subr.mxu0 0.0
  %3699 = vmatpush1.msra.mxu0 %v45
  %3700 = vmatprep.subr.mxu0 0.0
  %3701 = vmatpush1.msra.mxu0 %v46
  %3702 = vmatprep.subr.mxu0 0.0
  %3703 = vmatpush1.msra.mxu0 %v47
  %3704 = vmatprep.subr.mxu0 0.0
  %3705 = vmatpush1.msra.mxu0 %v48
  %3706 = vmatprep.subr.mxu0 0.0
  %3707 = vmatpush1.msra.mxu0 %v49
  %3708 = vmatprep.subr.mxu0 0.0
  %3709 = vmatpush1.msra.mxu0 %v50
  %3710 = vmatprep.subr.mxu0 0.0
  %3711 = vmatpush1.msra.mxu0 %v51
  %3712 = vmatprep.subr.mxu0 0.0
  %3713 = vmatpush1.msra.mxu0 %v52
  %3714 = vmatprep.subr.mxu0 0.0
  %3715 = vmatpush1.msra.mxu0 %v53
  %3716 = vmatprep.subr.mxu0 0.0
  %3717 = vmatpush1.msra.mxu0 %v54
  %3718 = vmatprep.subr.mxu0 0.0
  %3719 = vmatpush1.msra.mxu0 %v55
  %3720 = vmatprep.subr.mxu0 0.0
  %3721 = vmatpush1.msra.mxu0 %v56
  %3722 = vmatprep.subr.mxu0 0.0
  %3723 = vmatpush1.msra.mxu0 %v57
  %3724 = vmatprep.subr.mxu0 0.0
  %3725 = vmatpush1.msra.mxu0 %v58
  %3726 = vmatprep.subr.mxu0 0.0
  %3727 = vmatpush1.msra.mxu0 %v59
  %3728 = vmatprep.subr.mxu0 0.0
  %3729 = vmatpush1.msra.mxu0 %v60
  %3730 = vmatprep.subr.mxu0 0.0
  %3731 = vmatpush1.msra.mxu0 0.0
  %3732 = vmatprep.subr.mxu0 0.0
  %3733 = vmatpush1.msra.mxu0 0.0
  %3734 = vmatprep.subr.mxu0 0.0
  %3735 = vmatpush1.msra.mxu0 0.0
  %3736 = vmatprep.subr.mxu0 0.0
  %3737 = vmatpush1.msra.mxu0 0.0
  %3738 = vmatprep.subr.mxu0 0.0
  %3739 = vmatpush1.msra.mxu0 0.0
  %3740 = vmatprep.subr.mxu0 0.0
  %3741 = vmatpush1.msra.mxu0 0.0
  %3742 = vmatprep.subr.mxu0 0.0
  %3743 = vmatpush1.msra.mxu0 0.0
  %3744 = vmatprep.subr.mxu0 0.0
  %3745 = vmatpush1.msra.mxu0 0.0
  %3746 = vmatprep.subr.mxu0 0.0
  %3747 = vmatpush1.msra.mxu0 0.0
  %3748 = vmatprep.subr.mxu0 0.0
  %3749 = vmatpush1.msra.mxu0 0.0
  %3750 = vmatprep.subr.mxu0 0.0
  %3751 = vmatpush1.msra.mxu0 0.0
  %3752 = vmatprep.subr.mxu0 0.0
  %3753 = vmatpush1.msra.mxu0 0.0
  %3754 = vmatprep.subr.mxu0 0.0
  %3755 = vmatpush1.msra.mxu0 0.0
  %3756 = vmatprep.subr.mxu0 0.0
  %3757 = vmatpush1.msra.mxu0 0.0
  %3758 = vmatprep.subr.mxu0 0.0
  %3759 = vmatpush1.msra.mxu0 0.0
  %3760 = vmatprep.subr.mxu0 0.0
  %3761 = vmatpush1.msra.mxu0 0.0
  %3762 = vmatprep.mubr.f32.mxu0 0.0
  %3763 = vmatmul.mubr.f32.gmra.mrb[0].mxu0 %v3697
  %v3764 = vpop.f32.mrb[0].mxu0
  %v3765 = vadd.f32 0.0, %v3764
  %v3766 = vpop.f32.mrb[0].mxu0
  %3767 = vdwg.mxu0
  %v3768 = vlaneseq
  %v3769 = vshrl.u32 %v3768, 7
  %v3770 = vsub.s32 0, %v3769
  %v3771 = vrot.slane %v3765, %v3770
  %v3772 = vsub.f32 %v3681, %v3771
  %v3773 = vsub.f32 %v3682, %v3771
  %v3774 = vsub.f32 %v3683, %v3771
  %v3775 = vsub.f32 %v3684, %v3771
  %v3776 = vmul.f32 %v3772, %v3772
  %v3777 = vmul.f32 %v3773, %v3773
  %v3778 = vmul.f32 %v3774, %v3774
  %v3779 = vmul.f32 %v3775, %v3775
  %v3780 = vadd.f32 %v3776, %v3777
  %v3781 = vadd.f32 %v3780, %v3778
  %v3782 = vadd.f32 %v3781, %v3779
  %v3783 = vrot.slane %v3782, 4
  %v3784 = vadd.f32 %v3782, %v3783
  %v3785 = vrot.slane %v3784, 2
  %v3786 = vadd.f32 %v3784, %v3785
  %v3787 = vrot.slane %v3786, 1
  %v3788 = vadd.f32 %v3786, %v3787
  %3789 = vmatprep.subr.mxu0 0.0
  %3790 = vmatpush1.msra.mxu0 %v45
  %3791 = vmatprep.subr.mxu0 0.0
  %3792 = vmatpush1.msra.mxu0 %v46
  %3793 = vmatprep.subr.mxu0 0.0
  %3794 = vmatpush1.msra.mxu0 %v47
  %3795 = vmatprep.subr.mxu0 0.0
  %3796 = vmatpush1.msra.mxu0 %v48
  %3797 = vmatprep.subr.mxu0 0.0
  %3798 = vmatpush1.msra.mxu0 %v49
  %3799 = vmatprep.subr.mxu0 0.0
  %3800 = vmatpush1.msra.mxu0 %v50
  %3801 = vmatprep.subr.mxu0 0.0
  %3802 = vmatpush1.msra.mxu0 %v51
  %3803 = vmatprep.subr.mxu0 0.0
  %3804 = vmatpush1.msra.mxu0 %v52
  %3805 = vmatprep.subr.mxu0 0.0
  %3806 = vmatpush1.msra.mxu0 %v53
  %3807 = vmatprep.subr.mxu0 0.0
  %3808 = vmatpush1.msra.mxu0 %v54
  %3809 = vmatprep.subr.mxu0 0.0
  %3810 = vmatpush1.msra.mxu0 %v55
  %3811 = vmatprep.subr.mxu0 0.0
  %3812 = vmatpush1.msra.mxu0 %v56
  %3813 = vmatprep.subr.mxu0 0.0
  %3814 = vmatpush1.msra.mxu0 %v57
  %3815 = vmatprep.subr.mxu0 0.0
  %3816 = vmatpush1.msra.mxu0 %v58
  %3817 = vmatprep.subr.mxu0 0.0
  %3818 = vmatpush1.msra.mxu0 %v59
  %3819 = vmatprep.subr.mxu0 0.0
  %3820 = vmatpush1.msra.mxu0 %v60
  %3821 = vmatprep.subr.mxu0 0.0
  %3822 = vmatpush1.msra.mxu0 0.0
  %3823 = vmatprep.subr.mxu0 0.0
  %3824 = vmatpush1.msra.mxu0 0.0
  %3825 = vmatprep.subr.mxu0 0.0
  %3826 = vmatpush1.msra.mxu0 0.0
  %3827 = vmatprep.subr.mxu0 0.0
  %3828 = vmatpush1.msra.mxu0 0.0
  %3829 = vmatprep.subr.mxu0 0.0
  %3830 = vmatpush1.msra.mxu0 0.0
  %3831 = vmatprep.subr.mxu0 0.0
  %3832 = vmatpush1.msra.mxu0 0.0
  %3833 = vmatprep.subr.mxu0 0.0
  %3834 = vmatpush1.msra.mxu0 0.0
  %3835 = vmatprep.subr.mxu0 0.0
  %3836 = vmatpush1.msra.mxu0 0.0
  %3837 = vmatprep.subr.mxu0 0.0
  %3838 = vmatpush1.msra.mxu0 0.0
  %3839 = vmatprep.subr.mxu0 0.0
  %3840 = vmatpush1.msra.mxu0 0.0
  %3841 = vmatprep.subr.mxu0 0.0
  %3842 = vmatpush1.msra.mxu0 0.0
  %3843 = vmatprep.subr.mxu0 0.0
  %3844 = vmatpush1.msra.mxu0 0.0
  %3845 = vmatprep.subr.mxu0 0.0
  %3846 = vmatpush1.msra.mxu0 0.0
  %3847 = vmatprep.subr.mxu0 0.0
  %3848 = vmatpush1.msra.mxu0 0.0
  %3849 = vmatprep.subr.mxu0 0.0
  %3850 = vmatpush1.msra.mxu0 0.0
  %3851 = vmatprep.subr.mxu0 0.0
  %3852 = vmatpush1.msra.mxu0 0.0
  %3853 = vmatprep.mubr.f32.mxu0 0.0
  %3854 = vmatmul.mubr.f32.gmra.mrb[0].mxu0 %v3788
  %v3855 = vpop.f32.mrb[0].mxu0
  %v3856 = vadd.f32 1e-05, %v3855
  %v3857 = vpop.f32.mrb[0].mxu0
  %3858 = vdwg.mxu0
  %v3859 = vrsqrt.pop %v3856
  %v3860 = vmul.f32 %v3859, %v3686
  %v3861 = vlaneseq
  %v3862 = vshrl.u32 %v3861, 7
  %v3863 = vsub.s32 0, %v3862
  %v3864 = vrot.slane %v3860, %v3863
  %v3865 = vmul.f32 %v3772, %v3864
  %v3866 = vmul.f32 %v3773, %v3864
  %v3867 = vmul.f32 %v3774, %v3864
  %v3868 = vmul.f32 %v3775, %v3864
  %v3870 = vlaneseq
  %v3871 = vshrl.u32 %v3870, 7
  %v3872 = vsub.s32 0, %v3871
  %v3873 = vrot.slane %v3688, %v3872
  %v3875 = vadd.f32 %v3865, %v3873
  %v3876 = vadd.f32 %v3866, %v3873
  %v3877 = vadd.f32 %v3867, %v3873
  %v3878 = vadd.f32 %v3868, %v3873
  %v3879 = vmax.f32 %v3875, 0.0
  %v3880 = vmax.f32 %v3876, 0.0
  %v3881 = vmax.f32 %v3877, 0.0
  %v3882 = vmax.f32 %v3878, 0.0
  %s3883 = scalar_lea.vmem %s8, 3
  %v3884 = vld [vmem:[%s3883] sm:$0x1]
  %v3885 = vpack.c.bf16 %v3880, %v3879
  %v3886 = vpack.c.bf16 %v3882, %v3881
  %s3887 = scalar_lea.vmem %s7, 576
  %v3888 = vld [vmem:[%s3887] sm:$0xf]
  %v3889 = vld [vmem:[%s3887 + $0x4] sm:$0xf]
  %v3890 = vld [vmem:[%s3887 + $0x8] sm:$0xf]
  %v3891 = vld [vmem:[%s3887 + $0xc] sm:$0xf]
  %v3892 = vld [vmem:[%s3887 + $0x10] sm:$0xf]
  %v3893 = vld [vmem:[%s3887 + $0x14] sm:$0xf]
  %v3894 = vld [vmem:[%s3887 + $0x18] sm:$0xf]
  %v3895 = vld [vmem:[%s3887 + $0x1c] sm:$0xf]
  %v3896 = vld [vmem:[%s3887 + $0x20] sm:$0xf]
  %v3897 = vld [vmem:[%s3887 + $0x24] sm:$0xf]
  %v3898 = vld [vmem:[%s3887 + $0x28] sm:$0xf]
  %v3899 = vld [vmem:[%s3887 + $0x2c] sm:$0xf]
  %v3900 = vld [vmem:[%s3887 + $0x30] sm:$0xf]
  %v3901 = vld [vmem:[%s3887 + $0x34] sm:$0xf]
  %v3902 = vld [vmem:[%s3887 + $0x38] sm:$0xf]
  %v3903 = vld [vmem:[%s3887 + $0x3c] sm:$0xf]
  %v3920 = vunpack.c.l.b16 %v3888
  %v3921 = vunpack.c.l.b16 %v3889
  %v3922 = vunpack.c.l.b16 %v3890
  %v3923 = vunpack.c.l.b16 %v3891
  %v3924 = vunpack.c.l.b16 %v3892
  %v3925 = vunpack.c.l.b16 %v3893
  %v3926 = vunpack.c.l.b16 %v3894
  %v3927 = vunpack.c.l.b16 %v3895
  %v3928 = vunpack.c.l.b16 %v3896
  %v3929 = vunpack.c.l.b16 %v3897
  %v3930 = vunpack.c.l.b16 %v3898
  %v3931 = vunpack.c.l.b16 %v3899
  %v3932 = vunpack.c.l.b16 %v3900
  %v3933 = vunpack.c.l.b16 %v3901
  %v3934 = vunpack.c.l.b16 %v3902
  %v3935 = vunpack.c.l.b16 %v3903
  %v3936 = vpack.c.b16 %v3921, %v3920
  %v3937 = vpack.c.b16 %v3923, %v3922
  %v3938 = vpack.c.b16 %v3925, %v3924
  %v3939 = vpack.c.b16 %v3927, %v3926
  %v3940 = vpack.c.b16 %v3929, %v3928
  %v3941 = vpack.c.b16 %v3931, %v3930
  %v3942 = vpack.c.b16 %v3933, %v3932
  %v3943 = vpack.c.b16 %v3935, %v3934
  %3952 = vmatprep.subr.bf16.mxu0 0
  %3953 = vmatpush1.bf16.msra.mxu0 %v3936
  %3954 = vmatprep.subr.bf16.mxu0 0
  %3955 = vmatpush1.bf16.msra.mxu0 %v3937
  %3956 = vmatprep.subr.bf16.mxu0 0
  %3957 = vmatpush1.bf16.msra.mxu0 %v3938
  %3958 = vmatprep.subr.bf16.mxu0 0
  %3959 = vmatpush1.bf16.msra.mxu0 %v3939
  %3960 = vmatprep.subr.bf16.mxu0 0
  %3961 = vmatpush1.bf16.msra.mxu0 %v3940
  %3962 = vmatprep.subr.bf16.mxu0 0
  %3963 = vmatpush1.bf16.msra.mxu0 %v3941
  %3964 = vmatprep.subr.bf16.mxu0 0
  %3965 = vmatpush1.bf16.msra.mxu0 %v3942
  %3966 = vmatprep.subr.bf16.mxu0 0
  %3967 = vmatpush1.bf16.msra.mxu0 %v3943
  %3968 = vmatprep.subr.bf16.mxu0 0
  %3969 = vmatpush1.bf16.msra.mxu0 0
  %3970 = vmatprep.subr.bf16.mxu0 0
  %3971 = vmatpush1.bf16.msra.mxu0 0
  %3972 = vmatprep.subr.bf16.mxu0 0
  %3973 = vmatpush1.bf16.msra.mxu0 0
  %3974 = vmatprep.subr.bf16.mxu0 0
  %3975 = vmatpush1.bf16.msra.mxu0 0
  %3976 = vmatprep.subr.bf16.mxu0 0
  %3977 = vmatpush1.bf16.msra.mxu0 0
  %3978 = vmatprep.subr.bf16.mxu0 0
  %3979 = vmatpush1.bf16.msra.mxu0 0
  %3980 = vmatprep.subr.bf16.mxu0 0
  %3981 = vmatpush1.bf16.msra.mxu0 0
  %3982 = vmatprep.subr.bf16.mxu0 0
  %3983 = vmatpush1.bf16.msra.mxu0 0
  %3984 = vmatprep.mubr.bf16.mxu0 0
  %3985 = vmatmul.mubr.bf16.gmra.mrb[0].mxu0 %v3885
  %v3986 = vpop.f32.mrb[0].mxu0
  %v3987 = vadd.f32 0.0, %v3986
  %v3988 = vpop.f32.mrb[0].mxu0
  %v3989 = vpop.f32.mrb[0].mxu0
  %v3990 = vadd.f32 0.0, %v3989
  %v3991 = vpop.f32.mrb[0].mxu0
  %3992 = vmatprep.mubr.bf16.mxu0 0
  %3993 = vmatmul.mubr.bf16.gmra.mrb[0].mxu0 %v3886
  %v3994 = vpop.f32.mrb[0].mxu0
  %v3995 = vadd.f32 0.0, %v3994
  %v3996 = vpop.f32.mrb[0].mxu0
  %v3997 = vpop.f32.mrb[0].mxu0
  %v3998 = vadd.f32 0.0, %v3997
  %v3999 = vpop.f32.mrb[0].mxu0
  %4000 = vdwg.mxu0
  %s4001 = scalar_lea.vmem %s7, 640
  %v4002 = vld [vmem:[%s4001] sm:$0xf]
  %v4003 = vld [vmem:[%s4001 + $0x4] sm:$0xf]
  %v4004 = vld [vmem:[%s4001 + $0x8] sm:$0xf]
  %v4005 = vld [vmem:[%s4001 + $0xc] sm:$0xf]
  %v4006 = vld [vmem:[%s4001 + $0x10] sm:$0xf]
  %v4007 = vld [vmem:[%s4001 + $0x14] sm:$0xf]
  %v4008 = vld [vmem:[%s4001 + $0x18] sm:$0xf]
  %v4009 = vld [vmem:[%s4001 + $0x1c] sm:$0xf]
  %v4010 = vld [vmem:[%s4001 + $0x20] sm:$0xf]
  %v4011 = vld [vmem:[%s4001 + $0x24] sm:$0xf]
  %v4012 = vld [vmem:[%s4001 + $0x28] sm:$0xf]
  %v4013 = vld [vmem:[%s4001 + $0x2c] sm:$0xf]
  %v4014 = vld [vmem:[%s4001 + $0x30] sm:$0xf]
  %v4015 = vld [vmem:[%s4001 + $0x34] sm:$0xf]
  %v4016 = vld [vmem:[%s4001 + $0x38] sm:$0xf]
  %v4017 = vld [vmem:[%s4001 + $0x3c] sm:$0xf]
  %v4034 = vunpack.c.l.b16 %v4002
  %v4035 = vunpack.c.l.b16 %v4003
  %v4036 = vunpack.c.l.b16 %v4004
  %v4037 = vunpack.c.l.b16 %v4005
  %v4038 = vunpack.c.l.b16 %v4006
  %v4039 = vunpack.c.l.b16 %v4007
  %v4040 = vunpack.c.l.b16 %v4008
  %v4041 = vunpack.c.l.b16 %v4009
  %v4042 = vunpack.c.l.b16 %v4010
  %v4043 = vunpack.c.l.b16 %v4011
  %v4044 = vunpack.c.l.b16 %v4012
  %v4045 = vunpack.c.l.b16 %v4013
  %v4046 = vunpack.c.l.b16 %v4014
  %v4047 = vunpack.c.l.b16 %v4015
  %v4048 = vunpack.c.l.b16 %v4016
  %v4049 = vunpack.c.l.b16 %v4017
  %v4050 = vpack.c.b16 %v4035, %v4034
  %v4051 = vpack.c.b16 %v4037, %v4036
  %v4052 = vpack.c.b16 %v4039, %v4038
  %v4053 = vpack.c.b16 %v4041, %v4040
  %v4054 = vpack.c.b16 %v4043, %v4042
  %v4055 = vpack.c.b16 %v4045, %v4044
  %v4056 = vpack.c.b16 %v4047, %v4046
  %v4057 = vpack.c.b16 %v4049, %v4048
  %4066 = vmatprep.subr.bf16.mxu0 0
  %4067 = vmatpush1.bf16.msra.mxu0 %v4050
  %4068 = vmatprep.subr.bf16.mxu0 0
  %4069 = vmatpush1.bf16.msra.mxu0 %v4051
  %4070 = vmatprep.subr.bf16.mxu0 0
  %4071 = vmatpush1.bf16.msra.mxu0 %v4052
  %4072 = vmatprep.subr.bf16.mxu0 0
  %4073 = vmatpush1.bf16.msra.mxu0 %v4053
  %4074 = vmatprep.subr.bf16.mxu0 0
  %4075 = vmatpush1.bf16.msra.mxu0 %v4054
  %4076 = vmatprep.subr.bf16.mxu0 0
  %4077 = vmatpush1.bf16.msra.mxu0 %v4055
  %4078 = vmatprep.subr.bf16.mxu0 0
  %4079 = vmatpush1.bf16.msra.mxu0 %v4056
  %4080 = vmatprep.subr.bf16.mxu0 0
  %4081 = vmatpush1.bf16.msra.mxu0 %v4057
  %4082 = vmatprep.subr.bf16.mxu0 0
  %4083 = vmatpush1.bf16.msra.mxu0 0
  %4084 = vmatprep.subr.bf16.mxu0 0
  %4085 = vmatpush1.bf16.msra.mxu0 0
  %4086 = vmatprep.subr.bf16.mxu0 0
  %4087 = vmatpush1.bf16.msra.mxu0 0
  %4088 = vmatprep.subr.bf16.mxu0 0
  %4089 = vmatpush1.bf16.msra.mxu0 0
  %4090 = vmatprep.subr.bf16.mxu0 0
  %4091 = vmatpush1.bf16.msra.mxu0 0
  %4092 = vmatprep.subr.bf16.mxu0 0
  %4093 = vmatpush1.bf16.msra.mxu0 0
  %4094 = vmatprep.subr.bf16.mxu0 0
  %4095 = vmatpush1.bf16.msra.mxu0 0
  %4096 = vmatprep.subr.bf16.mxu0 0
  %4097 = vmatpush1.bf16.msra.mxu0 0
  %4098 = vmatprep.mubr.bf16.mxu0 0
  %4099 = vmatmul.mubr.bf16.gmra.mrb[0].mxu0 %v3885
  %v4100 = vpop.f32.mrb[0].mxu0
  %v4101 = vadd.f32 0.0, %v4100
  %v4102 = vpop.f32.mrb[0].mxu0
  %v4103 = vpop.f32.mrb[0].mxu0
  %v4104 = vadd.f32 0.0, %v4103
  %v4105 = vpop.f32.mrb[0].mxu0
  %4106 = vmatprep.mubr.bf16.mxu0 0
  %4107 = vmatmul.mubr.bf16.gmra.mrb[0].mxu0 %v3886
  %v4108 = vpop.f32.mrb[0].mxu0
  %v4109 = vadd.f32 0.0, %v4108
  %v4110 = vpop.f32.mrb[0].mxu0
  %v4111 = vpop.f32.mrb[0].mxu0
  %v4112 = vadd.f32 0.0, %v4111
  %v4113 = vpop.f32.mrb[0].mxu0
  %4114 = vdwg.mxu0
  %4115 = vmatprep.subr.mxu0 0.0
  %4116 = vmatpush1.msra.mxu0 %v3987
  %4117 = vmatprep.subr.mxu0 0.0
  %4118 = vmatpush1.msra.mxu0 %v3990
  %4119 = vmatprep.subr.mxu0 0.0
  %4120 = vmatpush1.msra.mxu0 %v3995
  %4121 = vmatprep.subr.mxu0 0.0
  %4122 = vmatpush1.msra.mxu0 %v3998
  %4123 = vmatprep.subr.mxu0 0.0
  %4124 = vmatpush1.msra.mxu0 0.0
  %4125 = vmatprep.subr.mxu0 0.0
  %4126 = vmatpush1.msra.mxu0 0.0
  %4127 = vmatprep.subr.mxu0 0.0
  %4128 = vmatpush1.msra.mxu0 0.0
  %4129 = vmatprep.subr.mxu0 0.0
  %4130 = vmatpush1.msra.mxu0 0.0
  %4131 = vmatprep.subr.mxu0 0.0
  %4132 = vmatpush1.msra.mxu0 0.0
  %4133 = vmatprep.subr.mxu0 0.0
  %4134 = vmatpush1.msra.mxu0 0.0
  %4135 = vmatprep.subr.mxu0 0.0
  %4136 = vmatpush1.msra.mxu0 0.0
  %4137 = vmatprep.subr.mxu0 0.0
  %4138 = vmatpush1.msra.mxu0 0.0
  %4139 = vmatprep.subr.mxu0 0.0
  %4140 = vmatpush1.msra.mxu0 0.0
  %4141 = vmatprep.subr.mxu0 0.0
  %4142 = vmatpush1.msra.mxu0 0.0
  %4143 = vmatprep.subr.mxu0 0.0
  %4144 = vmatpush1.msra.mxu0 0.0
  %4145 = vmatprep.subr.mxu0 0.0
  %4146 = vmatpush1.msra.mxu0 0.0
  %4147 = vmatprep.subr.mxu0 0.0
  %4148 = vmatpush1.msra.mxu0 0.0
  %4149 = vmatprep.subr.mxu0 0.0
  %4150 = vmatpush1.msra.mxu0 0.0
  %4151 = vmatprep.subr.mxu0 0.0
  %4152 = vmatpush1.msra.mxu0 0.0
  %4153 = vmatprep.subr.mxu0 0.0
  %4154 = vmatpush1.msra.mxu0 0.0
  %4155 = vmatprep.subr.mxu0 0.0
  %4156 = vmatpush1.msra.mxu0 0.0
  %4157 = vmatprep.subr.mxu0 0.0
  %4158 = vmatpush1.msra.mxu0 0.0
  %4159 = vmatprep.subr.mxu0 0.0
  %4160 = vmatpush1.msra.mxu0 0.0
  %4161 = vmatprep.subr.mxu0 0.0
  %4162 = vmatpush1.msra.mxu0 0.0
  %4163 = vmatprep.subr.mxu0 0.0
  %4164 = vmatpush1.msra.mxu0 0.0
  %4165 = vmatprep.subr.mxu0 0.0
  %4166 = vmatpush1.msra.mxu0 0.0
  %4167 = vmatprep.subr.mxu0 0.0
  %4168 = vmatpush1.msra.mxu0 0.0
  %4169 = vmatprep.subr.mxu0 0.0
  %4170 = vmatpush1.msra.mxu0 0.0
  %4171 = vmatprep.subr.mxu0 0.0
  %4172 = vmatpush1.msra.mxu0 0.0
  %4173 = vmatprep.subr.mxu0 0.0
  %4174 = vmatpush1.msra.mxu0 0.0
  %4175 = vmatprep.subr.mxu0 0.0
  %4176 = vmatpush1.msra.mxu0 0.0
  %4177 = vmatprep.subr.mxu0 0.0
  %4178 = vmatpush1.msra.mxu0 0.0
  %4179 = vmatprep.mubr.f32.mxu0 0.0
  %4180 = vmatmul.mubr.f32.gmra.mrb[0].mxu0 %v811
  %v4181 = vpop.f32.mrb[0].mxu0
  %v4182 = vadd.f32 %v4101, %v4181
  %v4183 = vpop.f32.mrb[0].mxu0
  %4184 = vmatprep.mubr.f32.mxu0 0.0
  %4185 = vmatmul.mubr.f32.gmra.mrb[0].mxu0 %v814
  %v4186 = vpop.f32.mrb[0].mxu0
  %v4187 = vadd.f32 %v4104, %v4186
  %v4188 = vpop.f32.mrb[0].mxu0
  %4189 = vmatprep.mubr.f32.mxu0 0.0
  %4190 = vmatmul.mubr.f32.gmra.mrb[0].mxu0 %v817
  %v4191 = vpop.f32.mrb[0].mxu0
  %v4192 = vadd.f32 %v4109, %v4191
  %v4193 = vpop.f32.mrb[0].mxu0
  %4194 = vmatprep.mubr.f32.mxu0 0.0
  %4195 = vmatmul.mubr.f32.gmra.mrb[0].mxu0 %v820
  %v4196 = vpop.f32.mrb[0].mxu0
  %v4197 = vadd.f32 %v4112, %v4196
  %v4198 = vpop.f32.mrb[0].mxu0
  %4199 = vdwg.mxu0
  %s4200 = scalar_lea.vmem %s7, 704
  %v4201 = vld [vmem:[%s4200] sm:$0xf]
  %v4202 = vld [vmem:[%s4200 + $0x4] sm:$0xf]
  %v4203 = vld [vmem:[%s4200 + $0x8] sm:$0xf]
  %v4204 = vld [vmem:[%s4200 + $0xc] sm:$0xf]
  %v4205 = vld [vmem:[%s4200 + $0x10] sm:$0xf]
  %v4206 = vld [vmem:[%s4200 + $0x14] sm:$0xf]
  %v4207 = vld [vmem:[%s4200 + $0x18] sm:$0xf]
  %v4208 = vld [vmem:[%s4200 + $0x1c] sm:$0xf]
  %v4209 = vld [vmem:[%s4200 + $0x20] sm:$0xf]
  %v4210 = vld [vmem:[%s4200 + $0x24] sm:$0xf]
  %v4211 = vld [vmem:[%s4200 + $0x28] sm:$0xf]
  %v4212 = vld [vmem:[%s4200 + $0x2c] sm:$0xf]
  %v4213 = vld [vmem:[%s4200 + $0x30] sm:$0xf]
  %v4214 = vld [vmem:[%s4200 + $0x34] sm:$0xf]
  %v4215 = vld [vmem:[%s4200 + $0x38] sm:$0xf]
  %v4216 = vld [vmem:[%s4200 + $0x3c] sm:$0xf]
  %v4233 = vunpack.c.l.b16 %v4201
  %v4234 = vunpack.c.l.b16 %v4202
  %v4235 = vunpack.c.l.b16 %v4203
  %v4236 = vunpack.c.l.b16 %v4204
  %v4237 = vunpack.c.l.b16 %v4205
  %v4238 = vunpack.c.l.b16 %v4206
  %v4239 = vunpack.c.l.b16 %v4207
  %v4240 = vunpack.c.l.b16 %v4208
  %v4241 = vunpack.c.l.b16 %v4209
  %v4242 = vunpack.c.l.b16 %v4210
  %v4243 = vunpack.c.l.b16 %v4211
  %v4244 = vunpack.c.l.b16 %v4212
  %v4245 = vunpack.c.l.b16 %v4213
  %v4246 = vunpack.c.l.b16 %v4214
  %v4247 = vunpack.c.l.b16 %v4215
  %v4248 = vunpack.c.l.b16 %v4216
  %v4249 = vpack.c.b16 %v4234, %v4233
  %v4250 = vpack.c.b16 %v4236, %v4235
  %v4251 = vpack.c.b16 %v4238, %v4237
  %v4252 = vpack.c.b16 %v4240, %v4239
  %v4253 = vpack.c.b16 %v4242, %v4241
  %v4254 = vpack.c.b16 %v4244, %v4243
  %v4255 = vpack.c.b16 %v4246, %v4245
  %v4256 = vpack.c.b16 %v4248, %v4247
  %4265 = vmatprep.subr.bf16.mxu0 0
  %4266 = vmatpush1.bf16.msra.mxu0 %v4249
  %4267 = vmatprep.subr.bf16.mxu0 0
  %4268 = vmatpush1.bf16.msra.mxu0 %v4250
  %4269 = vmatprep.subr.bf16.mxu0 0
  %4270 = vmatpush1.bf16.msra.mxu0 %v4251
  %4271 = vmatprep.subr.bf16.mxu0 0
  %4272 = vmatpush1.bf16.msra.mxu0 %v4252
  %4273 = vmatprep.subr.bf16.mxu0 0
  %4274 = vmatpush1.bf16.msra.mxu0 %v4253
  %4275 = vmatprep.subr.bf16.mxu0 0
  %4276 = vmatpush1.bf16.msra.mxu0 %v4254
  %4277 = vmatprep.subr.bf16.mxu0 0
  %4278 = vmatpush1.bf16.msra.mxu0 %v4255
  %4279 = vmatprep.subr.bf16.mxu0 0
  %4280 = vmatpush1.bf16.msra.mxu0 %v4256
  %4281 = vmatprep.subr.bf16.mxu0 0
  %4282 = vmatpush1.bf16.msra.mxu0 0
  %4283 = vmatprep.subr.bf16.mxu0 0
  %4284 = vmatpush1.bf16.msra.mxu0 0
  %4285 = vmatprep.subr.bf16.mxu0 0
  %4286 = vmatpush1.bf16.msra.mxu0 0
  %4287 = vmatprep.subr.bf16.mxu0 0
  %4288 = vmatpush1.bf16.msra.mxu0 0
  %4289 = vmatprep.subr.bf16.mxu0 0
  %4290 = vmatpush1.bf16.msra.mxu0 0
  %4291 = vmatprep.subr.bf16.mxu0 0
  %4292 = vmatpush1.bf16.msra.mxu0 0
  %4293 = vmatprep.subr.bf16.mxu0 0
  %4294 = vmatpush1.bf16.msra.mxu0 0
  %4295 = vmatprep.subr.bf16.mxu0 0
  %4296 = vmatpush1.bf16.msra.mxu0 0
  %4297 = vmatprep.mubr.bf16.mxu0 0
  %4298 = vmatmul.mubr.bf16.gmra.mrb[0].mxu0 %v3885
  %v4299 = vpop.f32.mrb[0].mxu0
  %v4300 = vadd.f32 0.0, %v4299
  %v4301 = vpop.f32.mrb[0].mxu0
  %v4302 = vpop.f32.mrb[0].mxu0
  %v4303 = vadd.f32 0.0, %v4302
  %v4304 = vpop.f32.mrb[0].mxu0
  %4305 = vmatprep.mubr.bf16.mxu0 0
  %4306 = vmatmul.mubr.bf16.gmra.mrb[0].mxu0 %v3886
  %v4307 = vpop.f32.mrb[0].mxu0
  %v4308 = vadd.f32 0.0, %v4307
  %v4309 = vpop.f32.mrb[0].mxu0
  %v4310 = vpop.f32.mrb[0].mxu0
  %v4311 = vadd.f32 0.0, %v4310
  %v4312 = vpop.f32.mrb[0].mxu0
  %4313 = vdwg.mxu0
  %4314 = vmatprep.subr.mxu0 0.0
  %4315 = vmatpush1.msra.mxu0 %v4300
  %4316 = vmatprep.subr.mxu0 0.0
  %4317 = vmatpush1.msra.mxu0 %v4303
  %4318 = vmatprep.subr.mxu0 0.0
  %4319 = vmatpush1.msra.mxu0 %v4308
  %4320 = vmatprep.subr.mxu0 0.0
  %4321 = vmatpush1.msra.mxu0 %v4311
  %4322 = vmatprep.subr.mxu0 0.0
  %4323 = vmatpush1.msra.mxu0 0.0
  %4324 = vmatprep.subr.mxu0 0.0
  %4325 = vmatpush1.msra.mxu0 0.0
  %4326 = vmatprep.subr.mxu0 0.0
  %4327 = vmatpush1.msra.mxu0 0.0
  %4328 = vmatprep.subr.mxu0 0.0
  %4329 = vmatpush1.msra.mxu0 0.0
  %4330 = vmatprep.subr.mxu0 0.0
  %4331 = vmatpush1.msra.mxu0 0.0
  %4332 = vmatprep.subr.mxu0 0.0
  %4333 = vmatpush1.msra.mxu0 0.0
  %4334 = vmatprep.subr.mxu0 0.0
  %4335 = vmatpush1.msra.mxu0 0.0
  %4336 = vmatprep.subr.mxu0 0.0
  %4337 = vmatpush1.msra.mxu0 0.0
  %4338 = vmatprep.subr.mxu0 0.0
  %4339 = vmatpush1.msra.mxu0 0.0
  %4340 = vmatprep.subr.mxu0 0.0
  %4341 = vmatpush1.msra.mxu0 0.0
  %4342 = vmatprep.subr.mxu0 0.0
  %4343 = vmatpush1.msra.mxu0 0.0
  %4344 = vmatprep.subr.mxu0 0.0
  %4345 = vmatpush1.msra.mxu0 0.0
  %4346 = vmatprep.subr.mxu0 0.0
  %4347 = vmatpush1.msra.mxu0 0.0
  %4348 = vmatprep.subr.mxu0 0.0
  %4349 = vmatpush1.msra.mxu0 0.0
  %4350 = vmatprep.subr.mxu0 0.0
  %4351 = vmatpush1.msra.mxu0 0.0
  %4352 = vmatprep.subr.mxu0 0.0
  %4353 = vmatpush1.msra.mxu0 0.0
  %4354 = vmatprep.subr.mxu0 0.0
  %4355 = vmatpush1.msra.mxu0 0.0
  %4356 = vmatprep.subr.mxu0 0.0
  %4357 = vmatpush1.msra.mxu0 0.0
  %4358 = vmatprep.subr.mxu0 0.0
  %4359 = vmatpush1.msra.mxu0 0.0
  %4360 = vmatprep.subr.mxu0 0.0
  %4361 = vmatpush1.msra.mxu0 0.0
  %4362 = vmatprep.subr.mxu0 0.0
  %4363 = vmatpush1.msra.mxu0 0.0
  %4364 = vmatprep.subr.mxu0 0.0
  %4365 = vmatpush1.msra.mxu0 0.0
  %4366 = vmatprep.subr.mxu0 0.0
  %4367 = vmatpush1.msra.mxu0 0.0
  %4368 = vmatprep.subr.mxu0 0.0
  %4369 = vmatpush1.msra.mxu0 0.0
  %4370 = vmatprep.subr.mxu0 0.0
  %4371 = vmatpush1.msra.mxu0 0.0
  %4372 = vmatprep.subr.mxu0 0.0
  %4373 = vmatpush1.msra.mxu0 0.0
  %4374 = vmatprep.subr.mxu0 0.0
  %4375 = vmatpush1.msra.mxu0 0.0
  %4376 = vmatprep.subr.mxu0 0.0
  %4377 = vmatpush1.msra.mxu0 0.0
  %4378 = vmatprep.mubr.f32.mxu0 0.0
  %4379 = vmatmul.mubr.f32.gmra.mrb[0].mxu0 %v1149
  %v4380 = vpop.f32.mrb[0].mxu0
  %v4381 = vadd.f32 0.0, %v4380
  %v4382 = vpop.f32.mrb[0].mxu0
  %4383 = vmatprep.mubr.f32.mxu0 0.0
  %4384 = vmatmul.mubr.f32.gmra.mrb[0].mxu0 %v1152
  %v4385 = vpop.f32.mrb[0].mxu0
  %v4386 = vadd.f32 0.0, %v4385
  %v4387 = vpop.f32.mrb[0].mxu0
  %4388 = vmatprep.mubr.f32.mxu0 0.0
  %4389 = vmatmul.mubr.f32.gmra.mrb[0].mxu0 %v1155
  %v4390 = vpop.f32.mrb[0].mxu0
  %v4391 = vadd.f32 0.0, %v4390
  %v4392 = vpop.f32.mrb[0].mxu0
  %4393 = vmatprep.mubr.f32.mxu0 0.0
  %4394 = vmatmul.mubr.f32.gmra.mrb[0].mxu0 %v1158
  %v4395 = vpop.f32.mrb[0].mxu0
  %v4396 = vadd.f32 0.0, %v4395
  %v4397 = vpop.f32.mrb[0].mxu0
  %4398 = vdwg.mxu0
  %v4399 = vadd.f32 %v4182, %v4381
  %v4400 = vadd.f32 %v4187, %v4386
  %v4401 = vadd.f32 %v4192, %v4391
  %v4402 = vadd.f32 %v4197, %v4396
  %v4404 = vlaneseq
  %v4405 = vshrl.u32 %v4404, 7
  %v4406 = vsub.s32 0, %v4405
  %v4407 = vrot.slane %v3884, %v4406
  %v4409 = vadd.f32 %v4399, %v4407
  %v4410 = vadd.f32 %v4400, %v4407
  %v4411 = vadd.f32 %v4401, %v4407
  %v4412 = vadd.f32 %v4402, %v4407
  %s4413 = scalar_lea.vmem %s9, 3
  %v4414 = vld [vmem:[%s4413] sm:$0x1]
  %s4415 = scalar_lea.vmem %s10, 3
  %v4416 = vld [vmem:[%s4415] sm:$0x1]
  %v4417 = vadd.f32 %v4409, %v4410
  %v4418 = vadd.f32 %v4417, %v4411
  %v4419 = vadd.f32 %v4418, %v4412
  %v4420 = vrot.slane %v4419, 4
  %v4421 = vadd.f32 %v4419, %v4420
  %v4422 = vrot.slane %v4421, 2
  %v4423 = vadd.f32 %v4421, %v4422
  %v4424 = vrot.slane %v4423, 1
  %v4425 = vadd.f32 %v4423, %v4424
  %4426 = vmatprep.subr.mxu0 0.0
  %4427 = vmatpush1.msra.mxu0 %v45
  %4428 = vmatprep.subr.mxu0 0.0
  %4429 = vmatpush1.msra.mxu0 %v46
  %4430 = vmatprep.subr.mxu0 0.0
  %4431 = vmatpush1.msra.mxu0 %v47
  %4432 = vmatprep.subr.mxu0 0.0
  %4433 = vmatpush1.msra.mxu0 %v48
  %4434 = vmatprep.subr.mxu0 0.0
  %4435 = vmatpush1.msra.mxu0 %v49
  %4436 = vmatprep.subr.mxu0 0.0
  %4437 = vmatpush1.msra.mxu0 %v50
  %4438 = vmatprep.subr.mxu0 0.0
  %4439 = vmatpush1.msra.mxu0 %v51
  %4440 = vmatprep.subr.mxu0 0.0
  %4441 = vmatpush1.msra.mxu0 %v52
  %4442 = vmatprep.subr.mxu0 0.0
  %4443 = vmatpush1.msra.mxu0 %v53
  %4444 = vmatprep.subr.mxu0 0.0
  %4445 = vmatpush1.msra.mxu0 %v54
  %4446 = vmatprep.subr.mxu0 0.0
  %4447 = vmatpush1.msra.mxu0 %v55
  %4448 = vmatprep.subr.mxu0 0.0
  %4449 = vmatpush1.msra.mxu0 %v56
  %4450 = vmatprep.subr.mxu0 0.0
  %4451 = vmatpush1.msra.mxu0 %v57
  %4452 = vmatprep.subr.mxu0 0.0
  %4453 = vmatpush1.msra.mxu0 %v58
  %4454 = vmatprep.subr.mxu0 0.0
  %4455 = vmatpush1.msra.mxu0 %v59
  %4456 = vmatprep.subr.mxu0 0.0
  %4457 = vmatpush1.msra.mxu0 %v60
  %4458 = vmatprep.subr.mxu0 0.0
  %4459 = vmatpush1.msra.mxu0 0.0
  %4460 = vmatprep.subr.mxu0 0.0
  %4461 = vmatpush1.msra.mxu0 0.0
  %4462 = vmatprep.subr.mxu0 0.0
  %4463 = vmatpush1.msra.mxu0 0.0
  %4464 = vmatprep.subr.mxu0 0.0
  %4465 = vmatpush1.msra.mxu0 0.0
  %4466 = vmatprep.subr.mxu0 0.0
  %4467 = vmatpush1.msra.mxu0 0.0
  %4468 = vmatprep.subr.mxu0 0.0
  %4469 = vmatpush1.msra.mxu0 0.0
  %4470 = vmatprep.subr.mxu0 0.0
  %4471 = vmatpush1.msra.mxu0 0.0
  %4472 = vmatprep.subr.mxu0 0.0
  %4473 = vmatpush1.msra.mxu0 0.0
  %4474 = vmatprep.subr.mxu0 0.0
  %4475 = vmatpush1.msra.mxu0 0.0
  %4476 = vmatprep.subr.mxu0 0.0
  %4477 = vmatpush1.msra.mxu0 0.0
  %4478 = vmatprep.subr.mxu0 0.0
  %4479 = vmatpush1.msra.mxu0 0.0
  %4480 = vmatprep.subr.mxu0 0.0
  %4481 = vmatpush1.msra.mxu0 0.0
  %4482 = vmatprep.subr.mxu0 0.0
  %4483 = vmatpush1.msra.mxu0 0.0
  %4484 = vmatprep.subr.mxu0 0.0
  %4485 = vmatpush1.msra.mxu0 0.0
  %4486 = vmatprep.subr.mxu0 0.0
  %4487 = vmatpush1.msra.mxu0 0.0
  %4488 = vmatprep.subr.mxu0 0.0
  %4489 = vmatpush1.msra.mxu0 0.0
  %4490 = vmatprep.mubr.f32.mxu0 0.0
  %4491 = vmatmul.mubr.f32.gmra.mrb[0].mxu0 %v4425
  %v4492 = vpop.f32.mrb[0].mxu0
  %v4493 = vadd.f32 0.0, %v4492
  %v4494 = vpop.f32.mrb[0].mxu0
  %4495 = vdwg.mxu0
  %v4496 = vlaneseq
  %v4497 = vshrl.u32 %v4496, 7
  %v4498 = vsub.s32 0, %v4497
  %v4499 = vrot.slane %v4493, %v4498
  %v4500 = vsub.f32 %v4409, %v4499
  %v4501 = vsub.f32 %v4410, %v4499
  %v4502 = vsub.f32 %v4411, %v4499
  %v4503 = vsub.f32 %v4412, %v4499
  %v4504 = vmul.f32 %v4500, %v4500
  %v4505 = vmul.f32 %v4501, %v4501
  %v4506 = vmul.f32 %v4502, %v4502
  %v4507 = vmul.f32 %v4503, %v4503
  %v4508 = vadd.f32 %v4504, %v4505
  %v4509 = vadd.f32 %v4508, %v4506
  %v4510 = vadd.f32 %v4509, %v4507
  %v4511 = vrot.slane %v4510, 4
  %v4512 = vadd.f32 %v4510, %v4511
  %v4513 = vrot.slane %v4512, 2
  %v4514 = vadd.f32 %v4512, %v4513
  %v4515 = vrot.slane %v4514, 1
  %v4516 = vadd.f32 %v4514, %v4515
  %4517 = vmatprep.subr.mxu0 0.0
  %4518 = vmatpush1.msra.mxu0 %v45
  %4519 = vmatprep.subr.mxu0 0.0
  %4520 = vmatpush1.msra.mxu0 %v46
  %4521 = vmatprep.subr.mxu0 0.0
  %4522 = vmatpush1.msra.mxu0 %v47
  %4523 = vmatprep.subr.mxu0 0.0
  %4524 = vmatpush1.msra.mxu0 %v48
  %4525 = vmatprep.subr.mxu0 0.0
  %4526 = vmatpush1.msra.mxu0 %v49
  %4527 = vmatprep.subr.mxu0 0.0
  %4528 = vmatpush1.msra.mxu0 %v50
  %4529 = vmatprep.subr.mxu0 0.0
  %4530 = vmatpush1.msra.mxu0 %v51
  %4531 = vmatprep.subr.mxu0 0.0
  %4532 = vmatpush1.msra.mxu0 %v52
  %4533 = vmatprep.subr.mxu0 0.0
  %4534 = vmatpush1.msra.mxu0 %v53
  %4535 = vmatprep.subr.mxu0 0.0
  %4536 = vmatpush1.msra.mxu0 %v54
  %4537 = vmatprep.subr.mxu0 0.0
  %4538 = vmatpush1.msra.mxu0 %v55
  %4539 = vmatprep.subr.mxu0 0.0
  %4540 = vmatpush1.msra.mxu0 %v56
  %4541 = vmatprep.subr.mxu0 0.0
  %4542 = vmatpush1.msra.mxu0 %v57
  %4543 = vmatprep.subr.mxu0 0.0
  %4544 = vmatpush1.msra.mxu0 %v58
  %4545 = vmatprep.subr.mxu0 0.0
  %4546 = vmatpush1.msra.mxu0 %v59
  %4547 = vmatprep.subr.mxu0 0.0
  %4548 = vmatpush1.msra.mxu0 %v60
  %4549 = vmatprep.subr.mxu0 0.0
  %4550 = vmatpush1.msra.mxu0 0.0
  %4551 = vmatprep.subr.mxu0 0.0
  %4552 = vmatpush1.msra.mxu0 0.0
  %4553 = vmatprep.subr.mxu0 0.0
  %4554 = vmatpush1.msra.mxu0 0.0
  %4555 = vmatprep.subr.mxu0 0.0
  %4556 = vmatpush1.msra.mxu0 0.0
  %4557 = vmatprep.subr.mxu0 0.0
  %4558 = vmatpush1.msra.mxu0 0.0
  %4559 = vmatprep.subr.mxu0 0.0
  %4560 = vmatpush1.msra.mxu0 0.0
  %4561 = vmatprep.subr.mxu0 0.0
  %4562 = vmatpush1.msra.mxu0 0.0
  %4563 = vmatprep.subr.mxu0 0.0
  %4564 = vmatpush1.msra.mxu0 0.0
  %4565 = vmatprep.subr.mxu0 0.0
  %4566 = vmatpush1.msra.mxu0 0.0
  %4567 = vmatprep.subr.mxu0 0.0
  %4568 = vmatpush1.msra.mxu0 0.0
  %4569 = vmatprep.subr.mxu0 0.0
  %4570 = vmatpush1.msra.mxu0 0.0
  %4571 = vmatprep.subr.mxu0 0.0
  %4572 = vmatpush1.msra.mxu0 0.0
  %4573 = vmatprep.subr.mxu0 0.0
  %4574 = vmatpush1.msra.mxu0 0.0
  %4575 = vmatprep.subr.mxu0 0.0
  %4576 = vmatpush1.msra.mxu0 0.0
  %4577 = vmatprep.subr.mxu0 0.0
  %4578 = vmatpush1.msra.mxu0 0.0
  %4579 = vmatprep.subr.mxu0 0.0
  %4580 = vmatpush1.msra.mxu0 0.0
  %4581 = vmatprep.mubr.f32.mxu0 0.0
  %4582 = vmatmul.mubr.f32.gmra.mrb[0].mxu0 %v4516
  %v4583 = vpop.f32.mrb[0].mxu0
  %v4584 = vadd.f32 1e-05, %v4583
  %v4585 = vpop.f32.mrb[0].mxu0
  %4586 = vdwg.mxu0
  %v4587 = vrsqrt.pop %v4584
  %v4588 = vmul.f32 %v4587, %v4414
  %v4589 = vlaneseq
  %v4590 = vshrl.u32 %v4589, 7
  %v4591 = vsub.s32 0, %v4590
  %v4592 = vrot.slane %v4588, %v4591
  %v4593 = vmul.f32 %v4500, %v4592
  %v4594 = vmul.f32 %v4501, %v4592
  %v4595 = vmul.f32 %v4502, %v4592
  %v4596 = vmul.f32 %v4503, %v4592
  %v4598 = vlaneseq
  %v4599 = vshrl.u32 %v4598, 7
  %v4600 = vsub.s32 0, %v4599
  %v4601 = vrot.slane %v4416, %v4600
  %v4603 = vadd.f32 %v4593, %v4601
  %v4604 = vadd.f32 %v4594, %v4601
  %v4605 = vadd.f32 %v4595, %v4601
  %v4606 = vadd.f32 %v4596, %v4601
  %v4607 = vmax.f32 %v4603, 0.0
  %v4608 = vmax.f32 %v4604, 0.0
  %v4609 = vmax.f32 %v4605, 0.0
  %v4610 = vmax.f32 %v4606, 0.0
  %s4611 = scalar_lea.vmem %s8, 4
  %v4612 = vld [vmem:[%s4611] sm:$0x1]
  %v4613 = vpack.c.bf16 %v4608, %v4607
  %v4614 = vpack.c.bf16 %v4610, %v4609
  %s4615 = scalar_lea.vmem %s7, 768
  %v4616 = vld [vmem:[%s4615] sm:$0xf]
  %v4617 = vld [vmem:[%s4615 + $0x4] sm:$0xf]
  %v4618 = vld [vmem:[%s4615 + $0x8] sm:$0xf]
  %v4619 = vld [vmem:[%s4615 + $0xc] sm:$0xf]
  %v4620 = vld [vmem:[%s4615 + $0x10] sm:$0xf]
  %v4621 = vld [vmem:[%s4615 + $0x14] sm:$0xf]
  %v4622 = vld [vmem:[%s4615 + $0x18] sm:$0xf]
  %v4623 = vld [vmem:[%s4615 + $0x1c] sm:$0xf]
  %v4624 = vld [vmem:[%s4615 + $0x20] sm:$0xf]
  %v4625 = vld [vmem:[%s4615 + $0x24] sm:$0xf]
  %v4626 = vld [vmem:[%s4615 + $0x28] sm:$0xf]
  %v4627 = vld [vmem:[%s4615 + $0x2c] sm:$0xf]
  %v4628 = vld [vmem:[%s4615 + $0x30] sm:$0xf]
  %v4629 = vld [vmem:[%s4615 + $0x34] sm:$0xf]
  %v4630 = vld [vmem:[%s4615 + $0x38] sm:$0xf]
  %v4631 = vld [vmem:[%s4615 + $0x3c] sm:$0xf]
  %v4648 = vunpack.c.l.b16 %v4616
  %v4649 = vunpack.c.l.b16 %v4617
  %v4650 = vunpack.c.l.b16 %v4618
  %v4651 = vunpack.c.l.b16 %v4619
  %v4652 = vunpack.c.l.b16 %v4620
  %v4653 = vunpack.c.l.b16 %v4621
  %v4654 = vunpack.c.l.b16 %v4622
  %v4655 = vunpack.c.l.b16 %v4623
  %v4656 = vunpack.c.l.b16 %v4624
  %v4657 = vunpack.c.l.b16 %v4625
  %v4658 = vunpack.c.l.b16 %v4626
  %v4659 = vunpack.c.l.b16 %v4627
  %v4660 = vunpack.c.l.b16 %v4628
  %v4661 = vunpack.c.l.b16 %v4629
  %v4662 = vunpack.c.l.b16 %v4630
  %v4663 = vunpack.c.l.b16 %v4631
  %v4664 = vpack.c.b16 %v4649, %v4648
  %v4665 = vpack.c.b16 %v4651, %v4650
  %v4666 = vpack.c.b16 %v4653, %v4652
  %v4667 = vpack.c.b16 %v4655, %v4654
  %v4668 = vpack.c.b16 %v4657, %v4656
  %v4669 = vpack.c.b16 %v4659, %v4658
  %v4670 = vpack.c.b16 %v4661, %v4660
  %v4671 = vpack.c.b16 %v4663, %v4662
  %4680 = vmatprep.subr.bf16.mxu0 0
  %4681 = vmatpush1.bf16.msra.mxu0 %v4664
  %4682 = vmatprep.subr.bf16.mxu0 0
  %4683 = vmatpush1.bf16.msra.mxu0 %v4665
  %4684 = vmatprep.subr.bf16.mxu0 0
  %4685 = vmatpush1.bf16.msra.mxu0 %v4666
  %4686 = vmatprep.subr.bf16.mxu0 0
  %4687 = vmatpush1.bf16.msra.mxu0 %v4667
  %4688 = vmatprep.subr.bf16.mxu0 0
  %4689 = vmatpush1.bf16.msra.mxu0 %v4668
  %4690 = vmatprep.subr.bf16.mxu0 0
  %4691 = vmatpush1.bf16.msra.mxu0 %v4669
  %4692 = vmatprep.subr.bf16.mxu0 0
  %4693 = vmatpush1.bf16.msra.mxu0 %v4670
  %4694 = vmatprep.subr.bf16.mxu0 0
  %4695 = vmatpush1.bf16.msra.mxu0 %v4671
  %4696 = vmatprep.subr.bf16.mxu0 0
  %4697 = vmatpush1.bf16.msra.mxu0 0
  %4698 = vmatprep.subr.bf16.mxu0 0
  %4699 = vmatpush1.bf16.msra.mxu0 0
  %4700 = vmatprep.subr.bf16.mxu0 0
  %4701 = vmatpush1.bf16.msra.mxu0 0
  %4702 = vmatprep.subr.bf16.mxu0 0
  %4703 = vmatpush1.bf16.msra.mxu0 0
  %4704 = vmatprep.subr.bf16.mxu0 0
  %4705 = vmatpush1.bf16.msra.mxu0 0
  %4706 = vmatprep.subr.bf16.mxu0 0
  %4707 = vmatpush1.bf16.msra.mxu0 0
  %4708 = vmatprep.subr.bf16.mxu0 0
  %4709 = vmatpush1.bf16.msra.mxu0 0
  %4710 = vmatprep.subr.bf16.mxu0 0
  %4711 = vmatpush1.bf16.msra.mxu0 0
  %4712 = vmatprep.mubr.bf16.mxu0 0
  %4713 = vmatmul.mubr.bf16.gmra.mrb[0].mxu0 %v4613
  %v4714 = vpop.f32.mrb[0].mxu0
  %v4715 = vadd.f32 0.0, %v4714
  %v4716 = vpop.f32.mrb[0].mxu0
  %v4717 = vpop.f32.mrb[0].mxu0
  %v4718 = vadd.f32 0.0, %v4717
  %v4719 = vpop.f32.mrb[0].mxu0
  %4720 = vmatprep.mubr.bf16.mxu0 0
  %4721 = vmatmul.mubr.bf16.gmra.mrb[0].mxu0 %v4614
  %v4722 = vpop.f32.mrb[0].mxu0
  %v4723 = vadd.f32 0.0, %v4722
  %v4724 = vpop.f32.mrb[0].mxu0
  %v4725 = vpop.f32.mrb[0].mxu0
  %v4726 = vadd.f32 0.0, %v4725
  %v4727 = vpop.f32.mrb[0].mxu0
  %4728 = vdwg.mxu0
  %s4729 = scalar_lea.vmem %s7, 832
  %v4730 = vld [vmem:[%s4729] sm:$0xf]
  %v4731 = vld [vmem:[%s4729 + $0x4] sm:$0xf]
  %v4732 = vld [vmem:[%s4729 + $0x8] sm:$0xf]
  %v4733 = vld [vmem:[%s4729 + $0xc] sm:$0xf]
  %v4734 = vld [vmem:[%s4729 + $0x10] sm:$0xf]
  %v4735 = vld [vmem:[%s4729 + $0x14] sm:$0xf]
  %v4736 = vld [vmem:[%s4729 + $0x18] sm:$0xf]
  %v4737 = vld [vmem:[%s4729 + $0x1c] sm:$0xf]
  %v4738 = vld [vmem:[%s4729 + $0x20] sm:$0xf]
  %v4739 = vld [vmem:[%s4729 + $0x24] sm:$0xf]
  %v4740 = vld [vmem:[%s4729 + $0x28] sm:$0xf]
  %v4741 = vld [vmem:[%s4729 + $0x2c] sm:$0xf]
  %v4742 = vld [vmem:[%s4729 + $0x30] sm:$0xf]
  %v4743 = vld [vmem:[%s4729 + $0x34] sm:$0xf]
  %v4744 = vld [vmem:[%s4729 + $0x38] sm:$0xf]
  %v4745 = vld [vmem:[%s4729 + $0x3c] sm:$0xf]
  %v4762 = vunpack.c.l.b16 %v4730
  %v4763 = vunpack.c.l.b16 %v4731
  %v4764 = vunpack.c.l.b16 %v4732
  %v4765 = vunpack.c.l.b16 %v4733
  %v4766 = vunpack.c.l.b16 %v4734
  %v4767 = vunpack.c.l.b16 %v4735
  %v4768 = vunpack.c.l.b16 %v4736
  %v4769 = vunpack.c.l.b16 %v4737
  %v4770 = vunpack.c.l.b16 %v4738
  %v4771 = vunpack.c.l.b16 %v4739
  %v4772 = vunpack.c.l.b16 %v4740
  %v4773 = vunpack.c.l.b16 %v4741
  %v4774 = vunpack.c.l.b16 %v4742
  %v4775 = vunpack.c.l.b16 %v4743
  %v4776 = vunpack.c.l.b16 %v4744
  %v4777 = vunpack.c.l.b16 %v4745
  %v4778 = vpack.c.b16 %v4763, %v4762
  %v4779 = vpack.c.b16 %v4765, %v4764
  %v4780 = vpack.c.b16 %v4767, %v4766
  %v4781 = vpack.c.b16 %v4769, %v4768
  %v4782 = vpack.c.b16 %v4771, %v4770
  %v4783 = vpack.c.b16 %v4773, %v4772
  %v4784 = vpack.c.b16 %v4775, %v4774
  %v4785 = vpack.c.b16 %v4777, %v4776
  %4794 = vmatprep.subr.bf16.mxu0 0
  %4795 = vmatpush1.bf16.msra.mxu0 %v4778
  %4796 = vmatprep.subr.bf16.mxu0 0
  %4797 = vmatpush1.bf16.msra.mxu0 %v4779
  %4798 = vmatprep.subr.bf16.mxu0 0
  %4799 = vmatpush1.bf16.msra.mxu0 %v4780
  %4800 = vmatprep.subr.bf16.mxu0 0
  %4801 = vmatpush1.bf16.msra.mxu0 %v4781
  %4802 = vmatprep.subr.bf16.mxu0 0
  %4803 = vmatpush1.bf16.msra.mxu0 %v4782
  %4804 = vmatprep.subr.bf16.mxu0 0
  %4805 = vmatpush1.bf16.msra.mxu0 %v4783
  %4806 = vmatprep.subr.bf16.mxu0 0
  %4807 = vmatpush1.bf16.msra.mxu0 %v4784
  %4808 = vmatprep.subr.bf16.mxu0 0
  %4809 = vmatpush1.bf16.msra.mxu0 %v4785
  %4810 = vmatprep.subr.bf16.mxu0 0
  %4811 = vmatpush1.bf16.msra.mxu0 0
  %4812 = vmatprep.subr.bf16.mxu0 0
  %4813 = vmatpush1.bf16.msra.mxu0 0
  %4814 = vmatprep.subr.bf16.mxu0 0
  %4815 = vmatpush1.bf16.msra.mxu0 0
  %4816 = vmatprep.subr.bf16.mxu0 0
  %4817 = vmatpush1.bf16.msra.mxu0 0
  %4818 = vmatprep.subr.bf16.mxu0 0
  %4819 = vmatpush1.bf16.msra.mxu0 0
  %4820 = vmatprep.subr.bf16.mxu0 0
  %4821 = vmatpush1.bf16.msra.mxu0 0
  %4822 = vmatprep.subr.bf16.mxu0 0
  %4823 = vmatpush1.bf16.msra.mxu0 0
  %4824 = vmatprep.subr.bf16.mxu0 0
  %4825 = vmatpush1.bf16.msra.mxu0 0
  %4826 = vmatprep.mubr.bf16.mxu0 0
  %4827 = vmatmul.mubr.bf16.gmra.mrb[0].mxu0 %v4613
  %v4828 = vpop.f32.mrb[0].mxu0
  %v4829 = vadd.f32 0.0, %v4828
  %v4830 = vpop.f32.mrb[0].mxu0
  %v4831 = vpop.f32.mrb[0].mxu0
  %v4832 = vadd.f32 0.0, %v4831
  %v4833 = vpop.f32.mrb[0].mxu0
  %4834 = vmatprep.mubr.bf16.mxu0 0
  %4835 = vmatmul.mubr.bf16.gmra.mrb[0].mxu0 %v4614
  %v4836 = vpop.f32.mrb[0].mxu0
  %v4837 = vadd.f32 0.0, %v4836
  %v4838 = vpop.f32.mrb[0].mxu0
  %v4839 = vpop.f32.mrb[0].mxu0
  %v4840 = vadd.f32 0.0, %v4839
  %v4841 = vpop.f32.mrb[0].mxu0
  %4842 = vdwg.mxu0
  %4843 = vmatprep.subr.mxu0 0.0
  %4844 = vmatpush1.msra.mxu0 %v4715
  %4845 = vmatprep.subr.mxu0 0.0
  %4846 = vmatpush1.msra.mxu0 %v4718
  %4847 = vmatprep.subr.mxu0 0.0
  %4848 = vmatpush1.msra.mxu0 %v4723
  %4849 = vmatprep.subr.mxu0 0.0
  %4850 = vmatpush1.msra.mxu0 %v4726
  %4851 = vmatprep.subr.mxu0 0.0
  %4852 = vmatpush1.msra.mxu0 0.0
  %4853 = vmatprep.subr.mxu0 0.0
  %4854 = vmatpush1.msra.mxu0 0.0
  %4855 = vmatprep.subr.mxu0 0.0
  %4856 = vmatpush1.msra.mxu0 0.0
  %4857 = vmatprep.subr.mxu0 0.0
  %4858 = vmatpush1.msra.mxu0 0.0
  %4859 = vmatprep.subr.mxu0 0.0
  %4860 = vmatpush1.msra.mxu0 0.0
  %4861 = vmatprep.subr.mxu0 0.0
  %4862 = vmatpush1.msra.mxu0 0.0
  %4863 = vmatprep.subr.mxu0 0.0
  %4864 = vmatpush1.msra.mxu0 0.0
  %4865 = vmatprep.subr.mxu0 0.0
  %4866 = vmatpush1.msra.mxu0 0.0
  %4867 = vmatprep.subr.mxu0 0.0
  %4868 = vmatpush1.msra.mxu0 0.0
  %4869 = vmatprep.subr.mxu0 0.0
  %4870 = vmatpush1.msra.mxu0 0.0
  %4871 = vmatprep.subr.mxu0 0.0
  %4872 = vmatpush1.msra.mxu0 0.0
  %4873 = vmatprep.subr.mxu0 0.0
  %4874 = vmatpush1.msra.mxu0 0.0
  %4875 = vmatprep.subr.mxu0 0.0
  %4876 = vmatpush1.msra.mxu0 0.0
  %4877 = vmatprep.subr.mxu0 0.0
  %4878 = vmatpush1.msra.mxu0 0.0
  %4879 = vmatprep.subr.mxu0 0.0
  %4880 = vmatpush1.msra.mxu0 0.0
  %4881 = vmatprep.subr.mxu0 0.0
  %4882 = vmatpush1.msra.mxu0 0.0
  %4883 = vmatprep.subr.mxu0 0.0
  %4884 = vmatpush1.msra.mxu0 0.0
  %4885 = vmatprep.subr.mxu0 0.0
  %4886 = vmatpush1.msra.mxu0 0.0
  %4887 = vmatprep.subr.mxu0 0.0
  %4888 = vmatpush1.msra.mxu0 0.0
  %4889 = vmatprep.subr.mxu0 0.0
  %4890 = vmatpush1.msra.mxu0 0.0
  %4891 = vmatprep.subr.mxu0 0.0
  %4892 = vmatpush1.msra.mxu0 0.0
  %4893 = vmatprep.subr.mxu0 0.0
  %4894 = vmatpush1.msra.mxu0 0.0
  %4895 = vmatprep.subr.mxu0 0.0
  %4896 = vmatpush1.msra.mxu0 0.0
  %4897 = vmatprep.subr.mxu0 0.0
  %4898 = vmatpush1.msra.mxu0 0.0
  %4899 = vmatprep.subr.mxu0 0.0
  %4900 = vmatpush1.msra.mxu0 0.0
  %4901 = vmatprep.subr.mxu0 0.0
  %4902 = vmatpush1.msra.mxu0 0.0
  %4903 = vmatprep.subr.mxu0 0.0
  %4904 = vmatpush1.msra.mxu0 0.0
  %4905 = vmatprep.subr.mxu0 0.0
  %4906 = vmatpush1.msra.mxu0 0.0
  %4907 = vmatprep.mubr.f32.mxu0 0.0
  %4908 = vmatmul.mubr.f32.gmra.mrb[0].mxu0 %v811
  %v4909 = vpop.f32.mrb[0].mxu0
  %v4910 = vadd.f32 %v4829, %v4909
  %v4911 = vpop.f32.mrb[0].mxu0
  %4912 = vmatprep.mubr.f32.mxu0 0.0
  %4913 = vmatmul.mubr.f32.gmra.mrb[0].mxu0 %v814
  %v4914 = vpop.f32.mrb[0].mxu0
  %v4915 = vadd.f32 %v4832, %v4914
  %v4916 = vpop.f32.mrb[0].mxu0
  %4917 = vmatprep.mubr.f32.mxu0 0.0
  %4918 = vmatmul.mubr.f32.gmra.mrb[0].mxu0 %v817
  %v4919 = vpop.f32.mrb[0].mxu0
  %v4920 = vadd.f32 %v4837, %v4919
  %v4921 = vpop.f32.mrb[0].mxu0
  %4922 = vmatprep.mubr.f32.mxu0 0.0
  %4923 = vmatmul.mubr.f32.gmra.mrb[0].mxu0 %v820
  %v4924 = vpop.f32.mrb[0].mxu0
  %v4925 = vadd.f32 %v4840, %v4924
  %v4926 = vpop.f32.mrb[0].mxu0
  %4927 = vdwg.mxu0
  %s4928 = scalar_lea.vmem %s7, 896
  %v4929 = vld [vmem:[%s4928] sm:$0xf]
  %v4930 = vld [vmem:[%s4928 + $0x4] sm:$0xf]
  %v4931 = vld [vmem:[%s4928 + $0x8] sm:$0xf]
  %v4932 = vld [vmem:[%s4928 + $0xc] sm:$0xf]
  %v4933 = vld [vmem:[%s4928 + $0x10] sm:$0xf]
  %v4934 = vld [vmem:[%s4928 + $0x14] sm:$0xf]
  %v4935 = vld [vmem:[%s4928 + $0x18] sm:$0xf]
  %v4936 = vld [vmem:[%s4928 + $0x1c] sm:$0xf]
  %v4937 = vld [vmem:[%s4928 + $0x20] sm:$0xf]
  %v4938 = vld [vmem:[%s4928 + $0x24] sm:$0xf]
  %v4939 = vld [vmem:[%s4928 + $0x28] sm:$0xf]
  %v4940 = vld [vmem:[%s4928 + $0x2c] sm:$0xf]
  %v4941 = vld [vmem:[%s4928 + $0x30] sm:$0xf]
  %v4942 = vld [vmem:[%s4928 + $0x34] sm:$0xf]
  %v4943 = vld [vmem:[%s4928 + $0x38] sm:$0xf]
  %v4944 = vld [vmem:[%s4928 + $0x3c] sm:$0xf]
  %v4961 = vunpack.c.l.b16 %v4929
  %v4962 = vunpack.c.l.b16 %v4930
  %v4963 = vunpack.c.l.b16 %v4931
  %v4964 = vunpack.c.l.b16 %v4932
  %v4965 = vunpack.c.l.b16 %v4933
  %v4966 = vunpack.c.l.b16 %v4934
  %v4967 = vunpack.c.l.b16 %v4935
  %v4968 = vunpack.c.l.b16 %v4936
  %v4969 = vunpack.c.l.b16 %v4937
  %v4970 = vunpack.c.l.b16 %v4938
  %v4971 = vunpack.c.l.b16 %v4939
  %v4972 = vunpack.c.l.b16 %v4940
  %v4973 = vunpack.c.l.b16 %v4941
  %v4974 = vunpack.c.l.b16 %v4942
  %v4975 = vunpack.c.l.b16 %v4943
  %v4976 = vunpack.c.l.b16 %v4944
  %v4977 = vpack.c.b16 %v4962, %v4961
  %v4978 = vpack.c.b16 %v4964, %v4963
  %v4979 = vpack.c.b16 %v4966, %v4965
  %v4980 = vpack.c.b16 %v4968, %v4967
  %v4981 = vpack.c.b16 %v4970, %v4969
  %v4982 = vpack.c.b16 %v4972, %v4971
  %v4983 = vpack.c.b16 %v4974, %v4973
  %v4984 = vpack.c.b16 %v4976, %v4975
  %4993 = vmatprep.subr.bf16.mxu0 0
  %4994 = vmatpush1.bf16.msra.mxu0 %v4977
  %4995 = vmatprep.subr.bf16.mxu0 0
  %4996 = vmatpush1.bf16.msra.mxu0 %v4978
  %4997 = vmatprep.subr.bf16.mxu0 0
  %4998 = vmatpush1.bf16.msra.mxu0 %v4979
  %4999 = vmatprep.subr.bf16.mxu0 0
  %5000 = vmatpush1.bf16.msra.mxu0 %v4980
  %5001 = vmatprep.subr.bf16.mxu0 0
  %5002 = vmatpush1.bf16.msra.mxu0 %v4981
  %5003 = vmatprep.subr.bf16.mxu0 0
  %5004 = vmatpush1.bf16.msra.mxu0 %v4982
  %5005 = vmatprep.subr.bf16.mxu0 0
  %5006 = vmatpush1.bf16.msra.mxu0 %v4983
  %5007 = vmatprep.subr.bf16.mxu0 0
  %5008 = vmatpush1.bf16.msra.mxu0 %v4984
  %5009 = vmatprep.subr.bf16.mxu0 0
  %5010 = vmatpush1.bf16.msra.mxu0 0
  %5011 = vmatprep.subr.bf16.mxu0 0
  %5012 = vmatpush1.bf16.msra.mxu0 0
  %5013 = vmatprep.subr.bf16.mxu0 0
  %5014 = vmatpush1.bf16.msra.mxu0 0
  %5015 = vmatprep.subr.bf16.mxu0 0
  %5016 = vmatpush1.bf16.msra.mxu0 0
  %5017 = vmatprep.subr.bf16.mxu0 0
  %5018 = vmatpush1.bf16.msra.mxu0 0
  %5019 = vmatprep.subr.bf16.mxu0 0
  %5020 = vmatpush1.bf16.msra.mxu0 0
  %5021 = vmatprep.subr.bf16.mxu0 0
  %5022 = vmatpush1.bf16.msra.mxu0 0
  %5023 = vmatprep.subr.bf16.mxu0 0
  %5024 = vmatpush1.bf16.msra.mxu0 0
  %5025 = vmatprep.mubr.bf16.mxu0 0
  %5026 = vmatmul.mubr.bf16.gmra.mrb[0].mxu0 %v4613
  %v5027 = vpop.f32.mrb[0].mxu0
  %v5028 = vadd.f32 0.0, %v5027
  %v5029 = vpop.f32.mrb[0].mxu0
  %v5030 = vpop.f32.mrb[0].mxu0
  %v5031 = vadd.f32 0.0, %v5030
  %v5032 = vpop.f32.mrb[0].mxu0
  %5033 = vmatprep.mubr.bf16.mxu0 0
  %5034 = vmatmul.mubr.bf16.gmra.mrb[0].mxu0 %v4614
  %v5035 = vpop.f32.mrb[0].mxu0
  %v5036 = vadd.f32 0.0, %v5035
  %v5037 = vpop.f32.mrb[0].mxu0
  %v5038 = vpop.f32.mrb[0].mxu0
  %v5039 = vadd.f32 0.0, %v5038
  %v5040 = vpop.f32.mrb[0].mxu0
  %5041 = vdwg.mxu0
  %5042 = vmatprep.subr.mxu0 0.0
  %5043 = vmatpush1.msra.mxu0 %v5028
  %5044 = vmatprep.subr.mxu0 0.0
  %5045 = vmatpush1.msra.mxu0 %v5031
  %5046 = vmatprep.subr.mxu0 0.0
  %5047 = vmatpush1.msra.mxu0 %v5036
  %5048 = vmatprep.subr.mxu0 0.0
  %5049 = vmatpush1.msra.mxu0 %v5039
  %5050 = vmatprep.subr.mxu0 0.0
  %5051 = vmatpush1.msra.mxu0 0.0
  %5052 = vmatprep.subr.mxu0 0.0
  %5053 = vmatpush1.msra.mxu0 0.0
  %5054 = vmatprep.subr.mxu0 0.0
  %5055 = vmatpush1.msra.mxu0 0.0
  %5056 = vmatprep.subr.mxu0 0.0
  %5057 = vmatpush1.msra.mxu0 0.0
  %5058 = vmatprep.subr.mxu0 0.0
  %5059 = vmatpush1.msra.mxu0 0.0
  %5060 = vmatprep.subr.mxu0 0.0
  %5061 = vmatpush1.msra.mxu0 0.0
  %5062 = vmatprep.subr.mxu0 0.0
  %5063 = vmatpush1.msra.mxu0 0.0
  %5064 = vmatprep.subr.mxu0 0.0
  %5065 = vmatpush1.msra.mxu0 0.0
  %5066 = vmatprep.subr.mxu0 0.0
  %5067 = vmatpush1.msra.mxu0 0.0
  %5068 = vmatprep.subr.mxu0 0.0
  %5069 = vmatpush1.msra.mxu0 0.0
  %5070 = vmatprep.subr.mxu0 0.0
  %5071 = vmatpush1.msra.mxu0 0.0
  %5072 = vmatprep.subr.mxu0 0.0
  %5073 = vmatpush1.msra.mxu0 0.0
  %5074 = vmatprep.subr.mxu0 0.0
  %5075 = vmatpush1.msra.mxu0 0.0
  %5076 = vmatprep.subr.mxu0 0.0
  %5077 = vmatpush1.msra.mxu0 0.0
  %5078 = vmatprep.subr.mxu0 0.0
  %5079 = vmatpush1.msra.mxu0 0.0
  %5080 = vmatprep.subr.mxu0 0.0
  %5081 = vmatpush1.msra.mxu0 0.0
  %5082 = vmatprep.subr.mxu0 0.0
  %5083 = vmatpush1.msra.mxu0 0.0
  %5084 = vmatprep.subr.mxu0 0.0
  %5085 = vmatpush1.msra.mxu0 0.0
  %5086 = vmatprep.subr.mxu0 0.0
  %5087 = vmatpush1.msra.mxu0 0.0
  %5088 = vmatprep.subr.mxu0 0.0
  %5089 = vmatpush1.msra.mxu0 0.0
  %5090 = vmatprep.subr.mxu0 0.0
  %5091 = vmatpush1.msra.mxu0 0.0
  %5092 = vmatprep.subr.mxu0 0.0
  %5093 = vmatpush1.msra.mxu0 0.0
  %5094 = vmatprep.subr.mxu0 0.0
  %5095 = vmatpush1.msra.mxu0 0.0
  %5096 = vmatprep.subr.mxu0 0.0
  %5097 = vmatpush1.msra.mxu0 0.0
  %5098 = vmatprep.subr.mxu0 0.0
  %5099 = vmatpush1.msra.mxu0 0.0
  %5100 = vmatprep.subr.mxu0 0.0
  %5101 = vmatpush1.msra.mxu0 0.0
  %5102 = vmatprep.subr.mxu0 0.0
  %5103 = vmatpush1.msra.mxu0 0.0
  %5104 = vmatprep.subr.mxu0 0.0
  %5105 = vmatpush1.msra.mxu0 0.0
  %5106 = vmatprep.mubr.f32.mxu0 0.0
  %5107 = vmatmul.mubr.f32.gmra.mrb[0].mxu0 %v1149
  %v5108 = vpop.f32.mrb[0].mxu0
  %v5109 = vadd.f32 0.0, %v5108
  %v5110 = vpop.f32.mrb[0].mxu0
  %5111 = vmatprep.mubr.f32.mxu0 0.0
  %5112 = vmatmul.mubr.f32.gmra.mrb[0].mxu0 %v1152
  %v5113 = vpop.f32.mrb[0].mxu0
  %v5114 = vadd.f32 0.0, %v5113
  %v5115 = vpop.f32.mrb[0].mxu0
  %5116 = vmatprep.mubr.f32.mxu0 0.0
  %5117 = vmatmul.mubr.f32.gmra.mrb[0].mxu0 %v1155
  %v5118 = vpop.f32.mrb[0].mxu0
  %v5119 = vadd.f32 0.0, %v5118
  %v5120 = vpop.f32.mrb[0].mxu0
  %5121 = vmatprep.mubr.f32.mxu0 0.0
  %5122 = vmatmul.mubr.f32.gmra.mrb[0].mxu0 %v1158
  %v5123 = vpop.f32.mrb[0].mxu0
  %v5124 = vadd.f32 0.0, %v5123
  %v5125 = vpop.f32.mrb[0].mxu0
  %5126 = vdwg.mxu0
  %v5127 = vadd.f32 %v4910, %v5109
  %v5128 = vadd.f32 %v4915, %v5114
  %v5129 = vadd.f32 %v4920, %v5119
  %v5130 = vadd.f32 %v4925, %v5124
  %v5132 = vlaneseq
  %v5133 = vshrl.u32 %v5132, 7
  %v5134 = vsub.s32 0, %v5133
  %v5135 = vrot.slane %v4612, %v5134
  %v5137 = vadd.f32 %v5127, %v5135
  %v5138 = vadd.f32 %v5128, %v5135
  %v5139 = vadd.f32 %v5129, %v5135
  %v5140 = vadd.f32 %v5130, %v5135
  %s5141 = scalar_lea.vmem %s9, 4
  %v5142 = vld [vmem:[%s5141] sm:$0x1]
  %s5143 = scalar_lea.vmem %s10, 4
  %v5144 = vld [vmem:[%s5143] sm:$0x1]
  %v5145 = vadd.f32 %v5137, %v5138
  %v5146 = vadd.f32 %v5145, %v5139
  %v5147 = vadd.f32 %v5146, %v5140
  %v5148 = vrot.slane %v5147, 4
  %v5149 = vadd.f32 %v5147, %v5148
  %v5150 = vrot.slane %v5149, 2
  %v5151 = vadd.f32 %v5149, %v5150
  %v5152 = vrot.slane %v5151, 1
  %v5153 = vadd.f32 %v5151, %v5152
  %5154 = vmatprep.subr.mxu0 0.0
  %5155 = vmatpush1.msra.mxu0 %v45
  %5156 = vmatprep.subr.mxu0 0.0
  %5157 = vmatpush1.msra.mxu0 %v46
  %5158 = vmatprep.subr.mxu0 0.0
  %5159 = vmatpush1.msra.mxu0 %v47
  %5160 = vmatprep.subr.mxu0 0.0
  %5161 = vmatpush1.msra.mxu0 %v48
  %5162 = vmatprep.subr.mxu0 0.0
  %5163 = vmatpush1.msra.mxu0 %v49
  %5164 = vmatprep.subr.mxu0 0.0
  %5165 = vmatpush1.msra.mxu0 %v50
  %5166 = vmatprep.subr.mxu0 0.0
  %5167 = vmatpush1.msra.mxu0 %v51
  %5168 = vmatprep.subr.mxu0 0.0
  %5169 = vmatpush1.msra.mxu0 %v52
  %5170 = vmatprep.subr.mxu0 0.0
  %5171 = vmatpush1.msra.mxu0 %v53
  %5172 = vmatprep.subr.mxu0 0.0
  %5173 = vmatpush1.msra.mxu0 %v54
  %5174 = vmatprep.subr.mxu0 0.0
  %5175 = vmatpush1.msra.mxu0 %v55
  %5176 = vmatprep.subr.mxu0 0.0
  %5177 = vmatpush1.msra.mxu0 %v56
  %5178 = vmatprep.subr.mxu0 0.0
  %5179 = vmatpush1.msra.mxu0 %v57
  %5180 = vmatprep.subr.mxu0 0.0
  %5181 = vmatpush1.msra.mxu0 %v58
  %5182 = vmatprep.subr.mxu0 0.0
  %5183 = vmatpush1.msra.mxu0 %v59
  %5184 = vmatprep.subr.mxu0 0.0
  %5185 = vmatpush1.msra.mxu0 %v60
  %5186 = vmatprep.subr.mxu0 0.0
  %5187 = vmatpush1.msra.mxu0 0.0
  %5188 = vmatprep.subr.mxu0 0.0
  %5189 = vmatpush1.msra.mxu0 0.0
  %5190 = vmatprep.subr.mxu0 0.0
  %5191 = vmatpush1.msra.mxu0 0.0
  %5192 = vmatprep.subr.mxu0 0.0
  %5193 = vmatpush1.msra.mxu0 0.0
  %5194 = vmatprep.subr.mxu0 0.0
  %5195 = vmatpush1.msra.mxu0 0.0
  %5196 = vmatprep.subr.mxu0 0.0
  %5197 = vmatpush1.msra.mxu0 0.0
  %5198 = vmatprep.subr.mxu0 0.0
  %5199 = vmatpush1.msra.mxu0 0.0
  %5200 = vmatprep.subr.mxu0 0.0
  %5201 = vmatpush1.msra.mxu0 0.0
  %5202 = vmatprep.subr.mxu0 0.0
  %5203 = vmatpush1.msra.mxu0 0.0
  %5204 = vmatprep.subr.mxu0 0.0
  %5205 = vmatpush1.msra.mxu0 0.0
  %5206 = vmatprep.subr.mxu0 0.0
  %5207 = vmatpush1.msra.mxu0 0.0
  %5208 = vmatprep.subr.mxu0 0.0
  %5209 = vmatpush1.msra.mxu0 0.0
  %5210 = vmatprep.subr.mxu0 0.0
  %5211 = vmatpush1.msra.mxu0 0.0
  %5212 = vmatprep.subr.mxu0 0.0
  %5213 = vmatpush1.msra.mxu0 0.0
  %5214 = vmatprep.subr.mxu0 0.0
  %5215 = vmatpush1.msra.mxu0 0.0
  %5216 = vmatprep.subr.mxu0 0.0
  %5217 = vmatpush1.msra.mxu0 0.0
  %5218 = vmatprep.mubr.f32.mxu0 0.0
  %5219 = vmatmul.mubr.f32.gmra.mrb[0].mxu0 %v5153
  %v5220 = vpop.f32.mrb[0].mxu0
  %v5221 = vadd.f32 0.0, %v5220
  %v5222 = vpop.f32.mrb[0].mxu0
  %5223 = vdwg.mxu0
  %v5224 = vlaneseq
  %v5225 = vshrl.u32 %v5224, 7
  %v5226 = vsub.s32 0, %v5225
  %v5227 = vrot.slane %v5221, %v5226
  %v5228 = vsub.f32 %v5137, %v5227
  %v5229 = vsub.f32 %v5138, %v5227
  %v5230 = vsub.f32 %v5139, %v5227
  %v5231 = vsub.f32 %v5140, %v5227
  %v5232 = vmul.f32 %v5228, %v5228
  %v5233 = vmul.f32 %v5229, %v5229
  %v5234 = vmul.f32 %v5230, %v5230
  %v5235 = vmul.f32 %v5231, %v5231
  %v5236 = vadd.f32 %v5232, %v5233
  %v5237 = vadd.f32 %v5236, %v5234
  %v5238 = vadd.f32 %v5237, %v5235
  %v5239 = vrot.slane %v5238, 4
  %v5240 = vadd.f32 %v5238, %v5239
  %v5241 = vrot.slane %v5240, 2
  %v5242 = vadd.f32 %v5240, %v5241
  %v5243 = vrot.slane %v5242, 1
  %v5244 = vadd.f32 %v5242, %v5243
  %5245 = vmatprep.subr.mxu0 0.0
  %5246 = vmatpush1.msra.mxu0 %v45
  %5247 = vmatprep.subr.mxu0 0.0
  %5248 = vmatpush1.msra.mxu0 %v46
  %5249 = vmatprep.subr.mxu0 0.0
  %5250 = vmatpush1.msra.mxu0 %v47
  %5251 = vmatprep.subr.mxu0 0.0
  %5252 = vmatpush1.msra.mxu0 %v48
  %5253 = vmatprep.subr.mxu0 0.0
  %5254 = vmatpush1.msra.mxu0 %v49
  %5255 = vmatprep.subr.mxu0 0.0
  %5256 = vmatpush1.msra.mxu0 %v50
  %5257 = vmatprep.subr.mxu0 0.0
  %5258 = vmatpush1.msra.mxu0 %v51
  %5259 = vmatprep.subr.mxu0 0.0
  %5260 = vmatpush1.msra.mxu0 %v52
  %5261 = vmatprep.subr.mxu0 0.0
  %5262 = vmatpush1.msra.mxu0 %v53
  %5263 = vmatprep.subr.mxu0 0.0
  %5264 = vmatpush1.msra.mxu0 %v54
  %5265 = vmatprep.subr.mxu0 0.0
  %5266 = vmatpush1.msra.mxu0 %v55
  %5267 = vmatprep.subr.mxu0 0.0
  %5268 = vmatpush1.msra.mxu0 %v56
  %5269 = vmatprep.subr.mxu0 0.0
  %5270 = vmatpush1.msra.mxu0 %v57
  %5271 = vmatprep.subr.mxu0 0.0
  %5272 = vmatpush1.msra.mxu0 %v58
  %5273 = vmatprep.subr.mxu0 0.0
  %5274 = vmatpush1.msra.mxu0 %v59
  %5275 = vmatprep.subr.mxu0 0.0
  %5276 = vmatpush1.msra.mxu0 %v60
  %5277 = vmatprep.subr.mxu0 0.0
  %5278 = vmatpush1.msra.mxu0 0.0
  %5279 = vmatprep.subr.mxu0 0.0
  %5280 = vmatpush1.msra.mxu0 0.0
  %5281 = vmatprep.subr.mxu0 0.0
  %5282 = vmatpush1.msra.mxu0 0.0
  %5283 = vmatprep.subr.mxu0 0.0
  %5284 = vmatpush1.msra.mxu0 0.0
  %5285 = vmatprep.subr.mxu0 0.0
  %5286 = vmatpush1.msra.mxu0 0.0
  %5287 = vmatprep.subr.mxu0 0.0
  %5288 = vmatpush1.msra.mxu0 0.0
  %5289 = vmatprep.subr.mxu0 0.0
  %5290 = vmatpush1.msra.mxu0 0.0
  %5291 = vmatprep.subr.mxu0 0.0
  %5292 = vmatpush1.msra.mxu0 0.0
  %5293 = vmatprep.subr.mxu0 0.0
  %5294 = vmatpush1.msra.mxu0 0.0
  %5295 = vmatprep.subr.mxu0 0.0
  %5296 = vmatpush1.msra.mxu0 0.0
  %5297 = vmatprep.subr.mxu0 0.0
  %5298 = vmatpush1.msra.mxu0 0.0
  %5299 = vmatprep.subr.mxu0 0.0
  %5300 = vmatpush1.msra.mxu0 0.0
  %5301 = vmatprep.subr.mxu0 0.0
  %5302 = vmatpush1.msra.mxu0 0.0
  %5303 = vmatprep.subr.mxu0 0.0
  %5304 = vmatpush1.msra.mxu0 0.0
  %5305 = vmatprep.subr.mxu0 0.0
  %5306 = vmatpush1.msra.mxu0 0.0
  %5307 = vmatprep.subr.mxu0 0.0
  %5308 = vmatpush1.msra.mxu0 0.0
  %5309 = vmatprep.mubr.f32.mxu0 0.0
  %5310 = vmatmul.mubr.f32.gmra.mrb[0].mxu0 %v5244
  %v5311 = vpop.f32.mrb[0].mxu0
  %v5312 = vadd.f32 1e-05, %v5311
  %v5313 = vpop.f32.mrb[0].mxu0
  %5314 = vdwg.mxu0
  %v5315 = vrsqrt.pop %v5312
  %v5316 = vmul.f32 %v5315, %v5142
  %v5317 = vlaneseq
  %v5318 = vshrl.u32 %v5317, 7
  %v5319 = vsub.s32 0, %v5318
  %v5320 = vrot.slane %v5316, %v5319
  %v5321 = vmul.f32 %v5228, %v5320
  %v5322 = vmul.f32 %v5229, %v5320
  %v5323 = vmul.f32 %v5230, %v5320
  %v5324 = vmul.f32 %v5231, %v5320
  %v5326 = vlaneseq
  %v5327 = vshrl.u32 %v5326, 7
  %v5328 = vsub.s32 0, %v5327
  %v5329 = vrot.slane %v5144, %v5328
  %v5331 = vadd.f32 %v5321, %v5329
  %v5332 = vadd.f32 %v5322, %v5329
  %v5333 = vadd.f32 %v5323, %v5329
  %v5334 = vadd.f32 %v5324, %v5329
  %v5335 = vmax.f32 %v5331, 0.0
  %v5336 = vmax.f32 %v5332, 0.0
  %v5337 = vmax.f32 %v5333, 0.0
  %v5338 = vmax.f32 %v5334, 0.0
  %s5339 = scalar_lea.vmem %s8, 5
  %v5340 = vld [vmem:[%s5339] sm:$0x1]
  %v5341 = vpack.c.bf16 %v5336, %v5335
  %v5342 = vpack.c.bf16 %v5338, %v5337
  %s5343 = scalar_lea.vmem %s7, 960
  %v5344 = vld [vmem:[%s5343] sm:$0xf]
  %v5345 = vld [vmem:[%s5343 + $0x4] sm:$0xf]
  %v5346 = vld [vmem:[%s5343 + $0x8] sm:$0xf]
  %v5347 = vld [vmem:[%s5343 + $0xc] sm:$0xf]
  %v5348 = vld [vmem:[%s5343 + $0x10] sm:$0xf]
  %v5349 = vld [vmem:[%s5343 + $0x14] sm:$0xf]
  %v5350 = vld [vmem:[%s5343 + $0x18] sm:$0xf]
  %v5351 = vld [vmem:[%s5343 + $0x1c] sm:$0xf]
  %v5352 = vld [vmem:[%s5343 + $0x20] sm:$0xf]
  %v5353 = vld [vmem:[%s5343 + $0x24] sm:$0xf]
  %v5354 = vld [vmem:[%s5343 + $0x28] sm:$0xf]
  %v5355 = vld [vmem:[%s5343 + $0x2c] sm:$0xf]
  %v5356 = vld [vmem:[%s5343 + $0x30] sm:$0xf]
  %v5357 = vld [vmem:[%s5343 + $0x34] sm:$0xf]
  %v5358 = vld [vmem:[%s5343 + $0x38] sm:$0xf]
  %v5359 = vld [vmem:[%s5343 + $0x3c] sm:$0xf]
  %v5376 = vunpack.c.l.b16 %v5344
  %v5377 = vunpack.c.l.b16 %v5345
  %v5378 = vunpack.c.l.b16 %v5346
  %v5379 = vunpack.c.l.b16 %v5347
  %v5380 = vunpack.c.l.b16 %v5348
  %v5381 = vunpack.c.l.b16 %v5349
  %v5382 = vunpack.c.l.b16 %v5350
  %v5383 = vunpack.c.l.b16 %v5351
  %v5384 = vunpack.c.l.b16 %v5352
  %v5385 = vunpack.c.l.b16 %v5353
  %v5386 = vunpack.c.l.b16 %v5354
  %v5387 = vunpack.c.l.b16 %v5355
  %v5388 = vunpack.c.l.b16 %v5356
  %v5389 = vunpack.c.l.b16 %v5357
  %v5390 = vunpack.c.l.b16 %v5358
  %v5391 = vunpack.c.l.b16 %v5359
  %v5392 = vpack.c.b16 %v5377, %v5376
  %v5393 = vpack.c.b16 %v5379, %v5378
  %v5394 = vpack.c.b16 %v5381, %v5380
  %v5395 = vpack.c.b16 %v5383, %v5382
  %v5396 = vpack.c.b16 %v5385, %v5384
  %v5397 = vpack.c.b16 %v5387, %v5386
  %v5398 = vpack.c.b16 %v5389, %v5388
  %v5399 = vpack.c.b16 %v5391, %v5390
  %5408 = vmatprep.subr.bf16.mxu0 0
  %5409 = vmatpush1.bf16.msra.mxu0 %v5392
  %5410 = vmatprep.subr.bf16.mxu0 0
  %5411 = vmatpush1.bf16.msra.mxu0 %v5393
  %5412 = vmatprep.subr.bf16.mxu0 0
  %5413 = vmatpush1.bf16.msra.mxu0 %v5394
  %5414 = vmatprep.subr.bf16.mxu0 0
  %5415 = vmatpush1.bf16.msra.mxu0 %v5395
  %5416 = vmatprep.subr.bf16.mxu0 0
  %5417 = vmatpush1.bf16.msra.mxu0 %v5396
  %5418 = vmatprep.subr.bf16.mxu0 0
  %5419 = vmatpush1.bf16.msra.mxu0 %v5397
  %5420 = vmatprep.subr.bf16.mxu0 0
  %5421 = vmatpush1.bf16.msra.mxu0 %v5398
  %5422 = vmatprep.subr.bf16.mxu0 0
  %5423 = vmatpush1.bf16.msra.mxu0 %v5399
  %5424 = vmatprep.subr.bf16.mxu0 0
  %5425 = vmatpush1.bf16.msra.mxu0 0
  %5426 = vmatprep.subr.bf16.mxu0 0
  %5427 = vmatpush1.bf16.msra.mxu0 0
  %5428 = vmatprep.subr.bf16.mxu0 0
  %5429 = vmatpush1.bf16.msra.mxu0 0
  %5430 = vmatprep.subr.bf16.mxu0 0
  %5431 = vmatpush1.bf16.msra.mxu0 0
  %5432 = vmatprep.subr.bf16.mxu0 0
  %5433 = vmatpush1.bf16.msra.mxu0 0
  %5434 = vmatprep.subr.bf16.mxu0 0
  %5435 = vmatpush1.bf16.msra.mxu0 0
  %5436 = vmatprep.subr.bf16.mxu0 0
  %5437 = vmatpush1.bf16.msra.mxu0 0
  %5438 = vmatprep.subr.bf16.mxu0 0
  %5439 = vmatpush1.bf16.msra.mxu0 0
  %5440 = vmatprep.mubr.bf16.mxu0 0
  %5441 = vmatmul.mubr.bf16.gmra.mrb[0].mxu0 %v5341
  %v5442 = vpop.f32.mrb[0].mxu0
  %v5443 = vadd.f32 0.0, %v5442
  %v5444 = vpop.f32.mrb[0].mxu0
  %v5445 = vpop.f32.mrb[0].mxu0
  %v5446 = vadd.f32 0.0, %v5445
  %v5447 = vpop.f32.mrb[0].mxu0
  %5448 = vmatprep.mubr.bf16.mxu0 0
  %5449 = vmatmul.mubr.bf16.gmra.mrb[0].mxu0 %v5342
  %v5450 = vpop.f32.mrb[0].mxu0
  %v5451 = vadd.f32 0.0, %v5450
  %v5452 = vpop.f32.mrb[0].mxu0
  %v5453 = vpop.f32.mrb[0].mxu0
  %v5454 = vadd.f32 0.0, %v5453
  %v5455 = vpop.f32.mrb[0].mxu0
  %5456 = vdwg.mxu0
  %s5457 = scalar_lea.vmem %s7, 1024
  %v5458 = vld [vmem:[%s5457] sm:$0xf]
  %v5459 = vld [vmem:[%s5457 + $0x4] sm:$0xf]
  %v5460 = vld [vmem:[%s5457 + $0x8] sm:$0xf]
  %v5461 = vld [vmem:[%s5457 + $0xc] sm:$0xf]
  %v5462 = vld [vmem:[%s5457 + $0x10] sm:$0xf]
  %v5463 = vld [vmem:[%s5457 + $0x14] sm:$0xf]
  %v5464 = vld [vmem:[%s5457 + $0x18] sm:$0xf]
  %v5465 = vld [vmem:[%s5457 + $0x1c] sm:$0xf]
  %v5466 = vld [vmem:[%s5457 + $0x20] sm:$0xf]
  %v5467 = vld [vmem:[%s5457 + $0x24] sm:$0xf]
  %v5468 = vld [vmem:[%s5457 + $0x28] sm:$0xf]
  %v5469 = vld [vmem:[%s5457 + $0x2c] sm:$0xf]
  %v5470 = vld [vmem:[%s5457 + $0x30] sm:$0xf]
  %v5471 = vld [vmem:[%s5457 + $0x34] sm:$0xf]
  %v5472 = vld [vmem:[%s5457 + $0x38] sm:$0xf]
  %v5473 = vld [vmem:[%s5457 + $0x3c] sm:$0xf]
  %v5490 = vunpack.c.l.b16 %v5458
  %v5491 = vunpack.c.l.b16 %v5459
  %v5492 = vunpack.c.l.b16 %v5460
  %v5493 = vunpack.c.l.b16 %v5461
  %v5494 = vunpack.c.l.b16 %v5462
  %v5495 = vunpack.c.l.b16 %v5463
  %v5496 = vunpack.c.l.b16 %v5464
  %v5497 = vunpack.c.l.b16 %v5465
  %v5498 = vunpack.c.l.b16 %v5466
  %v5499 = vunpack.c.l.b16 %v5467
  %v5500 = vunpack.c.l.b16 %v5468
  %v5501 = vunpack.c.l.b16 %v5469
  %v5502 = vunpack.c.l.b16 %v5470
  %v5503 = vunpack.c.l.b16 %v5471
  %v5504 = vunpack.c.l.b16 %v5472
  %v5505 = vunpack.c.l.b16 %v5473
  %v5506 = vpack.c.b16 %v5491, %v5490
  %v5507 = vpack.c.b16 %v5493, %v5492
  %v5508 = vpack.c.b16 %v5495, %v5494
  %v5509 = vpack.c.b16 %v5497, %v5496
  %v5510 = vpack.c.b16 %v5499, %v5498
  %v5511 = vpack.c.b16 %v5501, %v5500
  %v5512 = vpack.c.b16 %v5503, %v5502
  %v5513 = vpack.c.b16 %v5505, %v5504
  %5522 = vmatprep.subr.bf16.mxu0 0
  %5523 = vmatpush1.bf16.msra.mxu0 %v5506
  %5524 = vmatprep.subr.bf16.mxu0 0
  %5525 = vmatpush1.bf16.msra.mxu0 %v5507
  %5526 = vmatprep.subr.bf16.mxu0 0
  %5527 = vmatpush1.bf16.msra.mxu0 %v5508
  %5528 = vmatprep.subr.bf16.mxu0 0
  %5529 = vmatpush1.bf16.msra.mxu0 %v5509
  %5530 = vmatprep.subr.bf16.mxu0 0
  %5531 = vmatpush1.bf16.msra.mxu0 %v5510
  %5532 = vmatprep.subr.bf16.mxu0 0
  %5533 = vmatpush1.bf16.msra.mxu0 %v5511
  %5534 = vmatprep.subr.bf16.mxu0 0
  %5535 = vmatpush1.bf16.msra.mxu0 %v5512
  %5536 = vmatprep.subr.bf16.mxu0 0
  %5537 = vmatpush1.bf16.msra.mxu0 %v5513
  %5538 = vmatprep.subr.bf16.mxu0 0
  %5539 = vmatpush1.bf16.msra.mxu0 0
  %5540 = vmatprep.subr.bf16.mxu0 0
  %5541 = vmatpush1.bf16.msra.mxu0 0
  %5542 = vmatprep.subr.bf16.mxu0 0
  %5543 = vmatpush1.bf16.msra.mxu0 0
  %5544 = vmatprep.subr.bf16.mxu0 0
  %5545 = vmatpush1.bf16.msra.mxu0 0
  %5546 = vmatprep.subr.bf16.mxu0 0
  %5547 = vmatpush1.bf16.msra.mxu0 0
  %5548 = vmatprep.subr.bf16.mxu0 0
  %5549 = vmatpush1.bf16.msra.mxu0 0
  %5550 = vmatprep.subr.bf16.mxu0 0
  %5551 = vmatpush1.bf16.msra.mxu0 0
  %5552 = vmatprep.subr.bf16.mxu0 0
  %5553 = vmatpush1.bf16.msra.mxu0 0
  %5554 = vmatprep.mubr.bf16.mxu0 0
  %5555 = vmatmul.mubr.bf16.gmra.mrb[0].mxu0 %v5341
  %v5556 = vpop.f32.mrb[0].mxu0
  %v5557 = vadd.f32 0.0, %v5556
  %v5558 = vpop.f32.mrb[0].mxu0
  %v5559 = vpop.f32.mrb[0].mxu0
  %v5560 = vadd.f32 0.0, %v5559
  %v5561 = vpop.f32.mrb[0].mxu0
  %5562 = vmatprep.mubr.bf16.mxu0 0
  %5563 = vmatmul.mubr.bf16.gmra.mrb[0].mxu0 %v5342
  %v5564 = vpop.f32.mrb[0].mxu0
  %v5565 = vadd.f32 0.0, %v5564
  %v5566 = vpop.f32.mrb[0].mxu0
  %v5567 = vpop.f32.mrb[0].mxu0
  %v5568 = vadd.f32 0.0, %v5567
  %v5569 = vpop.f32.mrb[0].mxu0
  %5570 = vdwg.mxu0
  %5571 = vmatprep.subr.mxu0 0.0
  %5572 = vmatpush1.msra.mxu0 %v5443
  %5573 = vmatprep.subr.mxu0 0.0
  %5574 = vmatpush1.msra.mxu0 %v5446
  %5575 = vmatprep.subr.mxu0 0.0
  %5576 = vmatpush1.msra.mxu0 %v5451
  %5577 = vmatprep.subr.mxu0 0.0
  %5578 = vmatpush1.msra.mxu0 %v5454
  %5579 = vmatprep.subr.mxu0 0.0
  %5580 = vmatpush1.msra.mxu0 0.0
  %5581 = vmatprep.subr.mxu0 0.0
  %5582 = vmatpush1.msra.mxu0 0.0
  %5583 = vmatprep.subr.mxu0 0.0
  %5584 = vmatpush1.msra.mxu0 0.0
  %5585 = vmatprep.subr.mxu0 0.0
  %5586 = vmatpush1.msra.mxu0 0.0
  %5587 = vmatprep.subr.mxu0 0.0
  %5588 = vmatpush1.msra.mxu0 0.0
  %5589 = vmatprep.subr.mxu0 0.0
  %5590 = vmatpush1.msra.mxu0 0.0
  %5591 = vmatprep.subr.mxu0 0.0
  %5592 = vmatpush1.msra.mxu0 0.0
  %5593 = vmatprep.subr.mxu0 0.0
  %5594 = vmatpush1.msra.mxu0 0.0
  %5595 = vmatprep.subr.mxu0 0.0
  %5596 = vmatpush1.msra.mxu0 0.0
  %5597 = vmatprep.subr.mxu0 0.0
  %5598 = vmatpush1.msra.mxu0 0.0
  %5599 = vmatprep.subr.mxu0 0.0
  %5600 = vmatpush1.msra.mxu0 0.0
  %5601 = vmatprep.subr.mxu0 0.0
  %5602 = vmatpush1.msra.mxu0 0.0
  %5603 = vmatprep.subr.mxu0 0.0
  %5604 = vmatpush1.msra.mxu0 0.0
  %5605 = vmatprep.subr.mxu0 0.0
  %5606 = vmatpush1.msra.mxu0 0.0
  %5607 = vmatprep.subr.mxu0 0.0
  %5608 = vmatpush1.msra.mxu0 0.0
  %5609 = vmatprep.subr.mxu0 0.0
  %5610 = vmatpush1.msra.mxu0 0.0
  %5611 = vmatprep.subr.mxu0 0.0
  %5612 = vmatpush1.msra.mxu0 0.0
  %5613 = vmatprep.subr.mxu0 0.0
  %5614 = vmatpush1.msra.mxu0 0.0
  %5615 = vmatprep.subr.mxu0 0.0
  %5616 = vmatpush1.msra.mxu0 0.0
  %5617 = vmatprep.subr.mxu0 0.0
  %5618 = vmatpush1.msra.mxu0 0.0
  %5619 = vmatprep.subr.mxu0 0.0
  %5620 = vmatpush1.msra.mxu0 0.0
  %5621 = vmatprep.subr.mxu0 0.0
  %5622 = vmatpush1.msra.mxu0 0.0
  %5623 = vmatprep.subr.mxu0 0.0
  %5624 = vmatpush1.msra.mxu0 0.0
  %5625 = vmatprep.subr.mxu0 0.0
  %5626 = vmatpush1.msra.mxu0 0.0
  %5627 = vmatprep.subr.mxu0 0.0
  %5628 = vmatpush1.msra.mxu0 0.0
  %5629 = vmatprep.subr.mxu0 0.0
  %5630 = vmatpush1.msra.mxu0 0.0
  %5631 = vmatprep.subr.mxu0 0.0
  %5632 = vmatpush1.msra.mxu0 0.0
  %5633 = vmatprep.subr.mxu0 0.0
  %5634 = vmatpush1.msra.mxu0 0.0
  %5635 = vmatprep.mubr.f32.mxu0 0.0
  %5636 = vmatmul.mubr.f32.gmra.mrb[0].mxu0 %v811
  %v5637 = vpop.f32.mrb[0].mxu0
  %v5638 = vadd.f32 %v5557, %v5637
  %v5639 = vpop.f32.mrb[0].mxu0
  %5640 = vmatprep.mubr.f32.mxu0 0.0
  %5641 = vmatmul.mubr.f32.gmra.mrb[0].mxu0 %v814
  %v5642 = vpop.f32.mrb[0].mxu0
  %v5643 = vadd.f32 %v5560, %v5642
  %v5644 = vpop.f32.mrb[0].mxu0
  %5645 = vmatprep.mubr.f32.mxu0 0.0
  %5646 = vmatmul.mubr.f32.gmra.mrb[0].mxu0 %v817
  %v5647 = vpop.f32.mrb[0].mxu0
  %v5648 = vadd.f32 %v5565, %v5647
  %v5649 = vpop.f32.mrb[0].mxu0
  %5650 = vmatprep.mubr.f32.mxu0 0.0
  %5651 = vmatmul.mubr.f32.gmra.mrb[0].mxu0 %v820
  %v5652 = vpop.f32.mrb[0].mxu0
  %v5653 = vadd.f32 %v5568, %v5652
  %v5654 = vpop.f32.mrb[0].mxu0
  %5655 = vdwg.mxu0
  %s5656 = scalar_lea.vmem %s7, 1088
  %v5657 = vld [vmem:[%s5656] sm:$0xf]
  %v5658 = vld [vmem:[%s5656 + $0x4] sm:$0xf]
  %v5659 = vld [vmem:[%s5656 + $0x8] sm:$0xf]
  %v5660 = vld [vmem:[%s5656 + $0xc] sm:$0xf]
  %v5661 = vld [vmem:[%s5656 + $0x10] sm:$0xf]
  %v5662 = vld [vmem:[%s5656 + $0x14] sm:$0xf]
  %v5663 = vld [vmem:[%s5656 + $0x18] sm:$0xf]
  %v5664 = vld [vmem:[%s5656 + $0x1c] sm:$0xf]
  %v5665 = vld [vmem:[%s5656 + $0x20] sm:$0xf]
  %v5666 = vld [vmem:[%s5656 + $0x24] sm:$0xf]
  %v5667 = vld [vmem:[%s5656 + $0x28] sm:$0xf]
  %v5668 = vld [vmem:[%s5656 + $0x2c] sm:$0xf]
  %v5669 = vld [vmem:[%s5656 + $0x30] sm:$0xf]
  %v5670 = vld [vmem:[%s5656 + $0x34] sm:$0xf]
  %v5671 = vld [vmem:[%s5656 + $0x38] sm:$0xf]
  %v5672 = vld [vmem:[%s5656 + $0x3c] sm:$0xf]
  %v5689 = vunpack.c.l.b16 %v5657
  %v5690 = vunpack.c.l.b16 %v5658
  %v5691 = vunpack.c.l.b16 %v5659
  %v5692 = vunpack.c.l.b16 %v5660
  %v5693 = vunpack.c.l.b16 %v5661
  %v5694 = vunpack.c.l.b16 %v5662
  %v5695 = vunpack.c.l.b16 %v5663
  %v5696 = vunpack.c.l.b16 %v5664
  %v5697 = vunpack.c.l.b16 %v5665
  %v5698 = vunpack.c.l.b16 %v5666
  %v5699 = vunpack.c.l.b16 %v5667
  %v5700 = vunpack.c.l.b16 %v5668
  %v5701 = vunpack.c.l.b16 %v5669
  %v5702 = vunpack.c.l.b16 %v5670
  %v5703 = vunpack.c.l.b16 %v5671
  %v5704 = vunpack.c.l.b16 %v5672
  %v5705 = vpack.c.b16 %v5690, %v5689
  %v5706 = vpack.c.b16 %v5692, %v5691
  %v5707 = vpack.c.b16 %v5694, %v5693
  %v5708 = vpack.c.b16 %v5696, %v5695
  %v5709 = vpack.c.b16 %v5698, %v5697
  %v5710 = vpack.c.b16 %v5700, %v5699
  %v5711 = vpack.c.b16 %v5702, %v5701
  %v5712 = vpack.c.b16 %v5704, %v5703
  %5721 = vmatprep.subr.bf16.mxu0 0
  %5722 = vmatpush1.bf16.msra.mxu0 %v5705
  %5723 = vmatprep.subr.bf16.mxu0 0
  %5724 = vmatpush1.bf16.msra.mxu0 %v5706
  %5725 = vmatprep.subr.bf16.mxu0 0
  %5726 = vmatpush1.bf16.msra.mxu0 %v5707
  %5727 = vmatprep.subr.bf16.mxu0 0
  %5728 = vmatpush1.bf16.msra.mxu0 %v5708
  %5729 = vmatprep.subr.bf16.mxu0 0
  %5730 = vmatpush1.bf16.msra.mxu0 %v5709
  %5731 = vmatprep.subr.bf16.mxu0 0
  %5732 = vmatpush1.bf16.msra.mxu0 %v5710
  %5733 = vmatprep.subr.bf16.mxu0 0
  %5734 = vmatpush1.bf16.msra.mxu0 %v5711
  %5735 = vmatprep.subr.bf16.mxu0 0
  %5736 = vmatpush1.bf16.msra.mxu0 %v5712
  %5737 = vmatprep.subr.bf16.mxu0 0
  %5738 = vmatpush1.bf16.msra.mxu0 0
  %5739 = vmatprep.subr.bf16.mxu0 0
  %5740 = vmatpush1.bf16.msra.mxu0 0
  %5741 = vmatprep.subr.bf16.mxu0 0
  %5742 = vmatpush1.bf16.msra.mxu0 0
  %5743 = vmatprep.subr.bf16.mxu0 0
  %5744 = vmatpush1.bf16.msra.mxu0 0
  %5745 = vmatprep.subr.bf16.mxu0 0
  %5746 = vmatpush1.bf16.msra.mxu0 0
  %5747 = vmatprep.subr.bf16.mxu0 0
  %5748 = vmatpush1.bf16.msra.mxu0 0
  %5749 = vmatprep.subr.bf16.mxu0 0
  %5750 = vmatpush1.bf16.msra.mxu0 0
  %5751 = vmatprep.subr.bf16.mxu0 0
  %5752 = vmatpush1.bf16.msra.mxu0 0
  %5753 = vmatprep.mubr.bf16.mxu0 0
  %5754 = vmatmul.mubr.bf16.gmra.mrb[0].mxu0 %v5341
  %v5755 = vpop.f32.mrb[0].mxu0
  %v5756 = vadd.f32 0.0, %v5755
  %v5757 = vpop.f32.mrb[0].mxu0
  %v5758 = vpop.f32.mrb[0].mxu0
  %v5759 = vadd.f32 0.0, %v5758
  %v5760 = vpop.f32.mrb[0].mxu0
  %5761 = vmatprep.mubr.bf16.mxu0 0
  %5762 = vmatmul.mubr.bf16.gmra.mrb[0].mxu0 %v5342
  %v5763 = vpop.f32.mrb[0].mxu0
  %v5764 = vadd.f32 0.0, %v5763
  %v5765 = vpop.f32.mrb[0].mxu0
  %v5766 = vpop.f32.mrb[0].mxu0
  %v5767 = vadd.f32 0.0, %v5766
  %v5768 = vpop.f32.mrb[0].mxu0
  %5769 = vdwg.mxu0
  %5770 = vmatprep.subr.mxu0 0.0
  %5771 = vmatpush1.msra.mxu0 %v5756
  %5772 = vmatprep.subr.mxu0 0.0
  %5773 = vmatpush1.msra.mxu0 %v5759
  %5774 = vmatprep.subr.mxu0 0.0
  %5775 = vmatpush1.msra.mxu0 %v5764
  %5776 = vmatprep.subr.mxu0 0.0
  %5777 = vmatpush1.msra.mxu0 %v5767
  %5778 = vmatprep.subr.mxu0 0.0
  %5779 = vmatpush1.msra.mxu0 0.0
  %5780 = vmatprep.subr.mxu0 0.0
  %5781 = vmatpush1.msra.mxu0 0.0
  %5782 = vmatprep.subr.mxu0 0.0
  %5783 = vmatpush1.msra.mxu0 0.0
  %5784 = vmatprep.subr.mxu0 0.0
  %5785 = vmatpush1.msra.mxu0 0.0
  %5786 = vmatprep.subr.mxu0 0.0
  %5787 = vmatpush1.msra.mxu0 0.0
  %5788 = vmatprep.subr.mxu0 0.0
  %5789 = vmatpush1.msra.mxu0 0.0
  %5790 = vmatprep.subr.mxu0 0.0
  %5791 = vmatpush1.msra.mxu0 0.0
  %5792 = vmatprep.subr.mxu0 0.0
  %5793 = vmatpush1.msra.mxu0 0.0
  %5794 = vmatprep.subr.mxu0 0.0
  %5795 = vmatpush1.msra.mxu0 0.0
  %5796 = vmatprep.subr.mxu0 0.0
  %5797 = vmatpush1.msra.mxu0 0.0
  %5798 = vmatprep.subr.mxu0 0.0
  %5799 = vmatpush1.msra.mxu0 0.0
  %5800 = vmatprep.subr.mxu0 0.0
  %5801 = vmatpush1.msra.mxu0 0.0
  %5802 = vmatprep.subr.mxu0 0.0
  %5803 = vmatpush1.msra.mxu0 0.0
  %5804 = vmatprep.subr.mxu0 0.0
  %5805 = vmatpush1.msra.mxu0 0.0
  %5806 = vmatprep.subr.mxu0 0.0
  %5807 = vmatpush1.msra.mxu0 0.0
  %5808 = vmatprep.subr.mxu0 0.0
  %5809 = vmatpush1.msra.mxu0 0.0
  %5810 = vmatprep.subr.mxu0 0.0
  %5811 = vmatpush1.msra.mxu0 0.0
  %5812 = vmatprep.subr.mxu0 0.0
  %5813 = vmatpush1.msra.mxu0 0.0
  %5814 = vmatprep.subr.mxu0 0.0
  %5815 = vmatpush1.msra.mxu0 0.0
  %5816 = vmatprep.subr.mxu0 0.0
  %5817 = vmatpush1.msra.mxu0 0.0
  %5818 = vmatprep.subr.mxu0 0.0
  %5819 = vmatpush1.msra.mxu0 0.0
  %5820 = vmatprep.subr.mxu0 0.0
  %5821 = vmatpush1.msra.mxu0 0.0
  %5822 = vmatprep.subr.mxu0 0.0
  %5823 = vmatpush1.msra.mxu0 0.0
  %5824 = vmatprep.subr.mxu0 0.0
  %5825 = vmatpush1.msra.mxu0 0.0
  %5826 = vmatprep.subr.mxu0 0.0
  %5827 = vmatpush1.msra.mxu0 0.0
  %5828 = vmatprep.subr.mxu0 0.0
  %5829 = vmatpush1.msra.mxu0 0.0
  %5830 = vmatprep.subr.mxu0 0.0
  %5831 = vmatpush1.msra.mxu0 0.0
  %5832 = vmatprep.subr.mxu0 0.0
  %5833 = vmatpush1.msra.mxu0 0.0
  %5834 = vmatprep.mubr.f32.mxu0 0.0
  %5835 = vmatmul.mubr.f32.gmra.mrb[0].mxu0 %v1149
  %v5836 = vpop.f32.mrb[0].mxu0
  %v5837 = vadd.f32 0.0, %v5836
  %v5838 = vpop.f32.mrb[0].mxu0
  %5839 = vmatprep.mubr.f32.mxu0 0.0
  %5840 = vmatmul.mubr.f32.gmra.mrb[0].mxu0 %v1152
  %v5841 = vpop.f32.mrb[0].mxu0
  %v5842 = vadd.f32 0.0, %v5841
  %v5843 = vpop.f32.mrb[0].mxu0
  %5844 = vmatprep.mubr.f32.mxu0 0.0
  %5845 = vmatmul.mubr.f32.gmra.mrb[0].mxu0 %v1155
  %v5846 = vpop.f32.mrb[0].mxu0
  %v5847 = vadd.f32 0.0, %v5846
  %v5848 = vpop.f32.mrb[0].mxu0
  %5849 = vmatprep.mubr.f32.mxu0 0.0
  %5850 = vmatmul.mubr.f32.gmra.mrb[0].mxu0 %v1158
  %v5851 = vpop.f32.mrb[0].mxu0
  %v5852 = vadd.f32 0.0, %v5851
  %v5853 = vpop.f32.mrb[0].mxu0
  %5854 = vdwg.mxu0
  %v5855 = vadd.f32 %v5638, %v5837
  %v5856 = vadd.f32 %v5643, %v5842
  %v5857 = vadd.f32 %v5648, %v5847
  %v5858 = vadd.f32 %v5653, %v5852
  %v5860 = vlaneseq
  %v5861 = vshrl.u32 %v5860, 7
  %v5862 = vsub.s32 0, %v5861
  %v5863 = vrot.slane %v5340, %v5862
  %v5865 = vadd.f32 %v5855, %v5863
  %v5866 = vadd.f32 %v5856, %v5863
  %v5867 = vadd.f32 %v5857, %v5863
  %v5868 = vadd.f32 %v5858, %v5863
  %s5869 = scalar_lea.vmem %s9, 5
  %v5870 = vld [vmem:[%s5869] sm:$0x1]
  %s5871 = scalar_lea.vmem %s10, 5
  %v5872 = vld [vmem:[%s5871] sm:$0x1]
  %v5873 = vadd.f32 %v5865, %v5866
  %v5874 = vadd.f32 %v5873, %v5867
  %v5875 = vadd.f32 %v5874, %v5868
  %v5876 = vrot.slane %v5875, 4
  %v5877 = vadd.f32 %v5875, %v5876
  %v5878 = vrot.slane %v5877, 2
  %v5879 = vadd.f32 %v5877, %v5878
  %v5880 = vrot.slane %v5879, 1
  %v5881 = vadd.f32 %v5879, %v5880
  %5882 = vmatprep.subr.mxu0 0.0
  %5883 = vmatpush1.msra.mxu0 %v45
  %5884 = vmatprep.subr.mxu0 0.0
  %5885 = vmatpush1.msra.mxu0 %v46
  %5886 = vmatprep.subr.mxu0 0.0
  %5887 = vmatpush1.msra.mxu0 %v47
  %5888 = vmatprep.subr.mxu0 0.0
  %5889 = vmatpush1.msra.mxu0 %v48
  %5890 = vmatprep.subr.mxu0 0.0
  %5891 = vmatpush1.msra.mxu0 %v49
  %5892 = vmatprep.subr.mxu0 0.0
  %5893 = vmatpush1.msra.mxu0 %v50
  %5894 = vmatprep.subr.mxu0 0.0
  %5895 = vmatpush1.msra.mxu0 %v51
  %5896 = vmatprep.subr.mxu0 0.0
  %5897 = vmatpush1.msra.mxu0 %v52
  %5898 = vmatprep.subr.mxu0 0.0
  %5899 = vmatpush1.msra.mxu0 %v53
  %5900 = vmatprep.subr.mxu0 0.0
  %5901 = vmatpush1.msra.mxu0 %v54
  %5902 = vmatprep.subr.mxu0 0.0
  %5903 = vmatpush1.msra.mxu0 %v55
  %5904 = vmatprep.subr.mxu0 0.0
  %5905 = vmatpush1.msra.mxu0 %v56
  %5906 = vmatprep.subr.mxu0 0.0
  %5907 = vmatpush1.msra.mxu0 %v57
  %5908 = vmatprep.subr.mxu0 0.0
  %5909 = vmatpush1.msra.mxu0 %v58
  %5910 = vmatprep.subr.mxu0 0.0
  %5911 = vmatpush1.msra.mxu0 %v59
  %5912 = vmatprep.subr.mxu0 0.0
  %5913 = vmatpush1.msra.mxu0 %v60
  %5914 = vmatprep.subr.mxu0 0.0
  %5915 = vmatpush1.msra.mxu0 0.0
  %5916 = vmatprep.subr.mxu0 0.0
  %5917 = vmatpush1.msra.mxu0 0.0
  %5918 = vmatprep.subr.mxu0 0.0
  %5919 = vmatpush1.msra.mxu0 0.0
  %5920 = vmatprep.subr.mxu0 0.0
  %5921 = vmatpush1.msra.mxu0 0.0
  %5922 = vmatprep.subr.mxu0 0.0
  %5923 = vmatpush1.msra.mxu0 0.0
  %5924 = vmatprep.subr.mxu0 0.0
  %5925 = vmatpush1.msra.mxu0 0.0
  %5926 = vmatprep.subr.mxu0 0.0
  %5927 = vmatpush1.msra.mxu0 0.0
  %5928 = vmatprep.subr.mxu0 0.0
  %5929 = vmatpush1.msra.mxu0 0.0
  %5930 = vmatprep.subr.mxu0 0.0
  %5931 = vmatpush1.msra.mxu0 0.0
  %5932 = vmatprep.subr.mxu0 0.0
  %5933 = vmatpush1.msra.mxu0 0.0
  %5934 = vmatprep.subr.mxu0 0.0
  %5935 = vmatpush1.msra.mxu0 0.0
  %5936 = vmatprep.subr.mxu0 0.0
  %5937 = vmatpush1.msra.mxu0 0.0
  %5938 = vmatprep.subr.mxu0 0.0
  %5939 = vmatpush1.msra.mxu0 0.0
  %5940 = vmatprep.subr.mxu0 0.0
  %5941 = vmatpush1.msra.mxu0 0.0
  %5942 = vmatprep.subr.mxu0 0.0
  %5943 = vmatpush1.msra.mxu0 0.0
  %5944 = vmatprep.subr.mxu0 0.0
  %5945 = vmatpush1.msra.mxu0 0.0
  %5946 = vmatprep.mubr.f32.mxu0 0.0
  %5947 = vmatmul.mubr.f32.gmra.mrb[0].mxu0 %v5881
  %v5948 = vpop.f32.mrb[0].mxu0
  %v5949 = vadd.f32 0.0, %v5948
  %v5950 = vpop.f32.mrb[0].mxu0
  %5951 = vdwg.mxu0
  %v5952 = vlaneseq
  %v5953 = vshrl.u32 %v5952, 7
  %v5954 = vsub.s32 0, %v5953
  %v5955 = vrot.slane %v5949, %v5954
  %v5956 = vsub.f32 %v5865, %v5955
  %v5957 = vsub.f32 %v5866, %v5955
  %v5958 = vsub.f32 %v5867, %v5955
  %v5959 = vsub.f32 %v5868, %v5955
  %v5960 = vmul.f32 %v5956, %v5956
  %v5961 = vmul.f32 %v5957, %v5957
  %v5962 = vmul.f32 %v5958, %v5958
  %v5963 = vmul.f32 %v5959, %v5959
  %v5964 = vadd.f32 %v5960, %v5961
  %v5965 = vadd.f32 %v5964, %v5962
  %v5966 = vadd.f32 %v5965, %v5963
  %v5967 = vrot.slane %v5966, 4
  %v5968 = vadd.f32 %v5966, %v5967
  %v5969 = vrot.slane %v5968, 2
  %v5970 = vadd.f32 %v5968, %v5969
  %v5971 = vrot.slane %v5970, 1
  %v5972 = vadd.f32 %v5970, %v5971
  %5973 = vmatprep.subr.mxu0 0.0
  %5974 = vmatpush1.msra.mxu0 %v45
  %5975 = vmatprep.subr.mxu0 0.0
  %5976 = vmatpush1.msra.mxu0 %v46
  %5977 = vmatprep.subr.mxu0 0.0
  %5978 = vmatpush1.msra.mxu0 %v47
  %5979 = vmatprep.subr.mxu0 0.0
  %5980 = vmatpush1.msra.mxu0 %v48
  %5981 = vmatprep.subr.mxu0 0.0
  %5982 = vmatpush1.msra.mxu0 %v49
  %5983 = vmatprep.subr.mxu0 0.0
  %5984 = vmatpush1.msra.mxu0 %v50
  %5985 = vmatprep.subr.mxu0 0.0
  %5986 = vmatpush1.msra.mxu0 %v51
  %5987 = vmatprep.subr.mxu0 0.0
  %5988 = vmatpush1.msra.mxu0 %v52
  %5989 = vmatprep.subr.mxu0 0.0
  %5990 = vmatpush1.msra.mxu0 %v53
  %5991 = vmatprep.subr.mxu0 0.0
  %5992 = vmatpush1.msra.mxu0 %v54
  %5993 = vmatprep.subr.mxu0 0.0
  %5994 = vmatpush1.msra.mxu0 %v55
  %5995 = vmatprep.subr.mxu0 0.0
  %5996 = vmatpush1.msra.mxu0 %v56
  %5997 = vmatprep.subr.mxu0 0.0
  %5998 = vmatpush1.msra.mxu0 %v57
  %5999 = vmatprep.subr.mxu0 0.0
  %6000 = vmatpush1.msra.mxu0 %v58
  %6001 = vmatprep.subr.mxu0 0.0
  %6002 = vmatpush1.msra.mxu0 %v59
  %6003 = vmatprep.subr.mxu0 0.0
  %6004 = vmatpush1.msra.mxu0 %v60
  %6005 = vmatprep.subr.mxu0 0.0
  %6006 = vmatpush1.msra.mxu0 0.0
  %6007 = vmatprep.subr.mxu0 0.0
  %6008 = vmatpush1.msra.mxu0 0.0
  %6009 = vmatprep.subr.mxu0 0.0
  %6010 = vmatpush1.msra.mxu0 0.0
  %6011 = vmatprep.subr.mxu0 0.0
  %6012 = vmatpush1.msra.mxu0 0.0
  %6013 = vmatprep.subr.mxu0 0.0
  %6014 = vmatpush1.msra.mxu0 0.0
  %6015 = vmatprep.subr.mxu0 0.0
  %6016 = vmatpush1.msra.mxu0 0.0
  %6017 = vmatprep.subr.mxu0 0.0
  %6018 = vmatpush1.msra.mxu0 0.0
  %6019 = vmatprep.subr.mxu0 0.0
  %6020 = vmatpush1.msra.mxu0 0.0
  %6021 = vmatprep.subr.mxu0 0.0
  %6022 = vmatpush1.msra.mxu0 0.0
  %6023 = vmatprep.subr.mxu0 0.0
  %6024 = vmatpush1.msra.mxu0 0.0
  %6025 = vmatprep.subr.mxu0 0.0
  %6026 = vmatpush1.msra.mxu0 0.0
  %6027 = vmatprep.subr.mxu0 0.0
  %6028 = vmatpush1.msra.mxu0 0.0
  %6029 = vmatprep.subr.mxu0 0.0
  %6030 = vmatpush1.msra.mxu0 0.0
  %6031 = vmatprep.subr.mxu0 0.0
  %6032 = vmatpush1.msra.mxu0 0.0
  %6033 = vmatprep.subr.mxu0 0.0
  %6034 = vmatpush1.msra.mxu0 0.0
  %6035 = vmatprep.subr.mxu0 0.0
  %6036 = vmatpush1.msra.mxu0 0.0
  %6037 = vmatprep.mubr.f32.mxu0 0.0
  %6038 = vmatmul.mubr.f32.gmra.mrb[0].mxu0 %v5972
  %v6039 = vpop.f32.mrb[0].mxu0
  %v6040 = vadd.f32 1e-05, %v6039
  %v6041 = vpop.f32.mrb[0].mxu0
  %6042 = vdwg.mxu0
  %v6043 = vrsqrt.pop %v6040
  %v6044 = vmul.f32 %v6043, %v5870
  %v6045 = vlaneseq
  %v6046 = vshrl.u32 %v6045, 7
  %v6047 = vsub.s32 0, %v6046
  %v6048 = vrot.slane %v6044, %v6047
  %v6049 = vmul.f32 %v5956, %v6048
  %v6050 = vmul.f32 %v5957, %v6048
  %v6051 = vmul.f32 %v5958, %v6048
  %v6052 = vmul.f32 %v5959, %v6048
  %v6054 = vlaneseq
  %v6055 = vshrl.u32 %v6054, 7
  %v6056 = vsub.s32 0, %v6055
  %v6057 = vrot.slane %v5872, %v6056
  %v6059 = vadd.f32 %v6049, %v6057
  %v6060 = vadd.f32 %v6050, %v6057
  %v6061 = vadd.f32 %v6051, %v6057
  %v6062 = vadd.f32 %v6052, %v6057
  %v6063 = vmax.f32 %v6059, 0.0
  %v6064 = vmax.f32 %v6060, 0.0
  %v6065 = vmax.f32 %v6061, 0.0
  %v6066 = vmax.f32 %v6062, 0.0
  %v6067 = vpack.c.bf16 %v6064, %v6063
  %v6068 = vpack.c.bf16 %v6066, %v6065
  %v6069 = vld [vmem:[%s11] sm:$0xf]
  %v6070 = vld [vmem:[%s11 + $0x4] sm:$0xf]
  %v6071 = vld [vmem:[%s11 + $0x8] sm:$0xf]
  %v6072 = vld [vmem:[%s11 + $0xc] sm:$0xf]
  %v6073 = vld [vmem:[%s11 + $0x10] sm:$0xf]
  %v6074 = vld [vmem:[%s11 + $0x14] sm:$0xf]
  %v6075 = vld [vmem:[%s11 + $0x18] sm:$0xf]
  %v6076 = vld [vmem:[%s11 + $0x1c] sm:$0xf]
  %v6077 = vld [vmem:[%s11 + $0x20] sm:$0xf]
  %v6078 = vld [vmem:[%s11 + $0x24] sm:$0xf]
  %v6079 = vld [vmem:[%s11 + $0x28] sm:$0xf]
  %v6080 = vld [vmem:[%s11 + $0x2c] sm:$0xf]
  %v6081 = vld [vmem:[%s11 + $0x30] sm:$0xf]
  %v6082 = vld [vmem:[%s11 + $0x34] sm:$0xf]
  %v6083 = vld [vmem:[%s11 + $0x38] sm:$0xf]
  %v6084 = vld [vmem:[%s11 + $0x3c] sm:$0xf]
  %v6085 = vld [vmem:[%s12] sm:$0x1]
  %v6087 = vlaneseq
  %v6088 = vshrl.u32 %v6087, 7
  %v6089 = vsub.s32 0, %v6088
  %v6090 = vrot.slane %v6085, %v6089
  %v6108 = vunpack.c.l.b16 %v6069
  %v6109 = vunpack.c.l.b16 %v6070
  %v6110 = vunpack.c.l.b16 %v6071
  %v6111 = vunpack.c.l.b16 %v6072
  %v6112 = vunpack.c.l.b16 %v6073
  %v6113 = vunpack.c.l.b16 %v6074
  %v6114 = vunpack.c.l.b16 %v6075
  %v6115 = vunpack.c.l.b16 %v6076
  %v6116 = vunpack.c.l.b16 %v6077
  %v6117 = vunpack.c.l.b16 %v6078
  %v6118 = vunpack.c.l.b16 %v6079
  %v6119 = vunpack.c.l.b16 %v6080
  %v6120 = vunpack.c.l.b16 %v6081
  %v6121 = vunpack.c.l.b16 %v6082
  %v6122 = vunpack.c.l.b16 %v6083
  %v6123 = vunpack.c.l.b16 %v6084
  %v6124 = vpack.c.b16 %v6109, %v6108
  %v6125 = vpack.c.b16 %v6111, %v6110
  %v6126 = vpack.c.b16 %v6113, %v6112
  %v6127 = vpack.c.b16 %v6115, %v6114
  %v6128 = vpack.c.b16 %v6117, %v6116
  %v6129 = vpack.c.b16 %v6119, %v6118
  %v6130 = vpack.c.b16 %v6121, %v6120
  %v6131 = vpack.c.b16 %v6123, %v6122
  %6140 = vmatprep.subr.bf16.mxu0 0
  %6141 = vmatpush1.bf16.msra.mxu0 %v6124
  %6142 = vmatprep.subr.bf16.mxu0 0
  %6143 = vmatpush1.bf16.msra.mxu0 %v6125
  %6144 = vmatprep.subr.bf16.mxu0 0
  %6145 = vmatpush1.bf16.msra.mxu0 %v6126
  %6146 = vmatprep.subr.bf16.mxu0 0
  %6147 = vmatpush1.bf16.msra.mxu0 %v6127
  %6148 = vmatprep.subr.bf16.mxu0 0
  %6149 = vmatpush1.bf16.msra.mxu0 %v6128
  %6150 = vmatprep.subr.bf16.mxu0 0
  %6151 = vmatpush1.bf16.msra.mxu0 %v6129
  %6152 = vmatprep.subr.bf16.mxu0 0
  %6153 = vmatpush1.bf16.msra.mxu0 %v6130
  %6154 = vmatprep.subr.bf16.mxu0 0
  %6155 = vmatpush1.bf16.msra.mxu0 %v6131
  %6156 = vmatprep.subr.bf16.mxu0 0
  %6157 = vmatpush1.bf16.msra.mxu0 0
  %6158 = vmatprep.subr.bf16.mxu0 0
  %6159 = vmatpush1.bf16.msra.mxu0 0
  %6160 = vmatprep.subr.bf16.mxu0 0
  %6161 = vmatpush1.bf16.msra.mxu0 0
  %6162 = vmatprep.subr.bf16.mxu0 0
  %6163 = vmatpush1.bf16.msra.mxu0 0
  %6164 = vmatprep.subr.bf16.mxu0 0
  %6165 = vmatpush1.bf16.msra.mxu0 0
  %6166 = vmatprep.subr.bf16.mxu0 0
  %6167 = vmatpush1.bf16.msra.mxu0 0
  %6168 = vmatprep.subr.bf16.mxu0 0
  %6169 = vmatpush1.bf16.msra.mxu0 0
  %6170 = vmatprep.subr.bf16.mxu0 0
  %6171 = vmatpush1.bf16.msra.mxu0 0
  %6172 = vmatprep.mubr.bf16.mxu0 0
  %6173 = vmatmul.mubr.bf16.gmra.mrb[0].mxu0 %v6067
  %v6174 = vpop.f32.mrb[0].mxu0
  %v6175 = vadd.f32 %v6090, %v6174
  %v6176 = vpop.f32.mrb[0].mxu0
  %v6177 = vpop.f32.mrb[0].mxu0
  %v6178 = vadd.f32 %v6090, %v6177
  %v6179 = vpop.f32.mrb[0].mxu0
  %6180 = vmatprep.mubr.bf16.mxu0 0
  %6181 = vmatmul.mubr.bf16.gmra.mrb[0].mxu0 %v6068
  %v6182 = vpop.f32.mrb[0].mxu0
  %v6183 = vadd.f32 %v6090, %v6182
  %v6184 = vpop.f32.mrb[0].mxu0
  %v6185 = vpop.f32.mrb[0].mxu0
  %v6186 = vadd.f32 %v6090, %v6185
  %v6187 = vpop.f32.mrb[0].mxu0
  %6188 = vdwg.mxu0
  %v6189 = vxor.u32 %v6175, 2147483648
  %v6190 = vxor.u32 %v6178, 2147483648
  %v6191 = vxor.u32 %v6183, 2147483648
  %v6192 = vxor.u32 %v6186, 2147483648
  %v6193 = vmul.f32 %v6189, 1.442695
  %v6194 = vpow.pop %v6193
  %v6195 = vmul.f32 %v6190, 1.442695
  %v6196 = vpow.pop %v6195
  %v6197 = vmul.f32 %v6191, 1.442695
  %v6198 = vpow.pop %v6197
  %v6199 = vmul.f32 %v6192, 1.442695
  %v6200 = vpow.pop %v6199
  %v6201 = vadd.f32 %v6194, 1.0
  %v6202 = vadd.f32 %v6196, 1.0
  %v6203 = vadd.f32 %v6198, 1.0
  %v6204 = vadd.f32 %v6200, 1.0
  %v6205 = vrcp.pop %v6201
  %v6206 = vmul.f32 1.0, %v6205
  %v6207 = vrcp.pop %v6202
  %v6208 = vmul.f32 1.0, %v6207
  %v6209 = vrcp.pop %v6203
  %v6210 = vmul.f32 1.0, %v6209
  %v6211 = vrcp.pop %v6204
  %v6212 = vmul.f32 1.0, %v6211
  %6213 = vst [vmem:[%s13] sm:$0xff] %v6206
  %6214 = vst [vmem:[%s13 + $0x8] sm:$0xff] %v6208
  %6215 = vst [vmem:[%s13 + $0x10] sm:$0xff] %v6210
  %6216 = vst [vmem:[%s13 + $0x18] sm:$0xff] %v6212
  // Predicated region
  $region54: #{stage2_cnn_forward.1} parent=0 // pred_check
    _
  $region55: #{stage2_cnn_forward.1} parent=0 // pred_check_branch
    %6218 = sbr.rel (0) target = $region57
  $region56: #{stage2_cnn_forward.1} parent=0 // pred_region
    _
  $region57: #{stage2_cnn_forward.1} parent=0 // pred_fallthru
    _
  // Predicated region
  $region58: #{stage2_cnn_forward.1} parent=0 // pred_check
    _
  $region59: #{stage2_cnn_forward.1} parent=0 // pred_check_branch
    %6220 = sbr.rel (0) target = $region61
  $region60: #{stage2_cnn_forward.1} parent=0 // pred_region
    _
  $region61: #{stage2_cnn_forward.1} parent=0 // pred_fallthru
    _

</llo_original>
